<compile_context>
chip_gen: v7x
topology: tpu7x:2x2x1
jax: 0.10.0
libtpu: 0.0.40
codegen_flags: <defaults>
</compile_context>

<pallas_src>
import functools

import numpy as np
import jax
import jax.numpy as jnp
from jax.experimental import pallas as pl
from jax.experimental.pallas import tpu as pltpu


# ----------------------------------------------------------------------------
# Wrapper-side helpers (pure XLA, trace-time shapes).
# ----------------------------------------------------------------------------
def _im2col(img, k, pad):
    """img: (B, H, W, C) -> (B, H, W, k*k*C) patches, feature order (ky, kx, ci)."""
    B, H, W, C = img.shape
    imgp = jnp.pad(img, ((0, 0), (pad, pad), (pad, pad), (0, 0)))
    cols = []
    for ky in range(k):
        for kx in range(k):
            cols.append(imgp[:, ky:ky + H, kx:kx + W, :])
    return jnp.concatenate(cols, axis=-1)


def _conv_weight_to_matrix(w):
    """(Cout, Cin, k, k) conv weight -> dense (k*k*Cin, Cout), row order (ky,kx,ci)."""
    cout, cin, k, _ = w.shape
    return jnp.transpose(w, (2, 3, 1, 0)).reshape(k * k * cin, cout)


# ----------------------------------------------------------------------------
# Fused FlattenGRU kernel: one invocation processes the whole batch.
# ----------------------------------------------------------------------------
def flatten_gru_kernel(pzr_ref, phx_ref, par_ref, wzr_ref, bzr_ref,
                       whr_ref, whx_ref, bh_ref, o_ref, shift_ref,
                       *, wp, k2, guard):
    mp, hid = o_ref.shape                     # M = B*Hp*Wp, hidden

    # ---- conv_zr: one dense im2col matmul -> gates z, r (all padded-grid pixels)
    zr = jnp.dot(pzr_ref[...], wzr_ref[...], preferred_element_type=jnp.float32)
    zr = jax.nn.sigmoid(zr + bzr_ref[...])
    z = zr[:, :hid]
    r = zr[:, hid:]

    par = par_ref[...]                        # (mp, hid) f32, zero on the ring
    rpar = r * par                            # zero on the ring -> conv zero-pad

    # ---- guard-padded staging of r*par; zero only the guard rows (not the body)
    shift_ref[:guard, :] = jnp.zeros((guard, hid), jnp.float32)
    shift_ref[guard + mp:, :] = jnp.zeros((guard, hid), jnp.float32)
    shift_ref[guard:guard + mp, :] = rpar

    # ---- build the 3x3 r*par patch matrix via 9 constant row shifts + lane concat
    half = k2 // 2
    cols = []
    for dy in range(k2):
        for dx in range(k2):
            off = (dy - half) * wp + (dx - half)
            cols.append(shift_ref[guard + off: guard + off + mp, :])
    pr = jnp.concatenate(cols, axis=1).astype(jnp.bfloat16)      # (mp, k2*k2*hid)

    # ---- conv_h: one big matmul for the r*par part + one tiny one for the x part
    h = jnp.dot(pr, whr_ref[...], preferred_element_type=jnp.float32)
    h = h + jnp.dot(phx_ref[...], whx_ref[...], preferred_element_type=jnp.float32)
    h = jnp.tanh(h + bh_ref[...])

    # ---- GRU output gate
    o_ref[...] = (1.0 - z) * par + z * h


def flatten_gru_forward(x, params):
    """x: (B, C, H, W) float32 NCHW -> (B, hidden, H, W) float32 NCHW."""
    par, w_zr, b_zr, w_h, b_h = params
    B, C, H, W = x.shape
    hidden = w_h.shape[0]
    k1 = w_zr.shape[-1]
    p1 = (k1 - 1) // 2                        # 9x9, pad 4
    k2 = w_h.shape[-1]
    p2 = (k2 - 1) // 2                        # 3x3, pad 1
    assert par.shape == (1, 1, H, W)
    assert w_zr.shape == (2 * hidden, C + 1, k1, k1)
    assert w_h.shape == (hidden, hidden + C, k2, k2)

    Hp, Wp = H + 2 * p2, W + 2 * p2           # padded pixel grid (ring for conv_h)
    Mp = B * Hp * Wp                          # rows of every per-pixel tensor
    guard = p2 * Wp + p2                      # max |row shift| of the 3x3 window
    K1 = k1 * k1 * (C + 1)
    K2x = k2 * k2 * C

    # ---- activations: channels-last, bf16, on the padded pixel grid ----
    x_nhwc = jnp.transpose(x, (0, 2, 3, 1))                              # (B,H,W,C)
    par_hw = par[0, 0].astype(jnp.float32)                               # (H,W)
    par_b = jnp.broadcast_to(par_hw[None, :, :, None], (B, H, W, 1))
    xx = jnp.concatenate([par_b, x_nhwc], axis=-1)                       # ch0 = par

    xx_ring = jnp.pad(xx, ((0, 0), (p2, p2), (p2, p2), (0, 0))).astype(jnp.bfloat16)
    x_ring = jnp.pad(x_nhwc, ((0, 0), (p2, p2), (p2, p2), (0, 0))).astype(jnp.bfloat16)

    # Dense im2col patches (real data only, no structural zeros).
    p_zr = _im2col(xx_ring, k1, p1).reshape(Mp, K1)                      # (Mp, 405)
    p_hx = _im2col(x_ring, k2, p2).reshape(Mp, K2x)                      # (Mp, 36)

    # par broadcast over hidden on the padded grid; zero on the ring (masks r*par).
    par_grid = jnp.pad(par_hw, ((p2, p2), (p2, p2)))                     # (Hp, Wp)
    par_m = jnp.broadcast_to(par_grid[None, :, :, None],
                             (B, Hp, Wp, hidden)).reshape(Mp, hidden)

    # ---- dense bf16 weight matrices (~75 KiB total) + f32 biases ----
    wzr_m = _conv_weight_to_matrix(w_zr).astype(jnp.bfloat16)            # (405, 64)
    whr_m = _conv_weight_to_matrix(w_h[:, :hidden]).astype(jnp.bfloat16) # (288, 32)
    whx_m = _conv_weight_to_matrix(w_h[:, hidden:]).astype(jnp.bfloat16) # (36, 32)
    bzr = b_zr[None, :].astype(jnp.float32)                              # (1, 64)
    bh = b_h[None, :].astype(jnp.float32)                                # (1, 32)

    kernel = functools.partial(flatten_gru_kernel, wp=Wp, k2=k2, guard=guard)

    out = pl.pallas_call(
        kernel,
        out_shape=jax.ShapeDtypeStruct((Mp, hidden), jnp.float32),
        grid=(1,),                                       # batch folded into M
        in_specs=[
            pl.BlockSpec((Mp, K1),             lambda i: (0, 0)),   # conv_zr patches
            pl.BlockSpec((Mp, K2x),            lambda i: (0, 0)),   # conv_h x patches
            pl.BlockSpec((Mp, hidden),         lambda i: (0, 0)),   # par (ring-masked)
            pl.BlockSpec((K1, 2 * hidden),     lambda i: (0, 0)),   # dense conv_zr weight
            pl.BlockSpec((1, 2 * hidden),      lambda i: (0, 0)),   # bias zr
            pl.BlockSpec((k2 * k2 * hidden, hidden), lambda i: (0, 0)),  # conv_h r*par weight
            pl.BlockSpec((K2x, hidden),        lambda i: (0, 0)),   # conv_h x weight
            pl.BlockSpec((1, hidden),          lambda i: (0, 0)),   # bias h
        ],
        out_specs=pl.BlockSpec((Mp, hidden), lambda i: (0, 0)),
        scratch_shapes=[pltpu.VMEM((Mp + 2 * guard, hidden), jnp.float32)],
        compiler_params=pltpu.CompilerParams(
            dimension_semantics=("arbitrary",),
            vmem_limit_bytes=32 * 1024 * 1024),
    )(p_zr, p_hx, par_m, wzr_m, bzr, whr_m, whx_m, bh)

    # Drop the ring pixels, go back to NCHW (tiny final reshape/transpose).
    out = out.reshape(B, Hp, Wp, hidden)[:, p2:p2 + H, p2:p2 + W, :]
    return jnp.transpose(out, (0, 3, 1, 2))


# ----------------------------------------------------------------------------
# Plain-JAX reference (mirrors the PyTorch forward exactly) and test harness.
# ----------------------------------------------------------------------------
def reference_forward(x, params):
    par, w_zr, b_zr, w_h, b_h = params
    B = x.shape[0]
    hidden = w_h.shape[0]
    p1 = (w_zr.shape[-1] - 1) // 2
    p2 = (w_h.shape[-1] - 1) // 2
    par_b = jnp.broadcast_to(par, (B, 1) + par.shape[2:])
    xx = jnp.concatenate([par_b, x], axis=1)
    zr = jax.lax.conv_general_dilated(
        xx, w_zr, window_strides=(1, 1), padding=((p1, p1), (p1, p1)),
        dimension_numbers=("NCHW", "OIHW", "NCHW"),
        precision=jax.lax.Precision.HIGHEST) + b_zr[None, :, None, None]
    z = jax.nn.sigmoid(zr[:, :hidden])
    r = jax.nn.sigmoid(zr[:, hidden:])
    x2 = jnp.concatenate([r * par_b, x], axis=1)
    h = jax.lax.conv_general_dilated(
        x2, w_h, window_strides=(1, 1), padding=((p2, p2), (p2, p2)),
        dimension_numbers=("NCHW", "OIHW", "NCHW"),
        precision=jax.lax.Precision.HIGHEST) + b_h[None, :, None, None]
    h = jnp.tanh(h)
    return (1.0 - z) * par + z * h


def init_params(key, num_channels, hidden, width):
    """Synthetic parameters with PyTorch Conv2d-style init scales.
    (The module inits `par` to ones; a random `par` is used here so the test
    actually exercises the par plumbing — forward semantics are unchanged.)"""
    ks = jax.random.split(key, 5)
    cin1, k1 = num_channels + 1, 9
    cin2, k2 = hidden + num_channels, 3
    s1 = 1.0 / np.sqrt(cin1 * k1 * k1)
    s2 = 1.0 / np.sqrt(cin2 * k2 * k2)
    par = jax.random.uniform(ks[0], (1, 1, width, width), jnp.float32, 0.5, 1.5)
    w_zr = jax.random.uniform(ks[1], (2 * hidden, cin1, k1, k1), jnp.float32, -s1, s1)
    b_zr = jax.random.uniform(ks[2], (2 * hidden,), jnp.float32, -s1, s1)
    w_h = jax.random.uniform(ks[3], (hidden, cin2, k2, k2), jnp.float32, -s2, s2)
    b_h = jax.random.uniform(ks[4], (hidden,), jnp.float32, -s2, s2)
    return par, w_zr, b_zr, w_h, b_h


if __name__ == "__main__":
    key = jax.random.PRNGKey(0)
    k_x, k_p = jax.random.split(key)

    B, C, HID, WIDTH = 2, 4, 32, 16
    x = jax.random.normal(k_x, (B, C, WIDTH, WIDTH), dtype=jnp.float32)
    params = init_params(k_p, C, HID, WIDTH)

    out = jax.block_until_ready(flatten_gru_forward(x, params))

    ref = reference_forward(x, params)
    assert out.shape == (B, HID, WIDTH, WIDTH)
    max_diff = float(jnp.max(jnp.abs(out - ref)))
    # Tolerance covers the bf16 MXU operands over the 405-/324-term contractions.
    assert jnp.allclose(out, ref, atol=5e-2, rtol=0.0), f"max abs diff {max_diff}"

    print("KERNEL_OK")
</pallas_src>

<mosaic_0001>
module attributes {stable_mosaic.version = 11 : i64} {
  func.func @flatten_gru_kernel(%arg0: i32, %arg1: memref<648x405xbf16, #tpu.memory_space<vmem>>, %arg2: memref<648x36xbf16, #tpu.memory_space<vmem>>, %arg3: memref<648x32xf32, #tpu.memory_space<vmem>>, %arg4: memref<405x64xbf16, #tpu.memory_space<vmem>>, %arg5: memref<1x64xf32, #tpu.memory_space<vmem>>, %arg6: memref<288x32xbf16, #tpu.memory_space<vmem>>, %arg7: memref<36x32xbf16, #tpu.memory_space<vmem>>, %arg8: memref<1x32xf32, #tpu.memory_space<vmem>>, %arg9: memref<648x32xf32, #tpu.memory_space<vmem>>, %arg10: memref<686x32xf32, #tpu.memory_space<vmem>>) attributes {dimension_semantics = [#tpu.dimension_semantics<arbitrary>], iteration_bounds = array<i64: 1>, scalar_prefetch = 0 : i64, scratch_operands = 1 : i64, tpu.core_type = #tpu.core_type<tc>, window_params = [{pipeline_mode = #tpu.pipeline_mode<synchronous>, transform_indices = @transform_0, window_bounds = array<i64: 648, 405>}, {pipeline_mode = #tpu.pipeline_mode<synchronous>, transform_indices = @transform_1, window_bounds = array<i64: 648, 36>}, {pipeline_mode = #tpu.pipeline_mode<synchronous>, transform_indices = @transform_2, window_bounds = array<i64: 648, 32>}, {pipeline_mode = #tpu.pipeline_mode<synchronous>, transform_indices = @transform_3, window_bounds = array<i64: 405, 64>}, {pipeline_mode = #tpu.pipeline_mode<synchronous>, transform_indices = @transform_4, window_bounds = array<i64: 1, 64>}, {pipeline_mode = #tpu.pipeline_mode<synchronous>, transform_indices = @transform_5, window_bounds = array<i64: 288, 32>}, {pipeline_mode = #tpu.pipeline_mode<synchronous>, transform_indices = @transform_6, window_bounds = array<i64: 36, 32>}, {pipeline_mode = #tpu.pipeline_mode<synchronous>, transform_indices = @transform_7, window_bounds = array<i64: 1, 32>}, {pipeline_mode = #tpu.pipeline_mode<synchronous>, transform_indices = @transform_8, window_bounds = array<i64: 648, 32>}]} {
    %c0 = arith.constant 0 : index
    %c0_0 = arith.constant 0 : index
    %0 = vector.load %arg1[%c0, %c0_0] : memref<648x405xbf16, #tpu.memory_space<vmem>>, vector<648x405xbf16>
    %c0_1 = arith.constant 0 : index
    %c0_2 = arith.constant 0 : index
    %1 = vector.load %arg4[%c0_1, %c0_2] : memref<405x64xbf16, #tpu.memory_space<vmem>>, vector<405x64xbf16>
    %cst = arith.constant dense<0.000000e+00> : vector<648x64xf32>
    %2 = tpu.matmul %0, %1, %cst {dimension_numbers = #tpu.dot_dimension_numbers<[1], [0], [0], [1], [0, 0, 1, 1], [], []>} : vector<648x405xbf16>, vector<405x64xbf16>, vector<648x64xf32> -> vector<648x64xf32>
    %c0_3 = arith.constant 0 : index
    %c0_4 = arith.constant 0 : index
    %3 = vector.load %arg5[%c0_3, %c0_4] : memref<1x64xf32, #tpu.memory_space<vmem>>, vector<1x64xf32>
    %4 = vector.broadcast %3 : vector<1x64xf32> to vector<648x64xf32>
    %5 = arith.addf %2, %4 : vector<648x64xf32>
    %6 = arith.negf %5 : vector<648x64xf32>
    %7 = math.exp %6 : vector<648x64xf32>
    %cst_5 = arith.constant 1.000000e+00 : f32
    %8 = vector.broadcast %cst_5 : f32 to vector<648x64xf32>
    %9 = arith.addf %8, %7 : vector<648x64xf32>
    %10 = arith.divf %8, %9 : vector<648x64xf32>
    %11 = vector.extract_strided_slice %10 {offsets = [0, 0], sizes = [648, 32], strides = [1, 1]} : vector<648x64xf32> to vector<648x32xf32>
    %12 = vector.extract_strided_slice %10 {offsets = [0, 32], sizes = [648, 32], strides = [1, 1]} : vector<648x64xf32> to vector<648x32xf32>
    %c0_6 = arith.constant 0 : index
    %c0_7 = arith.constant 0 : index
    %13 = vector.load %arg3[%c0_6, %c0_7] : memref<648x32xf32, #tpu.memory_space<vmem>>, vector<648x32xf32>
    %14 = arith.mulf %12, %13 : vector<648x32xf32>
    %cst_8 = arith.constant 0.000000e+00 : f32
    %15 = vector.broadcast %cst_8 : f32 to vector<19x32xf32>
    %c0_9 = arith.constant 0 : index
    %c0_10 = arith.constant 0 : index
    %16 = vector.load %arg10[%c0_9, %c0_10] : memref<686x32xf32, #tpu.memory_space<vmem>>, vector<19x32xf32>
    tpu.vector_store %arg10[%c0_9, %c0_10], %15 {strides = array<i32>} : memref<686x32xf32, #tpu.memory_space<vmem>>, vector<19x32xf32>,
    %cst_11 = arith.constant 0.000000e+00 : f32
    %17 = vector.broadcast %cst_11 : f32 to vector<19x32xf32>
    %c667 = arith.constant 667 : index
    %c0_12 = arith.constant 0 : index
    %18 = vector.load %arg10[%c667, %c0_12] : memref<686x32xf32, #tpu.memory_space<vmem>>, vector<19x32xf32>
    tpu.vector_store %arg10[%c667, %c0_12], %17 {strides = array<i32>} : memref<686x32xf32, #tpu.memory_space<vmem>>, vector<19x32xf32>,
    %c19 = arith.constant 19 : index
    %c0_13 = arith.constant 0 : index
    %19 = vector.load %arg10[%c19, %c0_13] : memref<686x32xf32, #tpu.memory_space<vmem>>, vector<648x32xf32>
    tpu.vector_store %arg10[%c19, %c0_13], %14 {strides = array<i32>} : memref<686x32xf32, #tpu.memory_space<vmem>>, vector<648x32xf32>,
    %c0_14 = arith.constant 0 : index
    %c0_15 = arith.constant 0 : index
    %20 = vector.load %arg10[%c0_14, %c0_15] : memref<686x32xf32, #tpu.memory_space<vmem>>, vector<648x32xf32>
    %c1 = arith.constant 1 : index
    %c0_16 = arith.constant 0 : index
    %21 = vector.load %arg10[%c1, %c0_16] : memref<686x32xf32, #tpu.memory_space<vmem>>, vector<648x32xf32>
    %c2 = arith.constant 2 : index
    %c0_17 = arith.constant 0 : index
    %22 = vector.load %arg10[%c2, %c0_17] : memref<686x32xf32, #tpu.memory_space<vmem>>, vector<648x32xf32>
    %c18 = arith.constant 18 : index
    %c0_18 = arith.constant 0 : index
    %23 = vector.load %arg10[%c18, %c0_18] : memref<686x32xf32, #tpu.memory_space<vmem>>, vector<648x32xf32>
    %c19_19 = arith.constant 19 : index
    %c0_20 = arith.constant 0 : index
    %24 = vector.load %arg10[%c19_19, %c0_20] : memref<686x32xf32, #tpu.memory_space<vmem>>, vector<648x32xf32>
    %c20 = arith.constant 20 : index
    %c0_21 = arith.constant 0 : index
    %25 = vector.load %arg10[%c20, %c0_21] : memref<686x32xf32, #tpu.memory_space<vmem>>, vector<648x32xf32>
    %c36 = arith.constant 36 : index
    %c0_22 = arith.constant 0 : index
    %26 = vector.load %arg10[%c36, %c0_22] : memref<686x32xf32, #tpu.memory_space<vmem>>, vector<648x32xf32>
    %c37 = arith.constant 37 : index
    %c0_23 = arith.constant 0 : index
    %27 = vector.load %arg10[%c37, %c0_23] : memref<686x32xf32, #tpu.memory_space<vmem>>, vector<648x32xf32>
    %c38 = arith.constant 38 : index
    %c0_24 = arith.constant 0 : index
    %28 = vector.load %arg10[%c38, %c0_24] : memref<686x32xf32, #tpu.memory_space<vmem>>, vector<648x32xf32>
    %29 = tpu.concatenate %20, %21, %22, %23, %24, %25, %26, %27, %28 in 1 : vector<648x32xf32>, vector<648x32xf32>, vector<648x32xf32>, vector<648x32xf32>, vector<648x32xf32>, vector<648x32xf32>, vector<648x32xf32>, vector<648x32xf32>, vector<648x32xf32> -> vector<648x288xf32>
    %30 = arith.truncf %29 : vector<648x288xf32> to vector<648x288xbf16>
    %c0_25 = arith.constant 0 : index
    %c0_26 = arith.constant 0 : index
    %31 = vector.load %arg6[%c0_25, %c0_26] : memref<288x32xbf16, #tpu.memory_space<vmem>>, vector<288x32xbf16>
    %cst_27 = arith.constant dense<0.000000e+00> : vector<648x32xf32>
    %32 = tpu.matmul %30, %31, %cst_27 {dimension_numbers = #tpu.dot_dimension_numbers<[1], [0], [0], [1], [0, 0, 1, 1], [], []>} : vector<648x288xbf16>, vector<288x32xbf16>, vector<648x32xf32> -> vector<648x32xf32>
    %c0_28 = arith.constant 0 : index
    %c0_29 = arith.constant 0 : index
    %33 = vector.load %arg2[%c0_28, %c0_29] : memref<648x36xbf16, #tpu.memory_space<vmem>>, vector<648x36xbf16>
    %c0_30 = arith.constant 0 : index
    %c0_31 = arith.constant 0 : index
    %34 = vector.load %arg7[%c0_30, %c0_31] : memref<36x32xbf16, #tpu.memory_space<vmem>>, vector<36x32xbf16>
    %cst_32 = arith.constant dense<0.000000e+00> : vector<648x32xf32>
    %35 = tpu.matmul %33, %34, %cst_32 {dimension_numbers = #tpu.dot_dimension_numbers<[1], [0], [0], [1], [0, 0, 1, 1], [], []>} : vector<648x36xbf16>, vector<36x32xbf16>, vector<648x32xf32> -> vector<648x32xf32>
    %36 = arith.addf %32, %35 : vector<648x32xf32>
    %c0_33 = arith.constant 0 : index
    %c0_34 = arith.constant 0 : index
    %37 = vector.load %arg8[%c0_33, %c0_34] : memref<1x32xf32, #tpu.memory_space<vmem>>, vector<1x32xf32>
    %38 = vector.broadcast %37 : vector<1x32xf32> to vector<648x32xf32>
    %39 = arith.addf %36, %38 : vector<648x32xf32>
    %40 = math.tanh %39 : vector<648x32xf32>
    %cst_35 = arith.constant 1.000000e+00 : f32
    %41 = vector.broadcast %cst_35 : f32 to vector<648x32xf32>
    %42 = arith.subf %41, %11 : vector<648x32xf32>
    %43 = arith.mulf %42, %13 : vector<648x32xf32>
    %44 = arith.mulf %11, %40 : vector<648x32xf32>
    %45 = arith.addf %43, %44 : vector<648x32xf32>
    %c0_36 = arith.constant 0 : index
    %c0_37 = arith.constant 0 : index
    %46 = vector.load %arg9[%c0_36, %c0_37] : memref<648x32xf32, #tpu.memory_space<vmem>>, vector<648x32xf32>
    tpu.vector_store %arg9[%c0_36, %c0_37], %45 {strides = array<i32>} : memref<648x32xf32, #tpu.memory_space<vmem>>, vector<648x32xf32>,
    return
  }
  func.func @transform_0(%arg0: i32) -> (i32, i32) {
    %c0_i32 = arith.constant 0 : i32
    %c0_i32_0 = arith.constant 0 : i32
    %c0_i32_1 = arith.constant 0 : i32
    return %c0_i32, %c0_i32_0 : i32, i32
  }
  func.func @transform_1(%arg0: i32) -> (i32, i32) {
    %c0_i32 = arith.constant 0 : i32
    %c0_i32_0 = arith.constant 0 : i32
    %c0_i32_1 = arith.constant 0 : i32
    return %c0_i32, %c0_i32_0 : i32, i32
  }
  func.func @transform_2(%arg0: i32) -> (i32, i32) {
    %c0_i32 = arith.constant 0 : i32
    %c0_i32_0 = arith.constant 0 : i32
    %c0_i32_1 = arith.constant 0 : i32
    return %c0_i32, %c0_i32_0 : i32, i32
  }
  func.func @transform_3(%arg0: i32) -> (i32, i32) {
    %c0_i32 = arith.constant 0 : i32
    %c0_i32_0 = arith.constant 0 : i32
    %c0_i32_1 = arith.constant 0 : i32
    return %c0_i32, %c0_i32_0 : i32, i32
  }
  func.func @transform_4(%arg0: i32) -> (i32, i32) {
    %c0_i32 = arith.constant 0 : i32
    %c0_i32_0 = arith.constant 0 : i32
    %c0_i32_1 = arith.constant 0 : i32
    return %c0_i32, %c0_i32_0 : i32, i32
  }
  func.func @transform_5(%arg0: i32) -> (i32, i32) {
    %c0_i32 = arith.constant 0 : i32
    %c0_i32_0 = arith.constant 0 : i32
    %c0_i32_1 = arith.constant 0 : i32
    return %c0_i32, %c0_i32_0 : i32, i32
  }
  func.func @transform_6(%arg0: i32) -> (i32, i32) {
    %c0_i32 = arith.constant 0 : i32
    %c0_i32_0 = arith.constant 0 : i32
    %c0_i32_1 = arith.constant 0 : i32
    return %c0_i32, %c0_i32_0 : i32, i32
  }
  func.func @transform_7(%arg0: i32) -> (i32, i32) {
    %c0_i32 = arith.constant 0 : i32
    %c0_i32_0 = arith.constant 0 : i32
    %c0_i32_1 = arith.constant 0 : i32
    return %c0_i32, %c0_i32_0 : i32, i32
  }
  func.func @transform_8(%arg0: i32) -> (i32, i32) {
    %c0_i32 = arith.constant 0 : i32
    %c0_i32_0 = arith.constant 0 : i32
    %c0_i32_1 = arith.constant 0 : i32
    return %c0_i32, %c0_i32_0 : i32, i32
  }
}

</mosaic_0001>

<llo_original>
// kernel: tpu_custom_call.1
$region0: #{tpu_custom_call.1}
  #allocation0 [shape = 'u32[]', space=smem, size = 0x4, offset = 0x4, fixed_abs, tag = 'smem constant byte address 0x4 - core index']
  #allocation1 [shape = 'u32[144,128]{1,0:T(1,128)}', space=vmem, size = 0x12000, scoped, tag = 'internal scratch']
  #allocation2 [shape = 'f32[686,32]{1,0:T(8,128)}', space=vmem, size = 0x56000, scoped, tag = 'scratch operand']
  %s0 = inlined_call_operand.vmem [shape: bf16[648,405], index: 0, kind: input, shape index: {}]
  %s1 = inlined_call_operand.vmem [shape: bf16[648,36], index: 1, kind: input, shape index: {}]
  %s2 = inlined_call_operand.vmem [shape: f32[648,32], index: 2, kind: input, shape index: {}]
  %s3 = inlined_call_operand.vmem [shape: bf16[405,64], index: 3, kind: input, shape index: {}]
  %s4 = inlined_call_operand.vmem [shape: f32[1,64], index: 4, kind: input, shape index: {}]
  %s5 = inlined_call_operand.vmem [shape: bf16[288,32], index: 5, kind: input, shape index: {}]
  %s6 = inlined_call_operand.vmem [shape: bf16[36,32], index: 6, kind: input, shape index: {}]
  %s7 = inlined_call_operand.vmem [shape: f32[1,32], index: 7, kind: input, shape index: {}]
  %s8 = inlined_call_operand.vmem [shape: f32[648,32], index: 8, kind: output, shape index: {}]
  %s9 = sld [smem:[#allocation0]]
  $region42: #{tpu_custom_call.1} parent=0
    _
  %s11 = ssub.s32 1, %s9
  %s12 = scalar_select 0, %s11, %s9
  // Predicated region
  $region2: #{tpu_custom_call.1} parent=0 // pred_check
    _
  $region3: #{tpu_custom_call.1} parent=0 // pred_check_branch
    %14 = sbr.rel (0) target = $region5
  $region4: #{tpu_custom_call.1} parent=0 // pred_region
    _
  $region5: #{tpu_custom_call.1} parent=0 // pred_fallthru
    _
  // Predicated region
  $region6: #{tpu_custom_call.1} parent=0 // pred_check
    _
  $region7: #{tpu_custom_call.1} parent=0 // pred_check_branch
    %16 = sbr.rel (0) target = $region9
  $region8: #{tpu_custom_call.1} parent=0 // pred_region
    _
  $region9: #{tpu_custom_call.1} parent=0 // pred_fallthru
    _
  // Predicated region
  $region10: #{tpu_custom_call.1} parent=0 // pred_check
    _
  $region11: #{tpu_custom_call.1} parent=0 // pred_check_branch
    %18 = sbr.rel (0) target = $region13
  $region12: #{tpu_custom_call.1} parent=0 // pred_region
    _
  $region13: #{tpu_custom_call.1} parent=0 // pred_fallthru
    _
  // Predicated region
  $region14: #{tpu_custom_call.1} parent=0 // pred_check
    _
  $region15: #{tpu_custom_call.1} parent=0 // pred_check_branch
    %20 = sbr.rel (0) target = $region17
  $region16: #{tpu_custom_call.1} parent=0 // pred_region
    _
  $region17: #{tpu_custom_call.1} parent=0 // pred_fallthru
    _
  // Predicated region
  $region18: #{tpu_custom_call.1} parent=0 // pred_check
    _
  $region19: #{tpu_custom_call.1} parent=0 // pred_check_branch
    %22 = sbr.rel (0) target = $region21
  $region20: #{tpu_custom_call.1} parent=0 // pred_region
    _
  $region21: #{tpu_custom_call.1} parent=0 // pred_fallthru
    _
  // Predicated region
  $region22: #{tpu_custom_call.1} parent=0 // pred_check
    _
  $region23: #{tpu_custom_call.1} parent=0 // pred_check_branch
    %24 = sbr.rel (0) target = $region25
  $region24: #{tpu_custom_call.1} parent=0 // pred_region
    _
  $region25: #{tpu_custom_call.1} parent=0 // pred_fallthru
    _
  // Predicated region
  $region26: #{tpu_custom_call.1} parent=0 // pred_check
    _
  $region27: #{tpu_custom_call.1} parent=0 // pred_check_branch
    %26 = sbr.rel (0) target = $region29
  $region28: #{tpu_custom_call.1} parent=0 // pred_region
    _
  $region29: #{tpu_custom_call.1} parent=0 // pred_fallthru
    _
  // Predicated region
  $region30: #{tpu_custom_call.1} parent=0 // pred_check
    _
  $region31: #{tpu_custom_call.1} parent=0 // pred_check_branch
    %28 = sbr.rel (0) target = $region33
  $region32: #{tpu_custom_call.1} parent=0 // pred_region
    _
  $region33: #{tpu_custom_call.1} parent=0 // pred_fallthru
    _
  %v30 = vld [vmem:[%s0] sm:$0xff]
  %v31 = vld [vmem:[%s0 + $0x8] sm:$0xff]
  %v32 = vld [vmem:[%s0 + $0x10] sm:$0xff]
  %v33 = vld [vmem:[%s0 + $0x18] sm:$0xff]
  %v34 = vld [vmem:[%s0 + $0x20] sm:$0xff]
  %v35 = vld [vmem:[%s0 + $0x28] sm:$0xff]
  %v36 = vld [vmem:[%s0 + $0x30] sm:$0xff]
  %v37 = vld [vmem:[%s0 + $0x38] sm:$0xff]
  %v38 = vld [vmem:[%s0 + $0x40] sm:$0xff]
  %v39 = vld [vmem:[%s0 + $0x48] sm:$0xff]
  %v40 = vld [vmem:[%s0 + $0x50] sm:$0xff]
  %v41 = vld [vmem:[%s0 + $0x58] sm:$0xff]
  %v42 = vld [vmem:[%s0 + $0x60] sm:$0xff]
  %v43 = vld [vmem:[%s0 + $0x68] sm:$0xff]
  %v44 = vld [vmem:[%s0 + $0x70] sm:$0xff]
  %v45 = vld [vmem:[%s0 + $0x78] sm:$0xff]
  %v46 = vld [vmem:[%s0 + $0x80] sm:$0xff]
  %v47 = vld [vmem:[%s0 + $0x88] sm:$0xff]
  %v48 = vld [vmem:[%s0 + $0x90] sm:$0xff]
  %v49 = vld [vmem:[%s0 + $0x98] sm:$0xff]
  %v50 = vld [vmem:[%s0 + $0xa0] sm:$0xff]
  %v51 = vld [vmem:[%s0 + $0xa8] sm:$0xff]
  %v52 = vld [vmem:[%s0 + $0xb0] sm:$0xff]
  %v53 = vld [vmem:[%s0 + $0xb8] sm:$0xff]
  %v54 = vld [vmem:[%s0 + $0xc0] sm:$0xff]
  %v55 = vld [vmem:[%s0 + $0xc8] sm:$0xff]
  %v56 = vld [vmem:[%s0 + $0xd0] sm:$0xff]
  %v57 = vld [vmem:[%s0 + $0xd8] sm:$0xff]
  %v58 = vld [vmem:[%s0 + $0xe0] sm:$0xff]
  %v59 = vld [vmem:[%s0 + $0xe8] sm:$0xff]
  %v60 = vld [vmem:[%s0 + $0xf0] sm:$0xff]
  %v61 = vld [vmem:[%s0 + $0xf8] sm:$0xff]
  %v62 = vld [vmem:[%s0 + $0x100] sm:$0xff]
  %v63 = vld [vmem:[%s0 + $0x108] sm:$0xff]
  %v64 = vld [vmem:[%s0 + $0x110] sm:$0xff]
  %v65 = vld [vmem:[%s0 + $0x118] sm:$0xff]
  %v66 = vld [vmem:[%s0 + $0x120] sm:$0xff]
  %v67 = vld [vmem:[%s0 + $0x128] sm:$0xff]
  %v68 = vld [vmem:[%s0 + $0x130] sm:$0xff]
  %v69 = vld [vmem:[%s0 + $0x138] sm:$0xff]
  %v70 = vld [vmem:[%s0 + $0x140] sm:$0xff]
  %v71 = vld [vmem:[%s0 + $0x148] sm:$0xff]
  %v72 = vld [vmem:[%s0 + $0x150] sm:$0xff]
  %v73 = vld [vmem:[%s0 + $0x158] sm:$0xff]
  %v74 = vld [vmem:[%s0 + $0x160] sm:$0xff]
  %v75 = vld [vmem:[%s0 + $0x168] sm:$0xff]
  %v76 = vld [vmem:[%s0 + $0x170] sm:$0xff]
  %v77 = vld [vmem:[%s0 + $0x178] sm:$0xff]
  %v78 = vld [vmem:[%s0 + $0x180] sm:$0xff]
  %v79 = vld [vmem:[%s0 + $0x188] sm:$0xff]
  %v80 = vld [vmem:[%s0 + $0x190] sm:$0xff]
  %v81 = vld [vmem:[%s0 + $0x198] sm:$0xff]
  %v82 = vld [vmem:[%s0 + $0x1a0] sm:$0xff]
  %v83 = vld [vmem:[%s0 + $0x1a8] sm:$0xff]
  %v84 = vld [vmem:[%s0 + $0x1b0] sm:$0xff]
  %v85 = vld [vmem:[%s0 + $0x1b8] sm:$0xff]
  %v86 = vld [vmem:[%s0 + $0x1c0] sm:$0xff]
  %v87 = vld [vmem:[%s0 + $0x1c8] sm:$0xff]
  %v88 = vld [vmem:[%s0 + $0x1d0] sm:$0xff]
  %v89 = vld [vmem:[%s0 + $0x1d8] sm:$0xff]
  %v90 = vld [vmem:[%s0 + $0x1e0] sm:$0xff]
  %v91 = vld [vmem:[%s0 + $0x1e8] sm:$0xff]
  %v92 = vld [vmem:[%s0 + $0x1f0] sm:$0xff]
  %v93 = vld [vmem:[%s0 + $0x1f8] sm:$0xff]
  %v94 = vld [vmem:[%s0 + $0x200] sm:$0xff]
  %v95 = vld [vmem:[%s0 + $0x208] sm:$0xff]
  %v96 = vld [vmem:[%s0 + $0x210] sm:$0xff]
  %v97 = vld [vmem:[%s0 + $0x218] sm:$0xff]
  %v98 = vld [vmem:[%s0 + $0x220] sm:$0xff]
  %v99 = vld [vmem:[%s0 + $0x228] sm:$0xff]
  %v100 = vld [vmem:[%s0 + $0x230] sm:$0xff]
  %v101 = vld [vmem:[%s0 + $0x238] sm:$0xff]
  %v102 = vld [vmem:[%s0 + $0x240] sm:$0xff]
  %v103 = vld [vmem:[%s0 + $0x248] sm:$0xff]
  %v104 = vld [vmem:[%s0 + $0x250] sm:$0xff]
  %v105 = vld [vmem:[%s0 + $0x258] sm:$0xff]
  %v106 = vld [vmem:[%s0 + $0x260] sm:$0xff]
  %v107 = vld [vmem:[%s0 + $0x268] sm:$0xff]
  %v108 = vld [vmem:[%s0 + $0x270] sm:$0xff]
  %v109 = vld [vmem:[%s0 + $0x278] sm:$0xff]
  %v110 = vld [vmem:[%s0 + $0x280] sm:$0xff]
  %v111 = vld [vmem:[%s0 + $0x288] sm:$0xff]
  %v112 = vld [vmem:[%s0 + $0x290] sm:$0xff]
  %v113 = vld [vmem:[%s0 + $0x298] sm:$0xff]
  %v114 = vld [vmem:[%s0 + $0x2a0] sm:$0xff]
  %v115 = vld [vmem:[%s0 + $0x2a8] sm:$0xff]
  %v116 = vld [vmem:[%s0 + $0x2b0] sm:$0xff]
  %v117 = vld [vmem:[%s0 + $0x2b8] sm:$0xff]
  %v118 = vld [vmem:[%s0 + $0x2c0] sm:$0xff]
  %v119 = vld [vmem:[%s0 + $0x2c8] sm:$0xff]
  %v120 = vld [vmem:[%s0 + $0x2d0] sm:$0xff]
  %v121 = vld [vmem:[%s0 + $0x2d8] sm:$0xff]
  %v122 = vld [vmem:[%s0 + $0x2e0] sm:$0xff]
  %v123 = vld [vmem:[%s0 + $0x2e8] sm:$0xff]
  %v124 = vld [vmem:[%s0 + $0x2f0] sm:$0xff]
  %v125 = vld [vmem:[%s0 + $0x2f8] sm:$0xff]
  %v126 = vld [vmem:[%s0 + $0x300] sm:$0xff]
  %v127 = vld [vmem:[%s0 + $0x308] sm:$0xff]
  %v128 = vld [vmem:[%s0 + $0x310] sm:$0xff]
  %v129 = vld [vmem:[%s0 + $0x318] sm:$0xff]
  %v130 = vld [vmem:[%s0 + $0x320] sm:$0xff]
  %v131 = vld [vmem:[%s0 + $0x328] sm:$0xff]
  %v132 = vld [vmem:[%s0 + $0x330] sm:$0xff]
  %v133 = vld [vmem:[%s0 + $0x338] sm:$0xff]
  %v134 = vld [vmem:[%s0 + $0x340] sm:$0xff]
  %v135 = vld [vmem:[%s0 + $0x348] sm:$0xff]
  %v136 = vld [vmem:[%s0 + $0x350] sm:$0xff]
  %v137 = vld [vmem:[%s0 + $0x358] sm:$0xff]
  %v138 = vld [vmem:[%s0 + $0x360] sm:$0xff]
  %v139 = vld [vmem:[%s0 + $0x368] sm:$0xff]
  %v140 = vld [vmem:[%s0 + $0x370] sm:$0xff]
  %v141 = vld [vmem:[%s0 + $0x378] sm:$0xff]
  %v142 = vld [vmem:[%s0 + $0x380] sm:$0xff]
  %v143 = vld [vmem:[%s0 + $0x388] sm:$0xff]
  %v144 = vld [vmem:[%s0 + $0x390] sm:$0xff]
  %v145 = vld [vmem:[%s0 + $0x398] sm:$0xff]
  %v146 = vld [vmem:[%s0 + $0x3a0] sm:$0xff]
  %v147 = vld [vmem:[%s0 + $0x3a8] sm:$0xff]
  %v148 = vld [vmem:[%s0 + $0x3b0] sm:$0xff]
  %v149 = vld [vmem:[%s0 + $0x3b8] sm:$0xff]
  %v150 = vld [vmem:[%s0 + $0x3c0] sm:$0xff]
  %v151 = vld [vmem:[%s0 + $0x3c8] sm:$0xff]
  %v152 = vld [vmem:[%s0 + $0x3d0] sm:$0xff]
  %v153 = vld [vmem:[%s0 + $0x3d8] sm:$0xff]
  %v154 = vld [vmem:[%s0 + $0x3e0] sm:$0xff]
  %v155 = vld [vmem:[%s0 + $0x3e8] sm:$0xff]
  %v156 = vld [vmem:[%s0 + $0x3f0] sm:$0xff]
  %v157 = vld [vmem:[%s0 + $0x3f8] sm:$0xff]
  %v158 = vld [vmem:[%s0 + $0x400] sm:$0xff]
  %v159 = vld [vmem:[%s0 + $0x408] sm:$0xff]
  %v160 = vld [vmem:[%s0 + $0x410] sm:$0xff]
  %v161 = vld [vmem:[%s0 + $0x418] sm:$0xff]
  %v162 = vld [vmem:[%s0 + $0x420] sm:$0xff]
  %v163 = vld [vmem:[%s0 + $0x428] sm:$0xff]
  %v164 = vld [vmem:[%s0 + $0x430] sm:$0xff]
  %v165 = vld [vmem:[%s0 + $0x438] sm:$0xff]
  %v166 = vld [vmem:[%s0 + $0x440] sm:$0xff]
  %v167 = vld [vmem:[%s0 + $0x448] sm:$0xff]
  %v168 = vld [vmem:[%s0 + $0x450] sm:$0xff]
  %v169 = vld [vmem:[%s0 + $0x458] sm:$0xff]
  %v170 = vld [vmem:[%s0 + $0x460] sm:$0xff]
  %v171 = vld [vmem:[%s0 + $0x468] sm:$0xff]
  %v172 = vld [vmem:[%s0 + $0x470] sm:$0xff]
  %v173 = vld [vmem:[%s0 + $0x478] sm:$0xff]
  %v174 = vld [vmem:[%s0 + $0x480] sm:$0xff]
  %v175 = vld [vmem:[%s0 + $0x488] sm:$0xff]
  %v176 = vld [vmem:[%s0 + $0x490] sm:$0xff]
  %v177 = vld [vmem:[%s0 + $0x498] sm:$0xff]
  %v178 = vld [vmem:[%s0 + $0x4a0] sm:$0xff]
  %v179 = vld [vmem:[%s0 + $0x4a8] sm:$0xff]
  %v180 = vld [vmem:[%s0 + $0x4b0] sm:$0xff]
  %v181 = vld [vmem:[%s0 + $0x4b8] sm:$0xff]
  %v182 = vld [vmem:[%s0 + $0x4c0] sm:$0xff]
  %v183 = vld [vmem:[%s0 + $0x4c8] sm:$0xff]
  %v184 = vld [vmem:[%s0 + $0x4d0] sm:$0xff]
  %v185 = vld [vmem:[%s0 + $0x4d8] sm:$0xff]
  %v186 = vld [vmem:[%s0 + $0x4e0] sm:$0xff]
  %v187 = vld [vmem:[%s0 + $0x4e8] sm:$0xff]
  %v188 = vld [vmem:[%s0 + $0x4f0] sm:$0xff]
  %v189 = vld [vmem:[%s0 + $0x4f8] sm:$0xff]
  %v190 = vld [vmem:[%s0 + $0x500] sm:$0xff]
  %v191 = vld [vmem:[%s0 + $0x508] sm:$0xff]
  %v192 = vld [vmem:[%s3] sm:$0xf]
  %v193 = vld [vmem:[%s3 + $0x4] sm:$0xf]
  %v194 = vld [vmem:[%s3 + $0x8] sm:$0xf]
  %v195 = vld [vmem:[%s3 + $0xc] sm:$0xf]
  %v196 = vld [vmem:[%s3 + $0x10] sm:$0xf]
  %v197 = vld [vmem:[%s3 + $0x14] sm:$0xf]
  %v198 = vld [vmem:[%s3 + $0x18] sm:$0xf]
  %v199 = vld [vmem:[%s3 + $0x1c] sm:$0xf]
  %v200 = vld [vmem:[%s3 + $0x20] sm:$0xf]
  %v201 = vld [vmem:[%s3 + $0x24] sm:$0xf]
  %v202 = vld [vmem:[%s3 + $0x28] sm:$0xf]
  %v203 = vld [vmem:[%s3 + $0x2c] sm:$0xf]
  %v204 = vld [vmem:[%s3 + $0x30] sm:$0xf]
  %v205 = vld [vmem:[%s3 + $0x34] sm:$0xf]
  %v206 = vld [vmem:[%s3 + $0x38] sm:$0xf]
  %v207 = vld [vmem:[%s3 + $0x3c] sm:$0xf]
  %v208 = vld [vmem:[%s3 + $0x40] sm:$0xf]
  %v209 = vld [vmem:[%s3 + $0x44] sm:$0xf]
  %v210 = vld [vmem:[%s3 + $0x48] sm:$0xf]
  %v211 = vld [vmem:[%s3 + $0x4c] sm:$0xf]
  %v212 = vld [vmem:[%s3 + $0x50] sm:$0xf]
  %v213 = vld [vmem:[%s3 + $0x54] sm:$0xf]
  %v214 = vld [vmem:[%s3 + $0x58] sm:$0xf]
  %v215 = vld [vmem:[%s3 + $0x5c] sm:$0xf]
  %v216 = vld [vmem:[%s3 + $0x60] sm:$0xf]
  %v217 = vld [vmem:[%s3 + $0x64] sm:$0xf]
  %v218 = vld [vmem:[%s3 + $0x68] sm:$0xf]
  %v219 = vld [vmem:[%s3 + $0x6c] sm:$0xf]
  %v220 = vld [vmem:[%s3 + $0x70] sm:$0xf]
  %v221 = vld [vmem:[%s3 + $0x74] sm:$0xf]
  %v222 = vld [vmem:[%s3 + $0x78] sm:$0xf]
  %v223 = vld [vmem:[%s3 + $0x7c] sm:$0xf]
  %v224 = vld [vmem:[%s3 + $0x80] sm:$0xf]
  %v225 = vld [vmem:[%s3 + $0x84] sm:$0xf]
  %v226 = vld [vmem:[%s3 + $0x88] sm:$0xf]
  %v227 = vld [vmem:[%s3 + $0x8c] sm:$0xf]
  %v228 = vld [vmem:[%s3 + $0x90] sm:$0xf]
  %v229 = vld [vmem:[%s3 + $0x94] sm:$0xf]
  %v230 = vld [vmem:[%s3 + $0x98] sm:$0xf]
  %v231 = vld [vmem:[%s3 + $0x9c] sm:$0xf]
  %v232 = vld [vmem:[%s3 + $0xa0] sm:$0xf]
  %v233 = vld [vmem:[%s3 + $0xa4] sm:$0xf]
  %v234 = vld [vmem:[%s3 + $0xa8] sm:$0xf]
  %v235 = vld [vmem:[%s3 + $0xac] sm:$0xf]
  %v236 = vld [vmem:[%s3 + $0xb0] sm:$0xf]
  %v237 = vld [vmem:[%s3 + $0xb4] sm:$0xf]
  %v238 = vld [vmem:[%s3 + $0xb8] sm:$0xf]
  %v239 = vld [vmem:[%s3 + $0xbc] sm:$0xf]
  %v240 = vld [vmem:[%s3 + $0xc0] sm:$0xf]
  %v241 = vld [vmem:[%s3 + $0xc4] sm:$0xf]
  %v242 = vld [vmem:[%s3 + $0xc8] sm:$0x7]
  %v243 = vld [vmem:[%s4] sm:$0x1]
  %v245 = vlaneseq
  %v246 = vshrl.u32 %v245, 7
  %v247 = vsub.s32 0, %v246
  %v248 = vrot.slane %v243, %v247
  %v412 = vunpack.c.l.b16 %v30
  %v413 = vunpack.c.h.b16 %v30
  %v414 = vunpack.c.l.b16 %v31
  %v415 = vunpack.c.h.b16 %v31
  %v416 = vunpack.c.l.b16 %v32
  %v417 = vunpack.c.h.b16 %v32
  %v418 = vunpack.c.l.b16 %v33
  %v419 = vunpack.c.h.b16 %v33
  %v420 = vunpack.c.l.b16 %v34
  %v421 = vunpack.c.h.b16 %v34
  %v422 = vunpack.c.l.b16 %v35
  %v423 = vunpack.c.h.b16 %v35
  %v424 = vunpack.c.l.b16 %v36
  %v425 = vunpack.c.h.b16 %v36
  %v426 = vunpack.c.l.b16 %v37
  %v427 = vunpack.c.h.b16 %v37
  %v428 = vunpack.c.l.b16 %v38
  %v429 = vunpack.c.h.b16 %v38
  %v430 = vunpack.c.l.b16 %v39
  %v431 = vunpack.c.h.b16 %v39
  %v432 = vunpack.c.l.b16 %v40
  %v433 = vunpack.c.h.b16 %v40
  %v434 = vunpack.c.l.b16 %v41
  %v435 = vunpack.c.h.b16 %v41
  %v436 = vunpack.c.l.b16 %v42
  %v437 = vunpack.c.h.b16 %v42
  %v438 = vunpack.c.l.b16 %v43
  %v439 = vunpack.c.h.b16 %v43
  %v440 = vunpack.c.l.b16 %v44
  %v441 = vunpack.c.h.b16 %v44
  %v442 = vunpack.c.l.b16 %v45
  %v443 = vunpack.c.h.b16 %v45
  %v444 = vunpack.c.l.b16 %v46
  %v445 = vunpack.c.h.b16 %v46
  %v446 = vunpack.c.l.b16 %v47
  %v447 = vunpack.c.h.b16 %v47
  %v448 = vunpack.c.l.b16 %v48
  %v449 = vunpack.c.h.b16 %v48
  %v450 = vunpack.c.l.b16 %v49
  %v451 = vunpack.c.h.b16 %v49
  %v452 = vunpack.c.l.b16 %v50
  %v453 = vunpack.c.h.b16 %v50
  %v454 = vunpack.c.l.b16 %v51
  %v455 = vunpack.c.h.b16 %v51
  %v456 = vunpack.c.l.b16 %v52
  %v457 = vunpack.c.h.b16 %v52
  %v458 = vunpack.c.l.b16 %v53
  %v459 = vunpack.c.h.b16 %v53
  %v460 = vunpack.c.l.b16 %v54
  %v461 = vunpack.c.h.b16 %v54
  %v462 = vunpack.c.l.b16 %v55
  %v463 = vunpack.c.h.b16 %v55
  %v464 = vunpack.c.l.b16 %v56
  %v465 = vunpack.c.h.b16 %v56
  %v466 = vunpack.c.l.b16 %v57
  %v467 = vunpack.c.h.b16 %v57
  %v468 = vunpack.c.l.b16 %v58
  %v469 = vunpack.c.h.b16 %v58
  %v470 = vunpack.c.l.b16 %v59
  %v471 = vunpack.c.h.b16 %v59
  %v472 = vunpack.c.l.b16 %v60
  %v473 = vunpack.c.h.b16 %v60
  %v474 = vunpack.c.l.b16 %v61
  %v475 = vunpack.c.h.b16 %v61
  %v476 = vunpack.c.l.b16 %v62
  %v477 = vunpack.c.h.b16 %v62
  %v478 = vunpack.c.l.b16 %v63
  %v479 = vunpack.c.h.b16 %v63
  %v480 = vunpack.c.l.b16 %v64
  %v481 = vunpack.c.h.b16 %v64
  %v482 = vunpack.c.l.b16 %v65
  %v483 = vunpack.c.h.b16 %v65
  %v484 = vunpack.c.l.b16 %v66
  %v485 = vunpack.c.h.b16 %v66
  %v486 = vunpack.c.l.b16 %v67
  %v487 = vunpack.c.h.b16 %v67
  %v488 = vunpack.c.l.b16 %v68
  %v489 = vunpack.c.h.b16 %v68
  %v490 = vunpack.c.l.b16 %v69
  %v491 = vunpack.c.h.b16 %v69
  %v492 = vunpack.c.l.b16 %v70
  %v493 = vunpack.c.h.b16 %v70
  %v494 = vunpack.c.l.b16 %v71
  %v495 = vunpack.c.h.b16 %v71
  %v496 = vunpack.c.l.b16 %v72
  %v497 = vunpack.c.h.b16 %v72
  %v498 = vunpack.c.l.b16 %v73
  %v499 = vunpack.c.h.b16 %v73
  %v500 = vunpack.c.l.b16 %v74
  %v501 = vunpack.c.h.b16 %v74
  %v502 = vunpack.c.l.b16 %v75
  %v503 = vunpack.c.h.b16 %v75
  %v504 = vunpack.c.l.b16 %v76
  %v505 = vunpack.c.h.b16 %v76
  %v506 = vunpack.c.l.b16 %v77
  %v507 = vunpack.c.h.b16 %v77
  %v508 = vunpack.c.l.b16 %v78
  %v509 = vunpack.c.h.b16 %v78
  %v510 = vunpack.c.l.b16 %v79
  %v511 = vunpack.c.h.b16 %v79
  %v512 = vunpack.c.l.b16 %v80
  %v513 = vunpack.c.h.b16 %v80
  %v514 = vunpack.c.l.b16 %v81
  %v515 = vunpack.c.h.b16 %v81
  %v516 = vunpack.c.l.b16 %v82
  %v517 = vunpack.c.h.b16 %v82
  %v518 = vunpack.c.l.b16 %v83
  %v519 = vunpack.c.h.b16 %v83
  %v520 = vunpack.c.l.b16 %v84
  %v521 = vunpack.c.h.b16 %v84
  %v522 = vunpack.c.l.b16 %v85
  %v523 = vunpack.c.h.b16 %v85
  %v524 = vunpack.c.l.b16 %v86
  %v525 = vunpack.c.h.b16 %v86
  %v526 = vunpack.c.l.b16 %v87
  %v527 = vunpack.c.h.b16 %v87
  %v528 = vunpack.c.l.b16 %v88
  %v529 = vunpack.c.h.b16 %v88
  %v530 = vunpack.c.l.b16 %v89
  %v531 = vunpack.c.h.b16 %v89
  %v532 = vunpack.c.l.b16 %v90
  %v533 = vunpack.c.h.b16 %v90
  %v534 = vunpack.c.l.b16 %v91
  %v535 = vunpack.c.h.b16 %v91
  %v536 = vunpack.c.l.b16 %v92
  %v537 = vunpack.c.h.b16 %v92
  %v538 = vunpack.c.l.b16 %v93
  %v539 = vunpack.c.h.b16 %v93
  %v540 = vunpack.c.l.b16 %v94
  %v541 = vunpack.c.h.b16 %v94
  %v542 = vunpack.c.l.b16 %v95
  %v543 = vunpack.c.h.b16 %v95
  %v544 = vunpack.c.l.b16 %v96
  %v545 = vunpack.c.h.b16 %v96
  %v546 = vunpack.c.l.b16 %v97
  %v547 = vunpack.c.h.b16 %v97
  %v548 = vunpack.c.l.b16 %v98
  %v549 = vunpack.c.h.b16 %v98
  %v550 = vunpack.c.l.b16 %v99
  %v551 = vunpack.c.h.b16 %v99
  %v552 = vunpack.c.l.b16 %v100
  %v553 = vunpack.c.h.b16 %v100
  %v554 = vunpack.c.l.b16 %v101
  %v555 = vunpack.c.h.b16 %v101
  %v556 = vunpack.c.l.b16 %v102
  %v557 = vunpack.c.h.b16 %v102
  %v558 = vunpack.c.l.b16 %v103
  %v559 = vunpack.c.h.b16 %v103
  %v560 = vunpack.c.l.b16 %v104
  %v561 = vunpack.c.h.b16 %v104
  %v562 = vunpack.c.l.b16 %v105
  %v563 = vunpack.c.h.b16 %v105
  %v564 = vunpack.c.l.b16 %v106
  %v565 = vunpack.c.h.b16 %v106
  %v566 = vunpack.c.l.b16 %v107
  %v567 = vunpack.c.h.b16 %v107
  %v568 = vunpack.c.l.b16 %v108
  %v569 = vunpack.c.h.b16 %v108
  %v570 = vunpack.c.l.b16 %v109
  %v571 = vunpack.c.h.b16 %v109
  %v572 = vunpack.c.l.b16 %v110
  %v573 = vunpack.c.h.b16 %v110
  %v574 = vunpack.c.l.b16 %v111
  %v575 = vunpack.c.h.b16 %v111
  %v576 = vunpack.c.l.b16 %v112
  %v577 = vunpack.c.h.b16 %v112
  %v578 = vunpack.c.l.b16 %v113
  %v579 = vunpack.c.h.b16 %v113
  %v580 = vunpack.c.l.b16 %v114
  %v581 = vunpack.c.h.b16 %v114
  %v582 = vunpack.c.l.b16 %v115
  %v583 = vunpack.c.h.b16 %v115
  %v584 = vunpack.c.l.b16 %v116
  %v585 = vunpack.c.h.b16 %v116
  %v586 = vunpack.c.l.b16 %v117
  %v587 = vunpack.c.h.b16 %v117
  %v588 = vunpack.c.l.b16 %v118
  %v589 = vunpack.c.h.b16 %v118
  %v590 = vunpack.c.l.b16 %v119
  %v591 = vunpack.c.h.b16 %v119
  %v592 = vunpack.c.l.b16 %v120
  %v593 = vunpack.c.h.b16 %v120
  %v594 = vunpack.c.l.b16 %v121
  %v595 = vunpack.c.h.b16 %v121
  %v596 = vunpack.c.l.b16 %v122
  %v597 = vunpack.c.h.b16 %v122
  %v598 = vunpack.c.l.b16 %v123
  %v599 = vunpack.c.h.b16 %v123
  %v600 = vunpack.c.l.b16 %v124
  %v601 = vunpack.c.h.b16 %v124
  %v602 = vunpack.c.l.b16 %v125
  %v603 = vunpack.c.h.b16 %v125
  %v604 = vunpack.c.l.b16 %v126
  %v605 = vunpack.c.h.b16 %v126
  %v606 = vunpack.c.l.b16 %v127
  %v607 = vunpack.c.h.b16 %v127
  %v608 = vunpack.c.l.b16 %v128
  %v609 = vunpack.c.h.b16 %v128
  %v610 = vunpack.c.l.b16 %v129
  %v611 = vunpack.c.h.b16 %v129
  %v612 = vunpack.c.l.b16 %v130
  %v613 = vunpack.c.h.b16 %v130
  %v614 = vunpack.c.l.b16 %v131
  %v615 = vunpack.c.h.b16 %v131
  %v616 = vunpack.c.l.b16 %v132
  %v617 = vunpack.c.h.b16 %v132
  %v618 = vunpack.c.l.b16 %v133
  %v619 = vunpack.c.h.b16 %v133
  %v620 = vunpack.c.l.b16 %v134
  %v621 = vunpack.c.h.b16 %v134
  %v622 = vunpack.c.l.b16 %v135
  %v623 = vunpack.c.h.b16 %v135
  %v624 = vunpack.c.l.b16 %v136
  %v625 = vunpack.c.h.b16 %v136
  %v626 = vunpack.c.l.b16 %v137
  %v627 = vunpack.c.h.b16 %v137
  %v628 = vunpack.c.l.b16 %v138
  %v629 = vunpack.c.h.b16 %v138
  %v630 = vunpack.c.l.b16 %v139
  %v631 = vunpack.c.h.b16 %v139
  %v632 = vunpack.c.l.b16 %v140
  %v633 = vunpack.c.h.b16 %v140
  %v634 = vunpack.c.l.b16 %v141
  %v635 = vunpack.c.h.b16 %v141
  %v636 = vunpack.c.l.b16 %v142
  %v637 = vunpack.c.h.b16 %v142
  %v638 = vunpack.c.l.b16 %v143
  %v639 = vunpack.c.h.b16 %v143
  %v640 = vunpack.c.l.b16 %v144
  %v641 = vunpack.c.h.b16 %v144
  %v642 = vunpack.c.l.b16 %v145
  %v643 = vunpack.c.h.b16 %v145
  %v644 = vunpack.c.l.b16 %v146
  %v645 = vunpack.c.h.b16 %v146
  %v646 = vunpack.c.l.b16 %v147
  %v647 = vunpack.c.h.b16 %v147
  %v648 = vunpack.c.l.b16 %v148
  %v649 = vunpack.c.h.b16 %v148
  %v650 = vunpack.c.l.b16 %v149
  %v651 = vunpack.c.h.b16 %v149
  %v652 = vunpack.c.l.b16 %v150
  %v653 = vunpack.c.h.b16 %v150
  %v654 = vunpack.c.l.b16 %v151
  %v655 = vunpack.c.h.b16 %v151
  %v656 = vunpack.c.l.b16 %v152
  %v657 = vunpack.c.h.b16 %v152
  %v658 = vunpack.c.l.b16 %v153
  %v659 = vunpack.c.h.b16 %v153
  %v660 = vunpack.c.l.b16 %v154
  %v661 = vunpack.c.h.b16 %v154
  %v662 = vunpack.c.l.b16 %v155
  %v663 = vunpack.c.h.b16 %v155
  %v664 = vunpack.c.l.b16 %v156
  %v665 = vunpack.c.h.b16 %v156
  %v666 = vunpack.c.l.b16 %v157
  %v667 = vunpack.c.h.b16 %v157
  %v668 = vunpack.c.l.b16 %v158
  %v669 = vunpack.c.h.b16 %v158
  %v670 = vunpack.c.l.b16 %v159
  %v671 = vunpack.c.h.b16 %v159
  %v672 = vunpack.c.l.b16 %v160
  %v673 = vunpack.c.h.b16 %v160
  %v674 = vunpack.c.l.b16 %v161
  %v675 = vunpack.c.h.b16 %v161
  %v676 = vunpack.c.l.b16 %v162
  %v677 = vunpack.c.h.b16 %v162
  %v678 = vunpack.c.l.b16 %v163
  %v679 = vunpack.c.h.b16 %v163
  %v680 = vunpack.c.l.b16 %v164
  %v681 = vunpack.c.h.b16 %v164
  %v682 = vunpack.c.l.b16 %v165
  %v683 = vunpack.c.h.b16 %v165
  %v684 = vunpack.c.l.b16 %v166
  %v685 = vunpack.c.h.b16 %v166
  %v686 = vunpack.c.l.b16 %v167
  %v687 = vunpack.c.h.b16 %v167
  %v688 = vunpack.c.l.b16 %v168
  %v689 = vunpack.c.h.b16 %v168
  %v690 = vunpack.c.l.b16 %v169
  %v691 = vunpack.c.h.b16 %v169
  %v692 = vunpack.c.l.b16 %v170
  %v693 = vunpack.c.h.b16 %v170
  %v694 = vunpack.c.l.b16 %v171
  %v695 = vunpack.c.h.b16 %v171
  %v696 = vunpack.c.l.b16 %v172
  %v697 = vunpack.c.h.b16 %v172
  %v698 = vunpack.c.l.b16 %v173
  %v699 = vunpack.c.h.b16 %v173
  %v700 = vunpack.c.l.b16 %v174
  %v701 = vunpack.c.h.b16 %v174
  %v702 = vunpack.c.l.b16 %v175
  %v703 = vunpack.c.h.b16 %v175
  %v704 = vunpack.c.l.b16 %v176
  %v705 = vunpack.c.h.b16 %v176
  %v706 = vunpack.c.l.b16 %v177
  %v707 = vunpack.c.h.b16 %v177
  %v708 = vunpack.c.l.b16 %v178
  %v709 = vunpack.c.h.b16 %v178
  %v710 = vunpack.c.l.b16 %v179
  %v711 = vunpack.c.h.b16 %v179
  %v712 = vunpack.c.l.b16 %v180
  %v713 = vunpack.c.h.b16 %v180
  %v714 = vunpack.c.l.b16 %v181
  %v715 = vunpack.c.h.b16 %v181
  %v716 = vunpack.c.l.b16 %v182
  %v717 = vunpack.c.h.b16 %v182
  %v718 = vunpack.c.l.b16 %v183
  %v719 = vunpack.c.h.b16 %v183
  %v720 = vunpack.c.l.b16 %v184
  %v721 = vunpack.c.h.b16 %v184
  %v722 = vunpack.c.l.b16 %v185
  %v723 = vunpack.c.h.b16 %v185
  %v724 = vunpack.c.l.b16 %v186
  %v725 = vunpack.c.h.b16 %v186
  %v726 = vunpack.c.l.b16 %v187
  %v727 = vunpack.c.h.b16 %v187
  %v728 = vunpack.c.l.b16 %v188
  %v729 = vunpack.c.h.b16 %v188
  %v730 = vunpack.c.l.b16 %v189
  %v731 = vunpack.c.h.b16 %v189
  %v732 = vunpack.c.l.b16 %v190
  %v733 = vunpack.c.h.b16 %v190
  %v734 = vunpack.c.l.b16 %v191
  %v735 = vunpack.c.h.b16 %v191
  %v736 = vpack.c.b16 %v416, %v412
  %v737 = vpack.c.b16 %v417, %v413
  %v738 = vpack.c.b16 %v418, %v414
  %v739 = vpack.c.b16 %v419, %v415
  %v740 = vpack.c.b16 %v424, %v420
  %v741 = vpack.c.b16 %v425, %v421
  %v742 = vpack.c.b16 %v426, %v422
  %v743 = vpack.c.b16 %v427, %v423
  %v744 = vpack.c.b16 %v432, %v428
  %v745 = vpack.c.b16 %v433, %v429
  %v746 = vpack.c.b16 %v434, %v430
  %v747 = vpack.c.b16 %v435, %v431
  %v748 = vpack.c.b16 %v440, %v436
  %v749 = vpack.c.b16 %v441, %v437
  %v750 = vpack.c.b16 %v442, %v438
  %v751 = vpack.c.b16 %v443, %v439
  %v752 = vpack.c.b16 %v448, %v444
  %v753 = vpack.c.b16 %v449, %v445
  %v754 = vpack.c.b16 %v450, %v446
  %v755 = vpack.c.b16 %v451, %v447
  %v756 = vpack.c.b16 %v456, %v452
  %v757 = vpack.c.b16 %v457, %v453
  %v758 = vpack.c.b16 %v458, %v454
  %v759 = vpack.c.b16 %v459, %v455
  %v760 = vpack.c.b16 %v464, %v460
  %v761 = vpack.c.b16 %v465, %v461
  %v762 = vpack.c.b16 %v466, %v462
  %v763 = vpack.c.b16 %v467, %v463
  %v764 = vpack.c.b16 %v472, %v468
  %v765 = vpack.c.b16 %v473, %v469
  %v766 = vpack.c.b16 %v474, %v470
  %v767 = vpack.c.b16 %v475, %v471
  %v768 = vpack.c.b16 %v480, %v476
  %v769 = vpack.c.b16 %v481, %v477
  %v770 = vpack.c.b16 %v482, %v478
  %v771 = vpack.c.b16 %v483, %v479
  %v772 = vpack.c.b16 %v488, %v484
  %v773 = vpack.c.b16 %v489, %v485
  %v774 = vpack.c.b16 %v490, %v486
  %v775 = vpack.c.b16 %v491, %v487
  %v776 = vpack.c.b16 %v496, %v492
  %v777 = vpack.c.b16 %v497, %v493
  %v778 = vpack.c.b16 %v498, %v494
  %v779 = vpack.c.b16 %v499, %v495
  %v780 = vpack.c.b16 %v504, %v500
  %v781 = vpack.c.b16 %v505, %v501
  %v782 = vpack.c.b16 %v506, %v502
  %v783 = vpack.c.b16 %v507, %v503
  %v784 = vpack.c.b16 %v512, %v508
  %v785 = vpack.c.b16 %v513, %v509
  %v786 = vpack.c.b16 %v514, %v510
  %v787 = vpack.c.b16 %v515, %v511
  %v788 = vpack.c.b16 %v520, %v516
  %v789 = vpack.c.b16 %v521, %v517
  %v790 = vpack.c.b16 %v522, %v518
  %v791 = vpack.c.b16 %v523, %v519
  %v792 = vpack.c.b16 %v528, %v524
  %v793 = vpack.c.b16 %v529, %v525
  %v794 = vpack.c.b16 %v530, %v526
  %v795 = vpack.c.b16 %v531, %v527
  %v796 = vpack.c.b16 %v536, %v532
  %v797 = vpack.c.b16 %v537, %v533
  %v798 = vpack.c.b16 %v538, %v534
  %v799 = vpack.c.b16 %v539, %v535
  %v800 = vpack.c.b16 %v544, %v540
  %v801 = vpack.c.b16 %v545, %v541
  %v802 = vpack.c.b16 %v546, %v542
  %v803 = vpack.c.b16 %v547, %v543
  %v804 = vpack.c.b16 %v552, %v548
  %v805 = vpack.c.b16 %v553, %v549
  %v806 = vpack.c.b16 %v554, %v550
  %v807 = vpack.c.b16 %v555, %v551
  %v808 = vpack.c.b16 %v560, %v556
  %v809 = vpack.c.b16 %v561, %v557
  %v810 = vpack.c.b16 %v562, %v558
  %v811 = vpack.c.b16 %v563, %v559
  %v812 = vpack.c.b16 %v568, %v564
  %v813 = vpack.c.b16 %v569, %v565
  %v814 = vpack.c.b16 %v570, %v566
  %v815 = vpack.c.b16 %v571, %v567
  %v816 = vpack.c.b16 %v576, %v572
  %v817 = vpack.c.b16 %v577, %v573
  %v818 = vpack.c.b16 %v578, %v574
  %v819 = vpack.c.b16 %v579, %v575
  %v820 = vpack.c.b16 %v584, %v580
  %v821 = vpack.c.b16 %v585, %v581
  %v822 = vpack.c.b16 %v586, %v582
  %v823 = vpack.c.b16 %v587, %v583
  %v824 = vpack.c.b16 %v592, %v588
  %v825 = vpack.c.b16 %v593, %v589
  %v826 = vpack.c.b16 %v594, %v590
  %v827 = vpack.c.b16 %v595, %v591
  %v828 = vpack.c.b16 %v600, %v596
  %v829 = vpack.c.b16 %v601, %v597
  %v830 = vpack.c.b16 %v602, %v598
  %v831 = vpack.c.b16 %v603, %v599
  %v832 = vpack.c.b16 %v608, %v604
  %v833 = vpack.c.b16 %v609, %v605
  %v834 = vpack.c.b16 %v610, %v606
  %v835 = vpack.c.b16 %v611, %v607
  %v836 = vpack.c.b16 %v616, %v612
  %v837 = vpack.c.b16 %v617, %v613
  %v838 = vpack.c.b16 %v618, %v614
  %v839 = vpack.c.b16 %v619, %v615
  %v840 = vpack.c.b16 %v624, %v620
  %v841 = vpack.c.b16 %v625, %v621
  %v842 = vpack.c.b16 %v626, %v622
  %v843 = vpack.c.b16 %v627, %v623
  %v844 = vpack.c.b16 %v632, %v628
  %v845 = vpack.c.b16 %v633, %v629
  %v846 = vpack.c.b16 %v634, %v630
  %v847 = vpack.c.b16 %v635, %v631
  %v848 = vpack.c.b16 %v640, %v636
  %v849 = vpack.c.b16 %v641, %v637
  %v850 = vpack.c.b16 %v642, %v638
  %v851 = vpack.c.b16 %v643, %v639
  %v852 = vpack.c.b16 %v648, %v644
  %v853 = vpack.c.b16 %v649, %v645
  %v854 = vpack.c.b16 %v650, %v646
  %v855 = vpack.c.b16 %v651, %v647
  %v856 = vpack.c.b16 %v656, %v652
  %v857 = vpack.c.b16 %v657, %v653
  %v858 = vpack.c.b16 %v658, %v654
  %v859 = vpack.c.b16 %v659, %v655
  %v860 = vpack.c.b16 %v664, %v660
  %v861 = vpack.c.b16 %v665, %v661
  %v862 = vpack.c.b16 %v666, %v662
  %v863 = vpack.c.b16 %v667, %v663
  %v864 = vpack.c.b16 %v672, %v668
  %v865 = vpack.c.b16 %v673, %v669
  %v866 = vpack.c.b16 %v674, %v670
  %v867 = vpack.c.b16 %v675, %v671
  %v868 = vpack.c.b16 %v680, %v676
  %v869 = vpack.c.b16 %v681, %v677
  %v870 = vpack.c.b16 %v682, %v678
  %v871 = vpack.c.b16 %v683, %v679
  %v872 = vpack.c.b16 %v688, %v684
  %v873 = vpack.c.b16 %v689, %v685
  %v874 = vpack.c.b16 %v690, %v686
  %v875 = vpack.c.b16 %v691, %v687
  %v876 = vpack.c.b16 %v696, %v692
  %v877 = vpack.c.b16 %v697, %v693
  %v878 = vpack.c.b16 %v698, %v694
  %v879 = vpack.c.b16 %v699, %v695
  %v880 = vpack.c.b16 %v704, %v700
  %v881 = vpack.c.b16 %v705, %v701
  %v882 = vpack.c.b16 %v706, %v702
  %v883 = vpack.c.b16 %v707, %v703
  %v884 = vpack.c.b16 %v712, %v708
  %v885 = vpack.c.b16 %v713, %v709
  %v886 = vpack.c.b16 %v714, %v710
  %v887 = vpack.c.b16 %v715, %v711
  %v888 = vpack.c.b16 %v720, %v716
  %v889 = vpack.c.b16 %v721, %v717
  %v890 = vpack.c.b16 %v722, %v718
  %v891 = vpack.c.b16 %v723, %v719
  %v892 = vpack.c.b16 %v728, %v724
  %v893 = vpack.c.b16 %v729, %v725
  %v894 = vpack.c.b16 %v730, %v726
  %v895 = vpack.c.b16 %v731, %v727
  %v896 = vpack.c.b16 %v732, %v732
  %v897 = vpack.c.b16 %v733, %v733
  %v898 = vpack.c.b16 %v734, %v734
  %v899 = vpack.c.b16 %v735, %v735
  %v1074 = vunpack.c.l.b16 %v192
  %v1075 = vunpack.c.l.b16 %v193
  %v1076 = vunpack.c.l.b16 %v194
  %v1077 = vunpack.c.l.b16 %v195
  %v1078 = vunpack.c.l.b16 %v196
  %v1079 = vunpack.c.l.b16 %v197
  %v1080 = vunpack.c.l.b16 %v198
  %v1081 = vunpack.c.l.b16 %v199
  %v1082 = vunpack.c.l.b16 %v200
  %v1083 = vunpack.c.l.b16 %v201
  %v1084 = vunpack.c.l.b16 %v202
  %v1085 = vunpack.c.l.b16 %v203
  %v1086 = vunpack.c.l.b16 %v204
  %v1087 = vunpack.c.l.b16 %v205
  %v1088 = vunpack.c.l.b16 %v206
  %v1089 = vunpack.c.l.b16 %v207
  %v1090 = vunpack.c.l.b16 %v208
  %v1091 = vunpack.c.l.b16 %v209
  %v1092 = vunpack.c.l.b16 %v210
  %v1093 = vunpack.c.l.b16 %v211
  %v1094 = vunpack.c.l.b16 %v212
  %v1095 = vunpack.c.l.b16 %v213
  %v1096 = vunpack.c.l.b16 %v214
  %v1097 = vunpack.c.l.b16 %v215
  %v1098 = vunpack.c.l.b16 %v216
  %v1099 = vunpack.c.l.b16 %v217
  %v1100 = vunpack.c.l.b16 %v218
  %v1101 = vunpack.c.l.b16 %v219
  %v1102 = vunpack.c.l.b16 %v220
  %v1103 = vunpack.c.l.b16 %v221
  %v1104 = vunpack.c.l.b16 %v222
  %v1105 = vunpack.c.l.b16 %v223
  %v1106 = vunpack.c.l.b16 %v224
  %v1107 = vunpack.c.l.b16 %v225
  %v1108 = vunpack.c.l.b16 %v226
  %v1109 = vunpack.c.l.b16 %v227
  %v1110 = vunpack.c.l.b16 %v228
  %v1111 = vunpack.c.l.b16 %v229
  %v1112 = vunpack.c.l.b16 %v230
  %v1113 = vunpack.c.l.b16 %v231
  %v1114 = vunpack.c.l.b16 %v232
  %v1115 = vunpack.c.l.b16 %v233
  %v1116 = vunpack.c.l.b16 %v234
  %v1117 = vunpack.c.l.b16 %v235
  %v1118 = vunpack.c.l.b16 %v236
  %v1119 = vunpack.c.l.b16 %v237
  %v1120 = vunpack.c.l.b16 %v238
  %v1121 = vunpack.c.l.b16 %v239
  %v1122 = vunpack.c.l.b16 %v240
  %v1123 = vunpack.c.l.b16 %v241
  %v1124 = vunpack.c.l.b16 %v242
  %v1125 = vpack.c.b16 %v1075, %v1074
  %v1126 = vpack.c.b16 %v1077, %v1076
  %v1127 = vpack.c.b16 %v1079, %v1078
  %v1128 = vpack.c.b16 %v1081, %v1080
  %v1129 = vpack.c.b16 %v1083, %v1082
  %v1130 = vpack.c.b16 %v1085, %v1084
  %v1131 = vpack.c.b16 %v1087, %v1086
  %v1132 = vpack.c.b16 %v1089, %v1088
  %v1133 = vpack.c.b16 %v1091, %v1090
  %v1134 = vpack.c.b16 %v1093, %v1092
  %v1135 = vpack.c.b16 %v1095, %v1094
  %v1136 = vpack.c.b16 %v1097, %v1096
  %v1137 = vpack.c.b16 %v1099, %v1098
  %v1138 = vpack.c.b16 %v1101, %v1100
  %v1139 = vpack.c.b16 %v1103, %v1102
  %v1140 = vpack.c.b16 %v1105, %v1104
  %v1141 = vpack.c.b16 %v1107, %v1106
  %v1142 = vpack.c.b16 %v1109, %v1108
  %v1143 = vpack.c.b16 %v1111, %v1110
  %v1144 = vpack.c.b16 %v1113, %v1112
  %v1145 = vpack.c.b16 %v1115, %v1114
  %v1146 = vpack.c.b16 %v1117, %v1116
  %v1147 = vpack.c.b16 %v1119, %v1118
  %v1148 = vpack.c.b16 %v1121, %v1120
  %v1149 = vpack.c.b16 %v1123, %v1122
  %v1150 = vpack.c.b16 %v1124, %v1124
  %vm1176 = vcmask 171008
  %v1178 = vsel %vm1176, %v739, 0
  %v1181 = vsel %vm1176, %v743, 0
  %v1184 = vsel %vm1176, %v747, 0
  %v1187 = vsel %vm1176, %v751, 0
  %v1190 = vsel %vm1176, %v755, 0
  %v1193 = vsel %vm1176, %v759, 0
  %v1196 = vsel %vm1176, %v763, 0
  %v1199 = vsel %vm1176, %v767, 0
  %v1202 = vsel %vm1176, %v771, 0
  %v1205 = vsel %vm1176, %v775, 0
  %v1208 = vsel %vm1176, %v779, 0
  %v1211 = vsel %vm1176, %v783, 0
  %v1214 = vsel %vm1176, %v787, 0
  %v1217 = vsel %vm1176, %v791, 0
  %v1220 = vsel %vm1176, %v795, 0
  %v1223 = vsel %vm1176, %v799, 0
  %v1226 = vsel %vm1176, %v803, 0
  %v1229 = vsel %vm1176, %v807, 0
  %v1232 = vsel %vm1176, %v811, 0
  %v1235 = vsel %vm1176, %v815, 0
  %v1238 = vsel %vm1176, %v819, 0
  %v1241 = vsel %vm1176, %v823, 0
  %v1244 = vsel %vm1176, %v827, 0
  %v1247 = vsel %vm1176, %v831, 0
  %v1250 = vsel %vm1176, %v835, 0
  %v1253 = vsel %vm1176, %v839, 0
  %v1256 = vsel %vm1176, %v843, 0
  %v1259 = vsel %vm1176, %v847, 0
  %v1262 = vsel %vm1176, %v851, 0
  %v1265 = vsel %vm1176, %v855, 0
  %v1268 = vsel %vm1176, %v859, 0
  %v1271 = vsel %vm1176, %v863, 0
  %v1274 = vsel %vm1176, %v867, 0
  %v1277 = vsel %vm1176, %v871, 0
  %v1280 = vsel %vm1176, %v875, 0
  %v1283 = vsel %vm1176, %v879, 0
  %v1286 = vsel %vm1176, %v883, 0
  %v1289 = vsel %vm1176, %v887, 0
  %v1292 = vsel %vm1176, %v891, 0
  %v1295 = vsel %vm1176, %v895, 0
  %v1298 = vsel %vm1176, %v899, 0
  %vm1300 = vcmask 1041408
  %vm1301 = vcmask 1042432
  %v1302 = vsel %vm1300, 4294967295, 65535
  %v1303 = vsel %vm1301, %v1302, 0
  %v1305 = vand.u32 %v1150, %v1303
  %1307 = vmatprep.subr.bf16.mxu0 0
  %1308 = vmatpush1.bf16.msra.mxu0 %v1125
  %1309 = vmatprep.subr.bf16.mxu0 0
  %1310 = vmatpush1.bf16.msra.mxu0 %v1126
  %1311 = vmatprep.subr.bf16.mxu0 0
  %1312 = vmatpush1.bf16.msra.mxu0 %v1127
  %1313 = vmatprep.subr.bf16.mxu0 0
  %1314 = vmatpush1.bf16.msra.mxu0 %v1128
  %1315 = vmatprep.subr.bf16.mxu0 0
  %1316 = vmatpush1.bf16.msra.mxu0 %v1129
  %1317 = vmatprep.subr.bf16.mxu0 0
  %1318 = vmatpush1.bf16.msra.mxu0 %v1130
  %1319 = vmatprep.subr.bf16.mxu0 0
  %1320 = vmatpush1.bf16.msra.mxu0 %v1131
  %1321 = vmatprep.subr.bf16.mxu0 0
  %1322 = vmatpush1.bf16.msra.mxu0 %v1132
  %1323 = vmatprep.subr.bf16.mxu0 0
  %1324 = vmatpush1.bf16.msra.mxu0 %v1133
  %1325 = vmatprep.subr.bf16.mxu0 0
  %1326 = vmatpush1.bf16.msra.mxu0 %v1134
  %1327 = vmatprep.subr.bf16.mxu0 0
  %1328 = vmatpush1.bf16.msra.mxu0 %v1135
  %1329 = vmatprep.subr.bf16.mxu0 0
  %1330 = vmatpush1.bf16.msra.mxu0 %v1136
  %1331 = vmatprep.subr.bf16.mxu0 0
  %1332 = vmatpush1.bf16.msra.mxu0 %v1137
  %1333 = vmatprep.subr.bf16.mxu0 0
  %1334 = vmatpush1.bf16.msra.mxu0 %v1138
  %1335 = vmatprep.subr.bf16.mxu0 0
  %1336 = vmatpush1.bf16.msra.mxu0 %v1139
  %1337 = vmatprep.subr.bf16.mxu0 0
  %1338 = vmatpush1.bf16.msra.mxu0 %v1140
  %1339 = vmatprep.mubr.bf16.mxu0 %v737
  %1340 = vmatmul.mubr.bf16.gmra.mrb[0].mxu0 %v736
  %v1341 = vpop.f32.mrb[0].mxu0
  %v1342 = vadd.f32 %v248, %v1341
  %v1343 = vpop.f32.mrb[0].mxu0
  %v1344 = vpop.f32.mrb[0].mxu0
  %v1345 = vadd.f32 %v248, %v1344
  %v1346 = vpop.f32.mrb[0].mxu0
  %1347 = vmatprep.mubr.bf16.mxu0 %v741
  %1348 = vmatmul.mubr.bf16.gmra.mrb[0].mxu0 %v740
  %v1349 = vpop.f32.mrb[0].mxu0
  %v1350 = vadd.f32 %v248, %v1349
  %v1351 = vpop.f32.mrb[0].mxu0
  %v1352 = vpop.f32.mrb[0].mxu0
  %v1353 = vadd.f32 %v248, %v1352
  %v1354 = vpop.f32.mrb[0].mxu0
  %1355 = vmatprep.mubr.bf16.mxu0 %v745
  %1356 = vmatmul.mubr.bf16.gmra.mrb[0].mxu0 %v744
  %v1357 = vpop.f32.mrb[0].mxu0
  %v1358 = vadd.f32 %v248, %v1357
  %v1359 = vpop.f32.mrb[0].mxu0
  %v1360 = vpop.f32.mrb[0].mxu0
  %v1361 = vadd.f32 %v248, %v1360
  %v1362 = vpop.f32.mrb[0].mxu0
  %1363 = vmatprep.mubr.bf16.mxu0 %v749
  %1364 = vmatmul.mubr.bf16.gmra.mrb[0].mxu0 %v748
  %v1365 = vpop.f32.mrb[0].mxu0
  %v1366 = vadd.f32 %v248, %v1365
  %v1367 = vpop.f32.mrb[0].mxu0
  %v1368 = vpop.f32.mrb[0].mxu0
  %v1369 = vadd.f32 %v248, %v1368
  %v1370 = vpop.f32.mrb[0].mxu0
  %1371 = vmatprep.mubr.bf16.mxu0 %v753
  %1372 = vmatmul.mubr.bf16.gmra.mrb[0].mxu0 %v752
  %v1373 = vpop.f32.mrb[0].mxu0
  %v1374 = vadd.f32 %v248, %v1373
  %v1375 = vpop.f32.mrb[0].mxu0
  %v1376 = vpop.f32.mrb[0].mxu0
  %v1377 = vadd.f32 %v248, %v1376
  %v1378 = vpop.f32.mrb[0].mxu0
  %1379 = vmatprep.mubr.bf16.mxu0 %v757
  %1380 = vmatmul.mubr.bf16.gmra.mrb[0].mxu0 %v756
  %v1381 = vpop.f32.mrb[0].mxu0
  %v1382 = vadd.f32 %v248, %v1381
  %v1383 = vpop.f32.mrb[0].mxu0
  %v1384 = vpop.f32.mrb[0].mxu0
  %v1385 = vadd.f32 %v248, %v1384
  %v1386 = vpop.f32.mrb[0].mxu0
  %1387 = vmatprep.mubr.bf16.mxu0 %v761
  %1388 = vmatmul.mubr.bf16.gmra.mrb[0].mxu0 %v760
  %v1389 = vpop.f32.mrb[0].mxu0
  %v1390 = vadd.f32 %v248, %v1389
  %v1391 = vpop.f32.mrb[0].mxu0
  %v1392 = vpop.f32.mrb[0].mxu0
  %v1393 = vadd.f32 %v248, %v1392
  %v1394 = vpop.f32.mrb[0].mxu0
  %1395 = vmatprep.mubr.bf16.mxu0 %v765
  %1396 = vmatmul.mubr.bf16.gmra.mrb[0].mxu0 %v764
  %v1397 = vpop.f32.mrb[0].mxu0
  %v1398 = vadd.f32 %v248, %v1397
  %v1399 = vpop.f32.mrb[0].mxu0
  %v1400 = vpop.f32.mrb[0].mxu0
  %v1401 = vadd.f32 %v248, %v1400
  %v1402 = vpop.f32.mrb[0].mxu0
  %1403 = vmatprep.mubr.bf16.mxu0 %v769
  %1404 = vmatmul.mubr.bf16.gmra.mrb[0].mxu0 %v768
  %v1405 = vpop.f32.mrb[0].mxu0
  %v1406 = vadd.f32 %v248, %v1405
  %v1407 = vpop.f32.mrb[0].mxu0
  %v1408 = vpop.f32.mrb[0].mxu0
  %v1409 = vadd.f32 %v248, %v1408
  %v1410 = vpop.f32.mrb[0].mxu0
  %1411 = vmatprep.mubr.bf16.mxu0 %v773
  %1412 = vmatmul.mubr.bf16.gmra.mrb[0].mxu0 %v772
  %v1413 = vpop.f32.mrb[0].mxu0
  %v1414 = vadd.f32 %v248, %v1413
  %v1415 = vpop.f32.mrb[0].mxu0
  %v1416 = vpop.f32.mrb[0].mxu0
  %v1417 = vadd.f32 %v248, %v1416
  %v1418 = vpop.f32.mrb[0].mxu0
  %1419 = vmatprep.mubr.bf16.mxu0 %v777
  %1420 = vmatmul.mubr.bf16.gmra.mrb[0].mxu0 %v776
  %v1421 = vpop.f32.mrb[0].mxu0
  %v1422 = vadd.f32 %v248, %v1421
  %v1423 = vpop.f32.mrb[0].mxu0
  %v1424 = vpop.f32.mrb[0].mxu0
  %v1425 = vadd.f32 %v248, %v1424
  %v1426 = vpop.f32.mrb[0].mxu0
  %1427 = vmatprep.mubr.bf16.mxu0 %v781
  %1428 = vmatmul.mubr.bf16.gmra.mrb[0].mxu0 %v780
  %v1429 = vpop.f32.mrb[0].mxu0
  %v1430 = vadd.f32 %v248, %v1429
  %v1431 = vpop.f32.mrb[0].mxu0
  %v1432 = vpop.f32.mrb[0].mxu0
  %v1433 = vadd.f32 %v248, %v1432
  %v1434 = vpop.f32.mrb[0].mxu0
  %1435 = vmatprep.mubr.bf16.mxu0 %v785
  %1436 = vmatmul.mubr.bf16.gmra.mrb[0].mxu0 %v784
  %v1437 = vpop.f32.mrb[0].mxu0
  %v1438 = vadd.f32 %v248, %v1437
  %v1439 = vpop.f32.mrb[0].mxu0
  %v1440 = vpop.f32.mrb[0].mxu0
  %v1441 = vadd.f32 %v248, %v1440
  %v1442 = vpop.f32.mrb[0].mxu0
  %1443 = vmatprep.mubr.bf16.mxu0 %v789
  %1444 = vmatmul.mubr.bf16.gmra.mrb[0].mxu0 %v788
  %v1445 = vpop.f32.mrb[0].mxu0
  %v1446 = vadd.f32 %v248, %v1445
  %v1447 = vpop.f32.mrb[0].mxu0
  %v1448 = vpop.f32.mrb[0].mxu0
  %v1449 = vadd.f32 %v248, %v1448
  %v1450 = vpop.f32.mrb[0].mxu0
  %1451 = vmatprep.mubr.bf16.mxu0 %v793
  %1452 = vmatmul.mubr.bf16.gmra.mrb[0].mxu0 %v792
  %v1453 = vpop.f32.mrb[0].mxu0
  %v1454 = vadd.f32 %v248, %v1453
  %v1455 = vpop.f32.mrb[0].mxu0
  %v1456 = vpop.f32.mrb[0].mxu0
  %v1457 = vadd.f32 %v248, %v1456
  %v1458 = vpop.f32.mrb[0].mxu0
  %1459 = vmatprep.mubr.bf16.mxu0 %v797
  %1460 = vmatmul.mubr.bf16.gmra.mrb[0].mxu0 %v796
  %v1461 = vpop.f32.mrb[0].mxu0
  %v1462 = vadd.f32 %v248, %v1461
  %v1463 = vpop.f32.mrb[0].mxu0
  %v1464 = vpop.f32.mrb[0].mxu0
  %v1465 = vadd.f32 %v248, %v1464
  %v1466 = vpop.f32.mrb[0].mxu0
  %1467 = vmatprep.mubr.bf16.mxu0 %v801
  %1468 = vmatmul.mubr.bf16.gmra.mrb[0].mxu0 %v800
  %v1469 = vpop.f32.mrb[0].mxu0
  %v1470 = vadd.f32 %v248, %v1469
  %v1471 = vpop.f32.mrb[0].mxu0
  %v1472 = vpop.f32.mrb[0].mxu0
  %v1473 = vadd.f32 %v248, %v1472
  %v1474 = vpop.f32.mrb[0].mxu0
  %1475 = vmatprep.mubr.bf16.mxu0 %v805
  %1476 = vmatmul.mubr.bf16.gmra.mrb[0].mxu0 %v804
  %v1477 = vpop.f32.mrb[0].mxu0
  %v1478 = vadd.f32 %v248, %v1477
  %v1479 = vpop.f32.mrb[0].mxu0
  %v1480 = vpop.f32.mrb[0].mxu0
  %v1481 = vadd.f32 %v248, %v1480
  %v1482 = vpop.f32.mrb[0].mxu0
  %1483 = vmatprep.mubr.bf16.mxu0 %v809
  %1484 = vmatmul.mubr.bf16.gmra.mrb[0].mxu0 %v808
  %v1485 = vpop.f32.mrb[0].mxu0
  %v1486 = vadd.f32 %v248, %v1485
  %v1487 = vpop.f32.mrb[0].mxu0
  %v1488 = vpop.f32.mrb[0].mxu0
  %v1489 = vadd.f32 %v248, %v1488
  %v1490 = vpop.f32.mrb[0].mxu0
  %1491 = vmatprep.mubr.bf16.mxu0 %v813
  %1492 = vmatmul.mubr.bf16.gmra.mrb[0].mxu0 %v812
  %v1493 = vpop.f32.mrb[0].mxu0
  %v1494 = vadd.f32 %v248, %v1493
  %v1495 = vpop.f32.mrb[0].mxu0
  %v1496 = vpop.f32.mrb[0].mxu0
  %v1497 = vadd.f32 %v248, %v1496
  %v1498 = vpop.f32.mrb[0].mxu0
  %1499 = vmatprep.mubr.bf16.mxu0 %v817
  %1500 = vmatmul.mubr.bf16.gmra.mrb[0].mxu0 %v816
  %v1501 = vpop.f32.mrb[0].mxu0
  %v1502 = vadd.f32 %v248, %v1501
  %v1503 = vpop.f32.mrb[0].mxu0
  %v1504 = vpop.f32.mrb[0].mxu0
  %v1505 = vadd.f32 %v248, %v1504
  %v1506 = vpop.f32.mrb[0].mxu0
  %1507 = vmatprep.mubr.bf16.mxu0 %v821
  %1508 = vmatmul.mubr.bf16.gmra.mrb[0].mxu0 %v820
  %v1509 = vpop.f32.mrb[0].mxu0
  %v1510 = vadd.f32 %v248, %v1509
  %v1511 = vpop.f32.mrb[0].mxu0
  %v1512 = vpop.f32.mrb[0].mxu0
  %v1513 = vadd.f32 %v248, %v1512
  %v1514 = vpop.f32.mrb[0].mxu0
  %1515 = vmatprep.mubr.bf16.mxu0 %v825
  %1516 = vmatmul.mubr.bf16.gmra.mrb[0].mxu0 %v824
  %v1517 = vpop.f32.mrb[0].mxu0
  %v1518 = vadd.f32 %v248, %v1517
  %v1519 = vpop.f32.mrb[0].mxu0
  %v1520 = vpop.f32.mrb[0].mxu0
  %v1521 = vadd.f32 %v248, %v1520
  %v1522 = vpop.f32.mrb[0].mxu0
  %1523 = vmatprep.mubr.bf16.mxu0 %v829
  %1524 = vmatmul.mubr.bf16.gmra.mrb[0].mxu0 %v828
  %v1525 = vpop.f32.mrb[0].mxu0
  %v1526 = vadd.f32 %v248, %v1525
  %v1527 = vpop.f32.mrb[0].mxu0
  %v1528 = vpop.f32.mrb[0].mxu0
  %v1529 = vadd.f32 %v248, %v1528
  %v1530 = vpop.f32.mrb[0].mxu0
  %1531 = vmatprep.mubr.bf16.mxu0 %v833
  %1532 = vmatmul.mubr.bf16.gmra.mrb[0].mxu0 %v832
  %v1533 = vpop.f32.mrb[0].mxu0
  %v1534 = vadd.f32 %v248, %v1533
  %v1535 = vpop.f32.mrb[0].mxu0
  %v1536 = vpop.f32.mrb[0].mxu0
  %v1537 = vadd.f32 %v248, %v1536
  %v1538 = vpop.f32.mrb[0].mxu0
  %1539 = vmatprep.mubr.bf16.mxu0 %v837
  %1540 = vmatmul.mubr.bf16.gmra.mrb[0].mxu0 %v836
  %v1541 = vpop.f32.mrb[0].mxu0
  %v1542 = vadd.f32 %v248, %v1541
  %v1543 = vpop.f32.mrb[0].mxu0
  %v1544 = vpop.f32.mrb[0].mxu0
  %v1545 = vadd.f32 %v248, %v1544
  %v1546 = vpop.f32.mrb[0].mxu0
  %1547 = vmatprep.mubr.bf16.mxu0 %v841
  %1548 = vmatmul.mubr.bf16.gmra.mrb[0].mxu0 %v840
  %v1549 = vpop.f32.mrb[0].mxu0
  %v1550 = vadd.f32 %v248, %v1549
  %v1551 = vpop.f32.mrb[0].mxu0
  %v1552 = vpop.f32.mrb[0].mxu0
  %v1553 = vadd.f32 %v248, %v1552
  %v1554 = vpop.f32.mrb[0].mxu0
  %1555 = vmatprep.mubr.bf16.mxu0 %v845
  %1556 = vmatmul.mubr.bf16.gmra.mrb[0].mxu0 %v844
  %v1557 = vpop.f32.mrb[0].mxu0
  %v1558 = vadd.f32 %v248, %v1557
  %v1559 = vpop.f32.mrb[0].mxu0
  %v1560 = vpop.f32.mrb[0].mxu0
  %v1561 = vadd.f32 %v248, %v1560
  %v1562 = vpop.f32.mrb[0].mxu0
  %1563 = vmatprep.mubr.bf16.mxu0 %v849
  %1564 = vmatmul.mubr.bf16.gmra.mrb[0].mxu0 %v848
  %v1565 = vpop.f32.mrb[0].mxu0
  %v1566 = vadd.f32 %v248, %v1565
  %v1567 = vpop.f32.mrb[0].mxu0
  %v1568 = vpop.f32.mrb[0].mxu0
  %v1569 = vadd.f32 %v248, %v1568
  %v1570 = vpop.f32.mrb[0].mxu0
  %1571 = vmatprep.mubr.bf16.mxu0 %v853
  %1572 = vmatmul.mubr.bf16.gmra.mrb[0].mxu0 %v852
  %v1573 = vpop.f32.mrb[0].mxu0
  %v1574 = vadd.f32 %v248, %v1573
  %v1575 = vpop.f32.mrb[0].mxu0
  %v1576 = vpop.f32.mrb[0].mxu0
  %v1577 = vadd.f32 %v248, %v1576
  %v1578 = vpop.f32.mrb[0].mxu0
  %1579 = vmatprep.mubr.bf16.mxu0 %v857
  %1580 = vmatmul.mubr.bf16.gmra.mrb[0].mxu0 %v856
  %v1581 = vpop.f32.mrb[0].mxu0
  %v1582 = vadd.f32 %v248, %v1581
  %v1583 = vpop.f32.mrb[0].mxu0
  %v1584 = vpop.f32.mrb[0].mxu0
  %v1585 = vadd.f32 %v248, %v1584
  %v1586 = vpop.f32.mrb[0].mxu0
  %1587 = vmatprep.mubr.bf16.mxu0 %v861
  %1588 = vmatmul.mubr.bf16.gmra.mrb[0].mxu0 %v860
  %v1589 = vpop.f32.mrb[0].mxu0
  %v1590 = vadd.f32 %v248, %v1589
  %v1591 = vpop.f32.mrb[0].mxu0
  %v1592 = vpop.f32.mrb[0].mxu0
  %v1593 = vadd.f32 %v248, %v1592
  %v1594 = vpop.f32.mrb[0].mxu0
  %1595 = vmatprep.mubr.bf16.mxu0 %v865
  %1596 = vmatmul.mubr.bf16.gmra.mrb[0].mxu0 %v864
  %v1597 = vpop.f32.mrb[0].mxu0
  %v1598 = vadd.f32 %v248, %v1597
  %v1599 = vpop.f32.mrb[0].mxu0
  %v1600 = vpop.f32.mrb[0].mxu0
  %v1601 = vadd.f32 %v248, %v1600
  %v1602 = vpop.f32.mrb[0].mxu0
  %1603 = vmatprep.mubr.bf16.mxu0 %v869
  %1604 = vmatmul.mubr.bf16.gmra.mrb[0].mxu0 %v868
  %v1605 = vpop.f32.mrb[0].mxu0
  %v1606 = vadd.f32 %v248, %v1605
  %v1607 = vpop.f32.mrb[0].mxu0
  %v1608 = vpop.f32.mrb[0].mxu0
  %v1609 = vadd.f32 %v248, %v1608
  %v1610 = vpop.f32.mrb[0].mxu0
  %1611 = vmatprep.mubr.bf16.mxu0 %v873
  %1612 = vmatmul.mubr.bf16.gmra.mrb[0].mxu0 %v872
  %v1613 = vpop.f32.mrb[0].mxu0
  %v1614 = vadd.f32 %v248, %v1613
  %v1615 = vpop.f32.mrb[0].mxu0
  %v1616 = vpop.f32.mrb[0].mxu0
  %v1617 = vadd.f32 %v248, %v1616
  %v1618 = vpop.f32.mrb[0].mxu0
  %1619 = vmatprep.mubr.bf16.mxu0 %v877
  %1620 = vmatmul.mubr.bf16.gmra.mrb[0].mxu0 %v876
  %v1621 = vpop.f32.mrb[0].mxu0
  %v1622 = vadd.f32 %v248, %v1621
  %v1623 = vpop.f32.mrb[0].mxu0
  %v1624 = vpop.f32.mrb[0].mxu0
  %v1625 = vadd.f32 %v248, %v1624
  %v1626 = vpop.f32.mrb[0].mxu0
  %1627 = vmatprep.mubr.bf16.mxu0 %v881
  %1628 = vmatmul.mubr.bf16.gmra.mrb[0].mxu0 %v880
  %v1629 = vpop.f32.mrb[0].mxu0
  %v1630 = vadd.f32 %v248, %v1629
  %v1631 = vpop.f32.mrb[0].mxu0
  %v1632 = vpop.f32.mrb[0].mxu0
  %v1633 = vadd.f32 %v248, %v1632
  %v1634 = vpop.f32.mrb[0].mxu0
  %1635 = vmatprep.mubr.bf16.mxu0 %v885
  %1636 = vmatmul.mubr.bf16.gmra.mrb[0].mxu0 %v884
  %v1637 = vpop.f32.mrb[0].mxu0
  %v1638 = vadd.f32 %v248, %v1637
  %v1639 = vpop.f32.mrb[0].mxu0
  %v1640 = vpop.f32.mrb[0].mxu0
  %v1641 = vadd.f32 %v248, %v1640
  %v1642 = vpop.f32.mrb[0].mxu0
  %1643 = vmatprep.mubr.bf16.mxu0 %v889
  %1644 = vmatmul.mubr.bf16.gmra.mrb[0].mxu0 %v888
  %v1645 = vpop.f32.mrb[0].mxu0
  %v1646 = vadd.f32 %v248, %v1645
  %v1647 = vpop.f32.mrb[0].mxu0
  %v1648 = vpop.f32.mrb[0].mxu0
  %v1649 = vadd.f32 %v248, %v1648
  %v1650 = vpop.f32.mrb[0].mxu0
  %1651 = vmatprep.mubr.bf16.mxu0 %v893
  %1652 = vmatmul.mubr.bf16.gmra.mrb[0].mxu0 %v892
  %v1653 = vpop.f32.mrb[0].mxu0
  %v1654 = vadd.f32 %v248, %v1653
  %v1655 = vpop.f32.mrb[0].mxu0
  %v1656 = vpop.f32.mrb[0].mxu0
  %v1657 = vadd.f32 %v248, %v1656
  %v1658 = vpop.f32.mrb[0].mxu0
  %1659 = vmatprep.mubr.bf16.mxu0 %v897
  %1660 = vmatmul.mubr.bf16.gmra.mrb[0].mxu0 %v896
  %v1661 = vpop.f32.mrb[0].mxu0
  %v1662 = vadd.f32 %v248, %v1661
  %v1663 = vpop.f32.mrb[0].mxu0
  %v1664 = vpop.f32.mrb[0].mxu0
  %v1665 = vpop.f32.mrb[0].mxu0
  %1666 = vdwg.mxu0
  %1667 = vmatprep.subr.bf16.mxu0 0
  %1668 = vmatpush1.bf16.msra.mxu0 %v1141
  %1669 = vmatprep.subr.bf16.mxu0 0
  %1670 = vmatpush1.bf16.msra.mxu0 %v1142
  %1671 = vmatprep.subr.bf16.mxu0 0
  %1672 = vmatpush1.bf16.msra.mxu0 %v1143
  %1673 = vmatprep.subr.bf16.mxu0 0
  %1674 = vmatpush1.bf16.msra.mxu0 %v1144
  %1675 = vmatprep.subr.bf16.mxu0 0
  %1676 = vmatpush1.bf16.msra.mxu0 %v1145
  %1677 = vmatprep.subr.bf16.mxu0 0
  %1678 = vmatpush1.bf16.msra.mxu0 %v1146
  %1679 = vmatprep.subr.bf16.mxu0 0
  %1680 = vmatpush1.bf16.msra.mxu0 %v1147
  %1681 = vmatprep.subr.bf16.mxu0 0
  %1682 = vmatpush1.bf16.msra.mxu0 %v1148
  %1683 = vmatprep.subr.bf16.mxu0 0
  %1684 = vmatpush1.bf16.msra.mxu0 %v1149
  %1685 = vmatprep.subr.bf16.mxu0 0
  %1686 = vmatpush1.bf16.msra.mxu0 %v1305
  %1687 = vmatprep.subr.bf16.mxu0 0
  %1688 = vmatpush1.bf16.msra.mxu0 0
  %1689 = vmatprep.subr.bf16.mxu0 0
  %1690 = vmatpush1.bf16.msra.mxu0 0
  %1691 = vmatprep.subr.bf16.mxu0 0
  %1692 = vmatpush1.bf16.msra.mxu0 0
  %1693 = vmatprep.subr.bf16.mxu0 0
  %1694 = vmatpush1.bf16.msra.mxu0 0
  %1695 = vmatprep.subr.bf16.mxu0 0
  %1696 = vmatpush1.bf16.msra.mxu0 0
  %1697 = vmatprep.subr.bf16.mxu0 0
  %1698 = vmatpush1.bf16.msra.mxu0 0
  %1699 = vmatprep.mubr.bf16.mxu0 %v1178
  %1700 = vmatmul.mubr.bf16.gmra.mrb[0].mxu0 %v738
  %v1701 = vpop.f32.mrb[0].mxu0
  %v1702 = vadd.f32 %v1342, %v1701
  %v1703 = vpop.f32.mrb[0].mxu0
  %v1704 = vpop.f32.mrb[0].mxu0
  %v1705 = vadd.f32 %v1345, %v1704
  %v1706 = vpop.f32.mrb[0].mxu0
  %1707 = vmatprep.mubr.bf16.mxu0 %v1181
  %1708 = vmatmul.mubr.bf16.gmra.mrb[0].mxu0 %v742
  %v1709 = vpop.f32.mrb[0].mxu0
  %v1710 = vadd.f32 %v1350, %v1709
  %v1711 = vpop.f32.mrb[0].mxu0
  %v1712 = vpop.f32.mrb[0].mxu0
  %v1713 = vadd.f32 %v1353, %v1712
  %v1714 = vpop.f32.mrb[0].mxu0
  %1715 = vmatprep.mubr.bf16.mxu0 %v1184
  %1716 = vmatmul.mubr.bf16.gmra.mrb[0].mxu0 %v746
  %v1717 = vpop.f32.mrb[0].mxu0
  %v1718 = vadd.f32 %v1358, %v1717
  %v1719 = vpop.f32.mrb[0].mxu0
  %v1720 = vpop.f32.mrb[0].mxu0
  %v1721 = vadd.f32 %v1361, %v1720
  %v1722 = vpop.f32.mrb[0].mxu0
  %1723 = vmatprep.mubr.bf16.mxu0 %v1187
  %1724 = vmatmul.mubr.bf16.gmra.mrb[0].mxu0 %v750
  %v1725 = vpop.f32.mrb[0].mxu0
  %v1726 = vadd.f32 %v1366, %v1725
  %v1727 = vpop.f32.mrb[0].mxu0
  %v1728 = vpop.f32.mrb[0].mxu0
  %v1729 = vadd.f32 %v1369, %v1728
  %v1730 = vpop.f32.mrb[0].mxu0
  %1731 = vmatprep.mubr.bf16.mxu0 %v1190
  %1732 = vmatmul.mubr.bf16.gmra.mrb[0].mxu0 %v754
  %v1733 = vpop.f32.mrb[0].mxu0
  %v1734 = vadd.f32 %v1374, %v1733
  %v1735 = vpop.f32.mrb[0].mxu0
  %v1736 = vpop.f32.mrb[0].mxu0
  %v1737 = vadd.f32 %v1377, %v1736
  %v1738 = vpop.f32.mrb[0].mxu0
  %1739 = vmatprep.mubr.bf16.mxu0 %v1193
  %1740 = vmatmul.mubr.bf16.gmra.mrb[0].mxu0 %v758
  %v1741 = vpop.f32.mrb[0].mxu0
  %v1742 = vadd.f32 %v1382, %v1741
  %v1743 = vpop.f32.mrb[0].mxu0
  %v1744 = vpop.f32.mrb[0].mxu0
  %v1745 = vadd.f32 %v1385, %v1744
  %v1746 = vpop.f32.mrb[0].mxu0
  %1747 = vmatprep.mubr.bf16.mxu0 %v1196
  %1748 = vmatmul.mubr.bf16.gmra.mrb[0].mxu0 %v762
  %v1749 = vpop.f32.mrb[0].mxu0
  %v1750 = vadd.f32 %v1390, %v1749
  %v1751 = vpop.f32.mrb[0].mxu0
  %v1752 = vpop.f32.mrb[0].mxu0
  %v1753 = vadd.f32 %v1393, %v1752
  %v1754 = vpop.f32.mrb[0].mxu0
  %1755 = vmatprep.mubr.bf16.mxu0 %v1199
  %1756 = vmatmul.mubr.bf16.gmra.mrb[0].mxu0 %v766
  %v1757 = vpop.f32.mrb[0].mxu0
  %v1758 = vadd.f32 %v1398, %v1757
  %v1759 = vpop.f32.mrb[0].mxu0
  %v1760 = vpop.f32.mrb[0].mxu0
  %v1761 = vadd.f32 %v1401, %v1760
  %v1762 = vpop.f32.mrb[0].mxu0
  %1763 = vmatprep.mubr.bf16.mxu0 %v1202
  %1764 = vmatmul.mubr.bf16.gmra.mrb[0].mxu0 %v770
  %v1765 = vpop.f32.mrb[0].mxu0
  %v1766 = vadd.f32 %v1406, %v1765
  %v1767 = vpop.f32.mrb[0].mxu0
  %v1768 = vpop.f32.mrb[0].mxu0
  %v1769 = vadd.f32 %v1409, %v1768
  %v1770 = vpop.f32.mrb[0].mxu0
  %1771 = vmatprep.mubr.bf16.mxu0 %v1205
  %1772 = vmatmul.mubr.bf16.gmra.mrb[0].mxu0 %v774
  %v1773 = vpop.f32.mrb[0].mxu0
  %v1774 = vadd.f32 %v1414, %v1773
  %v1775 = vpop.f32.mrb[0].mxu0
  %v1776 = vpop.f32.mrb[0].mxu0
  %v1777 = vadd.f32 %v1417, %v1776
  %v1778 = vpop.f32.mrb[0].mxu0
  %1779 = vmatprep.mubr.bf16.mxu0 %v1208
  %1780 = vmatmul.mubr.bf16.gmra.mrb[0].mxu0 %v778
  %v1781 = vpop.f32.mrb[0].mxu0
  %v1782 = vadd.f32 %v1422, %v1781
  %v1783 = vpop.f32.mrb[0].mxu0
  %v1784 = vpop.f32.mrb[0].mxu0
  %v1785 = vadd.f32 %v1425, %v1784
  %v1786 = vpop.f32.mrb[0].mxu0
  %1787 = vmatprep.mubr.bf16.mxu0 %v1211
  %1788 = vmatmul.mubr.bf16.gmra.mrb[0].mxu0 %v782
  %v1789 = vpop.f32.mrb[0].mxu0
  %v1790 = vadd.f32 %v1430, %v1789
  %v1791 = vpop.f32.mrb[0].mxu0
  %v1792 = vpop.f32.mrb[0].mxu0
  %v1793 = vadd.f32 %v1433, %v1792
  %v1794 = vpop.f32.mrb[0].mxu0
  %1795 = vmatprep.mubr.bf16.mxu0 %v1214
  %1796 = vmatmul.mubr.bf16.gmra.mrb[0].mxu0 %v786
  %v1797 = vpop.f32.mrb[0].mxu0
  %v1798 = vadd.f32 %v1438, %v1797
  %v1799 = vpop.f32.mrb[0].mxu0
  %v1800 = vpop.f32.mrb[0].mxu0
  %v1801 = vadd.f32 %v1441, %v1800
  %v1802 = vpop.f32.mrb[0].mxu0
  %1803 = vmatprep.mubr.bf16.mxu0 %v1217
  %1804 = vmatmul.mubr.bf16.gmra.mrb[0].mxu0 %v790
  %v1805 = vpop.f32.mrb[0].mxu0
  %v1806 = vadd.f32 %v1446, %v1805
  %v1807 = vpop.f32.mrb[0].mxu0
  %v1808 = vpop.f32.mrb[0].mxu0
  %v1809 = vadd.f32 %v1449, %v1808
  %v1810 = vpop.f32.mrb[0].mxu0
  %1811 = vmatprep.mubr.bf16.mxu0 %v1220
  %1812 = vmatmul.mubr.bf16.gmra.mrb[0].mxu0 %v794
  %v1813 = vpop.f32.mrb[0].mxu0
  %v1814 = vadd.f32 %v1454, %v1813
  %v1815 = vpop.f32.mrb[0].mxu0
  %v1816 = vpop.f32.mrb[0].mxu0
  %v1817 = vadd.f32 %v1457, %v1816
  %v1818 = vpop.f32.mrb[0].mxu0
  %1819 = vmatprep.mubr.bf16.mxu0 %v1223
  %1820 = vmatmul.mubr.bf16.gmra.mrb[0].mxu0 %v798
  %v1821 = vpop.f32.mrb[0].mxu0
  %v1822 = vadd.f32 %v1462, %v1821
  %v1823 = vpop.f32.mrb[0].mxu0
  %v1824 = vpop.f32.mrb[0].mxu0
  %v1825 = vadd.f32 %v1465, %v1824
  %v1826 = vpop.f32.mrb[0].mxu0
  %1827 = vmatprep.mubr.bf16.mxu0 %v1226
  %1828 = vmatmul.mubr.bf16.gmra.mrb[0].mxu0 %v802
  %v1829 = vpop.f32.mrb[0].mxu0
  %v1830 = vadd.f32 %v1470, %v1829
  %v1831 = vpop.f32.mrb[0].mxu0
  %v1832 = vpop.f32.mrb[0].mxu0
  %v1833 = vadd.f32 %v1473, %v1832
  %v1834 = vpop.f32.mrb[0].mxu0
  %1835 = vmatprep.mubr.bf16.mxu0 %v1229
  %1836 = vmatmul.mubr.bf16.gmra.mrb[0].mxu0 %v806
  %v1837 = vpop.f32.mrb[0].mxu0
  %v1838 = vadd.f32 %v1478, %v1837
  %v1839 = vpop.f32.mrb[0].mxu0
  %v1840 = vpop.f32.mrb[0].mxu0
  %v1841 = vadd.f32 %v1481, %v1840
  %v1842 = vpop.f32.mrb[0].mxu0
  %1843 = vmatprep.mubr.bf16.mxu0 %v1232
  %1844 = vmatmul.mubr.bf16.gmra.mrb[0].mxu0 %v810
  %v1845 = vpop.f32.mrb[0].mxu0
  %v1846 = vadd.f32 %v1486, %v1845
  %v1847 = vpop.f32.mrb[0].mxu0
  %v1848 = vpop.f32.mrb[0].mxu0
  %v1849 = vadd.f32 %v1489, %v1848
  %v1850 = vpop.f32.mrb[0].mxu0
  %1851 = vmatprep.mubr.bf16.mxu0 %v1235
  %1852 = vmatmul.mubr.bf16.gmra.mrb[0].mxu0 %v814
  %v1853 = vpop.f32.mrb[0].mxu0
  %v1854 = vadd.f32 %v1494, %v1853
  %v1855 = vpop.f32.mrb[0].mxu0
  %v1856 = vpop.f32.mrb[0].mxu0
  %v1857 = vadd.f32 %v1497, %v1856
  %v1858 = vpop.f32.mrb[0].mxu0
  %1859 = vmatprep.mubr.bf16.mxu0 %v1238
  %1860 = vmatmul.mubr.bf16.gmra.mrb[0].mxu0 %v818
  %v1861 = vpop.f32.mrb[0].mxu0
  %v1862 = vadd.f32 %v1502, %v1861
  %v1863 = vpop.f32.mrb[0].mxu0
  %v1864 = vpop.f32.mrb[0].mxu0
  %v1865 = vadd.f32 %v1505, %v1864
  %v1866 = vpop.f32.mrb[0].mxu0
  %1867 = vmatprep.mubr.bf16.mxu0 %v1241
  %1868 = vmatmul.mubr.bf16.gmra.mrb[0].mxu0 %v822
  %v1869 = vpop.f32.mrb[0].mxu0
  %v1870 = vadd.f32 %v1510, %v1869
  %v1871 = vpop.f32.mrb[0].mxu0
  %v1872 = vpop.f32.mrb[0].mxu0
  %v1873 = vadd.f32 %v1513, %v1872
  %v1874 = vpop.f32.mrb[0].mxu0
  %1875 = vmatprep.mubr.bf16.mxu0 %v1244
  %1876 = vmatmul.mubr.bf16.gmra.mrb[0].mxu0 %v826
  %v1877 = vpop.f32.mrb[0].mxu0
  %v1878 = vadd.f32 %v1518, %v1877
  %v1879 = vpop.f32.mrb[0].mxu0
  %v1880 = vpop.f32.mrb[0].mxu0
  %v1881 = vadd.f32 %v1521, %v1880
  %v1882 = vpop.f32.mrb[0].mxu0
  %1883 = vmatprep.mubr.bf16.mxu0 %v1247
  %1884 = vmatmul.mubr.bf16.gmra.mrb[0].mxu0 %v830
  %v1885 = vpop.f32.mrb[0].mxu0
  %v1886 = vadd.f32 %v1526, %v1885
  %v1887 = vpop.f32.mrb[0].mxu0
  %v1888 = vpop.f32.mrb[0].mxu0
  %v1889 = vadd.f32 %v1529, %v1888
  %v1890 = vpop.f32.mrb[0].mxu0
  %1891 = vmatprep.mubr.bf16.mxu0 %v1250
  %1892 = vmatmul.mubr.bf16.gmra.mrb[0].mxu0 %v834
  %v1893 = vpop.f32.mrb[0].mxu0
  %v1894 = vadd.f32 %v1534, %v1893
  %v1895 = vpop.f32.mrb[0].mxu0
  %v1896 = vpop.f32.mrb[0].mxu0
  %v1897 = vadd.f32 %v1537, %v1896
  %v1898 = vpop.f32.mrb[0].mxu0
  %1899 = vmatprep.mubr.bf16.mxu0 %v1253
  %1900 = vmatmul.mubr.bf16.gmra.mrb[0].mxu0 %v838
  %v1901 = vpop.f32.mrb[0].mxu0
  %v1902 = vadd.f32 %v1542, %v1901
  %v1903 = vpop.f32.mrb[0].mxu0
  %v1904 = vpop.f32.mrb[0].mxu0
  %v1905 = vadd.f32 %v1545, %v1904
  %v1906 = vpop.f32.mrb[0].mxu0
  %1907 = vmatprep.mubr.bf16.mxu0 %v1256
  %1908 = vmatmul.mubr.bf16.gmra.mrb[0].mxu0 %v842
  %v1909 = vpop.f32.mrb[0].mxu0
  %v1910 = vadd.f32 %v1550, %v1909
  %v1911 = vpop.f32.mrb[0].mxu0
  %v1912 = vpop.f32.mrb[0].mxu0
  %v1913 = vadd.f32 %v1553, %v1912
  %v1914 = vpop.f32.mrb[0].mxu0
  %1915 = vmatprep.mubr.bf16.mxu0 %v1259
  %1916 = vmatmul.mubr.bf16.gmra.mrb[0].mxu0 %v846
  %v1917 = vpop.f32.mrb[0].mxu0
  %v1918 = vadd.f32 %v1558, %v1917
  %v1919 = vpop.f32.mrb[0].mxu0
  %v1920 = vpop.f32.mrb[0].mxu0
  %v1921 = vadd.f32 %v1561, %v1920
  %v1922 = vpop.f32.mrb[0].mxu0
  %1923 = vmatprep.mubr.bf16.mxu0 %v1262
  %1924 = vmatmul.mubr.bf16.gmra.mrb[0].mxu0 %v850
  %v1925 = vpop.f32.mrb[0].mxu0
  %v1926 = vadd.f32 %v1566, %v1925
  %v1927 = vpop.f32.mrb[0].mxu0
  %v1928 = vpop.f32.mrb[0].mxu0
  %v1929 = vadd.f32 %v1569, %v1928
  %v1930 = vpop.f32.mrb[0].mxu0
  %1931 = vmatprep.mubr.bf16.mxu0 %v1265
  %1932 = vmatmul.mubr.bf16.gmra.mrb[0].mxu0 %v854
  %v1933 = vpop.f32.mrb[0].mxu0
  %v1934 = vadd.f32 %v1574, %v1933
  %v1935 = vpop.f32.mrb[0].mxu0
  %v1936 = vpop.f32.mrb[0].mxu0
  %v1937 = vadd.f32 %v1577, %v1936
  %v1938 = vpop.f32.mrb[0].mxu0
  %1939 = vmatprep.mubr.bf16.mxu0 %v1268
  %1940 = vmatmul.mubr.bf16.gmra.mrb[0].mxu0 %v858
  %v1941 = vpop.f32.mrb[0].mxu0
  %v1942 = vadd.f32 %v1582, %v1941
  %v1943 = vpop.f32.mrb[0].mxu0
  %v1944 = vpop.f32.mrb[0].mxu0
  %v1945 = vadd.f32 %v1585, %v1944
  %v1946 = vpop.f32.mrb[0].mxu0
  %1947 = vmatprep.mubr.bf16.mxu0 %v1271
  %1948 = vmatmul.mubr.bf16.gmra.mrb[0].mxu0 %v862
  %v1949 = vpop.f32.mrb[0].mxu0
  %v1950 = vadd.f32 %v1590, %v1949
  %v1951 = vpop.f32.mrb[0].mxu0
  %v1952 = vpop.f32.mrb[0].mxu0
  %v1953 = vadd.f32 %v1593, %v1952
  %v1954 = vpop.f32.mrb[0].mxu0
  %1955 = vmatprep.mubr.bf16.mxu0 %v1274
  %1956 = vmatmul.mubr.bf16.gmra.mrb[0].mxu0 %v866
  %v1957 = vpop.f32.mrb[0].mxu0
  %v1958 = vadd.f32 %v1598, %v1957
  %v1959 = vpop.f32.mrb[0].mxu0
  %v1960 = vpop.f32.mrb[0].mxu0
  %v1961 = vadd.f32 %v1601, %v1960
  %v1962 = vpop.f32.mrb[0].mxu0
  %1963 = vmatprep.mubr.bf16.mxu0 %v1277
  %1964 = vmatmul.mubr.bf16.gmra.mrb[0].mxu0 %v870
  %v1965 = vpop.f32.mrb[0].mxu0
  %v1966 = vadd.f32 %v1606, %v1965
  %v1967 = vpop.f32.mrb[0].mxu0
  %v1968 = vpop.f32.mrb[0].mxu0
  %v1969 = vadd.f32 %v1609, %v1968
  %v1970 = vpop.f32.mrb[0].mxu0
  %1971 = vmatprep.mubr.bf16.mxu0 %v1280
  %1972 = vmatmul.mubr.bf16.gmra.mrb[0].mxu0 %v874
  %v1973 = vpop.f32.mrb[0].mxu0
  %v1974 = vadd.f32 %v1614, %v1973
  %v1975 = vpop.f32.mrb[0].mxu0
  %v1976 = vpop.f32.mrb[0].mxu0
  %v1977 = vadd.f32 %v1617, %v1976
  %v1978 = vpop.f32.mrb[0].mxu0
  %1979 = vmatprep.mubr.bf16.mxu0 %v1283
  %1980 = vmatmul.mubr.bf16.gmra.mrb[0].mxu0 %v878
  %v1981 = vpop.f32.mrb[0].mxu0
  %v1982 = vadd.f32 %v1622, %v1981
  %v1983 = vpop.f32.mrb[0].mxu0
  %v1984 = vpop.f32.mrb[0].mxu0
  %v1985 = vadd.f32 %v1625, %v1984
  %v1986 = vpop.f32.mrb[0].mxu0
  %1987 = vmatprep.mubr.bf16.mxu0 %v1286
  %1988 = vmatmul.mubr.bf16.gmra.mrb[0].mxu0 %v882
  %v1989 = vpop.f32.mrb[0].mxu0
  %v1990 = vadd.f32 %v1630, %v1989
  %v1991 = vpop.f32.mrb[0].mxu0
  %v1992 = vpop.f32.mrb[0].mxu0
  %v1993 = vadd.f32 %v1633, %v1992
  %v1994 = vpop.f32.mrb[0].mxu0
  %1995 = vmatprep.mubr.bf16.mxu0 %v1289
  %1996 = vmatmul.mubr.bf16.gmra.mrb[0].mxu0 %v886
  %v1997 = vpop.f32.mrb[0].mxu0
  %v1998 = vadd.f32 %v1638, %v1997
  %v1999 = vpop.f32.mrb[0].mxu0
  %v2000 = vpop.f32.mrb[0].mxu0
  %v2001 = vadd.f32 %v1641, %v2000
  %v2002 = vpop.f32.mrb[0].mxu0
  %2003 = vmatprep.mubr.bf16.mxu0 %v1292
  %2004 = vmatmul.mubr.bf16.gmra.mrb[0].mxu0 %v890
  %v2005 = vpop.f32.mrb[0].mxu0
  %v2006 = vadd.f32 %v1646, %v2005
  %v2007 = vpop.f32.mrb[0].mxu0
  %v2008 = vpop.f32.mrb[0].mxu0
  %v2009 = vadd.f32 %v1649, %v2008
  %v2010 = vpop.f32.mrb[0].mxu0
  %2011 = vmatprep.mubr.bf16.mxu0 %v1295
  %2012 = vmatmul.mubr.bf16.gmra.mrb[0].mxu0 %v894
  %v2013 = vpop.f32.mrb[0].mxu0
  %v2014 = vadd.f32 %v1654, %v2013
  %v2015 = vpop.f32.mrb[0].mxu0
  %v2016 = vpop.f32.mrb[0].mxu0
  %v2017 = vadd.f32 %v1657, %v2016
  %v2018 = vpop.f32.mrb[0].mxu0
  %2019 = vmatprep.mubr.bf16.mxu0 %v1298
  %2020 = vmatmul.mubr.bf16.gmra.mrb[0].mxu0 %v898
  %v2021 = vpop.f32.mrb[0].mxu0
  %v2022 = vadd.f32 %v1662, %v2021
  %v2023 = vpop.f32.mrb[0].mxu0
  %v2024 = vpop.f32.mrb[0].mxu0
  %v2025 = vpop.f32.mrb[0].mxu0
  %2026 = vdwg.mxu0
  %v2027 = vxor.u32 %v1702, 2147483648
  %v2028 = vxor.u32 %v1705, 2147483648
  %v2029 = vxor.u32 %v1710, 2147483648
  %v2030 = vxor.u32 %v1713, 2147483648
  %v2031 = vxor.u32 %v1718, 2147483648
  %v2032 = vxor.u32 %v1721, 2147483648
  %v2033 = vxor.u32 %v1726, 2147483648
  %v2034 = vxor.u32 %v1729, 2147483648
  %v2035 = vxor.u32 %v1734, 2147483648
  %v2036 = vxor.u32 %v1737, 2147483648
  %v2037 = vxor.u32 %v1742, 2147483648
  %v2038 = vxor.u32 %v1745, 2147483648
  %v2039 = vxor.u32 %v1750, 2147483648
  %v2040 = vxor.u32 %v1753, 2147483648
  %v2041 = vxor.u32 %v1758, 2147483648
  %v2042 = vxor.u32 %v1761, 2147483648
  %v2043 = vxor.u32 %v1766, 2147483648
  %v2044 = vxor.u32 %v1769, 2147483648
  %v2045 = vxor.u32 %v1774, 2147483648
  %v2046 = vxor.u32 %v1777, 2147483648
  %v2047 = vxor.u32 %v1782, 2147483648
  %v2048 = vxor.u32 %v1785, 2147483648
  %v2049 = vxor.u32 %v1790, 2147483648
  %v2050 = vxor.u32 %v1793, 2147483648
  %v2051 = vxor.u32 %v1798, 2147483648
  %v2052 = vxor.u32 %v1801, 2147483648
  %v2053 = vxor.u32 %v1806, 2147483648
  %v2054 = vxor.u32 %v1809, 2147483648
  %v2055 = vxor.u32 %v1814, 2147483648
  %v2056 = vxor.u32 %v1817, 2147483648
  %v2057 = vxor.u32 %v1822, 2147483648
  %v2058 = vxor.u32 %v1825, 2147483648
  %v2059 = vxor.u32 %v1830, 2147483648
  %v2060 = vxor.u32 %v1833, 2147483648
  %v2061 = vxor.u32 %v1838, 2147483648
  %v2062 = vxor.u32 %v1841, 2147483648
  %v2063 = vxor.u32 %v1846, 2147483648
  %v2064 = vxor.u32 %v1849, 2147483648
  %v2065 = vxor.u32 %v1854, 2147483648
  %v2066 = vxor.u32 %v1857, 2147483648
  %v2067 = vxor.u32 %v1862, 2147483648
  %v2068 = vxor.u32 %v1865, 2147483648
  %v2069 = vxor.u32 %v1870, 2147483648
  %v2070 = vxor.u32 %v1873, 2147483648
  %v2071 = vxor.u32 %v1878, 2147483648
  %v2072 = vxor.u32 %v1881, 2147483648
  %v2073 = vxor.u32 %v1886, 2147483648
  %v2074 = vxor.u32 %v1889, 2147483648
  %v2075 = vxor.u32 %v1894, 2147483648
  %v2076 = vxor.u32 %v1897, 2147483648
  %v2077 = vxor.u32 %v1902, 2147483648
  %v2078 = vxor.u32 %v1905, 2147483648
  %v2079 = vxor.u32 %v1910, 2147483648
  %v2080 = vxor.u32 %v1913, 2147483648
  %v2081 = vxor.u32 %v1918, 2147483648
  %v2082 = vxor.u32 %v1921, 2147483648
  %v2083 = vxor.u32 %v1926, 2147483648
  %v2084 = vxor.u32 %v1929, 2147483648
  %v2085 = vxor.u32 %v1934, 2147483648
  %v2086 = vxor.u32 %v1937, 2147483648
  %v2087 = vxor.u32 %v1942, 2147483648
  %v2088 = vxor.u32 %v1945, 2147483648
  %v2089 = vxor.u32 %v1950, 2147483648
  %v2090 = vxor.u32 %v1953, 2147483648
  %v2091 = vxor.u32 %v1958, 2147483648
  %v2092 = vxor.u32 %v1961, 2147483648
  %v2093 = vxor.u32 %v1966, 2147483648
  %v2094 = vxor.u32 %v1969, 2147483648
  %v2095 = vxor.u32 %v1974, 2147483648
  %v2096 = vxor.u32 %v1977, 2147483648
  %v2097 = vxor.u32 %v1982, 2147483648
  %v2098 = vxor.u32 %v1985, 2147483648
  %v2099 = vxor.u32 %v1990, 2147483648
  %v2100 = vxor.u32 %v1993, 2147483648
  %v2101 = vxor.u32 %v1998, 2147483648
  %v2102 = vxor.u32 %v2001, 2147483648
  %v2103 = vxor.u32 %v2006, 2147483648
  %v2104 = vxor.u32 %v2009, 2147483648
  %v2105 = vxor.u32 %v2014, 2147483648
  %v2106 = vxor.u32 %v2017, 2147483648
  %v2107 = vxor.u32 %v2022, 2147483648
  %v2108 = vmul.f32 %v2027, 1.442695
  %v2109 = vpow.pop %v2108
  %v2110 = vmul.f32 %v2028, 1.442695
  %v2111 = vpow.pop %v2110
  %v2112 = vmul.f32 %v2029, 1.442695
  %v2113 = vpow.pop %v2112
  %v2114 = vmul.f32 %v2030, 1.442695
  %v2115 = vpow.pop %v2114
  %v2116 = vmul.f32 %v2031, 1.442695
  %v2117 = vpow.pop %v2116
  %v2118 = vmul.f32 %v2032, 1.442695
  %v2119 = vpow.pop %v2118
  %v2120 = vmul.f32 %v2033, 1.442695
  %v2121 = vpow.pop %v2120
  %v2122 = vmul.f32 %v2034, 1.442695
  %v2123 = vpow.pop %v2122
  %v2124 = vmul.f32 %v2035, 1.442695
  %v2125 = vpow.pop %v2124
  %v2126 = vmul.f32 %v2036, 1.442695
  %v2127 = vpow.pop %v2126
  %v2128 = vmul.f32 %v2037, 1.442695
  %v2129 = vpow.pop %v2128
  %v2130 = vmul.f32 %v2038, 1.442695
  %v2131 = vpow.pop %v2130
  %v2132 = vmul.f32 %v2039, 1.442695
  %v2133 = vpow.pop %v2132
  %v2134 = vmul.f32 %v2040, 1.442695
  %v2135 = vpow.pop %v2134
  %v2136 = vmul.f32 %v2041, 1.442695
  %v2137 = vpow.pop %v2136
  %v2138 = vmul.f32 %v2042, 1.442695
  %v2139 = vpow.pop %v2138
  %v2140 = vmul.f32 %v2043, 1.442695
  %v2141 = vpow.pop %v2140
  %v2142 = vmul.f32 %v2044, 1.442695
  %v2143 = vpow.pop %v2142
  %v2144 = vmul.f32 %v2045, 1.442695
  %v2145 = vpow.pop %v2144
  %v2146 = vmul.f32 %v2046, 1.442695
  %v2147 = vpow.pop %v2146
  %v2148 = vmul.f32 %v2047, 1.442695
  %v2149 = vpow.pop %v2148
  %v2150 = vmul.f32 %v2048, 1.442695
  %v2151 = vpow.pop %v2150
  %v2152 = vmul.f32 %v2049, 1.442695
  %v2153 = vpow.pop %v2152
  %v2154 = vmul.f32 %v2050, 1.442695
  %v2155 = vpow.pop %v2154
  %v2156 = vmul.f32 %v2051, 1.442695
  %v2157 = vpow.pop %v2156
  %v2158 = vmul.f32 %v2052, 1.442695
  %v2159 = vpow.pop %v2158
  %v2160 = vmul.f32 %v2053, 1.442695
  %v2161 = vpow.pop %v2160
  %v2162 = vmul.f32 %v2054, 1.442695
  %v2163 = vpow.pop %v2162
  %v2164 = vmul.f32 %v2055, 1.442695
  %v2165 = vpow.pop %v2164
  %v2166 = vmul.f32 %v2056, 1.442695
  %v2167 = vpow.pop %v2166
  %v2168 = vmul.f32 %v2057, 1.442695
  %v2169 = vpow.pop %v2168
  %v2170 = vmul.f32 %v2058, 1.442695
  %v2171 = vpow.pop %v2170
  %v2172 = vmul.f32 %v2059, 1.442695
  %v2173 = vpow.pop %v2172
  %v2174 = vmul.f32 %v2060, 1.442695
  %v2175 = vpow.pop %v2174
  %v2176 = vmul.f32 %v2061, 1.442695
  %v2177 = vpow.pop %v2176
  %v2178 = vmul.f32 %v2062, 1.442695
  %v2179 = vpow.pop %v2178
  %v2180 = vmul.f32 %v2063, 1.442695
  %v2181 = vpow.pop %v2180
  %v2182 = vmul.f32 %v2064, 1.442695
  %v2183 = vpow.pop %v2182
  %v2184 = vmul.f32 %v2065, 1.442695
  %v2185 = vpow.pop %v2184
  %v2186 = vmul.f32 %v2066, 1.442695
  %v2187 = vpow.pop %v2186
  %v2188 = vmul.f32 %v2067, 1.442695
  %v2189 = vpow.pop %v2188
  %v2190 = vmul.f32 %v2068, 1.442695
  %v2191 = vpow.pop %v2190
  %v2192 = vmul.f32 %v2069, 1.442695
  %v2193 = vpow.pop %v2192
  %v2194 = vmul.f32 %v2070, 1.442695
  %v2195 = vpow.pop %v2194
  %v2196 = vmul.f32 %v2071, 1.442695
  %v2197 = vpow.pop %v2196
  %v2198 = vmul.f32 %v2072, 1.442695
  %v2199 = vpow.pop %v2198
  %v2200 = vmul.f32 %v2073, 1.442695
  %v2201 = vpow.pop %v2200
  %v2202 = vmul.f32 %v2074, 1.442695
  %v2203 = vpow.pop %v2202
  %v2204 = vmul.f32 %v2075, 1.442695
  %v2205 = vpow.pop %v2204
  %v2206 = vmul.f32 %v2076, 1.442695
  %v2207 = vpow.pop %v2206
  %v2208 = vmul.f32 %v2077, 1.442695
  %v2209 = vpow.pop %v2208
  %v2210 = vmul.f32 %v2078, 1.442695
  %v2211 = vpow.pop %v2210
  %v2212 = vmul.f32 %v2079, 1.442695
  %v2213 = vpow.pop %v2212
  %v2214 = vmul.f32 %v2080, 1.442695
  %v2215 = vpow.pop %v2214
  %v2216 = vmul.f32 %v2081, 1.442695
  %v2217 = vpow.pop %v2216
  %v2218 = vmul.f32 %v2082, 1.442695
  %v2219 = vpow.pop %v2218
  %v2220 = vmul.f32 %v2083, 1.442695
  %v2221 = vpow.pop %v2220
  %v2222 = vmul.f32 %v2084, 1.442695
  %v2223 = vpow.pop %v2222
  %v2224 = vmul.f32 %v2085, 1.442695
  %v2225 = vpow.pop %v2224
  %v2226 = vmul.f32 %v2086, 1.442695
  %v2227 = vpow.pop %v2226
  %v2228 = vmul.f32 %v2087, 1.442695
  %v2229 = vpow.pop %v2228
  %v2230 = vmul.f32 %v2088, 1.442695
  %v2231 = vpow.pop %v2230
  %v2232 = vmul.f32 %v2089, 1.442695
  %v2233 = vpow.pop %v2232
  %v2234 = vmul.f32 %v2090, 1.442695
  %v2235 = vpow.pop %v2234
  %v2236 = vmul.f32 %v2091, 1.442695
  %v2237 = vpow.pop %v2236
  %v2238 = vmul.f32 %v2092, 1.442695
  %v2239 = vpow.pop %v2238
  %v2240 = vmul.f32 %v2093, 1.442695
  %v2241 = vpow.pop %v2240
  %v2242 = vmul.f32 %v2094, 1.442695
  %v2243 = vpow.pop %v2242
  %v2244 = vmul.f32 %v2095, 1.442695
  %v2245 = vpow.pop %v2244
  %v2246 = vmul.f32 %v2096, 1.442695
  %v2247 = vpow.pop %v2246
  %v2248 = vmul.f32 %v2097, 1.442695
  %v2249 = vpow.pop %v2248
  %v2250 = vmul.f32 %v2098, 1.442695
  %v2251 = vpow.pop %v2250
  %v2252 = vmul.f32 %v2099, 1.442695
  %v2253 = vpow.pop %v2252
  %v2254 = vmul.f32 %v2100, 1.442695
  %v2255 = vpow.pop %v2254
  %v2256 = vmul.f32 %v2101, 1.442695
  %v2257 = vpow.pop %v2256
  %v2258 = vmul.f32 %v2102, 1.442695
  %v2259 = vpow.pop %v2258
  %v2260 = vmul.f32 %v2103, 1.442695
  %v2261 = vpow.pop %v2260
  %v2262 = vmul.f32 %v2104, 1.442695
  %v2263 = vpow.pop %v2262
  %v2264 = vmul.f32 %v2105, 1.442695
  %v2265 = vpow.pop %v2264
  %v2266 = vmul.f32 %v2106, 1.442695
  %v2267 = vpow.pop %v2266
  %v2268 = vmul.f32 %v2107, 1.442695
  %v2269 = vpow.pop %v2268
  %v2270 = vadd.f32 %v2109, 1.0
  %v2271 = vadd.f32 %v2111, 1.0
  %v2272 = vadd.f32 %v2113, 1.0
  %v2273 = vadd.f32 %v2115, 1.0
  %v2274 = vadd.f32 %v2117, 1.0
  %v2275 = vadd.f32 %v2119, 1.0
  %v2276 = vadd.f32 %v2121, 1.0
  %v2277 = vadd.f32 %v2123, 1.0
  %v2278 = vadd.f32 %v2125, 1.0
  %v2279 = vadd.f32 %v2127, 1.0
  %v2280 = vadd.f32 %v2129, 1.0
  %v2281 = vadd.f32 %v2131, 1.0
  %v2282 = vadd.f32 %v2133, 1.0
  %v2283 = vadd.f32 %v2135, 1.0
  %v2284 = vadd.f32 %v2137, 1.0
  %v2285 = vadd.f32 %v2139, 1.0
  %v2286 = vadd.f32 %v2141, 1.0
  %v2287 = vadd.f32 %v2143, 1.0
  %v2288 = vadd.f32 %v2145, 1.0
  %v2289 = vadd.f32 %v2147, 1.0
  %v2290 = vadd.f32 %v2149, 1.0
  %v2291 = vadd.f32 %v2151, 1.0
  %v2292 = vadd.f32 %v2153, 1.0
  %v2293 = vadd.f32 %v2155, 1.0
  %v2294 = vadd.f32 %v2157, 1.0
  %v2295 = vadd.f32 %v2159, 1.0
  %v2296 = vadd.f32 %v2161, 1.0
  %v2297 = vadd.f32 %v2163, 1.0
  %v2298 = vadd.f32 %v2165, 1.0
  %v2299 = vadd.f32 %v2167, 1.0
  %v2300 = vadd.f32 %v2169, 1.0
  %v2301 = vadd.f32 %v2171, 1.0
  %v2302 = vadd.f32 %v2173, 1.0
  %v2303 = vadd.f32 %v2175, 1.0
  %v2304 = vadd.f32 %v2177, 1.0
  %v2305 = vadd.f32 %v2179, 1.0
  %v2306 = vadd.f32 %v2181, 1.0
  %v2307 = vadd.f32 %v2183, 1.0
  %v2308 = vadd.f32 %v2185, 1.0
  %v2309 = vadd.f32 %v2187, 1.0
  %v2310 = vadd.f32 %v2189, 1.0
  %v2311 = vadd.f32 %v2191, 1.0
  %v2312 = vadd.f32 %v2193, 1.0
  %v2313 = vadd.f32 %v2195, 1.0
  %v2314 = vadd.f32 %v2197, 1.0
  %v2315 = vadd.f32 %v2199, 1.0
  %v2316 = vadd.f32 %v2201, 1.0
  %v2317 = vadd.f32 %v2203, 1.0
  %v2318 = vadd.f32 %v2205, 1.0
  %v2319 = vadd.f32 %v2207, 1.0
  %v2320 = vadd.f32 %v2209, 1.0
  %v2321 = vadd.f32 %v2211, 1.0
  %v2322 = vadd.f32 %v2213, 1.0
  %v2323 = vadd.f32 %v2215, 1.0
  %v2324 = vadd.f32 %v2217, 1.0
  %v2325 = vadd.f32 %v2219, 1.0
  %v2326 = vadd.f32 %v2221, 1.0
  %v2327 = vadd.f32 %v2223, 1.0
  %v2328 = vadd.f32 %v2225, 1.0
  %v2329 = vadd.f32 %v2227, 1.0
  %v2330 = vadd.f32 %v2229, 1.0
  %v2331 = vadd.f32 %v2231, 1.0
  %v2332 = vadd.f32 %v2233, 1.0
  %v2333 = vadd.f32 %v2235, 1.0
  %v2334 = vadd.f32 %v2237, 1.0
  %v2335 = vadd.f32 %v2239, 1.0
  %v2336 = vadd.f32 %v2241, 1.0
  %v2337 = vadd.f32 %v2243, 1.0
  %v2338 = vadd.f32 %v2245, 1.0
  %v2339 = vadd.f32 %v2247, 1.0
  %v2340 = vadd.f32 %v2249, 1.0
  %v2341 = vadd.f32 %v2251, 1.0
  %v2342 = vadd.f32 %v2253, 1.0
  %v2343 = vadd.f32 %v2255, 1.0
  %v2344 = vadd.f32 %v2257, 1.0
  %v2345 = vadd.f32 %v2259, 1.0
  %v2346 = vadd.f32 %v2261, 1.0
  %v2347 = vadd.f32 %v2263, 1.0
  %v2348 = vadd.f32 %v2265, 1.0
  %v2349 = vadd.f32 %v2267, 1.0
  %v2350 = vadd.f32 %v2269, 1.0
  %v2351 = vrcp.pop %v2270
  %v2352 = vmul.f32 1.0, %v2351
  %v2353 = vrcp.pop %v2271
  %v2354 = vmul.f32 1.0, %v2353
  %v2355 = vrcp.pop %v2272
  %v2356 = vmul.f32 1.0, %v2355
  %v2357 = vrcp.pop %v2273
  %v2358 = vmul.f32 1.0, %v2357
  %v2359 = vrcp.pop %v2274
  %v2360 = vmul.f32 1.0, %v2359
  %v2361 = vrcp.pop %v2275
  %v2362 = vmul.f32 1.0, %v2361
  %v2363 = vrcp.pop %v2276
  %v2364 = vmul.f32 1.0, %v2363
  %v2365 = vrcp.pop %v2277
  %v2366 = vmul.f32 1.0, %v2365
  %v2367 = vrcp.pop %v2278
  %v2368 = vmul.f32 1.0, %v2367
  %v2369 = vrcp.pop %v2279
  %v2370 = vmul.f32 1.0, %v2369
  %v2371 = vrcp.pop %v2280
  %v2372 = vmul.f32 1.0, %v2371
  %v2373 = vrcp.pop %v2281
  %v2374 = vmul.f32 1.0, %v2373
  %v2375 = vrcp.pop %v2282
  %v2376 = vmul.f32 1.0, %v2375
  %v2377 = vrcp.pop %v2283
  %v2378 = vmul.f32 1.0, %v2377
  %v2379 = vrcp.pop %v2284
  %v2380 = vmul.f32 1.0, %v2379
  %v2381 = vrcp.pop %v2285
  %v2382 = vmul.f32 1.0, %v2381
  %v2383 = vrcp.pop %v2286
  %v2384 = vmul.f32 1.0, %v2383
  %v2385 = vrcp.pop %v2287
  %v2386 = vmul.f32 1.0, %v2385
  %v2387 = vrcp.pop %v2288
  %v2388 = vmul.f32 1.0, %v2387
  %v2389 = vrcp.pop %v2289
  %v2390 = vmul.f32 1.0, %v2389
  %v2391 = vrcp.pop %v2290
  %v2392 = vmul.f32 1.0, %v2391
  %v2393 = vrcp.pop %v2291
  %v2394 = vmul.f32 1.0, %v2393
  %v2395 = vrcp.pop %v2292
  %v2396 = vmul.f32 1.0, %v2395
  %v2397 = vrcp.pop %v2293
  %v2398 = vmul.f32 1.0, %v2397
  %v2399 = vrcp.pop %v2294
  %v2400 = vmul.f32 1.0, %v2399
  %v2401 = vrcp.pop %v2295
  %v2402 = vmul.f32 1.0, %v2401
  %v2403 = vrcp.pop %v2296
  %v2404 = vmul.f32 1.0, %v2403
  %v2405 = vrcp.pop %v2297
  %v2406 = vmul.f32 1.0, %v2405
  %v2407 = vrcp.pop %v2298
  %v2408 = vmul.f32 1.0, %v2407
  %v2409 = vrcp.pop %v2299
  %v2410 = vmul.f32 1.0, %v2409
  %v2411 = vrcp.pop %v2300
  %v2412 = vmul.f32 1.0, %v2411
  %v2413 = vrcp.pop %v2301
  %v2414 = vmul.f32 1.0, %v2413
  %v2415 = vrcp.pop %v2302
  %v2416 = vmul.f32 1.0, %v2415
  %v2417 = vrcp.pop %v2303
  %v2418 = vmul.f32 1.0, %v2417
  %v2419 = vrcp.pop %v2304
  %v2420 = vmul.f32 1.0, %v2419
  %v2421 = vrcp.pop %v2305
  %v2422 = vmul.f32 1.0, %v2421
  %v2423 = vrcp.pop %v2306
  %v2424 = vmul.f32 1.0, %v2423
  %v2425 = vrcp.pop %v2307
  %v2426 = vmul.f32 1.0, %v2425
  %v2427 = vrcp.pop %v2308
  %v2428 = vmul.f32 1.0, %v2427
  %v2429 = vrcp.pop %v2309
  %v2430 = vmul.f32 1.0, %v2429
  %v2431 = vrcp.pop %v2310
  %v2432 = vmul.f32 1.0, %v2431
  %v2433 = vrcp.pop %v2311
  %v2434 = vmul.f32 1.0, %v2433
  %v2435 = vrcp.pop %v2312
  %v2436 = vmul.f32 1.0, %v2435
  %v2437 = vrcp.pop %v2313
  %v2438 = vmul.f32 1.0, %v2437
  %v2439 = vrcp.pop %v2314
  %v2440 = vmul.f32 1.0, %v2439
  %v2441 = vrcp.pop %v2315
  %v2442 = vmul.f32 1.0, %v2441
  %v2443 = vrcp.pop %v2316
  %v2444 = vmul.f32 1.0, %v2443
  %v2445 = vrcp.pop %v2317
  %v2446 = vmul.f32 1.0, %v2445
  %v2447 = vrcp.pop %v2318
  %v2448 = vmul.f32 1.0, %v2447
  %v2449 = vrcp.pop %v2319
  %v2450 = vmul.f32 1.0, %v2449
  %v2451 = vrcp.pop %v2320
  %v2452 = vmul.f32 1.0, %v2451
  %v2453 = vrcp.pop %v2321
  %v2454 = vmul.f32 1.0, %v2453
  %v2455 = vrcp.pop %v2322
  %v2456 = vmul.f32 1.0, %v2455
  %v2457 = vrcp.pop %v2323
  %v2458 = vmul.f32 1.0, %v2457
  %v2459 = vrcp.pop %v2324
  %v2460 = vmul.f32 1.0, %v2459
  %v2461 = vrcp.pop %v2325
  %v2462 = vmul.f32 1.0, %v2461
  %v2463 = vrcp.pop %v2326
  %v2464 = vmul.f32 1.0, %v2463
  %v2465 = vrcp.pop %v2327
  %v2466 = vmul.f32 1.0, %v2465
  %v2467 = vrcp.pop %v2328
  %v2468 = vmul.f32 1.0, %v2467
  %v2469 = vrcp.pop %v2329
  %v2470 = vmul.f32 1.0, %v2469
  %v2471 = vrcp.pop %v2330
  %v2472 = vmul.f32 1.0, %v2471
  %v2473 = vrcp.pop %v2331
  %v2474 = vmul.f32 1.0, %v2473
  %v2475 = vrcp.pop %v2332
  %v2476 = vmul.f32 1.0, %v2475
  %v2477 = vrcp.pop %v2333
  %v2478 = vmul.f32 1.0, %v2477
  %v2479 = vrcp.pop %v2334
  %v2480 = vmul.f32 1.0, %v2479
  %v2481 = vrcp.pop %v2335
  %v2482 = vmul.f32 1.0, %v2481
  %v2483 = vrcp.pop %v2336
  %v2484 = vmul.f32 1.0, %v2483
  %v2485 = vrcp.pop %v2337
  %v2486 = vmul.f32 1.0, %v2485
  %v2487 = vrcp.pop %v2338
  %v2488 = vmul.f32 1.0, %v2487
  %v2489 = vrcp.pop %v2339
  %v2490 = vmul.f32 1.0, %v2489
  %v2491 = vrcp.pop %v2340
  %v2492 = vmul.f32 1.0, %v2491
  %v2493 = vrcp.pop %v2341
  %v2494 = vmul.f32 1.0, %v2493
  %v2495 = vrcp.pop %v2342
  %v2496 = vmul.f32 1.0, %v2495
  %v2497 = vrcp.pop %v2343
  %v2498 = vmul.f32 1.0, %v2497
  %v2499 = vrcp.pop %v2344
  %v2500 = vmul.f32 1.0, %v2499
  %v2501 = vrcp.pop %v2345
  %v2502 = vmul.f32 1.0, %v2501
  %v2503 = vrcp.pop %v2346
  %v2504 = vmul.f32 1.0, %v2503
  %v2505 = vrcp.pop %v2347
  %v2506 = vmul.f32 1.0, %v2505
  %v2507 = vrcp.pop %v2348
  %v2508 = vmul.f32 1.0, %v2507
  %v2509 = vrcp.pop %v2349
  %v2510 = vmul.f32 1.0, %v2509
  %v2511 = vrcp.pop %v2350
  %v2512 = vmul.f32 1.0, %v2511
  %v2513 = vld [vmem:[%s2] sm:$0xff]
  %v2514 = vld [vmem:[%s2 + $0x8] sm:$0xff]
  %v2515 = vld [vmem:[%s2 + $0x10] sm:$0xff]
  %v2516 = vld [vmem:[%s2 + $0x18] sm:$0xff]
  %v2517 = vld [vmem:[%s2 + $0x20] sm:$0xff]
  %v2518 = vld [vmem:[%s2 + $0x28] sm:$0xff]
  %v2519 = vld [vmem:[%s2 + $0x30] sm:$0xff]
  %v2520 = vld [vmem:[%s2 + $0x38] sm:$0xff]
  %v2521 = vld [vmem:[%s2 + $0x40] sm:$0xff]
  %v2522 = vld [vmem:[%s2 + $0x48] sm:$0xff]
  %v2523 = vld [vmem:[%s2 + $0x50] sm:$0xff]
  %v2524 = vld [vmem:[%s2 + $0x58] sm:$0xff]
  %v2525 = vld [vmem:[%s2 + $0x60] sm:$0xff]
  %v2526 = vld [vmem:[%s2 + $0x68] sm:$0xff]
  %v2527 = vld [vmem:[%s2 + $0x70] sm:$0xff]
  %v2528 = vld [vmem:[%s2 + $0x78] sm:$0xff]
  %v2529 = vld [vmem:[%s2 + $0x80] sm:$0xff]
  %v2530 = vld [vmem:[%s2 + $0x88] sm:$0xff]
  %v2531 = vld [vmem:[%s2 + $0x90] sm:$0xff]
  %v2532 = vld [vmem:[%s2 + $0x98] sm:$0xff]
  %v2533 = vld [vmem:[%s2 + $0xa0] sm:$0xff]
  %v2534 = vld [vmem:[%s2 + $0xa8] sm:$0xff]
  %v2535 = vld [vmem:[%s2 + $0xb0] sm:$0xff]
  %v2536 = vld [vmem:[%s2 + $0xb8] sm:$0xff]
  %v2537 = vld [vmem:[%s2 + $0xc0] sm:$0xff]
  %v2538 = vld [vmem:[%s2 + $0xc8] sm:$0xff]
  %v2539 = vld [vmem:[%s2 + $0xd0] sm:$0xff]
  %v2540 = vld [vmem:[%s2 + $0xd8] sm:$0xff]
  %v2541 = vld [vmem:[%s2 + $0xe0] sm:$0xff]
  %v2542 = vld [vmem:[%s2 + $0xe8] sm:$0xff]
  %v2543 = vld [vmem:[%s2 + $0xf0] sm:$0xff]
  %v2544 = vld [vmem:[%s2 + $0xf8] sm:$0xff]
  %v2545 = vld [vmem:[%s2 + $0x100] sm:$0xff]
  %v2546 = vld [vmem:[%s2 + $0x108] sm:$0xff]
  %v2547 = vld [vmem:[%s2 + $0x110] sm:$0xff]
  %v2548 = vld [vmem:[%s2 + $0x118] sm:$0xff]
  %v2549 = vld [vmem:[%s2 + $0x120] sm:$0xff]
  %v2550 = vld [vmem:[%s2 + $0x128] sm:$0xff]
  %v2551 = vld [vmem:[%s2 + $0x130] sm:$0xff]
  %v2552 = vld [vmem:[%s2 + $0x138] sm:$0xff]
  %v2553 = vld [vmem:[%s2 + $0x140] sm:$0xff]
  %v2554 = vld [vmem:[%s2 + $0x148] sm:$0xff]
  %v2555 = vld [vmem:[%s2 + $0x150] sm:$0xff]
  %v2556 = vld [vmem:[%s2 + $0x158] sm:$0xff]
  %v2557 = vld [vmem:[%s2 + $0x160] sm:$0xff]
  %v2558 = vld [vmem:[%s2 + $0x168] sm:$0xff]
  %v2559 = vld [vmem:[%s2 + $0x170] sm:$0xff]
  %v2560 = vld [vmem:[%s2 + $0x178] sm:$0xff]
  %v2561 = vld [vmem:[%s2 + $0x180] sm:$0xff]
  %v2562 = vld [vmem:[%s2 + $0x188] sm:$0xff]
  %v2563 = vld [vmem:[%s2 + $0x190] sm:$0xff]
  %v2564 = vld [vmem:[%s2 + $0x198] sm:$0xff]
  %v2565 = vld [vmem:[%s2 + $0x1a0] sm:$0xff]
  %v2566 = vld [vmem:[%s2 + $0x1a8] sm:$0xff]
  %v2567 = vld [vmem:[%s2 + $0x1b0] sm:$0xff]
  %v2568 = vld [vmem:[%s2 + $0x1b8] sm:$0xff]
  %v2569 = vld [vmem:[%s2 + $0x1c0] sm:$0xff]
  %v2570 = vld [vmem:[%s2 + $0x1c8] sm:$0xff]
  %v2571 = vld [vmem:[%s2 + $0x1d0] sm:$0xff]
  %v2572 = vld [vmem:[%s2 + $0x1d8] sm:$0xff]
  %v2573 = vld [vmem:[%s2 + $0x1e0] sm:$0xff]
  %v2574 = vld [vmem:[%s2 + $0x1e8] sm:$0xff]
  %v2575 = vld [vmem:[%s2 + $0x1f0] sm:$0xff]
  %v2576 = vld [vmem:[%s2 + $0x1f8] sm:$0xff]
  %v2577 = vld [vmem:[%s2 + $0x200] sm:$0xff]
  %v2578 = vld [vmem:[%s2 + $0x208] sm:$0xff]
  %v2579 = vld [vmem:[%s2 + $0x210] sm:$0xff]
  %v2580 = vld [vmem:[%s2 + $0x218] sm:$0xff]
  %v2581 = vld [vmem:[%s2 + $0x220] sm:$0xff]
  %v2582 = vld [vmem:[%s2 + $0x228] sm:$0xff]
  %v2583 = vld [vmem:[%s2 + $0x230] sm:$0xff]
  %v2584 = vld [vmem:[%s2 + $0x238] sm:$0xff]
  %v2585 = vld [vmem:[%s2 + $0x240] sm:$0xff]
  %v2586 = vld [vmem:[%s2 + $0x248] sm:$0xff]
  %v2587 = vld [vmem:[%s2 + $0x250] sm:$0xff]
  %v2588 = vld [vmem:[%s2 + $0x258] sm:$0xff]
  %v2589 = vld [vmem:[%s2 + $0x260] sm:$0xff]
  %v2590 = vld [vmem:[%s2 + $0x268] sm:$0xff]
  %v2591 = vld [vmem:[%s2 + $0x270] sm:$0xff]
  %v2592 = vld [vmem:[%s2 + $0x278] sm:$0xff]
  %v2593 = vld [vmem:[%s2 + $0x280] sm:$0xff]
  %2675 = vrot.lane.b32.xlu0 %v2513, 32
  %v2676 = vpop.permute.xlu0 %2675
  %2677 = vrot.lane.b32.xlu0 %v2514, 32
  %v2678 = vpop.permute.xlu0 %2677
  %2679 = vrot.lane.b32.xlu0 %v2515, 32
  %v2680 = vpop.permute.xlu0 %2679
  %2681 = vrot.lane.b32.xlu0 %v2516, 32
  %v2682 = vpop.permute.xlu0 %2681
  %2683 = vrot.lane.b32.xlu0 %v2517, 32
  %v2684 = vpop.permute.xlu0 %2683
  %2685 = vrot.lane.b32.xlu0 %v2518, 32
  %v2686 = vpop.permute.xlu0 %2685
  %2687 = vrot.lane.b32.xlu0 %v2519, 32
  %v2688 = vpop.permute.xlu0 %2687
  %2689 = vrot.lane.b32.xlu0 %v2520, 32
  %v2690 = vpop.permute.xlu0 %2689
  %2691 = vrot.lane.b32.xlu0 %v2521, 32
  %v2692 = vpop.permute.xlu0 %2691
  %2693 = vrot.lane.b32.xlu0 %v2522, 32
  %v2694 = vpop.permute.xlu0 %2693
  %2695 = vrot.lane.b32.xlu0 %v2523, 32
  %v2696 = vpop.permute.xlu0 %2695
  %2697 = vrot.lane.b32.xlu0 %v2524, 32
  %v2698 = vpop.permute.xlu0 %2697
  %2699 = vrot.lane.b32.xlu0 %v2525, 32
  %v2700 = vpop.permute.xlu0 %2699
  %2701 = vrot.lane.b32.xlu0 %v2526, 32
  %v2702 = vpop.permute.xlu0 %2701
  %2703 = vrot.lane.b32.xlu0 %v2527, 32
  %v2704 = vpop.permute.xlu0 %2703
  %2705 = vrot.lane.b32.xlu0 %v2528, 32
  %v2706 = vpop.permute.xlu0 %2705
  %2707 = vrot.lane.b32.xlu0 %v2529, 32
  %v2708 = vpop.permute.xlu0 %2707
  %2709 = vrot.lane.b32.xlu0 %v2530, 32
  %v2710 = vpop.permute.xlu0 %2709
  %2711 = vrot.lane.b32.xlu0 %v2531, 32
  %v2712 = vpop.permute.xlu0 %2711
  %2713 = vrot.lane.b32.xlu0 %v2532, 32
  %v2714 = vpop.permute.xlu0 %2713
  %2715 = vrot.lane.b32.xlu0 %v2533, 32
  %v2716 = vpop.permute.xlu0 %2715
  %2717 = vrot.lane.b32.xlu0 %v2534, 32
  %v2718 = vpop.permute.xlu0 %2717
  %2719 = vrot.lane.b32.xlu0 %v2535, 32
  %v2720 = vpop.permute.xlu0 %2719
  %2721 = vrot.lane.b32.xlu0 %v2536, 32
  %v2722 = vpop.permute.xlu0 %2721
  %2723 = vrot.lane.b32.xlu0 %v2537, 32
  %v2724 = vpop.permute.xlu0 %2723
  %2725 = vrot.lane.b32.xlu0 %v2538, 32
  %v2726 = vpop.permute.xlu0 %2725
  %2727 = vrot.lane.b32.xlu0 %v2539, 32
  %v2728 = vpop.permute.xlu0 %2727
  %2729 = vrot.lane.b32.xlu0 %v2540, 32
  %v2730 = vpop.permute.xlu0 %2729
  %2731 = vrot.lane.b32.xlu0 %v2541, 32
  %v2732 = vpop.permute.xlu0 %2731
  %2733 = vrot.lane.b32.xlu0 %v2542, 32
  %v2734 = vpop.permute.xlu0 %2733
  %2735 = vrot.lane.b32.xlu0 %v2543, 32
  %v2736 = vpop.permute.xlu0 %2735
  %2737 = vrot.lane.b32.xlu0 %v2544, 32
  %v2738 = vpop.permute.xlu0 %2737
  %2739 = vrot.lane.b32.xlu0 %v2545, 32
  %v2740 = vpop.permute.xlu0 %2739
  %2741 = vrot.lane.b32.xlu0 %v2546, 32
  %v2742 = vpop.permute.xlu0 %2741
  %2743 = vrot.lane.b32.xlu0 %v2547, 32
  %v2744 = vpop.permute.xlu0 %2743
  %2745 = vrot.lane.b32.xlu0 %v2548, 32
  %v2746 = vpop.permute.xlu0 %2745
  %2747 = vrot.lane.b32.xlu0 %v2549, 32
  %v2748 = vpop.permute.xlu0 %2747
  %2749 = vrot.lane.b32.xlu0 %v2550, 32
  %v2750 = vpop.permute.xlu0 %2749
  %2751 = vrot.lane.b32.xlu0 %v2551, 32
  %v2752 = vpop.permute.xlu0 %2751
  %2753 = vrot.lane.b32.xlu0 %v2552, 32
  %v2754 = vpop.permute.xlu0 %2753
  %2755 = vrot.lane.b32.xlu0 %v2553, 32
  %v2756 = vpop.permute.xlu0 %2755
  %2757 = vrot.lane.b32.xlu0 %v2554, 32
  %v2758 = vpop.permute.xlu0 %2757
  %2759 = vrot.lane.b32.xlu0 %v2555, 32
  %v2760 = vpop.permute.xlu0 %2759
  %2761 = vrot.lane.b32.xlu0 %v2556, 32
  %v2762 = vpop.permute.xlu0 %2761
  %2763 = vrot.lane.b32.xlu0 %v2557, 32
  %v2764 = vpop.permute.xlu0 %2763
  %2765 = vrot.lane.b32.xlu0 %v2558, 32
  %v2766 = vpop.permute.xlu0 %2765
  %2767 = vrot.lane.b32.xlu0 %v2559, 32
  %v2768 = vpop.permute.xlu0 %2767
  %2769 = vrot.lane.b32.xlu0 %v2560, 32
  %v2770 = vpop.permute.xlu0 %2769
  %2771 = vrot.lane.b32.xlu0 %v2561, 32
  %v2772 = vpop.permute.xlu0 %2771
  %2773 = vrot.lane.b32.xlu0 %v2562, 32
  %v2774 = vpop.permute.xlu0 %2773
  %2775 = vrot.lane.b32.xlu0 %v2563, 32
  %v2776 = vpop.permute.xlu0 %2775
  %2777 = vrot.lane.b32.xlu0 %v2564, 32
  %v2778 = vpop.permute.xlu0 %2777
  %2779 = vrot.lane.b32.xlu0 %v2565, 32
  %v2780 = vpop.permute.xlu0 %2779
  %2781 = vrot.lane.b32.xlu0 %v2566, 32
  %v2782 = vpop.permute.xlu0 %2781
  %2783 = vrot.lane.b32.xlu0 %v2567, 32
  %v2784 = vpop.permute.xlu0 %2783
  %2785 = vrot.lane.b32.xlu0 %v2568, 32
  %v2786 = vpop.permute.xlu0 %2785
  %2787 = vrot.lane.b32.xlu0 %v2569, 32
  %v2788 = vpop.permute.xlu0 %2787
  %2789 = vrot.lane.b32.xlu0 %v2570, 32
  %v2790 = vpop.permute.xlu0 %2789
  %2791 = vrot.lane.b32.xlu0 %v2571, 32
  %v2792 = vpop.permute.xlu0 %2791
  %2793 = vrot.lane.b32.xlu0 %v2572, 32
  %v2794 = vpop.permute.xlu0 %2793
  %2795 = vrot.lane.b32.xlu0 %v2573, 32
  %v2796 = vpop.permute.xlu0 %2795
  %2797 = vrot.lane.b32.xlu0 %v2574, 32
  %v2798 = vpop.permute.xlu0 %2797
  %2799 = vrot.lane.b32.xlu0 %v2575, 32
  %v2800 = vpop.permute.xlu0 %2799
  %2801 = vrot.lane.b32.xlu0 %v2576, 32
  %v2802 = vpop.permute.xlu0 %2801
  %2803 = vrot.lane.b32.xlu0 %v2577, 32
  %v2804 = vpop.permute.xlu0 %2803
  %2805 = vrot.lane.b32.xlu0 %v2578, 32
  %v2806 = vpop.permute.xlu0 %2805
  %2807 = vrot.lane.b32.xlu0 %v2579, 32
  %v2808 = vpop.permute.xlu0 %2807
  %2809 = vrot.lane.b32.xlu0 %v2580, 32
  %v2810 = vpop.permute.xlu0 %2809
  %2811 = vrot.lane.b32.xlu0 %v2581, 32
  %v2812 = vpop.permute.xlu0 %2811
  %2813 = vrot.lane.b32.xlu0 %v2582, 32
  %v2814 = vpop.permute.xlu0 %2813
  %2815 = vrot.lane.b32.xlu0 %v2583, 32
  %v2816 = vpop.permute.xlu0 %2815
  %2817 = vrot.lane.b32.xlu0 %v2584, 32
  %v2818 = vpop.permute.xlu0 %2817
  %2819 = vrot.lane.b32.xlu0 %v2585, 32
  %v2820 = vpop.permute.xlu0 %2819
  %2821 = vrot.lane.b32.xlu0 %v2586, 32
  %v2822 = vpop.permute.xlu0 %2821
  %2823 = vrot.lane.b32.xlu0 %v2587, 32
  %v2824 = vpop.permute.xlu0 %2823
  %2825 = vrot.lane.b32.xlu0 %v2588, 32
  %v2826 = vpop.permute.xlu0 %2825
  %2827 = vrot.lane.b32.xlu0 %v2589, 32
  %v2828 = vpop.permute.xlu0 %2827
  %2829 = vrot.lane.b32.xlu0 %v2590, 32
  %v2830 = vpop.permute.xlu0 %2829
  %2831 = vrot.lane.b32.xlu0 %v2591, 32
  %v2832 = vpop.permute.xlu0 %2831
  %2833 = vrot.lane.b32.xlu0 %v2592, 32
  %v2834 = vpop.permute.xlu0 %2833
  %2835 = vrot.lane.b32.xlu0 %v2593, 32
  %v2836 = vpop.permute.xlu0 %2835
  %v2918 = vmul.f32 %v2352, %v2676
  %v2919 = vmul.f32 %v2354, %v2678
  %v2920 = vmul.f32 %v2356, %v2680
  %v2921 = vmul.f32 %v2358, %v2682
  %v2922 = vmul.f32 %v2360, %v2684
  %v2923 = vmul.f32 %v2362, %v2686
  %v2924 = vmul.f32 %v2364, %v2688
  %v2925 = vmul.f32 %v2366, %v2690
  %v2926 = vmul.f32 %v2368, %v2692
  %v2927 = vmul.f32 %v2370, %v2694
  %v2928 = vmul.f32 %v2372, %v2696
  %v2929 = vmul.f32 %v2374, %v2698
  %v2930 = vmul.f32 %v2376, %v2700
  %v2931 = vmul.f32 %v2378, %v2702
  %v2932 = vmul.f32 %v2380, %v2704
  %v2933 = vmul.f32 %v2382, %v2706
  %v2934 = vmul.f32 %v2384, %v2708
  %v2935 = vmul.f32 %v2386, %v2710
  %v2936 = vmul.f32 %v2388, %v2712
  %v2937 = vmul.f32 %v2390, %v2714
  %v2938 = vmul.f32 %v2392, %v2716
  %v2939 = vmul.f32 %v2394, %v2718
  %v2940 = vmul.f32 %v2396, %v2720
  %v2941 = vmul.f32 %v2398, %v2722
  %v2942 = vmul.f32 %v2400, %v2724
  %v2943 = vmul.f32 %v2402, %v2726
  %v2944 = vmul.f32 %v2404, %v2728
  %v2945 = vmul.f32 %v2406, %v2730
  %v2946 = vmul.f32 %v2408, %v2732
  %v2947 = vmul.f32 %v2410, %v2734
  %v2948 = vmul.f32 %v2412, %v2736
  %v2949 = vmul.f32 %v2414, %v2738
  %v2950 = vmul.f32 %v2416, %v2740
  %v2951 = vmul.f32 %v2418, %v2742
  %v2952 = vmul.f32 %v2420, %v2744
  %v2953 = vmul.f32 %v2422, %v2746
  %v2954 = vmul.f32 %v2424, %v2748
  %v2955 = vmul.f32 %v2426, %v2750
  %v2956 = vmul.f32 %v2428, %v2752
  %v2957 = vmul.f32 %v2430, %v2754
  %v2958 = vmul.f32 %v2432, %v2756
  %v2959 = vmul.f32 %v2434, %v2758
  %v2960 = vmul.f32 %v2436, %v2760
  %v2961 = vmul.f32 %v2438, %v2762
  %v2962 = vmul.f32 %v2440, %v2764
  %v2963 = vmul.f32 %v2442, %v2766
  %v2964 = vmul.f32 %v2444, %v2768
  %v2965 = vmul.f32 %v2446, %v2770
  %v2966 = vmul.f32 %v2448, %v2772
  %v2967 = vmul.f32 %v2450, %v2774
  %v2968 = vmul.f32 %v2452, %v2776
  %v2969 = vmul.f32 %v2454, %v2778
  %v2970 = vmul.f32 %v2456, %v2780
  %v2971 = vmul.f32 %v2458, %v2782
  %v2972 = vmul.f32 %v2460, %v2784
  %v2973 = vmul.f32 %v2462, %v2786
  %v2974 = vmul.f32 %v2464, %v2788
  %v2975 = vmul.f32 %v2466, %v2790
  %v2976 = vmul.f32 %v2468, %v2792
  %v2977 = vmul.f32 %v2470, %v2794
  %v2978 = vmul.f32 %v2472, %v2796
  %v2979 = vmul.f32 %v2474, %v2798
  %v2980 = vmul.f32 %v2476, %v2800
  %v2981 = vmul.f32 %v2478, %v2802
  %v2982 = vmul.f32 %v2480, %v2804
  %v2983 = vmul.f32 %v2482, %v2806
  %v2984 = vmul.f32 %v2484, %v2808
  %v2985 = vmul.f32 %v2486, %v2810
  %v2986 = vmul.f32 %v2488, %v2812
  %v2987 = vmul.f32 %v2490, %v2814
  %v2988 = vmul.f32 %v2492, %v2816
  %v2989 = vmul.f32 %v2494, %v2818
  %v2990 = vmul.f32 %v2496, %v2820
  %v2991 = vmul.f32 %v2498, %v2822
  %v2992 = vmul.f32 %v2500, %v2824
  %v2993 = vmul.f32 %v2502, %v2826
  %v2994 = vmul.f32 %v2504, %v2828
  %v2995 = vmul.f32 %v2506, %v2830
  %v2996 = vmul.f32 %v2508, %v2832
  %v2997 = vmul.f32 %v2510, %v2834
  %v2998 = vmul.f32 %v2512, %v2836
  %vm2999 = vcmask 261120
  %3000 = vst.msk [vmem:[#allocation2] sm:$0xff] %vm2999, 0.0
  %3001 = vst.msk [vmem:[#allocation2 + $0x8] sm:$0xff] %vm2999, 0.0
  %vm3002 = vcmask 256000
  %3003 = vst.msk [vmem:[#allocation2 + $0x10] sm:$0x7] %vm3002, 0.0
  %3004 = vst.msk [vmem:[#allocation2 + $0x29b] sm:$0xff] %vm2999, 0.0
  %3005 = vst.msk [vmem:[#allocation2 + $0x2a3] sm:$0xff] %vm2999, 0.0
  %3006 = vst.msk [vmem:[#allocation2 + $0x2ab] sm:$0x7] %vm3002, 0.0
  %3088 = vrot.lane.b32.xlu0 %v2918, 96
  %v3089 = vpop.permute.xlu0 %3088
  %3090 = vrot.lane.b32.xlu0 %v2919, 96
  %v3091 = vpop.permute.xlu0 %3090
  %3092 = vrot.lane.b32.xlu0 %v2920, 96
  %v3093 = vpop.permute.xlu0 %3092
  %3094 = vrot.lane.b32.xlu0 %v2921, 96
  %v3095 = vpop.permute.xlu0 %3094
  %3096 = vrot.lane.b32.xlu0 %v2922, 96
  %v3097 = vpop.permute.xlu0 %3096
  %3098 = vrot.lane.b32.xlu0 %v2923, 96
  %v3099 = vpop.permute.xlu0 %3098
  %3100 = vrot.lane.b32.xlu0 %v2924, 96
  %v3101 = vpop.permute.xlu0 %3100
  %3102 = vrot.lane.b32.xlu0 %v2925, 96
  %v3103 = vpop.permute.xlu0 %3102
  %3104 = vrot.lane.b32.xlu0 %v2926, 96
  %v3105 = vpop.permute.xlu0 %3104
  %3106 = vrot.lane.b32.xlu0 %v2927, 96
  %v3107 = vpop.permute.xlu0 %3106
  %3108 = vrot.lane.b32.xlu0 %v2928, 96
  %v3109 = vpop.permute.xlu0 %3108
  %3110 = vrot.lane.b32.xlu0 %v2929, 96
  %v3111 = vpop.permute.xlu0 %3110
  %3112 = vrot.lane.b32.xlu0 %v2930, 96
  %v3113 = vpop.permute.xlu0 %3112
  %3114 = vrot.lane.b32.xlu0 %v2931, 96
  %v3115 = vpop.permute.xlu0 %3114
  %3116 = vrot.lane.b32.xlu0 %v2932, 96
  %v3117 = vpop.permute.xlu0 %3116
  %3118 = vrot.lane.b32.xlu0 %v2933, 96
  %v3119 = vpop.permute.xlu0 %3118
  %3120 = vrot.lane.b32.xlu0 %v2934, 96
  %v3121 = vpop.permute.xlu0 %3120
  %3122 = vrot.lane.b32.xlu0 %v2935, 96
  %v3123 = vpop.permute.xlu0 %3122
  %3124 = vrot.lane.b32.xlu0 %v2936, 96
  %v3125 = vpop.permute.xlu0 %3124
  %3126 = vrot.lane.b32.xlu0 %v2937, 96
  %v3127 = vpop.permute.xlu0 %3126
  %3128 = vrot.lane.b32.xlu0 %v2938, 96
  %v3129 = vpop.permute.xlu0 %3128
  %3130 = vrot.lane.b32.xlu0 %v2939, 96
  %v3131 = vpop.permute.xlu0 %3130
  %3132 = vrot.lane.b32.xlu0 %v2940, 96
  %v3133 = vpop.permute.xlu0 %3132
  %3134 = vrot.lane.b32.xlu0 %v2941, 96
  %v3135 = vpop.permute.xlu0 %3134
  %3136 = vrot.lane.b32.xlu0 %v2942, 96
  %v3137 = vpop.permute.xlu0 %3136
  %3138 = vrot.lane.b32.xlu0 %v2943, 96
  %v3139 = vpop.permute.xlu0 %3138
  %3140 = vrot.lane.b32.xlu0 %v2944, 96
  %v3141 = vpop.permute.xlu0 %3140
  %3142 = vrot.lane.b32.xlu0 %v2945, 96
  %v3143 = vpop.permute.xlu0 %3142
  %3144 = vrot.lane.b32.xlu0 %v2946, 96
  %v3145 = vpop.permute.xlu0 %3144
  %3146 = vrot.lane.b32.xlu0 %v2947, 96
  %v3147 = vpop.permute.xlu0 %3146
  %3148 = vrot.lane.b32.xlu0 %v2948, 96
  %v3149 = vpop.permute.xlu0 %3148
  %3150 = vrot.lane.b32.xlu0 %v2949, 96
  %v3151 = vpop.permute.xlu0 %3150
  %3152 = vrot.lane.b32.xlu0 %v2950, 96
  %v3153 = vpop.permute.xlu0 %3152
  %3154 = vrot.lane.b32.xlu0 %v2951, 96
  %v3155 = vpop.permute.xlu0 %3154
  %3156 = vrot.lane.b32.xlu0 %v2952, 96
  %v3157 = vpop.permute.xlu0 %3156
  %3158 = vrot.lane.b32.xlu0 %v2953, 96
  %v3159 = vpop.permute.xlu0 %3158
  %3160 = vrot.lane.b32.xlu0 %v2954, 96
  %v3161 = vpop.permute.xlu0 %3160
  %3162 = vrot.lane.b32.xlu0 %v2955, 96
  %v3163 = vpop.permute.xlu0 %3162
  %3164 = vrot.lane.b32.xlu0 %v2956, 96
  %v3165 = vpop.permute.xlu0 %3164
  %3166 = vrot.lane.b32.xlu0 %v2957, 96
  %v3167 = vpop.permute.xlu0 %3166
  %3168 = vrot.lane.b32.xlu0 %v2958, 96
  %v3169 = vpop.permute.xlu0 %3168
  %3170 = vrot.lane.b32.xlu0 %v2959, 96
  %v3171 = vpop.permute.xlu0 %3170
  %3172 = vrot.lane.b32.xlu0 %v2960, 96
  %v3173 = vpop.permute.xlu0 %3172
  %3174 = vrot.lane.b32.xlu0 %v2961, 96
  %v3175 = vpop.permute.xlu0 %3174
  %3176 = vrot.lane.b32.xlu0 %v2962, 96
  %v3177 = vpop.permute.xlu0 %3176
  %3178 = vrot.lane.b32.xlu0 %v2963, 96
  %v3179 = vpop.permute.xlu0 %3178
  %3180 = vrot.lane.b32.xlu0 %v2964, 96
  %v3181 = vpop.permute.xlu0 %3180
  %3182 = vrot.lane.b32.xlu0 %v2965, 96
  %v3183 = vpop.permute.xlu0 %3182
  %3184 = vrot.lane.b32.xlu0 %v2966, 96
  %v3185 = vpop.permute.xlu0 %3184
  %3186 = vrot.lane.b32.xlu0 %v2967, 96
  %v3187 = vpop.permute.xlu0 %3186
  %3188 = vrot.lane.b32.xlu0 %v2968, 96
  %v3189 = vpop.permute.xlu0 %3188
  %3190 = vrot.lane.b32.xlu0 %v2969, 96
  %v3191 = vpop.permute.xlu0 %3190
  %3192 = vrot.lane.b32.xlu0 %v2970, 96
  %v3193 = vpop.permute.xlu0 %3192
  %3194 = vrot.lane.b32.xlu0 %v2971, 96
  %v3195 = vpop.permute.xlu0 %3194
  %3196 = vrot.lane.b32.xlu0 %v2972, 96
  %v3197 = vpop.permute.xlu0 %3196
  %3198 = vrot.lane.b32.xlu0 %v2973, 96
  %v3199 = vpop.permute.xlu0 %3198
  %3200 = vrot.lane.b32.xlu0 %v2974, 96
  %v3201 = vpop.permute.xlu0 %3200
  %3202 = vrot.lane.b32.xlu0 %v2975, 96
  %v3203 = vpop.permute.xlu0 %3202
  %3204 = vrot.lane.b32.xlu0 %v2976, 96
  %v3205 = vpop.permute.xlu0 %3204
  %3206 = vrot.lane.b32.xlu0 %v2977, 96
  %v3207 = vpop.permute.xlu0 %3206
  %3208 = vrot.lane.b32.xlu0 %v2978, 96
  %v3209 = vpop.permute.xlu0 %3208
  %3210 = vrot.lane.b32.xlu0 %v2979, 96
  %v3211 = vpop.permute.xlu0 %3210
  %3212 = vrot.lane.b32.xlu0 %v2980, 96
  %v3213 = vpop.permute.xlu0 %3212
  %3214 = vrot.lane.b32.xlu0 %v2981, 96
  %v3215 = vpop.permute.xlu0 %3214
  %3216 = vrot.lane.b32.xlu0 %v2982, 96
  %v3217 = vpop.permute.xlu0 %3216
  %3218 = vrot.lane.b32.xlu0 %v2983, 96
  %v3219 = vpop.permute.xlu0 %3218
  %3220 = vrot.lane.b32.xlu0 %v2984, 96
  %v3221 = vpop.permute.xlu0 %3220
  %3222 = vrot.lane.b32.xlu0 %v2985, 96
  %v3223 = vpop.permute.xlu0 %3222
  %3224 = vrot.lane.b32.xlu0 %v2986, 96
  %v3225 = vpop.permute.xlu0 %3224
  %3226 = vrot.lane.b32.xlu0 %v2987, 96
  %v3227 = vpop.permute.xlu0 %3226
  %3228 = vrot.lane.b32.xlu0 %v2988, 96
  %v3229 = vpop.permute.xlu0 %3228
  %3230 = vrot.lane.b32.xlu0 %v2989, 96
  %v3231 = vpop.permute.xlu0 %3230
  %3232 = vrot.lane.b32.xlu0 %v2990, 96
  %v3233 = vpop.permute.xlu0 %3232
  %3234 = vrot.lane.b32.xlu0 %v2991, 96
  %v3235 = vpop.permute.xlu0 %3234
  %3236 = vrot.lane.b32.xlu0 %v2992, 96
  %v3237 = vpop.permute.xlu0 %3236
  %3238 = vrot.lane.b32.xlu0 %v2993, 96
  %v3239 = vpop.permute.xlu0 %3238
  %3240 = vrot.lane.b32.xlu0 %v2994, 96
  %v3241 = vpop.permute.xlu0 %3240
  %3242 = vrot.lane.b32.xlu0 %v2995, 96
  %v3243 = vpop.permute.xlu0 %3242
  %3244 = vrot.lane.b32.xlu0 %v2996, 96
  %v3245 = vpop.permute.xlu0 %3244
  %3246 = vrot.lane.b32.xlu0 %v2997, 96
  %v3247 = vpop.permute.xlu0 %3246
  %3248 = vrot.lane.b32.xlu0 %v2998, 96
  %v3249 = vpop.permute.xlu0 %3248
  %3331 = vst.msk [vmem:[#allocation2 + $0x13] sm:$0xff] %vm2999, %v3089
  %3332 = vst.msk [vmem:[#allocation2 + $0x1b] sm:$0xff] %vm2999, %v3091
  %3333 = vst.msk [vmem:[#allocation2 + $0x23] sm:$0xff] %vm2999, %v3093
  %3334 = vst.msk [vmem:[#allocation2 + $0x2b] sm:$0xff] %vm2999, %v3095
  %3335 = vst.msk [vmem:[#allocation2 + $0x33] sm:$0xff] %vm2999, %v3097
  %3336 = vst.msk [vmem:[#allocation2 + $0x3b] sm:$0xff] %vm2999, %v3099
  %3337 = vst.msk [vmem:[#allocation2 + $0x43] sm:$0xff] %vm2999, %v3101
  %3338 = vst.msk [vmem:[#allocation2 + $0x4b] sm:$0xff] %vm2999, %v3103
  %3339 = vst.msk [vmem:[#allocation2 + $0x53] sm:$0xff] %vm2999, %v3105
  %3340 = vst.msk [vmem:[#allocation2 + $0x5b] sm:$0xff] %vm2999, %v3107
  %3341 = vst.msk [vmem:[#allocation2 + $0x63] sm:$0xff] %vm2999, %v3109
  %3342 = vst.msk [vmem:[#allocation2 + $0x6b] sm:$0xff] %vm2999, %v3111
  %3343 = vst.msk [vmem:[#allocation2 + $0x73] sm:$0xff] %vm2999, %v3113
  %3344 = vst.msk [vmem:[#allocation2 + $0x7b] sm:$0xff] %vm2999, %v3115
  %3345 = vst.msk [vmem:[#allocation2 + $0x83] sm:$0xff] %vm2999, %v3117
  %3346 = vst.msk [vmem:[#allocation2 + $0x8b] sm:$0xff] %vm2999, %v3119
  %3347 = vst.msk [vmem:[#allocation2 + $0x93] sm:$0xff] %vm2999, %v3121
  %3348 = vst.msk [vmem:[#allocation2 + $0x9b] sm:$0xff] %vm2999, %v3123
  %3349 = vst.msk [vmem:[#allocation2 + $0xa3] sm:$0xff] %vm2999, %v3125
  %3350 = vst.msk [vmem:[#allocation2 + $0xab] sm:$0xff] %vm2999, %v3127
  %3351 = vst.msk [vmem:[#allocation2 + $0xb3] sm:$0xff] %vm2999, %v3129
  %3352 = vst.msk [vmem:[#allocation2 + $0xbb] sm:$0xff] %vm2999, %v3131
  %3353 = vst.msk [vmem:[#allocation2 + $0xc3] sm:$0xff] %vm2999, %v3133
  %3354 = vst.msk [vmem:[#allocation2 + $0xcb] sm:$0xff] %vm2999, %v3135
  %3355 = vst.msk [vmem:[#allocation2 + $0xd3] sm:$0xff] %vm2999, %v3137
  %3356 = vst.msk [vmem:[#allocation2 + $0xdb] sm:$0xff] %vm2999, %v3139
  %3357 = vst.msk [vmem:[#allocation2 + $0xe3] sm:$0xff] %vm2999, %v3141
  %3358 = vst.msk [vmem:[#allocation2 + $0xeb] sm:$0xff] %vm2999, %v3143
  %3359 = vst.msk [vmem:[#allocation2 + $0xf3] sm:$0xff] %vm2999, %v3145
  %3360 = vst.msk [vmem:[#allocation2 + $0xfb] sm:$0xff] %vm2999, %v3147
  %3361 = vst.msk [vmem:[#allocation2 + $0x103] sm:$0xff] %vm2999, %v3149
  %3362 = vst.msk [vmem:[#allocation2 + $0x10b] sm:$0xff] %vm2999, %v3151
  %3363 = vst.msk [vmem:[#allocation2 + $0x113] sm:$0xff] %vm2999, %v3153
  %3364 = vst.msk [vmem:[#allocation2 + $0x11b] sm:$0xff] %vm2999, %v3155
  %3365 = vst.msk [vmem:[#allocation2 + $0x123] sm:$0xff] %vm2999, %v3157
  %3366 = vst.msk [vmem:[#allocation2 + $0x12b] sm:$0xff] %vm2999, %v3159
  %3367 = vst.msk [vmem:[#allocation2 + $0x133] sm:$0xff] %vm2999, %v3161
  %3368 = vst.msk [vmem:[#allocation2 + $0x13b] sm:$0xff] %vm2999, %v3163
  %3369 = vst.msk [vmem:[#allocation2 + $0x143] sm:$0xff] %vm2999, %v3165
  %3370 = vst.msk [vmem:[#allocation2 + $0x14b] sm:$0xff] %vm2999, %v3167
  %3371 = vst.msk [vmem:[#allocation2 + $0x153] sm:$0xff] %vm2999, %v3169
  %3372 = vst.msk [vmem:[#allocation2 + $0x15b] sm:$0xff] %vm2999, %v3171
  %3373 = vst.msk [vmem:[#allocation2 + $0x163] sm:$0xff] %vm2999, %v3173
  %3374 = vst.msk [vmem:[#allocation2 + $0x16b] sm:$0xff] %vm2999, %v3175
  %3375 = vst.msk [vmem:[#allocation2 + $0x173] sm:$0xff] %vm2999, %v3177
  %3376 = vst.msk [vmem:[#allocation2 + $0x17b] sm:$0xff] %vm2999, %v3179
  %3377 = vst.msk [vmem:[#allocation2 + $0x183] sm:$0xff] %vm2999, %v3181
  %3378 = vst.msk [vmem:[#allocation2 + $0x18b] sm:$0xff] %vm2999, %v3183
  %3379 = vst.msk [vmem:[#allocation2 + $0x193] sm:$0xff] %vm2999, %v3185
  %3380 = vst.msk [vmem:[#allocation2 + $0x19b] sm:$0xff] %vm2999, %v3187
  %3381 = vst.msk [vmem:[#allocation2 + $0x1a3] sm:$0xff] %vm2999, %v3189
  %3382 = vst.msk [vmem:[#allocation2 + $0x1ab] sm:$0xff] %vm2999, %v3191
  %3383 = vst.msk [vmem:[#allocation2 + $0x1b3] sm:$0xff] %vm2999, %v3193
  %3384 = vst.msk [vmem:[#allocation2 + $0x1bb] sm:$0xff] %vm2999, %v3195
  %3385 = vst.msk [vmem:[#allocation2 + $0x1c3] sm:$0xff] %vm2999, %v3197
  %3386 = vst.msk [vmem:[#allocation2 + $0x1cb] sm:$0xff] %vm2999, %v3199
  %3387 = vst.msk [vmem:[#allocation2 + $0x1d3] sm:$0xff] %vm2999, %v3201
  %3388 = vst.msk [vmem:[#allocation2 + $0x1db] sm:$0xff] %vm2999, %v3203
  %3389 = vst.msk [vmem:[#allocation2 + $0x1e3] sm:$0xff] %vm2999, %v3205
  %3390 = vst.msk [vmem:[#allocation2 + $0x1eb] sm:$0xff] %vm2999, %v3207
  %3391 = vst.msk [vmem:[#allocation2 + $0x1f3] sm:$0xff] %vm2999, %v3209
  %3392 = vst.msk [vmem:[#allocation2 + $0x1fb] sm:$0xff] %vm2999, %v3211
  %3393 = vst.msk [vmem:[#allocation2 + $0x203] sm:$0xff] %vm2999, %v3213
  %3394 = vst.msk [vmem:[#allocation2 + $0x20b] sm:$0xff] %vm2999, %v3215
  %3395 = vst.msk [vmem:[#allocation2 + $0x213] sm:$0xff] %vm2999, %v3217
  %3396 = vst.msk [vmem:[#allocation2 + $0x21b] sm:$0xff] %vm2999, %v3219
  %3397 = vst.msk [vmem:[#allocation2 + $0x223] sm:$0xff] %vm2999, %v3221
  %3398 = vst.msk [vmem:[#allocation2 + $0x22b] sm:$0xff] %vm2999, %v3223
  %3399 = vst.msk [vmem:[#allocation2 + $0x233] sm:$0xff] %vm2999, %v3225
  %3400 = vst.msk [vmem:[#allocation2 + $0x23b] sm:$0xff] %vm2999, %v3227
  %3401 = vst.msk [vmem:[#allocation2 + $0x243] sm:$0xff] %vm2999, %v3229
  %3402 = vst.msk [vmem:[#allocation2 + $0x24b] sm:$0xff] %vm2999, %v3231
  %3403 = vst.msk [vmem:[#allocation2 + $0x253] sm:$0xff] %vm2999, %v3233
  %3404 = vst.msk [vmem:[#allocation2 + $0x25b] sm:$0xff] %vm2999, %v3235
  %3405 = vst.msk [vmem:[#allocation2 + $0x263] sm:$0xff] %vm2999, %v3237
  %3406 = vst.msk [vmem:[#allocation2 + $0x26b] sm:$0xff] %vm2999, %v3239
  %3407 = vst.msk [vmem:[#allocation2 + $0x273] sm:$0xff] %vm2999, %v3241
  %3408 = vst.msk [vmem:[#allocation2 + $0x27b] sm:$0xff] %vm2999, %v3243
  %3409 = vst.msk [vmem:[#allocation2 + $0x283] sm:$0xff] %vm2999, %v3245
  %3410 = vst.msk [vmem:[#allocation2 + $0x28b] sm:$0xff] %vm2999, %v3247
  %3411 = vst.msk [vmem:[#allocation2 + $0x293] sm:$0xff] %vm2999, %v3249
  %v3412 = vld [vmem:[#allocation2] sm:$0xff]
  %v3413 = vld [vmem:[#allocation2 + $0x8] sm:$0xff]
  %v3414 = vld [vmem:[#allocation2 + $0x10] sm:$0xff]
  %v3415 = vld [vmem:[#allocation2 + $0x18] sm:$0xff]
  %v3416 = vld [vmem:[#allocation2 + $0x20] sm:$0xff]
  %v3417 = vld [vmem:[#allocation2 + $0x28] sm:$0xff]
  %v3418 = vld [vmem:[#allocation2 + $0x30] sm:$0xff]
  %v3419 = vld [vmem:[#allocation2 + $0x38] sm:$0xff]
  %v3420 = vld [vmem:[#allocation2 + $0x40] sm:$0xff]
  %v3421 = vld [vmem:[#allocation2 + $0x48] sm:$0xff]
  %v3422 = vld [vmem:[#allocation2 + $0x50] sm:$0xff]
  %v3423 = vld [vmem:[#allocation2 + $0x58] sm:$0xff]
  %v3424 = vld [vmem:[#allocation2 + $0x60] sm:$0xff]
  %v3425 = vld [vmem:[#allocation2 + $0x68] sm:$0xff]
  %v3426 = vld [vmem:[#allocation2 + $0x70] sm:$0xff]
  %v3427 = vld [vmem:[#allocation2 + $0x78] sm:$0xff]
  %v3428 = vld [vmem:[#allocation2 + $0x80] sm:$0xff]
  %v3429 = vld [vmem:[#allocation2 + $0x88] sm:$0xff]
  %v3430 = vld [vmem:[#allocation2 + $0x90] sm:$0xff]
  %v3431 = vld [vmem:[#allocation2 + $0x98] sm:$0xff]
  %v3432 = vld [vmem:[#allocation2 + $0xa0] sm:$0xff]
  %v3433 = vld [vmem:[#allocation2 + $0xa8] sm:$0xff]
  %v3434 = vld [vmem:[#allocation2 + $0xb0] sm:$0xff]
  %v3435 = vld [vmem:[#allocation2 + $0xb8] sm:$0xff]
  %v3436 = vld [vmem:[#allocation2 + $0xc0] sm:$0xff]
  %v3437 = vld [vmem:[#allocation2 + $0xc8] sm:$0xff]
  %v3438 = vld [vmem:[#allocation2 + $0xd0] sm:$0xff]
  %v3439 = vld [vmem:[#allocation2 + $0xd8] sm:$0xff]
  %v3440 = vld [vmem:[#allocation2 + $0xe0] sm:$0xff]
  %v3441 = vld [vmem:[#allocation2 + $0xe8] sm:$0xff]
  %v3442 = vld [vmem:[#allocation2 + $0xf0] sm:$0xff]
  %v3443 = vld [vmem:[#allocation2 + $0xf8] sm:$0xff]
  %v3444 = vld [vmem:[#allocation2 + $0x100] sm:$0xff]
  %v3445 = vld [vmem:[#allocation2 + $0x108] sm:$0xff]
  %v3446 = vld [vmem:[#allocation2 + $0x110] sm:$0xff]
  %v3447 = vld [vmem:[#allocation2 + $0x118] sm:$0xff]
  %v3448 = vld [vmem:[#allocation2 + $0x120] sm:$0xff]
  %v3449 = vld [vmem:[#allocation2 + $0x128] sm:$0xff]
  %v3450 = vld [vmem:[#allocation2 + $0x130] sm:$0xff]
  %v3451 = vld [vmem:[#allocation2 + $0x138] sm:$0xff]
  %v3452 = vld [vmem:[#allocation2 + $0x140] sm:$0xff]
  %v3453 = vld [vmem:[#allocation2 + $0x148] sm:$0xff]
  %v3454 = vld [vmem:[#allocation2 + $0x150] sm:$0xff]
  %v3455 = vld [vmem:[#allocation2 + $0x158] sm:$0xff]
  %v3456 = vld [vmem:[#allocation2 + $0x160] sm:$0xff]
  %v3457 = vld [vmem:[#allocation2 + $0x168] sm:$0xff]
  %v3458 = vld [vmem:[#allocation2 + $0x170] sm:$0xff]
  %v3459 = vld [vmem:[#allocation2 + $0x178] sm:$0xff]
  %v3460 = vld [vmem:[#allocation2 + $0x180] sm:$0xff]
  %v3461 = vld [vmem:[#allocation2 + $0x188] sm:$0xff]
  %v3462 = vld [vmem:[#allocation2 + $0x190] sm:$0xff]
  %v3463 = vld [vmem:[#allocation2 + $0x198] sm:$0xff]
  %v3464 = vld [vmem:[#allocation2 + $0x1a0] sm:$0xff]
  %v3465 = vld [vmem:[#allocation2 + $0x1a8] sm:$0xff]
  %v3466 = vld [vmem:[#allocation2 + $0x1b0] sm:$0xff]
  %v3467 = vld [vmem:[#allocation2 + $0x1b8] sm:$0xff]
  %v3468 = vld [vmem:[#allocation2 + $0x1c0] sm:$0xff]
  %v3469 = vld [vmem:[#allocation2 + $0x1c8] sm:$0xff]
  %v3470 = vld [vmem:[#allocation2 + $0x1d0] sm:$0xff]
  %v3471 = vld [vmem:[#allocation2 + $0x1d8] sm:$0xff]
  %v3472 = vld [vmem:[#allocation2 + $0x1e0] sm:$0xff]
  %v3473 = vld [vmem:[#allocation2 + $0x1e8] sm:$0xff]
  %v3474 = vld [vmem:[#allocation2 + $0x1f0] sm:$0xff]
  %v3475 = vld [vmem:[#allocation2 + $0x1f8] sm:$0xff]
  %v3476 = vld [vmem:[#allocation2 + $0x200] sm:$0xff]
  %v3477 = vld [vmem:[#allocation2 + $0x208] sm:$0xff]
  %v3478 = vld [vmem:[#allocation2 + $0x210] sm:$0xff]
  %v3479 = vld [vmem:[#allocation2 + $0x218] sm:$0xff]
  %v3480 = vld [vmem:[#allocation2 + $0x220] sm:$0xff]
  %v3481 = vld [vmem:[#allocation2 + $0x228] sm:$0xff]
  %v3482 = vld [vmem:[#allocation2 + $0x230] sm:$0xff]
  %v3483 = vld [vmem:[#allocation2 + $0x238] sm:$0xff]
  %v3484 = vld [vmem:[#allocation2 + $0x240] sm:$0xff]
  %v3485 = vld [vmem:[#allocation2 + $0x248] sm:$0xff]
  %v3486 = vld [vmem:[#allocation2 + $0x250] sm:$0xff]
  %v3487 = vld [vmem:[#allocation2 + $0x258] sm:$0xff]
  %v3488 = vld [vmem:[#allocation2 + $0x260] sm:$0xff]
  %v3489 = vld [vmem:[#allocation2 + $0x268] sm:$0xff]
  %v3490 = vld [vmem:[#allocation2 + $0x270] sm:$0xff]
  %v3491 = vld [vmem:[#allocation2 + $0x278] sm:$0xff]
  %v3492 = vld [vmem:[#allocation2 + $0x280] sm:$0xff]
  %v3493 = vld [vmem:[#allocation2 + $0x1] sm:$0xff]
  %v3494 = vld [vmem:[#allocation2 + $0x9] sm:$0xff]
  %v3495 = vld [vmem:[#allocation2 + $0x11] sm:$0xff]
  %v3496 = vld [vmem:[#allocation2 + $0x19] sm:$0xff]
  %v3497 = vld [vmem:[#allocation2 + $0x21] sm:$0xff]
  %v3498 = vld [vmem:[#allocation2 + $0x29] sm:$0xff]
  %v3499 = vld [vmem:[#allocation2 + $0x31] sm:$0xff]
  %v3500 = vld [vmem:[#allocation2 + $0x39] sm:$0xff]
  %v3501 = vld [vmem:[#allocation2 + $0x41] sm:$0xff]
  %v3502 = vld [vmem:[#allocation2 + $0x49] sm:$0xff]
  %v3503 = vld [vmem:[#allocation2 + $0x51] sm:$0xff]
  %v3504 = vld [vmem:[#allocation2 + $0x59] sm:$0xff]
  %v3505 = vld [vmem:[#allocation2 + $0x61] sm:$0xff]
  %v3506 = vld [vmem:[#allocation2 + $0x69] sm:$0xff]
  %v3507 = vld [vmem:[#allocation2 + $0x71] sm:$0xff]
  %v3508 = vld [vmem:[#allocation2 + $0x79] sm:$0xff]
  %v3509 = vld [vmem:[#allocation2 + $0x81] sm:$0xff]
  %v3510 = vld [vmem:[#allocation2 + $0x89] sm:$0xff]
  %v3511 = vld [vmem:[#allocation2 + $0x91] sm:$0xff]
  %v3512 = vld [vmem:[#allocation2 + $0x99] sm:$0xff]
  %v3513 = vld [vmem:[#allocation2 + $0xa1] sm:$0xff]
  %v3514 = vld [vmem:[#allocation2 + $0xa9] sm:$0xff]
  %v3515 = vld [vmem:[#allocation2 + $0xb1] sm:$0xff]
  %v3516 = vld [vmem:[#allocation2 + $0xb9] sm:$0xff]
  %v3517 = vld [vmem:[#allocation2 + $0xc1] sm:$0xff]
  %v3518 = vld [vmem:[#allocation2 + $0xc9] sm:$0xff]
  %v3519 = vld [vmem:[#allocation2 + $0xd1] sm:$0xff]
  %v3520 = vld [vmem:[#allocation2 + $0xd9] sm:$0xff]
  %v3521 = vld [vmem:[#allocation2 + $0xe1] sm:$0xff]
  %v3522 = vld [vmem:[#allocation2 + $0xe9] sm:$0xff]
  %v3523 = vld [vmem:[#allocation2 + $0xf1] sm:$0xff]
  %v3524 = vld [vmem:[#allocation2 + $0xf9] sm:$0xff]
  %v3525 = vld [vmem:[#allocation2 + $0x101] sm:$0xff]
  %v3526 = vld [vmem:[#allocation2 + $0x109] sm:$0xff]
  %v3527 = vld [vmem:[#allocation2 + $0x111] sm:$0xff]
  %v3528 = vld [vmem:[#allocation2 + $0x119] sm:$0xff]
  %v3529 = vld [vmem:[#allocation2 + $0x121] sm:$0xff]
  %v3530 = vld [vmem:[#allocation2 + $0x129] sm:$0xff]
  %v3531 = vld [vmem:[#allocation2 + $0x131] sm:$0xff]
  %v3532 = vld [vmem:[#allocation2 + $0x139] sm:$0xff]
  %v3533 = vld [vmem:[#allocation2 + $0x141] sm:$0xff]
  %v3534 = vld [vmem:[#allocation2 + $0x149] sm:$0xff]
  %v3535 = vld [vmem:[#allocation2 + $0x151] sm:$0xff]
  %v3536 = vld [vmem:[#allocation2 + $0x159] sm:$0xff]
  %v3537 = vld [vmem:[#allocation2 + $0x161] sm:$0xff]
  %v3538 = vld [vmem:[#allocation2 + $0x169] sm:$0xff]
  %v3539 = vld [vmem:[#allocation2 + $0x171] sm:$0xff]
  %v3540 = vld [vmem:[#allocation2 + $0x179] sm:$0xff]
  %v3541 = vld [vmem:[#allocation2 + $0x181] sm:$0xff]
  %v3542 = vld [vmem:[#allocation2 + $0x189] sm:$0xff]
  %v3543 = vld [vmem:[#allocation2 + $0x191] sm:$0xff]
  %v3544 = vld [vmem:[#allocation2 + $0x199] sm:$0xff]
  %v3545 = vld [vmem:[#allocation2 + $0x1a1] sm:$0xff]
  %v3546 = vld [vmem:[#allocation2 + $0x1a9] sm:$0xff]
  %v3547 = vld [vmem:[#allocation2 + $0x1b1] sm:$0xff]
  %v3548 = vld [vmem:[#allocation2 + $0x1b9] sm:$0xff]
  %v3549 = vld [vmem:[#allocation2 + $0x1c1] sm:$0xff]
  %v3550 = vld [vmem:[#allocation2 + $0x1c9] sm:$0xff]
  %v3551 = vld [vmem:[#allocation2 + $0x1d1] sm:$0xff]
  %v3552 = vld [vmem:[#allocation2 + $0x1d9] sm:$0xff]
  %v3553 = vld [vmem:[#allocation2 + $0x1e1] sm:$0xff]
  %v3554 = vld [vmem:[#allocation2 + $0x1e9] sm:$0xff]
  %v3555 = vld [vmem:[#allocation2 + $0x1f1] sm:$0xff]
  %v3556 = vld [vmem:[#allocation2 + $0x1f9] sm:$0xff]
  %v3557 = vld [vmem:[#allocation2 + $0x201] sm:$0xff]
  %v3558 = vld [vmem:[#allocation2 + $0x209] sm:$0xff]
  %v3559 = vld [vmem:[#allocation2 + $0x211] sm:$0xff]
  %v3560 = vld [vmem:[#allocation2 + $0x219] sm:$0xff]
  %v3561 = vld [vmem:[#allocation2 + $0x221] sm:$0xff]
  %v3562 = vld [vmem:[#allocation2 + $0x229] sm:$0xff]
  %v3563 = vld [vmem:[#allocation2 + $0x231] sm:$0xff]
  %v3564 = vld [vmem:[#allocation2 + $0x239] sm:$0xff]
  %v3565 = vld [vmem:[#allocation2 + $0x241] sm:$0xff]
  %v3566 = vld [vmem:[#allocation2 + $0x249] sm:$0xff]
  %v3567 = vld [vmem:[#allocation2 + $0x251] sm:$0xff]
  %v3568 = vld [vmem:[#allocation2 + $0x259] sm:$0xff]
  %v3569 = vld [vmem:[#allocation2 + $0x261] sm:$0xff]
  %v3570 = vld [vmem:[#allocation2 + $0x269] sm:$0xff]
  %v3571 = vld [vmem:[#allocation2 + $0x271] sm:$0xff]
  %v3572 = vld [vmem:[#allocation2 + $0x279] sm:$0xff]
  %v3573 = vld [vmem:[#allocation2 + $0x281] sm:$0xff]
  %v3574 = vld [vmem:[#allocation2 + $0x2] sm:$0xff]
  %v3575 = vld [vmem:[#allocation2 + $0xa] sm:$0xff]
  %v3576 = vld [vmem:[#allocation2 + $0x12] sm:$0xff]
  %v3577 = vld [vmem:[#allocation2 + $0x1a] sm:$0xff]
  %v3578 = vld [vmem:[#allocation2 + $0x22] sm:$0xff]
  %v3579 = vld [vmem:[#allocation2 + $0x2a] sm:$0xff]
  %v3580 = vld [vmem:[#allocation2 + $0x32] sm:$0xff]
  %v3581 = vld [vmem:[#allocation2 + $0x3a] sm:$0xff]
  %v3582 = vld [vmem:[#allocation2 + $0x42] sm:$0xff]
  %v3583 = vld [vmem:[#allocation2 + $0x4a] sm:$0xff]
  %v3584 = vld [vmem:[#allocation2 + $0x52] sm:$0xff]
  %v3585 = vld [vmem:[#allocation2 + $0x5a] sm:$0xff]
  %v3586 = vld [vmem:[#allocation2 + $0x62] sm:$0xff]
  %v3587 = vld [vmem:[#allocation2 + $0x6a] sm:$0xff]
  %v3588 = vld [vmem:[#allocation2 + $0x72] sm:$0xff]
  %v3589 = vld [vmem:[#allocation2 + $0x7a] sm:$0xff]
  %v3590 = vld [vmem:[#allocation2 + $0x82] sm:$0xff]
  %v3591 = vld [vmem:[#allocation2 + $0x8a] sm:$0xff]
  %v3592 = vld [vmem:[#allocation2 + $0x92] sm:$0xff]
  %v3593 = vld [vmem:[#allocation2 + $0x9a] sm:$0xff]
  %v3594 = vld [vmem:[#allocation2 + $0xa2] sm:$0xff]
  %v3595 = vld [vmem:[#allocation2 + $0xaa] sm:$0xff]
  %v3596 = vld [vmem:[#allocation2 + $0xb2] sm:$0xff]
  %v3597 = vld [vmem:[#allocation2 + $0xba] sm:$0xff]
  %v3598 = vld [vmem:[#allocation2 + $0xc2] sm:$0xff]
  %v3599 = vld [vmem:[#allocation2 + $0xca] sm:$0xff]
  %v3600 = vld [vmem:[#allocation2 + $0xd2] sm:$0xff]
  %v3601 = vld [vmem:[#allocation2 + $0xda] sm:$0xff]
  %v3602 = vld [vmem:[#allocation2 + $0xe2] sm:$0xff]
  %v3603 = vld [vmem:[#allocation2 + $0xea] sm:$0xff]
  %v3604 = vld [vmem:[#allocation2 + $0xf2] sm:$0xff]
  %v3605 = vld [vmem:[#allocation2 + $0xfa] sm:$0xff]
  %v3606 = vld [vmem:[#allocation2 + $0x102] sm:$0xff]
  %v3607 = vld [vmem:[#allocation2 + $0x10a] sm:$0xff]
  %v3608 = vld [vmem:[#allocation2 + $0x112] sm:$0xff]
  %v3609 = vld [vmem:[#allocation2 + $0x11a] sm:$0xff]
  %v3610 = vld [vmem:[#allocation2 + $0x122] sm:$0xff]
  %v3611 = vld [vmem:[#allocation2 + $0x12a] sm:$0xff]
  %v3612 = vld [vmem:[#allocation2 + $0x132] sm:$0xff]
  %v3613 = vld [vmem:[#allocation2 + $0x13a] sm:$0xff]
  %v3614 = vld [vmem:[#allocation2 + $0x142] sm:$0xff]
  %v3615 = vld [vmem:[#allocation2 + $0x14a] sm:$0xff]
  %v3616 = vld [vmem:[#allocation2 + $0x152] sm:$0xff]
  %v3617 = vld [vmem:[#allocation2 + $0x15a] sm:$0xff]
  %v3618 = vld [vmem:[#allocation2 + $0x162] sm:$0xff]
  %v3619 = vld [vmem:[#allocation2 + $0x16a] sm:$0xff]
  %v3620 = vld [vmem:[#allocation2 + $0x172] sm:$0xff]
  %v3621 = vld [vmem:[#allocation2 + $0x17a] sm:$0xff]
  %v3622 = vld [vmem:[#allocation2 + $0x182] sm:$0xff]
  %v3623 = vld [vmem:[#allocation2 + $0x18a] sm:$0xff]
  %v3624 = vld [vmem:[#allocation2 + $0x192] sm:$0xff]
  %v3625 = vld [vmem:[#allocation2 + $0x19a] sm:$0xff]
  %v3626 = vld [vmem:[#allocation2 + $0x1a2] sm:$0xff]
  %v3627 = vld [vmem:[#allocation2 + $0x1aa] sm:$0xff]
  %v3628 = vld [vmem:[#allocation2 + $0x1b2] sm:$0xff]
  %v3629 = vld [vmem:[#allocation2 + $0x1ba] sm:$0xff]
  %v3630 = vld [vmem:[#allocation2 + $0x1c2] sm:$0xff]
  %v3631 = vld [vmem:[#allocation2 + $0x1ca] sm:$0xff]
  %v3632 = vld [vmem:[#allocation2 + $0x1d2] sm:$0xff]
  %v3633 = vld [vmem:[#allocation2 + $0x1da] sm:$0xff]
  %v3634 = vld [vmem:[#allocation2 + $0x1e2] sm:$0xff]
  %v3635 = vld [vmem:[#allocation2 + $0x1ea] sm:$0xff]
  %v3636 = vld [vmem:[#allocation2 + $0x1f2] sm:$0xff]
  %v3637 = vld [vmem:[#allocation2 + $0x1fa] sm:$0xff]
  %v3638 = vld [vmem:[#allocation2 + $0x202] sm:$0xff]
  %v3639 = vld [vmem:[#allocation2 + $0x20a] sm:$0xff]
  %v3640 = vld [vmem:[#allocation2 + $0x212] sm:$0xff]
  %v3641 = vld [vmem:[#allocation2 + $0x21a] sm:$0xff]
  %v3642 = vld [vmem:[#allocation2 + $0x222] sm:$0xff]
  %v3643 = vld [vmem:[#allocation2 + $0x22a] sm:$0xff]
  %v3644 = vld [vmem:[#allocation2 + $0x232] sm:$0xff]
  %v3645 = vld [vmem:[#allocation2 + $0x23a] sm:$0xff]
  %v3646 = vld [vmem:[#allocation2 + $0x242] sm:$0xff]
  %v3647 = vld [vmem:[#allocation2 + $0x24a] sm:$0xff]
  %v3648 = vld [vmem:[#allocation2 + $0x252] sm:$0xff]
  %v3649 = vld [vmem:[#allocation2 + $0x25a] sm:$0xff]
  %v3650 = vld [vmem:[#allocation2 + $0x262] sm:$0xff]
  %v3651 = vld [vmem:[#allocation2 + $0x26a] sm:$0xff]
  %v3652 = vld [vmem:[#allocation2 + $0x272] sm:$0xff]
  %v3653 = vld [vmem:[#allocation2 + $0x27a] sm:$0xff]
  %v3654 = vld [vmem:[#allocation2 + $0x282] sm:$0xff]
  %v3655 = vld [vmem:[#allocation2 + $0x28a] sm:$0xff]
  %v3656 = vld [vmem:[#allocation2 + $0x292] sm:$0xff]
  %v3657 = vld [vmem:[#allocation2 + $0x13] sm:$0xff]
  %v3658 = vld [vmem:[#allocation2 + $0x1b] sm:$0xff]
  %v3659 = vld [vmem:[#allocation2 + $0x23] sm:$0xff]
  %v3660 = vld [vmem:[#allocation2 + $0x2b] sm:$0xff]
  %v3661 = vld [vmem:[#allocation2 + $0x33] sm:$0xff]
  %v3662 = vld [vmem:[#allocation2 + $0x3b] sm:$0xff]
  %v3663 = vld [vmem:[#allocation2 + $0x43] sm:$0xff]
  %v3664 = vld [vmem:[#allocation2 + $0x4b] sm:$0xff]
  %v3665 = vld [vmem:[#allocation2 + $0x53] sm:$0xff]
  %v3666 = vld [vmem:[#allocation2 + $0x5b] sm:$0xff]
  %v3667 = vld [vmem:[#allocation2 + $0x63] sm:$0xff]
  %v3668 = vld [vmem:[#allocation2 + $0x6b] sm:$0xff]
  %v3669 = vld [vmem:[#allocation2 + $0x73] sm:$0xff]
  %v3670 = vld [vmem:[#allocation2 + $0x7b] sm:$0xff]
  %v3671 = vld [vmem:[#allocation2 + $0x83] sm:$0xff]
  %v3672 = vld [vmem:[#allocation2 + $0x8b] sm:$0xff]
  %v3673 = vld [vmem:[#allocation2 + $0x93] sm:$0xff]
  %v3674 = vld [vmem:[#allocation2 + $0x9b] sm:$0xff]
  %v3675 = vld [vmem:[#allocation2 + $0xa3] sm:$0xff]
  %v3676 = vld [vmem:[#allocation2 + $0xab] sm:$0xff]
  %v3677 = vld [vmem:[#allocation2 + $0xb3] sm:$0xff]
  %v3678 = vld [vmem:[#allocation2 + $0xbb] sm:$0xff]
  %v3679 = vld [vmem:[#allocation2 + $0xc3] sm:$0xff]
  %v3680 = vld [vmem:[#allocation2 + $0xcb] sm:$0xff]
  %v3681 = vld [vmem:[#allocation2 + $0xd3] sm:$0xff]
  %v3682 = vld [vmem:[#allocation2 + $0xdb] sm:$0xff]
  %v3683 = vld [vmem:[#allocation2 + $0xe3] sm:$0xff]
  %v3684 = vld [vmem:[#allocation2 + $0xeb] sm:$0xff]
  %v3685 = vld [vmem:[#allocation2 + $0xf3] sm:$0xff]
  %v3686 = vld [vmem:[#allocation2 + $0xfb] sm:$0xff]
  %v3687 = vld [vmem:[#allocation2 + $0x103] sm:$0xff]
  %v3688 = vld [vmem:[#allocation2 + $0x10b] sm:$0xff]
  %v3689 = vld [vmem:[#allocation2 + $0x113] sm:$0xff]
  %v3690 = vld [vmem:[#allocation2 + $0x11b] sm:$0xff]
  %v3691 = vld [vmem:[#allocation2 + $0x123] sm:$0xff]
  %v3692 = vld [vmem:[#allocation2 + $0x12b] sm:$0xff]
  %v3693 = vld [vmem:[#allocation2 + $0x133] sm:$0xff]
  %v3694 = vld [vmem:[#allocation2 + $0x13b] sm:$0xff]
  %v3695 = vld [vmem:[#allocation2 + $0x143] sm:$0xff]
  %v3696 = vld [vmem:[#allocation2 + $0x14b] sm:$0xff]
  %v3697 = vld [vmem:[#allocation2 + $0x153] sm:$0xff]
  %v3698 = vld [vmem:[#allocation2 + $0x15b] sm:$0xff]
  %v3699 = vld [vmem:[#allocation2 + $0x163] sm:$0xff]
  %v3700 = vld [vmem:[#allocation2 + $0x16b] sm:$0xff]
  %v3701 = vld [vmem:[#allocation2 + $0x173] sm:$0xff]
  %v3702 = vld [vmem:[#allocation2 + $0x17b] sm:$0xff]
  %v3703 = vld [vmem:[#allocation2 + $0x183] sm:$0xff]
  %v3704 = vld [vmem:[#allocation2 + $0x18b] sm:$0xff]
  %v3705 = vld [vmem:[#allocation2 + $0x193] sm:$0xff]
  %v3706 = vld [vmem:[#allocation2 + $0x19b] sm:$0xff]
  %v3707 = vld [vmem:[#allocation2 + $0x1a3] sm:$0xff]
  %v3708 = vld [vmem:[#allocation2 + $0x1ab] sm:$0xff]
  %v3709 = vld [vmem:[#allocation2 + $0x1b3] sm:$0xff]
  %v3710 = vld [vmem:[#allocation2 + $0x1bb] sm:$0xff]
  %v3711 = vld [vmem:[#allocation2 + $0x1c3] sm:$0xff]
  %v3712 = vld [vmem:[#allocation2 + $0x1cb] sm:$0xff]
  %v3713 = vld [vmem:[#allocation2 + $0x1d3] sm:$0xff]
  %v3714 = vld [vmem:[#allocation2 + $0x1db] sm:$0xff]
  %v3715 = vld [vmem:[#allocation2 + $0x1e3] sm:$0xff]
  %v3716 = vld [vmem:[#allocation2 + $0x1eb] sm:$0xff]
  %v3717 = vld [vmem:[#allocation2 + $0x1f3] sm:$0xff]
  %v3718 = vld [vmem:[#allocation2 + $0x1fb] sm:$0xff]
  %v3719 = vld [vmem:[#allocation2 + $0x203] sm:$0xff]
  %v3720 = vld [vmem:[#allocation2 + $0x20b] sm:$0xff]
  %v3721 = vld [vmem:[#allocation2 + $0x213] sm:$0xff]
  %v3722 = vld [vmem:[#allocation2 + $0x21b] sm:$0xff]
  %v3723 = vld [vmem:[#allocation2 + $0x223] sm:$0xff]
  %v3724 = vld [vmem:[#allocation2 + $0x22b] sm:$0xff]
  %v3725 = vld [vmem:[#allocation2 + $0x233] sm:$0xff]
  %v3726 = vld [vmem:[#allocation2 + $0x23b] sm:$0xff]
  %v3727 = vld [vmem:[#allocation2 + $0x243] sm:$0xff]
  %v3728 = vld [vmem:[#allocation2 + $0x24b] sm:$0xff]
  %v3729 = vld [vmem:[#allocation2 + $0x253] sm:$0xff]
  %v3730 = vld [vmem:[#allocation2 + $0x25b] sm:$0xff]
  %v3731 = vld [vmem:[#allocation2 + $0x263] sm:$0xff]
  %v3732 = vld [vmem:[#allocation2 + $0x26b] sm:$0xff]
  %v3733 = vld [vmem:[#allocation2 + $0x273] sm:$0xff]
  %v3734 = vld [vmem:[#allocation2 + $0x27b] sm:$0xff]
  %v3735 = vld [vmem:[#allocation2 + $0x283] sm:$0xff]
  %v3736 = vld [vmem:[#allocation2 + $0x28b] sm:$0xff]
  %v3737 = vld [vmem:[#allocation2 + $0x293] sm:$0xff]
  %v3738 = vld [vmem:[#allocation2 + $0x14] sm:$0xff]
  %v3739 = vld [vmem:[#allocation2 + $0x1c] sm:$0xff]
  %v3740 = vld [vmem:[#allocation2 + $0x24] sm:$0xff]
  %v3741 = vld [vmem:[#allocation2 + $0x2c] sm:$0xff]
  %v3742 = vld [vmem:[#allocation2 + $0x34] sm:$0xff]
  %v3743 = vld [vmem:[#allocation2 + $0x3c] sm:$0xff]
  %v3744 = vld [vmem:[#allocation2 + $0x44] sm:$0xff]
  %v3745 = vld [vmem:[#allocation2 + $0x4c] sm:$0xff]
  %v3746 = vld [vmem:[#allocation2 + $0x54] sm:$0xff]
  %v3747 = vld [vmem:[#allocation2 + $0x5c] sm:$0xff]
  %v3748 = vld [vmem:[#allocation2 + $0x64] sm:$0xff]
  %v3749 = vld [vmem:[#allocation2 + $0x6c] sm:$0xff]
  %v3750 = vld [vmem:[#allocation2 + $0x74] sm:$0xff]
  %v3751 = vld [vmem:[#allocation2 + $0x7c] sm:$0xff]
  %v3752 = vld [vmem:[#allocation2 + $0x84] sm:$0xff]
  %v3753 = vld [vmem:[#allocation2 + $0x8c] sm:$0xff]
  %v3754 = vld [vmem:[#allocation2 + $0x94] sm:$0xff]
  %v3755 = vld [vmem:[#allocation2 + $0x9c] sm:$0xff]
  %v3756 = vld [vmem:[#allocation2 + $0xa4] sm:$0xff]
  %v3757 = vld [vmem:[#allocation2 + $0xac] sm:$0xff]
  %v3758 = vld [vmem:[#allocation2 + $0xb4] sm:$0xff]
  %v3759 = vld [vmem:[#allocation2 + $0xbc] sm:$0xff]
  %v3760 = vld [vmem:[#allocation2 + $0xc4] sm:$0xff]
  %v3761 = vld [vmem:[#allocation2 + $0xcc] sm:$0xff]
  %v3762 = vld [vmem:[#allocation2 + $0xd4] sm:$0xff]
  %v3763 = vld [vmem:[#allocation2 + $0xdc] sm:$0xff]
  %v3764 = vld [vmem:[#allocation2 + $0xe4] sm:$0xff]
  %v3765 = vld [vmem:[#allocation2 + $0xec] sm:$0xff]
  %v3766 = vld [vmem:[#allocation2 + $0xf4] sm:$0xff]
  %v3767 = vld [vmem:[#allocation2 + $0xfc] sm:$0xff]
  %v3768 = vld [vmem:[#allocation2 + $0x104] sm:$0xff]
  %v3769 = vld [vmem:[#allocation2 + $0x10c] sm:$0xff]
  %v3770 = vld [vmem:[#allocation2 + $0x114] sm:$0xff]
  %v3771 = vld [vmem:[#allocation2 + $0x11c] sm:$0xff]
  %v3772 = vld [vmem:[#allocation2 + $0x124] sm:$0xff]
  %v3773 = vld [vmem:[#allocation2 + $0x12c] sm:$0xff]
  %v3774 = vld [vmem:[#allocation2 + $0x134] sm:$0xff]
  %v3775 = vld [vmem:[#allocation2 + $0x13c] sm:$0xff]
  %v3776 = vld [vmem:[#allocation2 + $0x144] sm:$0xff]
  %v3777 = vld [vmem:[#allocation2 + $0x14c] sm:$0xff]
  %v3778 = vld [vmem:[#allocation2 + $0x154] sm:$0xff]
  %v3779 = vld [vmem:[#allocation2 + $0x15c] sm:$0xff]
  %v3780 = vld [vmem:[#allocation2 + $0x164] sm:$0xff]
  %v3781 = vld [vmem:[#allocation2 + $0x16c] sm:$0xff]
  %v3782 = vld [vmem:[#allocation2 + $0x174] sm:$0xff]
  %v3783 = vld [vmem:[#allocation2 + $0x17c] sm:$0xff]
  %v3784 = vld [vmem:[#allocation2 + $0x184] sm:$0xff]
  %v3785 = vld [vmem:[#allocation2 + $0x18c] sm:$0xff]
  %v3786 = vld [vmem:[#allocation2 + $0x194] sm:$0xff]
  %v3787 = vld [vmem:[#allocation2 + $0x19c] sm:$0xff]
  %v3788 = vld [vmem:[#allocation2 + $0x1a4] sm:$0xff]
  %v3789 = vld [vmem:[#allocation2 + $0x1ac] sm:$0xff]
  %v3790 = vld [vmem:[#allocation2 + $0x1b4] sm:$0xff]
  %v3791 = vld [vmem:[#allocation2 + $0x1bc] sm:$0xff]
  %v3792 = vld [vmem:[#allocation2 + $0x1c4] sm:$0xff]
  %v3793 = vld [vmem:[#allocation2 + $0x1cc] sm:$0xff]
  %v3794 = vld [vmem:[#allocation2 + $0x1d4] sm:$0xff]
  %v3795 = vld [vmem:[#allocation2 + $0x1dc] sm:$0xff]
  %v3796 = vld [vmem:[#allocation2 + $0x1e4] sm:$0xff]
  %v3797 = vld [vmem:[#allocation2 + $0x1ec] sm:$0xff]
  %v3798 = vld [vmem:[#allocation2 + $0x1f4] sm:$0xff]
  %v3799 = vld [vmem:[#allocation2 + $0x1fc] sm:$0xff]
  %v3800 = vld [vmem:[#allocation2 + $0x204] sm:$0xff]
  %v3801 = vld [vmem:[#allocation2 + $0x20c] sm:$0xff]
  %v3802 = vld [vmem:[#allocation2 + $0x214] sm:$0xff]
  %v3803 = vld [vmem:[#allocation2 + $0x21c] sm:$0xff]
  %v3804 = vld [vmem:[#allocation2 + $0x224] sm:$0xff]
  %v3805 = vld [vmem:[#allocation2 + $0x22c] sm:$0xff]
  %v3806 = vld [vmem:[#allocation2 + $0x234] sm:$0xff]
  %v3807 = vld [vmem:[#allocation2 + $0x23c] sm:$0xff]
  %v3808 = vld [vmem:[#allocation2 + $0x244] sm:$0xff]
  %v3809 = vld [vmem:[#allocation2 + $0x24c] sm:$0xff]
  %v3810 = vld [vmem:[#allocation2 + $0x254] sm:$0xff]
  %v3811 = vld [vmem:[#allocation2 + $0x25c] sm:$0xff]
  %v3812 = vld [vmem:[#allocation2 + $0x264] sm:$0xff]
  %v3813 = vld [vmem:[#allocation2 + $0x26c] sm:$0xff]
  %v3814 = vld [vmem:[#allocation2 + $0x274] sm:$0xff]
  %v3815 = vld [vmem:[#allocation2 + $0x27c] sm:$0xff]
  %v3816 = vld [vmem:[#allocation2 + $0x284] sm:$0xff]
  %v3817 = vld [vmem:[#allocation2 + $0x28c] sm:$0xff]
  %v3818 = vld [vmem:[#allocation2 + $0x294] sm:$0xff]
  %v3819 = vld [vmem:[#allocation2 + $0x29c] sm:$0xff]
  %v3820 = vld [vmem:[#allocation2 + $0x2a4] sm:$0xff]
  %v3821 = vld [vmem:[#allocation2 + $0x25] sm:$0xff]
  %v3822 = vld [vmem:[#allocation2 + $0x2d] sm:$0xff]
  %v3823 = vld [vmem:[#allocation2 + $0x35] sm:$0xff]
  %v3824 = vld [vmem:[#allocation2 + $0x3d] sm:$0xff]
  %v3825 = vld [vmem:[#allocation2 + $0x45] sm:$0xff]
  %v3826 = vld [vmem:[#allocation2 + $0x4d] sm:$0xff]
  %v3827 = vld [vmem:[#allocation2 + $0x55] sm:$0xff]
  %v3828 = vld [vmem:[#allocation2 + $0x5d] sm:$0xff]
  %v3829 = vld [vmem:[#allocation2 + $0x65] sm:$0xff]
  %v3830 = vld [vmem:[#allocation2 + $0x6d] sm:$0xff]
  %v3831 = vld [vmem:[#allocation2 + $0x75] sm:$0xff]
  %v3832 = vld [vmem:[#allocation2 + $0x7d] sm:$0xff]
  %v3833 = vld [vmem:[#allocation2 + $0x85] sm:$0xff]
  %v3834 = vld [vmem:[#allocation2 + $0x8d] sm:$0xff]
  %v3835 = vld [vmem:[#allocation2 + $0x95] sm:$0xff]
  %v3836 = vld [vmem:[#allocation2 + $0x9d] sm:$0xff]
  %v3837 = vld [vmem:[#allocation2 + $0xa5] sm:$0xff]
  %v3838 = vld [vmem:[#allocation2 + $0xad] sm:$0xff]
  %v3839 = vld [vmem:[#allocation2 + $0xb5] sm:$0xff]
  %v3840 = vld [vmem:[#allocation2 + $0xbd] sm:$0xff]
  %v3841 = vld [vmem:[#allocation2 + $0xc5] sm:$0xff]
  %v3842 = vld [vmem:[#allocation2 + $0xcd] sm:$0xff]
  %v3843 = vld [vmem:[#allocation2 + $0xd5] sm:$0xff]
  %v3844 = vld [vmem:[#allocation2 + $0xdd] sm:$0xff]
  %v3845 = vld [vmem:[#allocation2 + $0xe5] sm:$0xff]
  %v3846 = vld [vmem:[#allocation2 + $0xed] sm:$0xff]
  %v3847 = vld [vmem:[#allocation2 + $0xf5] sm:$0xff]
  %v3848 = vld [vmem:[#allocation2 + $0xfd] sm:$0xff]
  %v3849 = vld [vmem:[#allocation2 + $0x105] sm:$0xff]
  %v3850 = vld [vmem:[#allocation2 + $0x10d] sm:$0xff]
  %v3851 = vld [vmem:[#allocation2 + $0x115] sm:$0xff]
  %v3852 = vld [vmem:[#allocation2 + $0x11d] sm:$0xff]
  %v3853 = vld [vmem:[#allocation2 + $0x125] sm:$0xff]
  %v3854 = vld [vmem:[#allocation2 + $0x12d] sm:$0xff]
  %v3855 = vld [vmem:[#allocation2 + $0x135] sm:$0xff]
  %v3856 = vld [vmem:[#allocation2 + $0x13d] sm:$0xff]
  %v3857 = vld [vmem:[#allocation2 + $0x145] sm:$0xff]
  %v3858 = vld [vmem:[#allocation2 + $0x14d] sm:$0xff]
  %v3859 = vld [vmem:[#allocation2 + $0x155] sm:$0xff]
  %v3860 = vld [vmem:[#allocation2 + $0x15d] sm:$0xff]
  %v3861 = vld [vmem:[#allocation2 + $0x165] sm:$0xff]
  %v3862 = vld [vmem:[#allocation2 + $0x16d] sm:$0xff]
  %v3863 = vld [vmem:[#allocation2 + $0x175] sm:$0xff]
  %v3864 = vld [vmem:[#allocation2 + $0x17d] sm:$0xff]
  %v3865 = vld [vmem:[#allocation2 + $0x185] sm:$0xff]
  %v3866 = vld [vmem:[#allocation2 + $0x18d] sm:$0xff]
  %v3867 = vld [vmem:[#allocation2 + $0x195] sm:$0xff]
  %v3868 = vld [vmem:[#allocation2 + $0x19d] sm:$0xff]
  %v3869 = vld [vmem:[#allocation2 + $0x1a5] sm:$0xff]
  %v3870 = vld [vmem:[#allocation2 + $0x1ad] sm:$0xff]
  %v3871 = vld [vmem:[#allocation2 + $0x1b5] sm:$0xff]
  %v3872 = vld [vmem:[#allocation2 + $0x1bd] sm:$0xff]
  %v3873 = vld [vmem:[#allocation2 + $0x1c5] sm:$0xff]
  %v3874 = vld [vmem:[#allocation2 + $0x1cd] sm:$0xff]
  %v3875 = vld [vmem:[#allocation2 + $0x1d5] sm:$0xff]
  %v3876 = vld [vmem:[#allocation2 + $0x1dd] sm:$0xff]
  %v3877 = vld [vmem:[#allocation2 + $0x1e5] sm:$0xff]
  %v3878 = vld [vmem:[#allocation2 + $0x1ed] sm:$0xff]
  %v3879 = vld [vmem:[#allocation2 + $0x1f5] sm:$0xff]
  %v3880 = vld [vmem:[#allocation2 + $0x1fd] sm:$0xff]
  %v3881 = vld [vmem:[#allocation2 + $0x205] sm:$0xff]
  %v3882 = vld [vmem:[#allocation2 + $0x20d] sm:$0xff]
  %v3883 = vld [vmem:[#allocation2 + $0x215] sm:$0xff]
  %v3884 = vld [vmem:[#allocation2 + $0x21d] sm:$0xff]
  %v3885 = vld [vmem:[#allocation2 + $0x225] sm:$0xff]
  %v3886 = vld [vmem:[#allocation2 + $0x22d] sm:$0xff]
  %v3887 = vld [vmem:[#allocation2 + $0x235] sm:$0xff]
  %v3888 = vld [vmem:[#allocation2 + $0x23d] sm:$0xff]
  %v3889 = vld [vmem:[#allocation2 + $0x245] sm:$0xff]
  %v3890 = vld [vmem:[#allocation2 + $0x24d] sm:$0xff]
  %v3891 = vld [vmem:[#allocation2 + $0x255] sm:$0xff]
  %v3892 = vld [vmem:[#allocation2 + $0x25d] sm:$0xff]
  %v3893 = vld [vmem:[#allocation2 + $0x265] sm:$0xff]
  %v3894 = vld [vmem:[#allocation2 + $0x26d] sm:$0xff]
  %v3895 = vld [vmem:[#allocation2 + $0x275] sm:$0xff]
  %v3896 = vld [vmem:[#allocation2 + $0x27d] sm:$0xff]
  %v3897 = vld [vmem:[#allocation2 + $0x285] sm:$0xff]
  %v3898 = vld [vmem:[#allocation2 + $0x28d] sm:$0xff]
  %v3899 = vld [vmem:[#allocation2 + $0x295] sm:$0xff]
  %v3900 = vld [vmem:[#allocation2 + $0x29d] sm:$0xff]
  %v3901 = vld [vmem:[#allocation2 + $0x2a5] sm:$0xff]
  %v3902 = vld [vmem:[#allocation2 + $0x26] sm:$0xff]
  %v3903 = vld [vmem:[#allocation2 + $0x2e] sm:$0xff]
  %v3904 = vld [vmem:[#allocation2 + $0x36] sm:$0xff]
  %v3905 = vld [vmem:[#allocation2 + $0x3e] sm:$0xff]
  %v3906 = vld [vmem:[#allocation2 + $0x46] sm:$0xff]
  %v3907 = vld [vmem:[#allocation2 + $0x4e] sm:$0xff]
  %v3908 = vld [vmem:[#allocation2 + $0x56] sm:$0xff]
  %v3909 = vld [vmem:[#allocation2 + $0x5e] sm:$0xff]
  %v3910 = vld [vmem:[#allocation2 + $0x66] sm:$0xff]
  %v3911 = vld [vmem:[#allocation2 + $0x6e] sm:$0xff]
  %v3912 = vld [vmem:[#allocation2 + $0x76] sm:$0xff]
  %v3913 = vld [vmem:[#allocation2 + $0x7e] sm:$0xff]
  %v3914 = vld [vmem:[#allocation2 + $0x86] sm:$0xff]
  %v3915 = vld [vmem:[#allocation2 + $0x8e] sm:$0xff]
  %v3916 = vld [vmem:[#allocation2 + $0x96] sm:$0xff]
  %v3917 = vld [vmem:[#allocation2 + $0x9e] sm:$0xff]
  %v3918 = vld [vmem:[#allocation2 + $0xa6] sm:$0xff]
  %v3919 = vld [vmem:[#allocation2 + $0xae] sm:$0xff]
  %v3920 = vld [vmem:[#allocation2 + $0xb6] sm:$0xff]
  %v3921 = vld [vmem:[#allocation2 + $0xbe] sm:$0xff]
  %v3922 = vld [vmem:[#allocation2 + $0xc6] sm:$0xff]
  %v3923 = vld [vmem:[#allocation2 + $0xce] sm:$0xff]
  %v3924 = vld [vmem:[#allocation2 + $0xd6] sm:$0xff]
  %v3925 = vld [vmem:[#allocation2 + $0xde] sm:$0xff]
  %v3926 = vld [vmem:[#allocation2 + $0xe6] sm:$0xff]
  %v3927 = vld [vmem:[#allocation2 + $0xee] sm:$0xff]
  %v3928 = vld [vmem:[#allocation2 + $0xf6] sm:$0xff]
  %v3929 = vld [vmem:[#allocation2 + $0xfe] sm:$0xff]
  %v3930 = vld [vmem:[#allocation2 + $0x106] sm:$0xff]
  %v3931 = vld [vmem:[#allocation2 + $0x10e] sm:$0xff]
  %v3932 = vld [vmem:[#allocation2 + $0x116] sm:$0xff]
  %v3933 = vld [vmem:[#allocation2 + $0x11e] sm:$0xff]
  %v3934 = vld [vmem:[#allocation2 + $0x126] sm:$0xff]
  %v3935 = vld [vmem:[#allocation2 + $0x12e] sm:$0xff]
  %v3936 = vld [vmem:[#allocation2 + $0x136] sm:$0xff]
  %v3937 = vld [vmem:[#allocation2 + $0x13e] sm:$0xff]
  %v3938 = vld [vmem:[#allocation2 + $0x146] sm:$0xff]
  %v3939 = vld [vmem:[#allocation2 + $0x14e] sm:$0xff]
  %v3940 = vld [vmem:[#allocation2 + $0x156] sm:$0xff]
  %v3941 = vld [vmem:[#allocation2 + $0x15e] sm:$0xff]
  %v3942 = vld [vmem:[#allocation2 + $0x166] sm:$0xff]
  %v3943 = vld [vmem:[#allocation2 + $0x16e] sm:$0xff]
  %v3944 = vld [vmem:[#allocation2 + $0x176] sm:$0xff]
  %v3945 = vld [vmem:[#allocation2 + $0x17e] sm:$0xff]
  %v3946 = vld [vmem:[#allocation2 + $0x186] sm:$0xff]
  %v3947 = vld [vmem:[#allocation2 + $0x18e] sm:$0xff]
  %v3948 = vld [vmem:[#allocation2 + $0x196] sm:$0xff]
  %v3949 = vld [vmem:[#allocation2 + $0x19e] sm:$0xff]
  %v3950 = vld [vmem:[#allocation2 + $0x1a6] sm:$0xff]
  %v3951 = vld [vmem:[#allocation2 + $0x1ae] sm:$0xff]
  %v3952 = vld [vmem:[#allocation2 + $0x1b6] sm:$0xff]
  %v3953 = vld [vmem:[#allocation2 + $0x1be] sm:$0xff]
  %v3954 = vld [vmem:[#allocation2 + $0x1c6] sm:$0xff]
  %v3955 = vld [vmem:[#allocation2 + $0x1ce] sm:$0xff]
  %v3956 = vld [vmem:[#allocation2 + $0x1d6] sm:$0xff]
  %v3957 = vld [vmem:[#allocation2 + $0x1de] sm:$0xff]
  %v3958 = vld [vmem:[#allocation2 + $0x1e6] sm:$0xff]
  %v3959 = vld [vmem:[#allocation2 + $0x1ee] sm:$0xff]
  %v3960 = vld [vmem:[#allocation2 + $0x1f6] sm:$0xff]
  %v3961 = vld [vmem:[#allocation2 + $0x1fe] sm:$0xff]
  %v3962 = vld [vmem:[#allocation2 + $0x206] sm:$0xff]
  %v3963 = vld [vmem:[#allocation2 + $0x20e] sm:$0xff]
  %v3964 = vld [vmem:[#allocation2 + $0x216] sm:$0xff]
  %v3965 = vld [vmem:[#allocation2 + $0x21e] sm:$0xff]
  %v3966 = vld [vmem:[#allocation2 + $0x226] sm:$0xff]
  %v3967 = vld [vmem:[#allocation2 + $0x22e] sm:$0xff]
  %v3968 = vld [vmem:[#allocation2 + $0x236] sm:$0xff]
  %v3969 = vld [vmem:[#allocation2 + $0x23e] sm:$0xff]
  %v3970 = vld [vmem:[#allocation2 + $0x246] sm:$0xff]
  %v3971 = vld [vmem:[#allocation2 + $0x24e] sm:$0xff]
  %v3972 = vld [vmem:[#allocation2 + $0x256] sm:$0xff]
  %v3973 = vld [vmem:[#allocation2 + $0x25e] sm:$0xff]
  %v3974 = vld [vmem:[#allocation2 + $0x266] sm:$0xff]
  %v3975 = vld [vmem:[#allocation2 + $0x26e] sm:$0xff]
  %v3976 = vld [vmem:[#allocation2 + $0x276] sm:$0xff]
  %v3977 = vld [vmem:[#allocation2 + $0x27e] sm:$0xff]
  %v3978 = vld [vmem:[#allocation2 + $0x286] sm:$0xff]
  %v3979 = vld [vmem:[#allocation2 + $0x28e] sm:$0xff]
  %v3980 = vld [vmem:[#allocation2 + $0x296] sm:$0xff]
  %v3981 = vld [vmem:[#allocation2 + $0x29e] sm:$0xff]
  %v3982 = vld [vmem:[#allocation2 + $0x2a6] sm:$0xff]
  %4064 = vrot.lane.b32.xlu0 %v3493, 32
  %v4065 = vpop.permute.xlu0 %4064
  %4066 = vrot.lane.b32.xlu0 %v3494, 32
  %v4067 = vpop.permute.xlu0 %4066
  %4068 = vrot.lane.b32.xlu0 %v3495, 32
  %v4069 = vpop.permute.xlu0 %4068
  %4070 = vrot.lane.b32.xlu0 %v3496, 32
  %v4071 = vpop.permute.xlu0 %4070
  %4072 = vrot.lane.b32.xlu0 %v3497, 32
  %v4073 = vpop.permute.xlu0 %4072
  %4074 = vrot.lane.b32.xlu0 %v3498, 32
  %v4075 = vpop.permute.xlu0 %4074
  %4076 = vrot.lane.b32.xlu0 %v3499, 32
  %v4077 = vpop.permute.xlu0 %4076
  %4078 = vrot.lane.b32.xlu0 %v3500, 32
  %v4079 = vpop.permute.xlu0 %4078
  %4080 = vrot.lane.b32.xlu0 %v3501, 32
  %v4081 = vpop.permute.xlu0 %4080
  %4082 = vrot.lane.b32.xlu0 %v3502, 32
  %v4083 = vpop.permute.xlu0 %4082
  %4084 = vrot.lane.b32.xlu0 %v3503, 32
  %v4085 = vpop.permute.xlu0 %4084
  %4086 = vrot.lane.b32.xlu0 %v3504, 32
  %v4087 = vpop.permute.xlu0 %4086
  %4088 = vrot.lane.b32.xlu0 %v3505, 32
  %v4089 = vpop.permute.xlu0 %4088
  %4090 = vrot.lane.b32.xlu0 %v3506, 32
  %v4091 = vpop.permute.xlu0 %4090
  %4092 = vrot.lane.b32.xlu0 %v3507, 32
  %v4093 = vpop.permute.xlu0 %4092
  %4094 = vrot.lane.b32.xlu0 %v3508, 32
  %v4095 = vpop.permute.xlu0 %4094
  %4096 = vrot.lane.b32.xlu0 %v3509, 32
  %v4097 = vpop.permute.xlu0 %4096
  %4098 = vrot.lane.b32.xlu0 %v3510, 32
  %v4099 = vpop.permute.xlu0 %4098
  %4100 = vrot.lane.b32.xlu0 %v3511, 32
  %v4101 = vpop.permute.xlu0 %4100
  %4102 = vrot.lane.b32.xlu0 %v3512, 32
  %v4103 = vpop.permute.xlu0 %4102
  %4104 = vrot.lane.b32.xlu0 %v3513, 32
  %v4105 = vpop.permute.xlu0 %4104
  %4106 = vrot.lane.b32.xlu0 %v3514, 32
  %v4107 = vpop.permute.xlu0 %4106
  %4108 = vrot.lane.b32.xlu0 %v3515, 32
  %v4109 = vpop.permute.xlu0 %4108
  %4110 = vrot.lane.b32.xlu0 %v3516, 32
  %v4111 = vpop.permute.xlu0 %4110
  %4112 = vrot.lane.b32.xlu0 %v3517, 32
  %v4113 = vpop.permute.xlu0 %4112
  %4114 = vrot.lane.b32.xlu0 %v3518, 32
  %v4115 = vpop.permute.xlu0 %4114
  %4116 = vrot.lane.b32.xlu0 %v3519, 32
  %v4117 = vpop.permute.xlu0 %4116
  %4118 = vrot.lane.b32.xlu0 %v3520, 32
  %v4119 = vpop.permute.xlu0 %4118
  %4120 = vrot.lane.b32.xlu0 %v3521, 32
  %v4121 = vpop.permute.xlu0 %4120
  %4122 = vrot.lane.b32.xlu0 %v3522, 32
  %v4123 = vpop.permute.xlu0 %4122
  %4124 = vrot.lane.b32.xlu0 %v3523, 32
  %v4125 = vpop.permute.xlu0 %4124
  %4126 = vrot.lane.b32.xlu0 %v3524, 32
  %v4127 = vpop.permute.xlu0 %4126
  %4128 = vrot.lane.b32.xlu0 %v3525, 32
  %v4129 = vpop.permute.xlu0 %4128
  %4130 = vrot.lane.b32.xlu0 %v3526, 32
  %v4131 = vpop.permute.xlu0 %4130
  %4132 = vrot.lane.b32.xlu0 %v3527, 32
  %v4133 = vpop.permute.xlu0 %4132
  %4134 = vrot.lane.b32.xlu0 %v3528, 32
  %v4135 = vpop.permute.xlu0 %4134
  %4136 = vrot.lane.b32.xlu0 %v3529, 32
  %v4137 = vpop.permute.xlu0 %4136
  %4138 = vrot.lane.b32.xlu0 %v3530, 32
  %v4139 = vpop.permute.xlu0 %4138
  %4140 = vrot.lane.b32.xlu0 %v3531, 32
  %v4141 = vpop.permute.xlu0 %4140
  %4142 = vrot.lane.b32.xlu0 %v3532, 32
  %v4143 = vpop.permute.xlu0 %4142
  %4144 = vrot.lane.b32.xlu0 %v3533, 32
  %v4145 = vpop.permute.xlu0 %4144
  %4146 = vrot.lane.b32.xlu0 %v3534, 32
  %v4147 = vpop.permute.xlu0 %4146
  %4148 = vrot.lane.b32.xlu0 %v3535, 32
  %v4149 = vpop.permute.xlu0 %4148
  %4150 = vrot.lane.b32.xlu0 %v3536, 32
  %v4151 = vpop.permute.xlu0 %4150
  %4152 = vrot.lane.b32.xlu0 %v3537, 32
  %v4153 = vpop.permute.xlu0 %4152
  %4154 = vrot.lane.b32.xlu0 %v3538, 32
  %v4155 = vpop.permute.xlu0 %4154
  %4156 = vrot.lane.b32.xlu0 %v3539, 32
  %v4157 = vpop.permute.xlu0 %4156
  %4158 = vrot.lane.b32.xlu0 %v3540, 32
  %v4159 = vpop.permute.xlu0 %4158
  %4160 = vrot.lane.b32.xlu0 %v3541, 32
  %v4161 = vpop.permute.xlu0 %4160
  %4162 = vrot.lane.b32.xlu0 %v3542, 32
  %v4163 = vpop.permute.xlu0 %4162
  %4164 = vrot.lane.b32.xlu0 %v3543, 32
  %v4165 = vpop.permute.xlu0 %4164
  %4166 = vrot.lane.b32.xlu0 %v3544, 32
  %v4167 = vpop.permute.xlu0 %4166
  %4168 = vrot.lane.b32.xlu0 %v3545, 32
  %v4169 = vpop.permute.xlu0 %4168
  %4170 = vrot.lane.b32.xlu0 %v3546, 32
  %v4171 = vpop.permute.xlu0 %4170
  %4172 = vrot.lane.b32.xlu0 %v3547, 32
  %v4173 = vpop.permute.xlu0 %4172
  %4174 = vrot.lane.b32.xlu0 %v3548, 32
  %v4175 = vpop.permute.xlu0 %4174
  %4176 = vrot.lane.b32.xlu0 %v3549, 32
  %v4177 = vpop.permute.xlu0 %4176
  %4178 = vrot.lane.b32.xlu0 %v3550, 32
  %v4179 = vpop.permute.xlu0 %4178
  %4180 = vrot.lane.b32.xlu0 %v3551, 32
  %v4181 = vpop.permute.xlu0 %4180
  %4182 = vrot.lane.b32.xlu0 %v3552, 32
  %v4183 = vpop.permute.xlu0 %4182
  %4184 = vrot.lane.b32.xlu0 %v3553, 32
  %v4185 = vpop.permute.xlu0 %4184
  %4186 = vrot.lane.b32.xlu0 %v3554, 32
  %v4187 = vpop.permute.xlu0 %4186
  %4188 = vrot.lane.b32.xlu0 %v3555, 32
  %v4189 = vpop.permute.xlu0 %4188
  %4190 = vrot.lane.b32.xlu0 %v3556, 32
  %v4191 = vpop.permute.xlu0 %4190
  %4192 = vrot.lane.b32.xlu0 %v3557, 32
  %v4193 = vpop.permute.xlu0 %4192
  %4194 = vrot.lane.b32.xlu0 %v3558, 32
  %v4195 = vpop.permute.xlu0 %4194
  %4196 = vrot.lane.b32.xlu0 %v3559, 32
  %v4197 = vpop.permute.xlu0 %4196
  %4198 = vrot.lane.b32.xlu0 %v3560, 32
  %v4199 = vpop.permute.xlu0 %4198
  %4200 = vrot.lane.b32.xlu0 %v3561, 32
  %v4201 = vpop.permute.xlu0 %4200
  %4202 = vrot.lane.b32.xlu0 %v3562, 32
  %v4203 = vpop.permute.xlu0 %4202
  %4204 = vrot.lane.b32.xlu0 %v3563, 32
  %v4205 = vpop.permute.xlu0 %4204
  %4206 = vrot.lane.b32.xlu0 %v3564, 32
  %v4207 = vpop.permute.xlu0 %4206
  %4208 = vrot.lane.b32.xlu0 %v3565, 32
  %v4209 = vpop.permute.xlu0 %4208
  %4210 = vrot.lane.b32.xlu0 %v3566, 32
  %v4211 = vpop.permute.xlu0 %4210
  %4212 = vrot.lane.b32.xlu0 %v3567, 32
  %v4213 = vpop.permute.xlu0 %4212
  %4214 = vrot.lane.b32.xlu0 %v3568, 32
  %v4215 = vpop.permute.xlu0 %4214
  %4216 = vrot.lane.b32.xlu0 %v3569, 32
  %v4217 = vpop.permute.xlu0 %4216
  %4218 = vrot.lane.b32.xlu0 %v3570, 32
  %v4219 = vpop.permute.xlu0 %4218
  %4220 = vrot.lane.b32.xlu0 %v3571, 32
  %v4221 = vpop.permute.xlu0 %4220
  %4222 = vrot.lane.b32.xlu0 %v3572, 32
  %v4223 = vpop.permute.xlu0 %4222
  %4224 = vrot.lane.b32.xlu0 %v3573, 32
  %v4225 = vpop.permute.xlu0 %4224
  %4388 = vrot.lane.b32.xlu0 %v3574, 64
  %v4389 = vpop.permute.xlu0 %4388
  %4390 = vrot.lane.b32.xlu0 %v3575, 64
  %v4391 = vpop.permute.xlu0 %4390
  %4392 = vrot.lane.b32.xlu0 %v3576, 64
  %v4393 = vpop.permute.xlu0 %4392
  %4394 = vrot.lane.b32.xlu0 %v3577, 64
  %v4395 = vpop.permute.xlu0 %4394
  %4396 = vrot.lane.b32.xlu0 %v3578, 64
  %v4397 = vpop.permute.xlu0 %4396
  %4398 = vrot.lane.b32.xlu0 %v3579, 64
  %v4399 = vpop.permute.xlu0 %4398
  %4400 = vrot.lane.b32.xlu0 %v3580, 64
  %v4401 = vpop.permute.xlu0 %4400
  %4402 = vrot.lane.b32.xlu0 %v3581, 64
  %v4403 = vpop.permute.xlu0 %4402
  %4404 = vrot.lane.b32.xlu0 %v3582, 64
  %v4405 = vpop.permute.xlu0 %4404
  %4406 = vrot.lane.b32.xlu0 %v3583, 64
  %v4407 = vpop.permute.xlu0 %4406
  %4408 = vrot.lane.b32.xlu0 %v3584, 64
  %v4409 = vpop.permute.xlu0 %4408
  %4410 = vrot.lane.b32.xlu0 %v3585, 64
  %v4411 = vpop.permute.xlu0 %4410
  %4412 = vrot.lane.b32.xlu0 %v3586, 64
  %v4413 = vpop.permute.xlu0 %4412
  %4414 = vrot.lane.b32.xlu0 %v3587, 64
  %v4415 = vpop.permute.xlu0 %4414
  %4416 = vrot.lane.b32.xlu0 %v3588, 64
  %v4417 = vpop.permute.xlu0 %4416
  %4418 = vrot.lane.b32.xlu0 %v3589, 64
  %v4419 = vpop.permute.xlu0 %4418
  %4420 = vrot.lane.b32.xlu0 %v3590, 64
  %v4421 = vpop.permute.xlu0 %4420
  %4422 = vrot.lane.b32.xlu0 %v3591, 64
  %v4423 = vpop.permute.xlu0 %4422
  %4424 = vrot.lane.b32.xlu0 %v3592, 64
  %v4425 = vpop.permute.xlu0 %4424
  %4426 = vrot.lane.b32.xlu0 %v3593, 64
  %v4427 = vpop.permute.xlu0 %4426
  %4428 = vrot.lane.b32.xlu0 %v3594, 64
  %v4429 = vpop.permute.xlu0 %4428
  %4430 = vrot.lane.b32.xlu0 %v3595, 64
  %v4431 = vpop.permute.xlu0 %4430
  %4432 = vrot.lane.b32.xlu0 %v3596, 64
  %v4433 = vpop.permute.xlu0 %4432
  %4434 = vrot.lane.b32.xlu0 %v3597, 64
  %v4435 = vpop.permute.xlu0 %4434
  %4436 = vrot.lane.b32.xlu0 %v3598, 64
  %v4437 = vpop.permute.xlu0 %4436
  %4438 = vrot.lane.b32.xlu0 %v3599, 64
  %v4439 = vpop.permute.xlu0 %4438
  %4440 = vrot.lane.b32.xlu0 %v3600, 64
  %v4441 = vpop.permute.xlu0 %4440
  %4442 = vrot.lane.b32.xlu0 %v3601, 64
  %v4443 = vpop.permute.xlu0 %4442
  %4444 = vrot.lane.b32.xlu0 %v3602, 64
  %v4445 = vpop.permute.xlu0 %4444
  %4446 = vrot.lane.b32.xlu0 %v3603, 64
  %v4447 = vpop.permute.xlu0 %4446
  %4448 = vrot.lane.b32.xlu0 %v3604, 64
  %v4449 = vpop.permute.xlu0 %4448
  %4450 = vrot.lane.b32.xlu0 %v3605, 64
  %v4451 = vpop.permute.xlu0 %4450
  %4452 = vrot.lane.b32.xlu0 %v3606, 64
  %v4453 = vpop.permute.xlu0 %4452
  %4454 = vrot.lane.b32.xlu0 %v3607, 64
  %v4455 = vpop.permute.xlu0 %4454
  %4456 = vrot.lane.b32.xlu0 %v3608, 64
  %v4457 = vpop.permute.xlu0 %4456
  %4458 = vrot.lane.b32.xlu0 %v3609, 64
  %v4459 = vpop.permute.xlu0 %4458
  %4460 = vrot.lane.b32.xlu0 %v3610, 64
  %v4461 = vpop.permute.xlu0 %4460
  %4462 = vrot.lane.b32.xlu0 %v3611, 64
  %v4463 = vpop.permute.xlu0 %4462
  %4464 = vrot.lane.b32.xlu0 %v3612, 64
  %v4465 = vpop.permute.xlu0 %4464
  %4466 = vrot.lane.b32.xlu0 %v3613, 64
  %v4467 = vpop.permute.xlu0 %4466
  %4468 = vrot.lane.b32.xlu0 %v3614, 64
  %v4469 = vpop.permute.xlu0 %4468
  %4470 = vrot.lane.b32.xlu0 %v3615, 64
  %v4471 = vpop.permute.xlu0 %4470
  %4472 = vrot.lane.b32.xlu0 %v3616, 64
  %v4473 = vpop.permute.xlu0 %4472
  %4474 = vrot.lane.b32.xlu0 %v3617, 64
  %v4475 = vpop.permute.xlu0 %4474
  %4476 = vrot.lane.b32.xlu0 %v3618, 64
  %v4477 = vpop.permute.xlu0 %4476
  %4478 = vrot.lane.b32.xlu0 %v3619, 64
  %v4479 = vpop.permute.xlu0 %4478
  %4480 = vrot.lane.b32.xlu0 %v3620, 64
  %v4481 = vpop.permute.xlu0 %4480
  %4482 = vrot.lane.b32.xlu0 %v3621, 64
  %v4483 = vpop.permute.xlu0 %4482
  %4484 = vrot.lane.b32.xlu0 %v3622, 64
  %v4485 = vpop.permute.xlu0 %4484
  %4486 = vrot.lane.b32.xlu0 %v3623, 64
  %v4487 = vpop.permute.xlu0 %4486
  %4488 = vrot.lane.b32.xlu0 %v3624, 64
  %v4489 = vpop.permute.xlu0 %4488
  %4490 = vrot.lane.b32.xlu0 %v3625, 64
  %v4491 = vpop.permute.xlu0 %4490
  %4492 = vrot.lane.b32.xlu0 %v3626, 64
  %v4493 = vpop.permute.xlu0 %4492
  %4494 = vrot.lane.b32.xlu0 %v3627, 64
  %v4495 = vpop.permute.xlu0 %4494
  %4496 = vrot.lane.b32.xlu0 %v3628, 64
  %v4497 = vpop.permute.xlu0 %4496
  %4498 = vrot.lane.b32.xlu0 %v3629, 64
  %v4499 = vpop.permute.xlu0 %4498
  %4500 = vrot.lane.b32.xlu0 %v3630, 64
  %v4501 = vpop.permute.xlu0 %4500
  %4502 = vrot.lane.b32.xlu0 %v3631, 64
  %v4503 = vpop.permute.xlu0 %4502
  %4504 = vrot.lane.b32.xlu0 %v3632, 64
  %v4505 = vpop.permute.xlu0 %4504
  %4506 = vrot.lane.b32.xlu0 %v3633, 64
  %v4507 = vpop.permute.xlu0 %4506
  %4508 = vrot.lane.b32.xlu0 %v3634, 64
  %v4509 = vpop.permute.xlu0 %4508
  %4510 = vrot.lane.b32.xlu0 %v3635, 64
  %v4511 = vpop.permute.xlu0 %4510
  %4512 = vrot.lane.b32.xlu0 %v3636, 64
  %v4513 = vpop.permute.xlu0 %4512
  %4514 = vrot.lane.b32.xlu0 %v3637, 64
  %v4515 = vpop.permute.xlu0 %4514
  %4516 = vrot.lane.b32.xlu0 %v3638, 64
  %v4517 = vpop.permute.xlu0 %4516
  %4518 = vrot.lane.b32.xlu0 %v3639, 64
  %v4519 = vpop.permute.xlu0 %4518
  %4520 = vrot.lane.b32.xlu0 %v3640, 64
  %v4521 = vpop.permute.xlu0 %4520
  %4522 = vrot.lane.b32.xlu0 %v3641, 64
  %v4523 = vpop.permute.xlu0 %4522
  %4524 = vrot.lane.b32.xlu0 %v3642, 64
  %v4525 = vpop.permute.xlu0 %4524
  %4526 = vrot.lane.b32.xlu0 %v3643, 64
  %v4527 = vpop.permute.xlu0 %4526
  %4528 = vrot.lane.b32.xlu0 %v3644, 64
  %v4529 = vpop.permute.xlu0 %4528
  %4530 = vrot.lane.b32.xlu0 %v3645, 64
  %v4531 = vpop.permute.xlu0 %4530
  %4532 = vrot.lane.b32.xlu0 %v3646, 64
  %v4533 = vpop.permute.xlu0 %4532
  %4534 = vrot.lane.b32.xlu0 %v3647, 64
  %v4535 = vpop.permute.xlu0 %4534
  %4536 = vrot.lane.b32.xlu0 %v3648, 64
  %v4537 = vpop.permute.xlu0 %4536
  %4538 = vrot.lane.b32.xlu0 %v3649, 64
  %v4539 = vpop.permute.xlu0 %4538
  %4540 = vrot.lane.b32.xlu0 %v3650, 64
  %v4541 = vpop.permute.xlu0 %4540
  %4542 = vrot.lane.b32.xlu0 %v3651, 64
  %v4543 = vpop.permute.xlu0 %4542
  %4544 = vrot.lane.b32.xlu0 %v3652, 64
  %v4545 = vpop.permute.xlu0 %4544
  %4546 = vrot.lane.b32.xlu0 %v3653, 64
  %v4547 = vpop.permute.xlu0 %4546
  %4548 = vrot.lane.b32.xlu0 %v3654, 64
  %v4549 = vpop.permute.xlu0 %4548
  %4633 = vrot.lane.b32.xlu0 %v3576, 96
  %v4634 = vpop.permute.xlu0 %4633
  %4635 = vrot.lane.b32.xlu0 %v3577, 96
  %v4636 = vpop.permute.xlu0 %4635
  %4637 = vrot.lane.b32.xlu0 %v3578, 96
  %v4638 = vpop.permute.xlu0 %4637
  %4639 = vrot.lane.b32.xlu0 %v3579, 96
  %v4640 = vpop.permute.xlu0 %4639
  %4641 = vrot.lane.b32.xlu0 %v3580, 96
  %v4642 = vpop.permute.xlu0 %4641
  %4643 = vrot.lane.b32.xlu0 %v3581, 96
  %v4644 = vpop.permute.xlu0 %4643
  %4645 = vrot.lane.b32.xlu0 %v3582, 96
  %v4646 = vpop.permute.xlu0 %4645
  %4647 = vrot.lane.b32.xlu0 %v3583, 96
  %v4648 = vpop.permute.xlu0 %4647
  %4649 = vrot.lane.b32.xlu0 %v3584, 96
  %v4650 = vpop.permute.xlu0 %4649
  %4651 = vrot.lane.b32.xlu0 %v3585, 96
  %v4652 = vpop.permute.xlu0 %4651
  %4653 = vrot.lane.b32.xlu0 %v3586, 96
  %v4654 = vpop.permute.xlu0 %4653
  %4655 = vrot.lane.b32.xlu0 %v3587, 96
  %v4656 = vpop.permute.xlu0 %4655
  %4657 = vrot.lane.b32.xlu0 %v3588, 96
  %v4658 = vpop.permute.xlu0 %4657
  %4659 = vrot.lane.b32.xlu0 %v3589, 96
  %v4660 = vpop.permute.xlu0 %4659
  %4661 = vrot.lane.b32.xlu0 %v3590, 96
  %v4662 = vpop.permute.xlu0 %4661
  %4663 = vrot.lane.b32.xlu0 %v3591, 96
  %v4664 = vpop.permute.xlu0 %4663
  %4665 = vrot.lane.b32.xlu0 %v3592, 96
  %v4666 = vpop.permute.xlu0 %4665
  %4667 = vrot.lane.b32.xlu0 %v3593, 96
  %v4668 = vpop.permute.xlu0 %4667
  %4669 = vrot.lane.b32.xlu0 %v3594, 96
  %v4670 = vpop.permute.xlu0 %4669
  %4671 = vrot.lane.b32.xlu0 %v3595, 96
  %v4672 = vpop.permute.xlu0 %4671
  %4673 = vrot.lane.b32.xlu0 %v3596, 96
  %v4674 = vpop.permute.xlu0 %4673
  %4675 = vrot.lane.b32.xlu0 %v3597, 96
  %v4676 = vpop.permute.xlu0 %4675
  %4677 = vrot.lane.b32.xlu0 %v3598, 96
  %v4678 = vpop.permute.xlu0 %4677
  %4679 = vrot.lane.b32.xlu0 %v3599, 96
  %v4680 = vpop.permute.xlu0 %4679
  %4681 = vrot.lane.b32.xlu0 %v3600, 96
  %v4682 = vpop.permute.xlu0 %4681
  %4683 = vrot.lane.b32.xlu0 %v3601, 96
  %v4684 = vpop.permute.xlu0 %4683
  %4685 = vrot.lane.b32.xlu0 %v3602, 96
  %v4686 = vpop.permute.xlu0 %4685
  %4687 = vrot.lane.b32.xlu0 %v3603, 96
  %v4688 = vpop.permute.xlu0 %4687
  %4689 = vrot.lane.b32.xlu0 %v3604, 96
  %v4690 = vpop.permute.xlu0 %4689
  %4691 = vrot.lane.b32.xlu0 %v3605, 96
  %v4692 = vpop.permute.xlu0 %4691
  %4693 = vrot.lane.b32.xlu0 %v3606, 96
  %v4694 = vpop.permute.xlu0 %4693
  %4695 = vrot.lane.b32.xlu0 %v3607, 96
  %v4696 = vpop.permute.xlu0 %4695
  %4697 = vrot.lane.b32.xlu0 %v3608, 96
  %v4698 = vpop.permute.xlu0 %4697
  %4699 = vrot.lane.b32.xlu0 %v3609, 96
  %v4700 = vpop.permute.xlu0 %4699
  %4701 = vrot.lane.b32.xlu0 %v3610, 96
  %v4702 = vpop.permute.xlu0 %4701
  %4703 = vrot.lane.b32.xlu0 %v3611, 96
  %v4704 = vpop.permute.xlu0 %4703
  %4705 = vrot.lane.b32.xlu0 %v3612, 96
  %v4706 = vpop.permute.xlu0 %4705
  %4707 = vrot.lane.b32.xlu0 %v3613, 96
  %v4708 = vpop.permute.xlu0 %4707
  %4709 = vrot.lane.b32.xlu0 %v3614, 96
  %v4710 = vpop.permute.xlu0 %4709
  %4711 = vrot.lane.b32.xlu0 %v3615, 96
  %v4712 = vpop.permute.xlu0 %4711
  %4713 = vrot.lane.b32.xlu0 %v3616, 96
  %v4714 = vpop.permute.xlu0 %4713
  %4715 = vrot.lane.b32.xlu0 %v3617, 96
  %v4716 = vpop.permute.xlu0 %4715
  %4717 = vrot.lane.b32.xlu0 %v3618, 96
  %v4718 = vpop.permute.xlu0 %4717
  %4719 = vrot.lane.b32.xlu0 %v3619, 96
  %v4720 = vpop.permute.xlu0 %4719
  %4721 = vrot.lane.b32.xlu0 %v3620, 96
  %v4722 = vpop.permute.xlu0 %4721
  %4723 = vrot.lane.b32.xlu0 %v3621, 96
  %v4724 = vpop.permute.xlu0 %4723
  %4725 = vrot.lane.b32.xlu0 %v3622, 96
  %v4726 = vpop.permute.xlu0 %4725
  %4727 = vrot.lane.b32.xlu0 %v3623, 96
  %v4728 = vpop.permute.xlu0 %4727
  %4729 = vrot.lane.b32.xlu0 %v3624, 96
  %v4730 = vpop.permute.xlu0 %4729
  %4731 = vrot.lane.b32.xlu0 %v3625, 96
  %v4732 = vpop.permute.xlu0 %4731
  %4733 = vrot.lane.b32.xlu0 %v3626, 96
  %v4734 = vpop.permute.xlu0 %4733
  %4735 = vrot.lane.b32.xlu0 %v3627, 96
  %v4736 = vpop.permute.xlu0 %4735
  %4737 = vrot.lane.b32.xlu0 %v3628, 96
  %v4738 = vpop.permute.xlu0 %4737
  %4739 = vrot.lane.b32.xlu0 %v3629, 96
  %v4740 = vpop.permute.xlu0 %4739
  %4741 = vrot.lane.b32.xlu0 %v3630, 96
  %v4742 = vpop.permute.xlu0 %4741
  %4743 = vrot.lane.b32.xlu0 %v3631, 96
  %v4744 = vpop.permute.xlu0 %4743
  %4745 = vrot.lane.b32.xlu0 %v3632, 96
  %v4746 = vpop.permute.xlu0 %4745
  %4747 = vrot.lane.b32.xlu0 %v3633, 96
  %v4748 = vpop.permute.xlu0 %4747
  %4749 = vrot.lane.b32.xlu0 %v3634, 96
  %v4750 = vpop.permute.xlu0 %4749
  %4751 = vrot.lane.b32.xlu0 %v3635, 96
  %v4752 = vpop.permute.xlu0 %4751
  %4753 = vrot.lane.b32.xlu0 %v3636, 96
  %v4754 = vpop.permute.xlu0 %4753
  %4755 = vrot.lane.b32.xlu0 %v3637, 96
  %v4756 = vpop.permute.xlu0 %4755
  %4757 = vrot.lane.b32.xlu0 %v3638, 96
  %v4758 = vpop.permute.xlu0 %4757
  %4759 = vrot.lane.b32.xlu0 %v3639, 96
  %v4760 = vpop.permute.xlu0 %4759
  %4761 = vrot.lane.b32.xlu0 %v3640, 96
  %v4762 = vpop.permute.xlu0 %4761
  %4763 = vrot.lane.b32.xlu0 %v3641, 96
  %v4764 = vpop.permute.xlu0 %4763
  %4765 = vrot.lane.b32.xlu0 %v3642, 96
  %v4766 = vpop.permute.xlu0 %4765
  %4767 = vrot.lane.b32.xlu0 %v3643, 96
  %v4768 = vpop.permute.xlu0 %4767
  %4769 = vrot.lane.b32.xlu0 %v3644, 96
  %v4770 = vpop.permute.xlu0 %4769
  %4771 = vrot.lane.b32.xlu0 %v3645, 96
  %v4772 = vpop.permute.xlu0 %4771
  %4773 = vrot.lane.b32.xlu0 %v3646, 96
  %v4774 = vpop.permute.xlu0 %4773
  %4775 = vrot.lane.b32.xlu0 %v3647, 96
  %v4776 = vpop.permute.xlu0 %4775
  %4777 = vrot.lane.b32.xlu0 %v3648, 96
  %v4778 = vpop.permute.xlu0 %4777
  %4779 = vrot.lane.b32.xlu0 %v3649, 96
  %v4780 = vpop.permute.xlu0 %4779
  %4781 = vrot.lane.b32.xlu0 %v3650, 96
  %v4782 = vpop.permute.xlu0 %4781
  %4783 = vrot.lane.b32.xlu0 %v3651, 96
  %v4784 = vpop.permute.xlu0 %4783
  %4785 = vrot.lane.b32.xlu0 %v3652, 96
  %v4786 = vpop.permute.xlu0 %4785
  %4787 = vrot.lane.b32.xlu0 %v3653, 96
  %v4788 = vpop.permute.xlu0 %4787
  %4789 = vrot.lane.b32.xlu0 %v3654, 96
  %v4790 = vpop.permute.xlu0 %4789
  %4791 = vrot.lane.b32.xlu0 %v3655, 96
  %v4792 = vpop.permute.xlu0 %4791
  %4793 = vrot.lane.b32.xlu0 %v3656, 96
  %v4794 = vpop.permute.xlu0 %4793
  %4957 = vrot.lane.b32.xlu0 %v3738, 32
  %v4958 = vpop.permute.xlu0 %4957
  %4959 = vrot.lane.b32.xlu0 %v3739, 32
  %v4960 = vpop.permute.xlu0 %4959
  %4961 = vrot.lane.b32.xlu0 %v3740, 32
  %v4962 = vpop.permute.xlu0 %4961
  %4963 = vrot.lane.b32.xlu0 %v3741, 32
  %v4964 = vpop.permute.xlu0 %4963
  %4965 = vrot.lane.b32.xlu0 %v3742, 32
  %v4966 = vpop.permute.xlu0 %4965
  %4967 = vrot.lane.b32.xlu0 %v3743, 32
  %v4968 = vpop.permute.xlu0 %4967
  %4969 = vrot.lane.b32.xlu0 %v3744, 32
  %v4970 = vpop.permute.xlu0 %4969
  %4971 = vrot.lane.b32.xlu0 %v3745, 32
  %v4972 = vpop.permute.xlu0 %4971
  %4973 = vrot.lane.b32.xlu0 %v3746, 32
  %v4974 = vpop.permute.xlu0 %4973
  %4975 = vrot.lane.b32.xlu0 %v3747, 32
  %v4976 = vpop.permute.xlu0 %4975
  %4977 = vrot.lane.b32.xlu0 %v3748, 32
  %v4978 = vpop.permute.xlu0 %4977
  %4979 = vrot.lane.b32.xlu0 %v3749, 32
  %v4980 = vpop.permute.xlu0 %4979
  %4981 = vrot.lane.b32.xlu0 %v3750, 32
  %v4982 = vpop.permute.xlu0 %4981
  %4983 = vrot.lane.b32.xlu0 %v3751, 32
  %v4984 = vpop.permute.xlu0 %4983
  %4985 = vrot.lane.b32.xlu0 %v3752, 32
  %v4986 = vpop.permute.xlu0 %4985
  %4987 = vrot.lane.b32.xlu0 %v3753, 32
  %v4988 = vpop.permute.xlu0 %4987
  %4989 = vrot.lane.b32.xlu0 %v3754, 32
  %v4990 = vpop.permute.xlu0 %4989
  %4991 = vrot.lane.b32.xlu0 %v3755, 32
  %v4992 = vpop.permute.xlu0 %4991
  %4993 = vrot.lane.b32.xlu0 %v3756, 32
  %v4994 = vpop.permute.xlu0 %4993
  %4995 = vrot.lane.b32.xlu0 %v3757, 32
  %v4996 = vpop.permute.xlu0 %4995
  %4997 = vrot.lane.b32.xlu0 %v3758, 32
  %v4998 = vpop.permute.xlu0 %4997
  %4999 = vrot.lane.b32.xlu0 %v3759, 32
  %v5000 = vpop.permute.xlu0 %4999
  %5001 = vrot.lane.b32.xlu0 %v3760, 32
  %v5002 = vpop.permute.xlu0 %5001
  %5003 = vrot.lane.b32.xlu0 %v3761, 32
  %v5004 = vpop.permute.xlu0 %5003
  %5005 = vrot.lane.b32.xlu0 %v3762, 32
  %v5006 = vpop.permute.xlu0 %5005
  %5007 = vrot.lane.b32.xlu0 %v3763, 32
  %v5008 = vpop.permute.xlu0 %5007
  %5009 = vrot.lane.b32.xlu0 %v3764, 32
  %v5010 = vpop.permute.xlu0 %5009
  %5011 = vrot.lane.b32.xlu0 %v3765, 32
  %v5012 = vpop.permute.xlu0 %5011
  %5013 = vrot.lane.b32.xlu0 %v3766, 32
  %v5014 = vpop.permute.xlu0 %5013
  %5015 = vrot.lane.b32.xlu0 %v3767, 32
  %v5016 = vpop.permute.xlu0 %5015
  %5017 = vrot.lane.b32.xlu0 %v3768, 32
  %v5018 = vpop.permute.xlu0 %5017
  %5019 = vrot.lane.b32.xlu0 %v3769, 32
  %v5020 = vpop.permute.xlu0 %5019
  %5021 = vrot.lane.b32.xlu0 %v3770, 32
  %v5022 = vpop.permute.xlu0 %5021
  %5023 = vrot.lane.b32.xlu0 %v3771, 32
  %v5024 = vpop.permute.xlu0 %5023
  %5025 = vrot.lane.b32.xlu0 %v3772, 32
  %v5026 = vpop.permute.xlu0 %5025
  %5027 = vrot.lane.b32.xlu0 %v3773, 32
  %v5028 = vpop.permute.xlu0 %5027
  %5029 = vrot.lane.b32.xlu0 %v3774, 32
  %v5030 = vpop.permute.xlu0 %5029
  %5031 = vrot.lane.b32.xlu0 %v3775, 32
  %v5032 = vpop.permute.xlu0 %5031
  %5033 = vrot.lane.b32.xlu0 %v3776, 32
  %v5034 = vpop.permute.xlu0 %5033
  %5035 = vrot.lane.b32.xlu0 %v3777, 32
  %v5036 = vpop.permute.xlu0 %5035
  %5037 = vrot.lane.b32.xlu0 %v3778, 32
  %v5038 = vpop.permute.xlu0 %5037
  %5039 = vrot.lane.b32.xlu0 %v3779, 32
  %v5040 = vpop.permute.xlu0 %5039
  %5041 = vrot.lane.b32.xlu0 %v3780, 32
  %v5042 = vpop.permute.xlu0 %5041
  %5043 = vrot.lane.b32.xlu0 %v3781, 32
  %v5044 = vpop.permute.xlu0 %5043
  %5045 = vrot.lane.b32.xlu0 %v3782, 32
  %v5046 = vpop.permute.xlu0 %5045
  %5047 = vrot.lane.b32.xlu0 %v3783, 32
  %v5048 = vpop.permute.xlu0 %5047
  %5049 = vrot.lane.b32.xlu0 %v3784, 32
  %v5050 = vpop.permute.xlu0 %5049
  %5051 = vrot.lane.b32.xlu0 %v3785, 32
  %v5052 = vpop.permute.xlu0 %5051
  %5053 = vrot.lane.b32.xlu0 %v3786, 32
  %v5054 = vpop.permute.xlu0 %5053
  %5055 = vrot.lane.b32.xlu0 %v3787, 32
  %v5056 = vpop.permute.xlu0 %5055
  %5057 = vrot.lane.b32.xlu0 %v3788, 32
  %v5058 = vpop.permute.xlu0 %5057
  %5059 = vrot.lane.b32.xlu0 %v3789, 32
  %v5060 = vpop.permute.xlu0 %5059
  %5061 = vrot.lane.b32.xlu0 %v3790, 32
  %v5062 = vpop.permute.xlu0 %5061
  %5063 = vrot.lane.b32.xlu0 %v3791, 32
  %v5064 = vpop.permute.xlu0 %5063
  %5065 = vrot.lane.b32.xlu0 %v3792, 32
  %v5066 = vpop.permute.xlu0 %5065
  %5067 = vrot.lane.b32.xlu0 %v3793, 32
  %v5068 = vpop.permute.xlu0 %5067
  %5069 = vrot.lane.b32.xlu0 %v3794, 32
  %v5070 = vpop.permute.xlu0 %5069
  %5071 = vrot.lane.b32.xlu0 %v3795, 32
  %v5072 = vpop.permute.xlu0 %5071
  %5073 = vrot.lane.b32.xlu0 %v3796, 32
  %v5074 = vpop.permute.xlu0 %5073
  %5075 = vrot.lane.b32.xlu0 %v3797, 32
  %v5076 = vpop.permute.xlu0 %5075
  %5077 = vrot.lane.b32.xlu0 %v3798, 32
  %v5078 = vpop.permute.xlu0 %5077
  %5079 = vrot.lane.b32.xlu0 %v3799, 32
  %v5080 = vpop.permute.xlu0 %5079
  %5081 = vrot.lane.b32.xlu0 %v3800, 32
  %v5082 = vpop.permute.xlu0 %5081
  %5083 = vrot.lane.b32.xlu0 %v3801, 32
  %v5084 = vpop.permute.xlu0 %5083
  %5085 = vrot.lane.b32.xlu0 %v3802, 32
  %v5086 = vpop.permute.xlu0 %5085
  %5087 = vrot.lane.b32.xlu0 %v3803, 32
  %v5088 = vpop.permute.xlu0 %5087
  %5089 = vrot.lane.b32.xlu0 %v3804, 32
  %v5090 = vpop.permute.xlu0 %5089
  %5091 = vrot.lane.b32.xlu0 %v3805, 32
  %v5092 = vpop.permute.xlu0 %5091
  %5093 = vrot.lane.b32.xlu0 %v3806, 32
  %v5094 = vpop.permute.xlu0 %5093
  %5095 = vrot.lane.b32.xlu0 %v3807, 32
  %v5096 = vpop.permute.xlu0 %5095
  %5097 = vrot.lane.b32.xlu0 %v3808, 32
  %v5098 = vpop.permute.xlu0 %5097
  %5099 = vrot.lane.b32.xlu0 %v3809, 32
  %v5100 = vpop.permute.xlu0 %5099
  %5101 = vrot.lane.b32.xlu0 %v3810, 32
  %v5102 = vpop.permute.xlu0 %5101
  %5103 = vrot.lane.b32.xlu0 %v3811, 32
  %v5104 = vpop.permute.xlu0 %5103
  %5105 = vrot.lane.b32.xlu0 %v3812, 32
  %v5106 = vpop.permute.xlu0 %5105
  %5107 = vrot.lane.b32.xlu0 %v3813, 32
  %v5108 = vpop.permute.xlu0 %5107
  %5109 = vrot.lane.b32.xlu0 %v3814, 32
  %v5110 = vpop.permute.xlu0 %5109
  %5111 = vrot.lane.b32.xlu0 %v3815, 32
  %v5112 = vpop.permute.xlu0 %5111
  %5113 = vrot.lane.b32.xlu0 %v3816, 32
  %v5114 = vpop.permute.xlu0 %5113
  %5115 = vrot.lane.b32.xlu0 %v3817, 32
  %v5116 = vpop.permute.xlu0 %5115
  %5117 = vrot.lane.b32.xlu0 %v3818, 32
  %v5118 = vpop.permute.xlu0 %5117
  %5202 = vrot.lane.b32.xlu0 %v3740, 64
  %v5203 = vpop.permute.xlu0 %5202
  %5204 = vrot.lane.b32.xlu0 %v3741, 64
  %v5205 = vpop.permute.xlu0 %5204
  %5206 = vrot.lane.b32.xlu0 %v3742, 64
  %v5207 = vpop.permute.xlu0 %5206
  %5208 = vrot.lane.b32.xlu0 %v3743, 64
  %v5209 = vpop.permute.xlu0 %5208
  %5210 = vrot.lane.b32.xlu0 %v3744, 64
  %v5211 = vpop.permute.xlu0 %5210
  %5212 = vrot.lane.b32.xlu0 %v3745, 64
  %v5213 = vpop.permute.xlu0 %5212
  %5214 = vrot.lane.b32.xlu0 %v3746, 64
  %v5215 = vpop.permute.xlu0 %5214
  %5216 = vrot.lane.b32.xlu0 %v3747, 64
  %v5217 = vpop.permute.xlu0 %5216
  %5218 = vrot.lane.b32.xlu0 %v3748, 64
  %v5219 = vpop.permute.xlu0 %5218
  %5220 = vrot.lane.b32.xlu0 %v3749, 64
  %v5221 = vpop.permute.xlu0 %5220
  %5222 = vrot.lane.b32.xlu0 %v3750, 64
  %v5223 = vpop.permute.xlu0 %5222
  %5224 = vrot.lane.b32.xlu0 %v3751, 64
  %v5225 = vpop.permute.xlu0 %5224
  %5226 = vrot.lane.b32.xlu0 %v3752, 64
  %v5227 = vpop.permute.xlu0 %5226
  %5228 = vrot.lane.b32.xlu0 %v3753, 64
  %v5229 = vpop.permute.xlu0 %5228
  %5230 = vrot.lane.b32.xlu0 %v3754, 64
  %v5231 = vpop.permute.xlu0 %5230
  %5232 = vrot.lane.b32.xlu0 %v3755, 64
  %v5233 = vpop.permute.xlu0 %5232
  %5234 = vrot.lane.b32.xlu0 %v3756, 64
  %v5235 = vpop.permute.xlu0 %5234
  %5236 = vrot.lane.b32.xlu0 %v3757, 64
  %v5237 = vpop.permute.xlu0 %5236
  %5238 = vrot.lane.b32.xlu0 %v3758, 64
  %v5239 = vpop.permute.xlu0 %5238
  %5240 = vrot.lane.b32.xlu0 %v3759, 64
  %v5241 = vpop.permute.xlu0 %5240
  %5242 = vrot.lane.b32.xlu0 %v3760, 64
  %v5243 = vpop.permute.xlu0 %5242
  %5244 = vrot.lane.b32.xlu0 %v3761, 64
  %v5245 = vpop.permute.xlu0 %5244
  %5246 = vrot.lane.b32.xlu0 %v3762, 64
  %v5247 = vpop.permute.xlu0 %5246
  %5248 = vrot.lane.b32.xlu0 %v3763, 64
  %v5249 = vpop.permute.xlu0 %5248
  %5250 = vrot.lane.b32.xlu0 %v3764, 64
  %v5251 = vpop.permute.xlu0 %5250
  %5252 = vrot.lane.b32.xlu0 %v3765, 64
  %v5253 = vpop.permute.xlu0 %5252
  %5254 = vrot.lane.b32.xlu0 %v3766, 64
  %v5255 = vpop.permute.xlu0 %5254
  %5256 = vrot.lane.b32.xlu0 %v3767, 64
  %v5257 = vpop.permute.xlu0 %5256
  %5258 = vrot.lane.b32.xlu0 %v3768, 64
  %v5259 = vpop.permute.xlu0 %5258
  %5260 = vrot.lane.b32.xlu0 %v3769, 64
  %v5261 = vpop.permute.xlu0 %5260
  %5262 = vrot.lane.b32.xlu0 %v3770, 64
  %v5263 = vpop.permute.xlu0 %5262
  %5264 = vrot.lane.b32.xlu0 %v3771, 64
  %v5265 = vpop.permute.xlu0 %5264
  %5266 = vrot.lane.b32.xlu0 %v3772, 64
  %v5267 = vpop.permute.xlu0 %5266
  %5268 = vrot.lane.b32.xlu0 %v3773, 64
  %v5269 = vpop.permute.xlu0 %5268
  %5270 = vrot.lane.b32.xlu0 %v3774, 64
  %v5271 = vpop.permute.xlu0 %5270
  %5272 = vrot.lane.b32.xlu0 %v3775, 64
  %v5273 = vpop.permute.xlu0 %5272
  %5274 = vrot.lane.b32.xlu0 %v3776, 64
  %v5275 = vpop.permute.xlu0 %5274
  %5276 = vrot.lane.b32.xlu0 %v3777, 64
  %v5277 = vpop.permute.xlu0 %5276
  %5278 = vrot.lane.b32.xlu0 %v3778, 64
  %v5279 = vpop.permute.xlu0 %5278
  %5280 = vrot.lane.b32.xlu0 %v3779, 64
  %v5281 = vpop.permute.xlu0 %5280
  %5282 = vrot.lane.b32.xlu0 %v3780, 64
  %v5283 = vpop.permute.xlu0 %5282
  %5284 = vrot.lane.b32.xlu0 %v3781, 64
  %v5285 = vpop.permute.xlu0 %5284
  %5286 = vrot.lane.b32.xlu0 %v3782, 64
  %v5287 = vpop.permute.xlu0 %5286
  %5288 = vrot.lane.b32.xlu0 %v3783, 64
  %v5289 = vpop.permute.xlu0 %5288
  %5290 = vrot.lane.b32.xlu0 %v3784, 64
  %v5291 = vpop.permute.xlu0 %5290
  %5292 = vrot.lane.b32.xlu0 %v3785, 64
  %v5293 = vpop.permute.xlu0 %5292
  %5294 = vrot.lane.b32.xlu0 %v3786, 64
  %v5295 = vpop.permute.xlu0 %5294
  %5296 = vrot.lane.b32.xlu0 %v3787, 64
  %v5297 = vpop.permute.xlu0 %5296
  %5298 = vrot.lane.b32.xlu0 %v3788, 64
  %v5299 = vpop.permute.xlu0 %5298
  %5300 = vrot.lane.b32.xlu0 %v3789, 64
  %v5301 = vpop.permute.xlu0 %5300
  %5302 = vrot.lane.b32.xlu0 %v3790, 64
  %v5303 = vpop.permute.xlu0 %5302
  %5304 = vrot.lane.b32.xlu0 %v3791, 64
  %v5305 = vpop.permute.xlu0 %5304
  %5306 = vrot.lane.b32.xlu0 %v3792, 64
  %v5307 = vpop.permute.xlu0 %5306
  %5308 = vrot.lane.b32.xlu0 %v3793, 64
  %v5309 = vpop.permute.xlu0 %5308
  %5310 = vrot.lane.b32.xlu0 %v3794, 64
  %v5311 = vpop.permute.xlu0 %5310
  %5312 = vrot.lane.b32.xlu0 %v3795, 64
  %v5313 = vpop.permute.xlu0 %5312
  %5314 = vrot.lane.b32.xlu0 %v3796, 64
  %v5315 = vpop.permute.xlu0 %5314
  %5316 = vrot.lane.b32.xlu0 %v3797, 64
  %v5317 = vpop.permute.xlu0 %5316
  %5318 = vrot.lane.b32.xlu0 %v3798, 64
  %v5319 = vpop.permute.xlu0 %5318
  %5320 = vrot.lane.b32.xlu0 %v3799, 64
  %v5321 = vpop.permute.xlu0 %5320
  %5322 = vrot.lane.b32.xlu0 %v3800, 64
  %v5323 = vpop.permute.xlu0 %5322
  %5324 = vrot.lane.b32.xlu0 %v3801, 64
  %v5325 = vpop.permute.xlu0 %5324
  %5326 = vrot.lane.b32.xlu0 %v3802, 64
  %v5327 = vpop.permute.xlu0 %5326
  %5328 = vrot.lane.b32.xlu0 %v3803, 64
  %v5329 = vpop.permute.xlu0 %5328
  %5330 = vrot.lane.b32.xlu0 %v3804, 64
  %v5331 = vpop.permute.xlu0 %5330
  %5332 = vrot.lane.b32.xlu0 %v3805, 64
  %v5333 = vpop.permute.xlu0 %5332
  %5334 = vrot.lane.b32.xlu0 %v3806, 64
  %v5335 = vpop.permute.xlu0 %5334
  %5336 = vrot.lane.b32.xlu0 %v3807, 64
  %v5337 = vpop.permute.xlu0 %5336
  %5338 = vrot.lane.b32.xlu0 %v3808, 64
  %v5339 = vpop.permute.xlu0 %5338
  %5340 = vrot.lane.b32.xlu0 %v3809, 64
  %v5341 = vpop.permute.xlu0 %5340
  %5342 = vrot.lane.b32.xlu0 %v3810, 64
  %v5343 = vpop.permute.xlu0 %5342
  %5344 = vrot.lane.b32.xlu0 %v3811, 64
  %v5345 = vpop.permute.xlu0 %5344
  %5346 = vrot.lane.b32.xlu0 %v3812, 64
  %v5347 = vpop.permute.xlu0 %5346
  %5348 = vrot.lane.b32.xlu0 %v3813, 64
  %v5349 = vpop.permute.xlu0 %5348
  %5350 = vrot.lane.b32.xlu0 %v3814, 64
  %v5351 = vpop.permute.xlu0 %5350
  %5352 = vrot.lane.b32.xlu0 %v3815, 64
  %v5353 = vpop.permute.xlu0 %5352
  %5354 = vrot.lane.b32.xlu0 %v3816, 64
  %v5355 = vpop.permute.xlu0 %5354
  %5356 = vrot.lane.b32.xlu0 %v3817, 64
  %v5357 = vpop.permute.xlu0 %5356
  %5358 = vrot.lane.b32.xlu0 %v3818, 64
  %v5359 = vpop.permute.xlu0 %5358
  %5360 = vrot.lane.b32.xlu0 %v3819, 64
  %v5361 = vpop.permute.xlu0 %5360
  %5362 = vrot.lane.b32.xlu0 %v3820, 64
  %v5363 = vpop.permute.xlu0 %5362
  %5526 = vrot.lane.b32.xlu0 %v3821, 96
  %v5527 = vpop.permute.xlu0 %5526
  %5528 = vrot.lane.b32.xlu0 %v3822, 96
  %v5529 = vpop.permute.xlu0 %5528
  %5530 = vrot.lane.b32.xlu0 %v3823, 96
  %v5531 = vpop.permute.xlu0 %5530
  %5532 = vrot.lane.b32.xlu0 %v3824, 96
  %v5533 = vpop.permute.xlu0 %5532
  %5534 = vrot.lane.b32.xlu0 %v3825, 96
  %v5535 = vpop.permute.xlu0 %5534
  %5536 = vrot.lane.b32.xlu0 %v3826, 96
  %v5537 = vpop.permute.xlu0 %5536
  %5538 = vrot.lane.b32.xlu0 %v3827, 96
  %v5539 = vpop.permute.xlu0 %5538
  %5540 = vrot.lane.b32.xlu0 %v3828, 96
  %v5541 = vpop.permute.xlu0 %5540
  %5542 = vrot.lane.b32.xlu0 %v3829, 96
  %v5543 = vpop.permute.xlu0 %5542
  %5544 = vrot.lane.b32.xlu0 %v3830, 96
  %v5545 = vpop.permute.xlu0 %5544
  %5546 = vrot.lane.b32.xlu0 %v3831, 96
  %v5547 = vpop.permute.xlu0 %5546
  %5548 = vrot.lane.b32.xlu0 %v3832, 96
  %v5549 = vpop.permute.xlu0 %5548
  %5550 = vrot.lane.b32.xlu0 %v3833, 96
  %v5551 = vpop.permute.xlu0 %5550
  %5552 = vrot.lane.b32.xlu0 %v3834, 96
  %v5553 = vpop.permute.xlu0 %5552
  %5554 = vrot.lane.b32.xlu0 %v3835, 96
  %v5555 = vpop.permute.xlu0 %5554
  %5556 = vrot.lane.b32.xlu0 %v3836, 96
  %v5557 = vpop.permute.xlu0 %5556
  %5558 = vrot.lane.b32.xlu0 %v3837, 96
  %v5559 = vpop.permute.xlu0 %5558
  %5560 = vrot.lane.b32.xlu0 %v3838, 96
  %v5561 = vpop.permute.xlu0 %5560
  %5562 = vrot.lane.b32.xlu0 %v3839, 96
  %v5563 = vpop.permute.xlu0 %5562
  %5564 = vrot.lane.b32.xlu0 %v3840, 96
  %v5565 = vpop.permute.xlu0 %5564
  %5566 = vrot.lane.b32.xlu0 %v3841, 96
  %v5567 = vpop.permute.xlu0 %5566
  %5568 = vrot.lane.b32.xlu0 %v3842, 96
  %v5569 = vpop.permute.xlu0 %5568
  %5570 = vrot.lane.b32.xlu0 %v3843, 96
  %v5571 = vpop.permute.xlu0 %5570
  %5572 = vrot.lane.b32.xlu0 %v3844, 96
  %v5573 = vpop.permute.xlu0 %5572
  %5574 = vrot.lane.b32.xlu0 %v3845, 96
  %v5575 = vpop.permute.xlu0 %5574
  %5576 = vrot.lane.b32.xlu0 %v3846, 96
  %v5577 = vpop.permute.xlu0 %5576
  %5578 = vrot.lane.b32.xlu0 %v3847, 96
  %v5579 = vpop.permute.xlu0 %5578
  %5580 = vrot.lane.b32.xlu0 %v3848, 96
  %v5581 = vpop.permute.xlu0 %5580
  %5582 = vrot.lane.b32.xlu0 %v3849, 96
  %v5583 = vpop.permute.xlu0 %5582
  %5584 = vrot.lane.b32.xlu0 %v3850, 96
  %v5585 = vpop.permute.xlu0 %5584
  %5586 = vrot.lane.b32.xlu0 %v3851, 96
  %v5587 = vpop.permute.xlu0 %5586
  %5588 = vrot.lane.b32.xlu0 %v3852, 96
  %v5589 = vpop.permute.xlu0 %5588
  %5590 = vrot.lane.b32.xlu0 %v3853, 96
  %v5591 = vpop.permute.xlu0 %5590
  %5592 = vrot.lane.b32.xlu0 %v3854, 96
  %v5593 = vpop.permute.xlu0 %5592
  %5594 = vrot.lane.b32.xlu0 %v3855, 96
  %v5595 = vpop.permute.xlu0 %5594
  %5596 = vrot.lane.b32.xlu0 %v3856, 96
  %v5597 = vpop.permute.xlu0 %5596
  %5598 = vrot.lane.b32.xlu0 %v3857, 96
  %v5599 = vpop.permute.xlu0 %5598
  %5600 = vrot.lane.b32.xlu0 %v3858, 96
  %v5601 = vpop.permute.xlu0 %5600
  %5602 = vrot.lane.b32.xlu0 %v3859, 96
  %v5603 = vpop.permute.xlu0 %5602
  %5604 = vrot.lane.b32.xlu0 %v3860, 96
  %v5605 = vpop.permute.xlu0 %5604
  %5606 = vrot.lane.b32.xlu0 %v3861, 96
  %v5607 = vpop.permute.xlu0 %5606
  %5608 = vrot.lane.b32.xlu0 %v3862, 96
  %v5609 = vpop.permute.xlu0 %5608
  %5610 = vrot.lane.b32.xlu0 %v3863, 96
  %v5611 = vpop.permute.xlu0 %5610
  %5612 = vrot.lane.b32.xlu0 %v3864, 96
  %v5613 = vpop.permute.xlu0 %5612
  %5614 = vrot.lane.b32.xlu0 %v3865, 96
  %v5615 = vpop.permute.xlu0 %5614
  %5616 = vrot.lane.b32.xlu0 %v3866, 96
  %v5617 = vpop.permute.xlu0 %5616
  %5618 = vrot.lane.b32.xlu0 %v3867, 96
  %v5619 = vpop.permute.xlu0 %5618
  %5620 = vrot.lane.b32.xlu0 %v3868, 96
  %v5621 = vpop.permute.xlu0 %5620
  %5622 = vrot.lane.b32.xlu0 %v3869, 96
  %v5623 = vpop.permute.xlu0 %5622
  %5624 = vrot.lane.b32.xlu0 %v3870, 96
  %v5625 = vpop.permute.xlu0 %5624
  %5626 = vrot.lane.b32.xlu0 %v3871, 96
  %v5627 = vpop.permute.xlu0 %5626
  %5628 = vrot.lane.b32.xlu0 %v3872, 96
  %v5629 = vpop.permute.xlu0 %5628
  %5630 = vrot.lane.b32.xlu0 %v3873, 96
  %v5631 = vpop.permute.xlu0 %5630
  %5632 = vrot.lane.b32.xlu0 %v3874, 96
  %v5633 = vpop.permute.xlu0 %5632
  %5634 = vrot.lane.b32.xlu0 %v3875, 96
  %v5635 = vpop.permute.xlu0 %5634
  %5636 = vrot.lane.b32.xlu0 %v3876, 96
  %v5637 = vpop.permute.xlu0 %5636
  %5638 = vrot.lane.b32.xlu0 %v3877, 96
  %v5639 = vpop.permute.xlu0 %5638
  %5640 = vrot.lane.b32.xlu0 %v3878, 96
  %v5641 = vpop.permute.xlu0 %5640
  %5642 = vrot.lane.b32.xlu0 %v3879, 96
  %v5643 = vpop.permute.xlu0 %5642
  %5644 = vrot.lane.b32.xlu0 %v3880, 96
  %v5645 = vpop.permute.xlu0 %5644
  %5646 = vrot.lane.b32.xlu0 %v3881, 96
  %v5647 = vpop.permute.xlu0 %5646
  %5648 = vrot.lane.b32.xlu0 %v3882, 96
  %v5649 = vpop.permute.xlu0 %5648
  %5650 = vrot.lane.b32.xlu0 %v3883, 96
  %v5651 = vpop.permute.xlu0 %5650
  %5652 = vrot.lane.b32.xlu0 %v3884, 96
  %v5653 = vpop.permute.xlu0 %5652
  %5654 = vrot.lane.b32.xlu0 %v3885, 96
  %v5655 = vpop.permute.xlu0 %5654
  %5656 = vrot.lane.b32.xlu0 %v3886, 96
  %v5657 = vpop.permute.xlu0 %5656
  %5658 = vrot.lane.b32.xlu0 %v3887, 96
  %v5659 = vpop.permute.xlu0 %5658
  %5660 = vrot.lane.b32.xlu0 %v3888, 96
  %v5661 = vpop.permute.xlu0 %5660
  %5662 = vrot.lane.b32.xlu0 %v3889, 96
  %v5663 = vpop.permute.xlu0 %5662
  %5664 = vrot.lane.b32.xlu0 %v3890, 96
  %v5665 = vpop.permute.xlu0 %5664
  %5666 = vrot.lane.b32.xlu0 %v3891, 96
  %v5667 = vpop.permute.xlu0 %5666
  %5668 = vrot.lane.b32.xlu0 %v3892, 96
  %v5669 = vpop.permute.xlu0 %5668
  %5670 = vrot.lane.b32.xlu0 %v3893, 96
  %v5671 = vpop.permute.xlu0 %5670
  %5672 = vrot.lane.b32.xlu0 %v3894, 96
  %v5673 = vpop.permute.xlu0 %5672
  %5674 = vrot.lane.b32.xlu0 %v3895, 96
  %v5675 = vpop.permute.xlu0 %5674
  %5676 = vrot.lane.b32.xlu0 %v3896, 96
  %v5677 = vpop.permute.xlu0 %5676
  %5678 = vrot.lane.b32.xlu0 %v3897, 96
  %v5679 = vpop.permute.xlu0 %5678
  %5680 = vrot.lane.b32.xlu0 %v3898, 96
  %v5681 = vpop.permute.xlu0 %5680
  %5682 = vrot.lane.b32.xlu0 %v3899, 96
  %v5683 = vpop.permute.xlu0 %5682
  %5684 = vrot.lane.b32.xlu0 %v3900, 96
  %v5685 = vpop.permute.xlu0 %5684
  %5686 = vrot.lane.b32.xlu0 %v3901, 96
  %v5687 = vpop.permute.xlu0 %5686
  %v5769 = vsel %vm2999, %v3412, %v4065
  %v5770 = vsel %vm2999, %v3413, %v4067
  %v5771 = vsel %vm2999, %v3414, %v4069
  %v5772 = vsel %vm2999, %v3415, %v4071
  %v5773 = vsel %vm2999, %v3416, %v4073
  %v5774 = vsel %vm2999, %v3417, %v4075
  %v5775 = vsel %vm2999, %v3418, %v4077
  %v5776 = vsel %vm2999, %v3419, %v4079
  %v5777 = vsel %vm2999, %v3420, %v4081
  %v5778 = vsel %vm2999, %v3421, %v4083
  %v5779 = vsel %vm2999, %v3422, %v4085
  %v5780 = vsel %vm2999, %v3423, %v4087
  %v5781 = vsel %vm2999, %v3424, %v4089
  %v5782 = vsel %vm2999, %v3425, %v4091
  %v5783 = vsel %vm2999, %v3426, %v4093
  %v5784 = vsel %vm2999, %v3427, %v4095
  %v5785 = vsel %vm2999, %v3428, %v4097
  %v5786 = vsel %vm2999, %v3429, %v4099
  %v5787 = vsel %vm2999, %v3430, %v4101
  %v5788 = vsel %vm2999, %v3431, %v4103
  %v5789 = vsel %vm2999, %v3432, %v4105
  %v5790 = vsel %vm2999, %v3433, %v4107
  %v5791 = vsel %vm2999, %v3434, %v4109
  %v5792 = vsel %vm2999, %v3435, %v4111
  %v5793 = vsel %vm2999, %v3436, %v4113
  %v5794 = vsel %vm2999, %v3437, %v4115
  %v5795 = vsel %vm2999, %v3438, %v4117
  %v5796 = vsel %vm2999, %v3439, %v4119
  %v5797 = vsel %vm2999, %v3440, %v4121
  %v5798 = vsel %vm2999, %v3441, %v4123
  %v5799 = vsel %vm2999, %v3442, %v4125
  %v5800 = vsel %vm2999, %v3443, %v4127
  %v5801 = vsel %vm2999, %v3444, %v4129
  %v5802 = vsel %vm2999, %v3445, %v4131
  %v5803 = vsel %vm2999, %v3446, %v4133
  %v5804 = vsel %vm2999, %v3447, %v4135
  %v5805 = vsel %vm2999, %v3448, %v4137
  %v5806 = vsel %vm2999, %v3449, %v4139
  %v5807 = vsel %vm2999, %v3450, %v4141
  %v5808 = vsel %vm2999, %v3451, %v4143
  %v5809 = vsel %vm2999, %v3452, %v4145
  %v5810 = vsel %vm2999, %v3453, %v4147
  %v5811 = vsel %vm2999, %v3454, %v4149
  %v5812 = vsel %vm2999, %v3455, %v4151
  %v5813 = vsel %vm2999, %v3456, %v4153
  %v5814 = vsel %vm2999, %v3457, %v4155
  %v5815 = vsel %vm2999, %v3458, %v4157
  %v5816 = vsel %vm2999, %v3459, %v4159
  %v5817 = vsel %vm2999, %v3460, %v4161
  %v5818 = vsel %vm2999, %v3461, %v4163
  %v5819 = vsel %vm2999, %v3462, %v4165
  %v5820 = vsel %vm2999, %v3463, %v4167
  %v5821 = vsel %vm2999, %v3464, %v4169
  %v5822 = vsel %vm2999, %v3465, %v4171
  %v5823 = vsel %vm2999, %v3466, %v4173
  %v5824 = vsel %vm2999, %v3467, %v4175
  %v5825 = vsel %vm2999, %v3468, %v4177
  %v5826 = vsel %vm2999, %v3469, %v4179
  %v5827 = vsel %vm2999, %v3470, %v4181
  %v5828 = vsel %vm2999, %v3471, %v4183
  %v5829 = vsel %vm2999, %v3472, %v4185
  %v5830 = vsel %vm2999, %v3473, %v4187
  %v5831 = vsel %vm2999, %v3474, %v4189
  %v5832 = vsel %vm2999, %v3475, %v4191
  %v5833 = vsel %vm2999, %v3476, %v4193
  %v5834 = vsel %vm2999, %v3477, %v4195
  %v5835 = vsel %vm2999, %v3478, %v4197
  %v5836 = vsel %vm2999, %v3479, %v4199
  %v5837 = vsel %vm2999, %v3480, %v4201
  %v5838 = vsel %vm2999, %v3481, %v4203
  %v5839 = vsel %vm2999, %v3482, %v4205
  %v5840 = vsel %vm2999, %v3483, %v4207
  %v5841 = vsel %vm2999, %v3484, %v4209
  %v5842 = vsel %vm2999, %v3485, %v4211
  %v5843 = vsel %vm2999, %v3486, %v4213
  %v5844 = vsel %vm2999, %v3487, %v4215
  %v5845 = vsel %vm2999, %v3488, %v4217
  %v5846 = vsel %vm2999, %v3489, %v4219
  %v5847 = vsel %vm2999, %v3490, %v4221
  %v5848 = vsel %vm2999, %v3491, %v4223
  %v5849 = vsel %vm2999, %v3492, %v4225
  %vm5850 = vcmask 523264
  %v5851 = vsel %vm5850, %v5769, %v4389
  %v5852 = vsel %vm5850, %v5770, %v4391
  %v5853 = vsel %vm5850, %v5771, %v4393
  %v5854 = vsel %vm5850, %v5772, %v4395
  %v5855 = vsel %vm5850, %v5773, %v4397
  %v5856 = vsel %vm5850, %v5774, %v4399
  %v5857 = vsel %vm5850, %v5775, %v4401
  %v5858 = vsel %vm5850, %v5776, %v4403
  %v5859 = vsel %vm5850, %v5777, %v4405
  %v5860 = vsel %vm5850, %v5778, %v4407
  %v5861 = vsel %vm5850, %v5779, %v4409
  %v5862 = vsel %vm5850, %v5780, %v4411
  %v5863 = vsel %vm5850, %v5781, %v4413
  %v5864 = vsel %vm5850, %v5782, %v4415
  %v5865 = vsel %vm5850, %v5783, %v4417
  %v5866 = vsel %vm5850, %v5784, %v4419
  %v5867 = vsel %vm5850, %v5785, %v4421
  %v5868 = vsel %vm5850, %v5786, %v4423
  %v5869 = vsel %vm5850, %v5787, %v4425
  %v5870 = vsel %vm5850, %v5788, %v4427
  %v5871 = vsel %vm5850, %v5789, %v4429
  %v5872 = vsel %vm5850, %v5790, %v4431
  %v5873 = vsel %vm5850, %v5791, %v4433
  %v5874 = vsel %vm5850, %v5792, %v4435
  %v5875 = vsel %vm5850, %v5793, %v4437
  %v5876 = vsel %vm5850, %v5794, %v4439
  %v5877 = vsel %vm5850, %v5795, %v4441
  %v5878 = vsel %vm5850, %v5796, %v4443
  %v5879 = vsel %vm5850, %v5797, %v4445
  %v5880 = vsel %vm5850, %v5798, %v4447
  %v5881 = vsel %vm5850, %v5799, %v4449
  %v5882 = vsel %vm5850, %v5800, %v4451
  %v5883 = vsel %vm5850, %v5801, %v4453
  %v5884 = vsel %vm5850, %v5802, %v4455
  %v5885 = vsel %vm5850, %v5803, %v4457
  %v5886 = vsel %vm5850, %v5804, %v4459
  %v5887 = vsel %vm5850, %v5805, %v4461
  %v5888 = vsel %vm5850, %v5806, %v4463
  %v5889 = vsel %vm5850, %v5807, %v4465
  %v5890 = vsel %vm5850, %v5808, %v4467
  %v5891 = vsel %vm5850, %v5809, %v4469
  %v5892 = vsel %vm5850, %v5810, %v4471
  %v5893 = vsel %vm5850, %v5811, %v4473
  %v5894 = vsel %vm5850, %v5812, %v4475
  %v5895 = vsel %vm5850, %v5813, %v4477
  %v5896 = vsel %vm5850, %v5814, %v4479
  %v5897 = vsel %vm5850, %v5815, %v4481
  %v5898 = vsel %vm5850, %v5816, %v4483
  %v5899 = vsel %vm5850, %v5817, %v4485
  %v5900 = vsel %vm5850, %v5818, %v4487
  %v5901 = vsel %vm5850, %v5819, %v4489
  %v5902 = vsel %vm5850, %v5820, %v4491
  %v5903 = vsel %vm5850, %v5821, %v4493
  %v5904 = vsel %vm5850, %v5822, %v4495
  %v5905 = vsel %vm5850, %v5823, %v4497
  %v5906 = vsel %vm5850, %v5824, %v4499
  %v5907 = vsel %vm5850, %v5825, %v4501
  %v5908 = vsel %vm5850, %v5826, %v4503
  %v5909 = vsel %vm5850, %v5827, %v4505
  %v5910 = vsel %vm5850, %v5828, %v4507
  %v5911 = vsel %vm5850, %v5829, %v4509
  %v5912 = vsel %vm5850, %v5830, %v4511
  %v5913 = vsel %vm5850, %v5831, %v4513
  %v5914 = vsel %vm5850, %v5832, %v4515
  %v5915 = vsel %vm5850, %v5833, %v4517
  %v5916 = vsel %vm5850, %v5834, %v4519
  %v5917 = vsel %vm5850, %v5835, %v4521
  %v5918 = vsel %vm5850, %v5836, %v4523
  %v5919 = vsel %vm5850, %v5837, %v4525
  %v5920 = vsel %vm5850, %v5838, %v4527
  %v5921 = vsel %vm5850, %v5839, %v4529
  %v5922 = vsel %vm5850, %v5840, %v4531
  %v5923 = vsel %vm5850, %v5841, %v4533
  %v5924 = vsel %vm5850, %v5842, %v4535
  %v5925 = vsel %vm5850, %v5843, %v4537
  %v5926 = vsel %vm5850, %v5844, %v4539
  %v5927 = vsel %vm5850, %v5845, %v4541
  %v5928 = vsel %vm5850, %v5846, %v4543
  %v5929 = vsel %vm5850, %v5847, %v4545
  %v5930 = vsel %vm5850, %v5848, %v4547
  %v5931 = vsel %vm5850, %v5849, %v4549
  %vm5932 = vcmask 785408
  %v5933 = vsel %vm5932, %v5851, %v4634
  %v5934 = vsel %vm5932, %v5852, %v4636
  %v5935 = vsel %vm5932, %v5853, %v4638
  %v5936 = vsel %vm5932, %v5854, %v4640
  %v5937 = vsel %vm5932, %v5855, %v4642
  %v5938 = vsel %vm5932, %v5856, %v4644
  %v5939 = vsel %vm5932, %v5857, %v4646
  %v5940 = vsel %vm5932, %v5858, %v4648
  %v5941 = vsel %vm5932, %v5859, %v4650
  %v5942 = vsel %vm5932, %v5860, %v4652
  %v5943 = vsel %vm5932, %v5861, %v4654
  %v5944 = vsel %vm5932, %v5862, %v4656
  %v5945 = vsel %vm5932, %v5863, %v4658
  %v5946 = vsel %vm5932, %v5864, %v4660
  %v5947 = vsel %vm5932, %v5865, %v4662
  %v5948 = vsel %vm5932, %v5866, %v4664
  %v5949 = vsel %vm5932, %v5867, %v4666
  %v5950 = vsel %vm5932, %v5868, %v4668
  %v5951 = vsel %vm5932, %v5869, %v4670
  %v5952 = vsel %vm5932, %v5870, %v4672
  %v5953 = vsel %vm5932, %v5871, %v4674
  %v5954 = vsel %vm5932, %v5872, %v4676
  %v5955 = vsel %vm5932, %v5873, %v4678
  %v5956 = vsel %vm5932, %v5874, %v4680
  %v5957 = vsel %vm5932, %v5875, %v4682
  %v5958 = vsel %vm5932, %v5876, %v4684
  %v5959 = vsel %vm5932, %v5877, %v4686
  %v5960 = vsel %vm5932, %v5878, %v4688
  %v5961 = vsel %vm5932, %v5879, %v4690
  %v5962 = vsel %vm5932, %v5880, %v4692
  %v5963 = vsel %vm5932, %v5881, %v4694
  %v5964 = vsel %vm5932, %v5882, %v4696
  %v5965 = vsel %vm5932, %v5883, %v4698
  %v5966 = vsel %vm5932, %v5884, %v4700
  %v5967 = vsel %vm5932, %v5885, %v4702
  %v5968 = vsel %vm5932, %v5886, %v4704
  %v5969 = vsel %vm5932, %v5887, %v4706
  %v5970 = vsel %vm5932, %v5888, %v4708
  %v5971 = vsel %vm5932, %v5889, %v4710
  %v5972 = vsel %vm5932, %v5890, %v4712
  %v5973 = vsel %vm5932, %v5891, %v4714
  %v5974 = vsel %vm5932, %v5892, %v4716
  %v5975 = vsel %vm5932, %v5893, %v4718
  %v5976 = vsel %vm5932, %v5894, %v4720
  %v5977 = vsel %vm5932, %v5895, %v4722
  %v5978 = vsel %vm5932, %v5896, %v4724
  %v5979 = vsel %vm5932, %v5897, %v4726
  %v5980 = vsel %vm5932, %v5898, %v4728
  %v5981 = vsel %vm5932, %v5899, %v4730
  %v5982 = vsel %vm5932, %v5900, %v4732
  %v5983 = vsel %vm5932, %v5901, %v4734
  %v5984 = vsel %vm5932, %v5902, %v4736
  %v5985 = vsel %vm5932, %v5903, %v4738
  %v5986 = vsel %vm5932, %v5904, %v4740
  %v5987 = vsel %vm5932, %v5905, %v4742
  %v5988 = vsel %vm5932, %v5906, %v4744
  %v5989 = vsel %vm5932, %v5907, %v4746
  %v5990 = vsel %vm5932, %v5908, %v4748
  %v5991 = vsel %vm5932, %v5909, %v4750
  %v5992 = vsel %vm5932, %v5910, %v4752
  %v5993 = vsel %vm5932, %v5911, %v4754
  %v5994 = vsel %vm5932, %v5912, %v4756
  %v5995 = vsel %vm5932, %v5913, %v4758
  %v5996 = vsel %vm5932, %v5914, %v4760
  %v5997 = vsel %vm5932, %v5915, %v4762
  %v5998 = vsel %vm5932, %v5916, %v4764
  %v5999 = vsel %vm5932, %v5917, %v4766
  %v6000 = vsel %vm5932, %v5918, %v4768
  %v6001 = vsel %vm5932, %v5919, %v4770
  %v6002 = vsel %vm5932, %v5920, %v4772
  %v6003 = vsel %vm5932, %v5921, %v4774
  %v6004 = vsel %vm5932, %v5922, %v4776
  %v6005 = vsel %vm5932, %v5923, %v4778
  %v6006 = vsel %vm5932, %v5924, %v4780
  %v6007 = vsel %vm5932, %v5925, %v4782
  %v6008 = vsel %vm5932, %v5926, %v4784
  %v6009 = vsel %vm5932, %v5927, %v4786
  %v6010 = vsel %vm5932, %v5928, %v4788
  %v6011 = vsel %vm5932, %v5929, %v4790
  %v6012 = vsel %vm5932, %v5930, %v4792
  %v6013 = vsel %vm5932, %v5931, %v4794
  %v6014 = vsel %vm2999, %v3657, %v4958
  %v6015 = vsel %vm2999, %v3658, %v4960
  %v6016 = vsel %vm2999, %v3659, %v4962
  %v6017 = vsel %vm2999, %v3660, %v4964
  %v6018 = vsel %vm2999, %v3661, %v4966
  %v6019 = vsel %vm2999, %v3662, %v4968
  %v6020 = vsel %vm2999, %v3663, %v4970
  %v6021 = vsel %vm2999, %v3664, %v4972
  %v6022 = vsel %vm2999, %v3665, %v4974
  %v6023 = vsel %vm2999, %v3666, %v4976
  %v6024 = vsel %vm2999, %v3667, %v4978
  %v6025 = vsel %vm2999, %v3668, %v4980
  %v6026 = vsel %vm2999, %v3669, %v4982
  %v6027 = vsel %vm2999, %v3670, %v4984
  %v6028 = vsel %vm2999, %v3671, %v4986
  %v6029 = vsel %vm2999, %v3672, %v4988
  %v6030 = vsel %vm2999, %v3673, %v4990
  %v6031 = vsel %vm2999, %v3674, %v4992
  %v6032 = vsel %vm2999, %v3675, %v4994
  %v6033 = vsel %vm2999, %v3676, %v4996
  %v6034 = vsel %vm2999, %v3677, %v4998
  %v6035 = vsel %vm2999, %v3678, %v5000
  %v6036 = vsel %vm2999, %v3679, %v5002
  %v6037 = vsel %vm2999, %v3680, %v5004
  %v6038 = vsel %vm2999, %v3681, %v5006
  %v6039 = vsel %vm2999, %v3682, %v5008
  %v6040 = vsel %vm2999, %v3683, %v5010
  %v6041 = vsel %vm2999, %v3684, %v5012
  %v6042 = vsel %vm2999, %v3685, %v5014
  %v6043 = vsel %vm2999, %v3686, %v5016
  %v6044 = vsel %vm2999, %v3687, %v5018
  %v6045 = vsel %vm2999, %v3688, %v5020
  %v6046 = vsel %vm2999, %v3689, %v5022
  %v6047 = vsel %vm2999, %v3690, %v5024
  %v6048 = vsel %vm2999, %v3691, %v5026
  %v6049 = vsel %vm2999, %v3692, %v5028
  %v6050 = vsel %vm2999, %v3693, %v5030
  %v6051 = vsel %vm2999, %v3694, %v5032
  %v6052 = vsel %vm2999, %v3695, %v5034
  %v6053 = vsel %vm2999, %v3696, %v5036
  %v6054 = vsel %vm2999, %v3697, %v5038
  %v6055 = vsel %vm2999, %v3698, %v5040
  %v6056 = vsel %vm2999, %v3699, %v5042
  %v6057 = vsel %vm2999, %v3700, %v5044
  %v6058 = vsel %vm2999, %v3701, %v5046
  %v6059 = vsel %vm2999, %v3702, %v5048
  %v6060 = vsel %vm2999, %v3703, %v5050
  %v6061 = vsel %vm2999, %v3704, %v5052
  %v6062 = vsel %vm2999, %v3705, %v5054
  %v6063 = vsel %vm2999, %v3706, %v5056
  %v6064 = vsel %vm2999, %v3707, %v5058
  %v6065 = vsel %vm2999, %v3708, %v5060
  %v6066 = vsel %vm2999, %v3709, %v5062
  %v6067 = vsel %vm2999, %v3710, %v5064
  %v6068 = vsel %vm2999, %v3711, %v5066
  %v6069 = vsel %vm2999, %v3712, %v5068
  %v6070 = vsel %vm2999, %v3713, %v5070
  %v6071 = vsel %vm2999, %v3714, %v5072
  %v6072 = vsel %vm2999, %v3715, %v5074
  %v6073 = vsel %vm2999, %v3716, %v5076
  %v6074 = vsel %vm2999, %v3717, %v5078
  %v6075 = vsel %vm2999, %v3718, %v5080
  %v6076 = vsel %vm2999, %v3719, %v5082
  %v6077 = vsel %vm2999, %v3720, %v5084
  %v6078 = vsel %vm2999, %v3721, %v5086
  %v6079 = vsel %vm2999, %v3722, %v5088
  %v6080 = vsel %vm2999, %v3723, %v5090
  %v6081 = vsel %vm2999, %v3724, %v5092
  %v6082 = vsel %vm2999, %v3725, %v5094
  %v6083 = vsel %vm2999, %v3726, %v5096
  %v6084 = vsel %vm2999, %v3727, %v5098
  %v6085 = vsel %vm2999, %v3728, %v5100
  %v6086 = vsel %vm2999, %v3729, %v5102
  %v6087 = vsel %vm2999, %v3730, %v5104
  %v6088 = vsel %vm2999, %v3731, %v5106
  %v6089 = vsel %vm2999, %v3732, %v5108
  %v6090 = vsel %vm2999, %v3733, %v5110
  %v6091 = vsel %vm2999, %v3734, %v5112
  %v6092 = vsel %vm2999, %v3735, %v5114
  %v6093 = vsel %vm2999, %v3736, %v5116
  %v6094 = vsel %vm2999, %v3737, %v5118
  %v6095 = vsel %vm5850, %v6014, %v5203
  %v6096 = vsel %vm5850, %v6015, %v5205
  %v6097 = vsel %vm5850, %v6016, %v5207
  %v6098 = vsel %vm5850, %v6017, %v5209
  %v6099 = vsel %vm5850, %v6018, %v5211
  %v6100 = vsel %vm5850, %v6019, %v5213
  %v6101 = vsel %vm5850, %v6020, %v5215
  %v6102 = vsel %vm5850, %v6021, %v5217
  %v6103 = vsel %vm5850, %v6022, %v5219
  %v6104 = vsel %vm5850, %v6023, %v5221
  %v6105 = vsel %vm5850, %v6024, %v5223
  %v6106 = vsel %vm5850, %v6025, %v5225
  %v6107 = vsel %vm5850, %v6026, %v5227
  %v6108 = vsel %vm5850, %v6027, %v5229
  %v6109 = vsel %vm5850, %v6028, %v5231
  %v6110 = vsel %vm5850, %v6029, %v5233
  %v6111 = vsel %vm5850, %v6030, %v5235
  %v6112 = vsel %vm5850, %v6031, %v5237
  %v6113 = vsel %vm5850, %v6032, %v5239
  %v6114 = vsel %vm5850, %v6033, %v5241
  %v6115 = vsel %vm5850, %v6034, %v5243
  %v6116 = vsel %vm5850, %v6035, %v5245
  %v6117 = vsel %vm5850, %v6036, %v5247
  %v6118 = vsel %vm5850, %v6037, %v5249
  %v6119 = vsel %vm5850, %v6038, %v5251
  %v6120 = vsel %vm5850, %v6039, %v5253
  %v6121 = vsel %vm5850, %v6040, %v5255
  %v6122 = vsel %vm5850, %v6041, %v5257
  %v6123 = vsel %vm5850, %v6042, %v5259
  %v6124 = vsel %vm5850, %v6043, %v5261
  %v6125 = vsel %vm5850, %v6044, %v5263
  %v6126 = vsel %vm5850, %v6045, %v5265
  %v6127 = vsel %vm5850, %v6046, %v5267
  %v6128 = vsel %vm5850, %v6047, %v5269
  %v6129 = vsel %vm5850, %v6048, %v5271
  %v6130 = vsel %vm5850, %v6049, %v5273
  %v6131 = vsel %vm5850, %v6050, %v5275
  %v6132 = vsel %vm5850, %v6051, %v5277
  %v6133 = vsel %vm5850, %v6052, %v5279
  %v6134 = vsel %vm5850, %v6053, %v5281
  %v6135 = vsel %vm5850, %v6054, %v5283
  %v6136 = vsel %vm5850, %v6055, %v5285
  %v6137 = vsel %vm5850, %v6056, %v5287
  %v6138 = vsel %vm5850, %v6057, %v5289
  %v6139 = vsel %vm5850, %v6058, %v5291
  %v6140 = vsel %vm5850, %v6059, %v5293
  %v6141 = vsel %vm5850, %v6060, %v5295
  %v6142 = vsel %vm5850, %v6061, %v5297
  %v6143 = vsel %vm5850, %v6062, %v5299
  %v6144 = vsel %vm5850, %v6063, %v5301
  %v6145 = vsel %vm5850, %v6064, %v5303
  %v6146 = vsel %vm5850, %v6065, %v5305
  %v6147 = vsel %vm5850, %v6066, %v5307
  %v6148 = vsel %vm5850, %v6067, %v5309
  %v6149 = vsel %vm5850, %v6068, %v5311
  %v6150 = vsel %vm5850, %v6069, %v5313
  %v6151 = vsel %vm5850, %v6070, %v5315
  %v6152 = vsel %vm5850, %v6071, %v5317
  %v6153 = vsel %vm5850, %v6072, %v5319
  %v6154 = vsel %vm5850, %v6073, %v5321
  %v6155 = vsel %vm5850, %v6074, %v5323
  %v6156 = vsel %vm5850, %v6075, %v5325
  %v6157 = vsel %vm5850, %v6076, %v5327
  %v6158 = vsel %vm5850, %v6077, %v5329
  %v6159 = vsel %vm5850, %v6078, %v5331
  %v6160 = vsel %vm5850, %v6079, %v5333
  %v6161 = vsel %vm5850, %v6080, %v5335
  %v6162 = vsel %vm5850, %v6081, %v5337
  %v6163 = vsel %vm5850, %v6082, %v5339
  %v6164 = vsel %vm5850, %v6083, %v5341
  %v6165 = vsel %vm5850, %v6084, %v5343
  %v6166 = vsel %vm5850, %v6085, %v5345
  %v6167 = vsel %vm5850, %v6086, %v5347
  %v6168 = vsel %vm5850, %v6087, %v5349
  %v6169 = vsel %vm5850, %v6088, %v5351
  %v6170 = vsel %vm5850, %v6089, %v5353
  %v6171 = vsel %vm5850, %v6090, %v5355
  %v6172 = vsel %vm5850, %v6091, %v5357
  %v6173 = vsel %vm5850, %v6092, %v5359
  %v6174 = vsel %vm5850, %v6093, %v5361
  %v6175 = vsel %vm5850, %v6094, %v5363
  %v6176 = vsel %vm5932, %v6095, %v5527
  %v6177 = vsel %vm5932, %v6096, %v5529
  %v6178 = vsel %vm5932, %v6097, %v5531
  %v6179 = vsel %vm5932, %v6098, %v5533
  %v6180 = vsel %vm5932, %v6099, %v5535
  %v6181 = vsel %vm5932, %v6100, %v5537
  %v6182 = vsel %vm5932, %v6101, %v5539
  %v6183 = vsel %vm5932, %v6102, %v5541
  %v6184 = vsel %vm5932, %v6103, %v5543
  %v6185 = vsel %vm5932, %v6104, %v5545
  %v6186 = vsel %vm5932, %v6105, %v5547
  %v6187 = vsel %vm5932, %v6106, %v5549
  %v6188 = vsel %vm5932, %v6107, %v5551
  %v6189 = vsel %vm5932, %v6108, %v5553
  %v6190 = vsel %vm5932, %v6109, %v5555
  %v6191 = vsel %vm5932, %v6110, %v5557
  %v6192 = vsel %vm5932, %v6111, %v5559
  %v6193 = vsel %vm5932, %v6112, %v5561
  %v6194 = vsel %vm5932, %v6113, %v5563
  %v6195 = vsel %vm5932, %v6114, %v5565
  %v6196 = vsel %vm5932, %v6115, %v5567
  %v6197 = vsel %vm5932, %v6116, %v5569
  %v6198 = vsel %vm5932, %v6117, %v5571
  %v6199 = vsel %vm5932, %v6118, %v5573
  %v6200 = vsel %vm5932, %v6119, %v5575
  %v6201 = vsel %vm5932, %v6120, %v5577
  %v6202 = vsel %vm5932, %v6121, %v5579
  %v6203 = vsel %vm5932, %v6122, %v5581
  %v6204 = vsel %vm5932, %v6123, %v5583
  %v6205 = vsel %vm5932, %v6124, %v5585
  %v6206 = vsel %vm5932, %v6125, %v5587
  %v6207 = vsel %vm5932, %v6126, %v5589
  %v6208 = vsel %vm5932, %v6127, %v5591
  %v6209 = vsel %vm5932, %v6128, %v5593
  %v6210 = vsel %vm5932, %v6129, %v5595
  %v6211 = vsel %vm5932, %v6130, %v5597
  %v6212 = vsel %vm5932, %v6131, %v5599
  %v6213 = vsel %vm5932, %v6132, %v5601
  %v6214 = vsel %vm5932, %v6133, %v5603
  %v6215 = vsel %vm5932, %v6134, %v5605
  %v6216 = vsel %vm5932, %v6135, %v5607
  %v6217 = vsel %vm5932, %v6136, %v5609
  %v6218 = vsel %vm5932, %v6137, %v5611
  %v6219 = vsel %vm5932, %v6138, %v5613
  %v6220 = vsel %vm5932, %v6139, %v5615
  %v6221 = vsel %vm5932, %v6140, %v5617
  %v6222 = vsel %vm5932, %v6141, %v5619
  %v6223 = vsel %vm5932, %v6142, %v5621
  %v6224 = vsel %vm5932, %v6143, %v5623
  %v6225 = vsel %vm5932, %v6144, %v5625
  %v6226 = vsel %vm5932, %v6145, %v5627
  %v6227 = vsel %vm5932, %v6146, %v5629
  %v6228 = vsel %vm5932, %v6147, %v5631
  %v6229 = vsel %vm5932, %v6148, %v5633
  %v6230 = vsel %vm5932, %v6149, %v5635
  %v6231 = vsel %vm5932, %v6150, %v5637
  %v6232 = vsel %vm5932, %v6151, %v5639
  %v6233 = vsel %vm5932, %v6152, %v5641
  %v6234 = vsel %vm5932, %v6153, %v5643
  %v6235 = vsel %vm5932, %v6154, %v5645
  %v6236 = vsel %vm5932, %v6155, %v5647
  %v6237 = vsel %vm5932, %v6156, %v5649
  %v6238 = vsel %vm5932, %v6157, %v5651
  %v6239 = vsel %vm5932, %v6158, %v5653
  %v6240 = vsel %vm5932, %v6159, %v5655
  %v6241 = vsel %vm5932, %v6160, %v5657
  %v6242 = vsel %vm5932, %v6161, %v5659
  %v6243 = vsel %vm5932, %v6162, %v5661
  %v6244 = vsel %vm5932, %v6163, %v5663
  %v6245 = vsel %vm5932, %v6164, %v5665
  %v6246 = vsel %vm5932, %v6165, %v5667
  %v6247 = vsel %vm5932, %v6166, %v5669
  %v6248 = vsel %vm5932, %v6167, %v5671
  %v6249 = vsel %vm5932, %v6168, %v5673
  %v6250 = vsel %vm5932, %v6169, %v5675
  %v6251 = vsel %vm5932, %v6170, %v5677
  %v6252 = vsel %vm5932, %v6171, %v5679
  %v6253 = vsel %vm5932, %v6172, %v5681
  %v6254 = vsel %vm5932, %v6173, %v5683
  %v6255 = vsel %vm5932, %v6174, %v5685
  %v6256 = vsel %vm5932, %v6175, %v5687
  %v6257 = vpack.c.bf16 %v5934, %v5933
  %v6258 = vpack.c.bf16 %v6177, %v6176
  %v6259 = vpack.c.bf16 %v3903, %v3902
  %v6260 = vpack.c.bf16 %v5936, %v5935
  %v6261 = vpack.c.bf16 %v6179, %v6178
  %v6262 = vpack.c.bf16 %v3905, %v3904
  %v6263 = vpack.c.bf16 %v5938, %v5937
  %v6264 = vpack.c.bf16 %v6181, %v6180
  %v6265 = vpack.c.bf16 %v3907, %v3906
  %v6266 = vpack.c.bf16 %v5940, %v5939
  %v6267 = vpack.c.bf16 %v6183, %v6182
  %v6268 = vpack.c.bf16 %v3909, %v3908
  %v6269 = vpack.c.bf16 %v5942, %v5941
  %v6270 = vpack.c.bf16 %v6185, %v6184
  %v6271 = vpack.c.bf16 %v3911, %v3910
  %v6272 = vpack.c.bf16 %v5944, %v5943
  %v6273 = vpack.c.bf16 %v6187, %v6186
  %v6274 = vpack.c.bf16 %v3913, %v3912
  %v6275 = vpack.c.bf16 %v5946, %v5945
  %v6276 = vpack.c.bf16 %v6189, %v6188
  %v6277 = vpack.c.bf16 %v3915, %v3914
  %v6278 = vpack.c.bf16 %v5948, %v5947
  %v6279 = vpack.c.bf16 %v6191, %v6190
  %v6280 = vpack.c.bf16 %v3917, %v3916
  %v6281 = vpack.c.bf16 %v5950, %v5949
  %v6282 = vpack.c.bf16 %v6193, %v6192
  %v6283 = vpack.c.bf16 %v3919, %v3918
  %v6284 = vpack.c.bf16 %v5952, %v5951
  %v6285 = vpack.c.bf16 %v6195, %v6194
  %v6286 = vpack.c.bf16 %v3921, %v3920
  %v6287 = vpack.c.bf16 %v5954, %v5953
  %v6288 = vpack.c.bf16 %v6197, %v6196
  %v6289 = vpack.c.bf16 %v3923, %v3922
  %v6290 = vpack.c.bf16 %v5956, %v5955
  %v6291 = vpack.c.bf16 %v6199, %v6198
  %v6292 = vpack.c.bf16 %v3925, %v3924
  %v6293 = vpack.c.bf16 %v5958, %v5957
  %v6294 = vpack.c.bf16 %v6201, %v6200
  %v6295 = vpack.c.bf16 %v3927, %v3926
  %v6296 = vpack.c.bf16 %v5960, %v5959
  %v6297 = vpack.c.bf16 %v6203, %v6202
  %v6298 = vpack.c.bf16 %v3929, %v3928
  %v6299 = vpack.c.bf16 %v5962, %v5961
  %v6300 = vpack.c.bf16 %v6205, %v6204
  %v6301 = vpack.c.bf16 %v3931, %v3930
  %v6302 = vpack.c.bf16 %v5964, %v5963
  %v6303 = vpack.c.bf16 %v6207, %v6206
  %v6304 = vpack.c.bf16 %v3933, %v3932
  %v6305 = vpack.c.bf16 %v5966, %v5965
  %v6306 = vpack.c.bf16 %v6209, %v6208
  %v6307 = vpack.c.bf16 %v3935, %v3934
  %v6308 = vpack.c.bf16 %v5968, %v5967
  %v6309 = vpack.c.bf16 %v6211, %v6210
  %v6310 = vpack.c.bf16 %v3937, %v3936
  %v6311 = vpack.c.bf16 %v5970, %v5969
  %v6312 = vpack.c.bf16 %v6213, %v6212
  %v6313 = vpack.c.bf16 %v3939, %v3938
  %v6314 = vpack.c.bf16 %v5972, %v5971
  %v6315 = vpack.c.bf16 %v6215, %v6214
  %v6316 = vpack.c.bf16 %v3941, %v3940
  %v6317 = vpack.c.bf16 %v5974, %v5973
  %v6318 = vpack.c.bf16 %v6217, %v6216
  %v6319 = vpack.c.bf16 %v3943, %v3942
  %v6320 = vpack.c.bf16 %v5976, %v5975
  %v6321 = vpack.c.bf16 %v6219, %v6218
  %v6322 = vpack.c.bf16 %v3945, %v3944
  %v6323 = vpack.c.bf16 %v5978, %v5977
  %v6324 = vpack.c.bf16 %v6221, %v6220
  %v6325 = vpack.c.bf16 %v3947, %v3946
  %v6326 = vpack.c.bf16 %v5980, %v5979
  %v6327 = vpack.c.bf16 %v6223, %v6222
  %v6328 = vpack.c.bf16 %v3949, %v3948
  %v6329 = vpack.c.bf16 %v5982, %v5981
  %v6330 = vpack.c.bf16 %v6225, %v6224
  %v6331 = vpack.c.bf16 %v3951, %v3950
  %v6332 = vpack.c.bf16 %v5984, %v5983
  %v6333 = vpack.c.bf16 %v6227, %v6226
  %v6334 = vpack.c.bf16 %v3953, %v3952
  %v6335 = vpack.c.bf16 %v5986, %v5985
  %v6336 = vpack.c.bf16 %v6229, %v6228
  %v6337 = vpack.c.bf16 %v3955, %v3954
  %v6338 = vpack.c.bf16 %v5988, %v5987
  %v6339 = vpack.c.bf16 %v6231, %v6230
  %v6340 = vpack.c.bf16 %v3957, %v3956
  %v6341 = vpack.c.bf16 %v5990, %v5989
  %v6342 = vpack.c.bf16 %v6233, %v6232
  %v6343 = vpack.c.bf16 %v3959, %v3958
  %v6344 = vpack.c.bf16 %v5992, %v5991
  %v6345 = vpack.c.bf16 %v6235, %v6234
  %v6346 = vpack.c.bf16 %v3961, %v3960
  %v6347 = vpack.c.bf16 %v5994, %v5993
  %v6348 = vpack.c.bf16 %v6237, %v6236
  %v6349 = vpack.c.bf16 %v3963, %v3962
  %v6350 = vpack.c.bf16 %v5996, %v5995
  %v6351 = vpack.c.bf16 %v6239, %v6238
  %v6352 = vpack.c.bf16 %v3965, %v3964
  %v6353 = vpack.c.bf16 %v5998, %v5997
  %v6354 = vpack.c.bf16 %v6241, %v6240
  %v6355 = vpack.c.bf16 %v3967, %v3966
  %v6356 = vpack.c.bf16 %v6000, %v5999
  %v6357 = vpack.c.bf16 %v6243, %v6242
  %v6358 = vpack.c.bf16 %v3969, %v3968
  %v6359 = vpack.c.bf16 %v6002, %v6001
  %v6360 = vpack.c.bf16 %v6245, %v6244
  %v6361 = vpack.c.bf16 %v3971, %v3970
  %v6362 = vpack.c.bf16 %v6004, %v6003
  %v6363 = vpack.c.bf16 %v6247, %v6246
  %v6364 = vpack.c.bf16 %v3973, %v3972
  %v6365 = vpack.c.bf16 %v6006, %v6005
  %v6366 = vpack.c.bf16 %v6249, %v6248
  %v6367 = vpack.c.bf16 %v3975, %v3974
  %v6368 = vpack.c.bf16 %v6008, %v6007
  %v6369 = vpack.c.bf16 %v6251, %v6250
  %v6370 = vpack.c.bf16 %v3977, %v3976
  %v6371 = vpack.c.bf16 %v6010, %v6009
  %v6372 = vpack.c.bf16 %v6253, %v6252
  %v6373 = vpack.c.bf16 %v3979, %v3978
  %v6374 = vpack.c.bf16 %v6012, %v6011
  %v6375 = vpack.c.bf16 %v6255, %v6254
  %v6376 = vpack.c.bf16 %v3981, %v3980
  %v6377 = vpack.c.bf16 %v6013, %v6013
  %v6378 = vpack.c.bf16 %v6256, %v6256
  %v6379 = vpack.c.bf16 %v3982, %v3982
  %v6380 = vld [vmem:[%s5] sm:$0xf]
  %v6381 = vld [vmem:[%s5 + $0x4] sm:$0xf]
  %v6382 = vld [vmem:[%s5 + $0x8] sm:$0xf]
  %v6383 = vld [vmem:[%s5 + $0xc] sm:$0xf]
  %v6384 = vld [vmem:[%s5 + $0x10] sm:$0xf]
  %v6385 = vld [vmem:[%s5 + $0x14] sm:$0xf]
  %v6386 = vld [vmem:[%s5 + $0x18] sm:$0xf]
  %v6387 = vld [vmem:[%s5 + $0x1c] sm:$0xf]
  %v6388 = vld [vmem:[%s5 + $0x20] sm:$0xf]
  %v6389 = vld [vmem:[%s5 + $0x24] sm:$0xf]
  %v6390 = vld [vmem:[%s5 + $0x28] sm:$0xf]
  %v6391 = vld [vmem:[%s5 + $0x2c] sm:$0xf]
  %v6392 = vld [vmem:[%s5 + $0x30] sm:$0xf]
  %v6393 = vld [vmem:[%s5 + $0x34] sm:$0xf]
  %v6394 = vld [vmem:[%s5 + $0x38] sm:$0xf]
  %v6395 = vld [vmem:[%s5 + $0x3c] sm:$0xf]
  %v6396 = vld [vmem:[%s5 + $0x40] sm:$0xf]
  %v6397 = vld [vmem:[%s5 + $0x44] sm:$0xf]
  %v6398 = vld [vmem:[%s5 + $0x48] sm:$0xf]
  %v6399 = vld [vmem:[%s5 + $0x4c] sm:$0xf]
  %v6400 = vld [vmem:[%s5 + $0x50] sm:$0xf]
  %v6401 = vld [vmem:[%s5 + $0x54] sm:$0xf]
  %v6402 = vld [vmem:[%s5 + $0x58] sm:$0xf]
  %v6403 = vld [vmem:[%s5 + $0x5c] sm:$0xf]
  %v6404 = vld [vmem:[%s5 + $0x60] sm:$0xf]
  %v6405 = vld [vmem:[%s5 + $0x64] sm:$0xf]
  %v6406 = vld [vmem:[%s5 + $0x68] sm:$0xf]
  %v6407 = vld [vmem:[%s5 + $0x6c] sm:$0xf]
  %v6408 = vld [vmem:[%s5 + $0x70] sm:$0xf]
  %v6409 = vld [vmem:[%s5 + $0x74] sm:$0xf]
  %v6410 = vld [vmem:[%s5 + $0x78] sm:$0xf]
  %v6411 = vld [vmem:[%s5 + $0x7c] sm:$0xf]
  %v6412 = vld [vmem:[%s5 + $0x80] sm:$0xf]
  %v6413 = vld [vmem:[%s5 + $0x84] sm:$0xf]
  %v6414 = vld [vmem:[%s5 + $0x88] sm:$0xf]
  %v6415 = vld [vmem:[%s5 + $0x8c] sm:$0xf]
  %v6416 = vld [vmem:[%s1] sm:$0xf]
  %v6417 = vld [vmem:[%s1 + $0x4] sm:$0xf]
  %v6418 = vld [vmem:[%s1 + $0x8] sm:$0xf]
  %v6419 = vld [vmem:[%s1 + $0xc] sm:$0xf]
  %v6420 = vld [vmem:[%s1 + $0x10] sm:$0xf]
  %v6421 = vld [vmem:[%s1 + $0x14] sm:$0xf]
  %v6422 = vld [vmem:[%s1 + $0x18] sm:$0xf]
  %v6423 = vld [vmem:[%s1 + $0x1c] sm:$0xf]
  %v6424 = vld [vmem:[%s1 + $0x20] sm:$0xf]
  %v6425 = vld [vmem:[%s1 + $0x24] sm:$0xf]
  %v6426 = vld [vmem:[%s1 + $0x28] sm:$0xf]
  %v6427 = vld [vmem:[%s1 + $0x2c] sm:$0xf]
  %v6428 = vld [vmem:[%s1 + $0x30] sm:$0xf]
  %v6429 = vld [vmem:[%s1 + $0x34] sm:$0xf]
  %v6430 = vld [vmem:[%s1 + $0x38] sm:$0xf]
  %v6431 = vld [vmem:[%s1 + $0x3c] sm:$0xf]
  %v6432 = vld [vmem:[%s1 + $0x40] sm:$0xf]
  %v6433 = vld [vmem:[%s1 + $0x44] sm:$0xf]
  %v6434 = vld [vmem:[%s1 + $0x48] sm:$0xf]
  %v6435 = vld [vmem:[%s1 + $0x4c] sm:$0xf]
  %v6436 = vld [vmem:[%s1 + $0x50] sm:$0xf]
  %v6437 = vld [vmem:[%s1 + $0x54] sm:$0xf]
  %v6438 = vld [vmem:[%s1 + $0x58] sm:$0xf]
  %v6439 = vld [vmem:[%s1 + $0x5c] sm:$0xf]
  %v6440 = vld [vmem:[%s1 + $0x60] sm:$0xf]
  %v6441 = vld [vmem:[%s1 + $0x64] sm:$0xf]
  %v6442 = vld [vmem:[%s1 + $0x68] sm:$0xf]
  %v6443 = vld [vmem:[%s1 + $0x6c] sm:$0xf]
  %v6444 = vld [vmem:[%s1 + $0x70] sm:$0xf]
  %v6445 = vld [vmem:[%s1 + $0x74] sm:$0xf]
  %v6446 = vld [vmem:[%s1 + $0x78] sm:$0xf]
  %v6447 = vld [vmem:[%s1 + $0x7c] sm:$0xf]
  %v6448 = vld [vmem:[%s1 + $0x80] sm:$0xf]
  %v6449 = vld [vmem:[%s1 + $0x84] sm:$0xf]
  %v6450 = vld [vmem:[%s1 + $0x88] sm:$0xf]
  %v6451 = vld [vmem:[%s1 + $0x8c] sm:$0xf]
  %v6452 = vld [vmem:[%s1 + $0x90] sm:$0xf]
  %v6453 = vld [vmem:[%s1 + $0x94] sm:$0xf]
  %v6454 = vld [vmem:[%s1 + $0x98] sm:$0xf]
  %v6455 = vld [vmem:[%s1 + $0x9c] sm:$0xf]
  %v6456 = vld [vmem:[%s1 + $0xa0] sm:$0xf]
  %v6457 = vld [vmem:[%s1 + $0xa4] sm:$0xf]
  %v6458 = vld [vmem:[%s1 + $0xa8] sm:$0xf]
  %v6459 = vld [vmem:[%s1 + $0xac] sm:$0xf]
  %v6460 = vld [vmem:[%s1 + $0xb0] sm:$0xf]
  %v6461 = vld [vmem:[%s1 + $0xb4] sm:$0xf]
  %v6462 = vld [vmem:[%s1 + $0xb8] sm:$0xf]
  %v6463 = vld [vmem:[%s1 + $0xbc] sm:$0xf]
  %v6464 = vld [vmem:[%s1 + $0xc0] sm:$0xf]
  %v6465 = vld [vmem:[%s1 + $0xc4] sm:$0xf]
  %v6466 = vld [vmem:[%s1 + $0xc8] sm:$0xf]
  %v6467 = vld [vmem:[%s1 + $0xcc] sm:$0xf]
  %v6468 = vld [vmem:[%s1 + $0xd0] sm:$0xf]
  %v6469 = vld [vmem:[%s1 + $0xd4] sm:$0xf]
  %v6470 = vld [vmem:[%s1 + $0xd8] sm:$0xf]
  %v6471 = vld [vmem:[%s1 + $0xdc] sm:$0xf]
  %v6472 = vld [vmem:[%s1 + $0xe0] sm:$0xf]
  %v6473 = vld [vmem:[%s1 + $0xe4] sm:$0xf]
  %v6474 = vld [vmem:[%s1 + $0xe8] sm:$0xf]
  %v6475 = vld [vmem:[%s1 + $0xec] sm:$0xf]
  %v6476 = vld [vmem:[%s1 + $0xf0] sm:$0xf]
  %v6477 = vld [vmem:[%s1 + $0xf4] sm:$0xf]
  %v6478 = vld [vmem:[%s1 + $0xf8] sm:$0xf]
  %v6479 = vld [vmem:[%s1 + $0xfc] sm:$0xf]
  %v6480 = vld [vmem:[%s1 + $0x100] sm:$0xf]
  %v6481 = vld [vmem:[%s1 + $0x104] sm:$0xf]
  %v6482 = vld [vmem:[%s1 + $0x108] sm:$0xf]
  %v6483 = vld [vmem:[%s1 + $0x10c] sm:$0xf]
  %v6484 = vld [vmem:[%s1 + $0x110] sm:$0xf]
  %v6485 = vld [vmem:[%s1 + $0x114] sm:$0xf]
  %v6486 = vld [vmem:[%s1 + $0x118] sm:$0xf]
  %v6487 = vld [vmem:[%s1 + $0x11c] sm:$0xf]
  %v6488 = vld [vmem:[%s1 + $0x120] sm:$0xf]
  %v6489 = vld [vmem:[%s1 + $0x124] sm:$0xf]
  %v6490 = vld [vmem:[%s1 + $0x128] sm:$0xf]
  %v6491 = vld [vmem:[%s1 + $0x12c] sm:$0xf]
  %v6492 = vld [vmem:[%s1 + $0x130] sm:$0xf]
  %v6493 = vld [vmem:[%s1 + $0x134] sm:$0xf]
  %v6494 = vld [vmem:[%s1 + $0x138] sm:$0xf]
  %v6495 = vld [vmem:[%s1 + $0x13c] sm:$0xf]
  %v6496 = vld [vmem:[%s1 + $0x140] sm:$0xf]
  %v6497 = vld [vmem:[%s6] sm:$0xf]
  %v6498 = vld [vmem:[%s6 + $0x4] sm:$0xf]
  %v6499 = vld [vmem:[%s6 + $0x8] sm:$0xf]
  %v6500 = vld [vmem:[%s6 + $0xc] sm:$0xf]
  %v6501 = vld [vmem:[%s6 + $0x10] sm:$0x3]
  %v6583 = vunpack.c.l.b16 %v6416
  %v6584 = vunpack.c.l.b16 %v6417
  %v6585 = vunpack.c.l.b16 %v6418
  %v6586 = vunpack.c.l.b16 %v6419
  %v6587 = vunpack.c.l.b16 %v6420
  %v6588 = vunpack.c.l.b16 %v6421
  %v6589 = vunpack.c.l.b16 %v6422
  %v6590 = vunpack.c.l.b16 %v6423
  %v6591 = vunpack.c.l.b16 %v6424
  %v6592 = vunpack.c.l.b16 %v6425
  %v6593 = vunpack.c.l.b16 %v6426
  %v6594 = vunpack.c.l.b16 %v6427
  %v6595 = vunpack.c.l.b16 %v6428
  %v6596 = vunpack.c.l.b16 %v6429
  %v6597 = vunpack.c.l.b16 %v6430
  %v6598 = vunpack.c.l.b16 %v6431
  %v6599 = vunpack.c.l.b16 %v6432
  %v6600 = vunpack.c.l.b16 %v6433
  %v6601 = vunpack.c.l.b16 %v6434
  %v6602 = vunpack.c.l.b16 %v6435
  %v6603 = vunpack.c.l.b16 %v6436
  %v6604 = vunpack.c.l.b16 %v6437
  %v6605 = vunpack.c.l.b16 %v6438
  %v6606 = vunpack.c.l.b16 %v6439
  %v6607 = vunpack.c.l.b16 %v6440
  %v6608 = vunpack.c.l.b16 %v6441
  %v6609 = vunpack.c.l.b16 %v6442
  %v6610 = vunpack.c.l.b16 %v6443
  %v6611 = vunpack.c.l.b16 %v6444
  %v6612 = vunpack.c.l.b16 %v6445
  %v6613 = vunpack.c.l.b16 %v6446
  %v6614 = vunpack.c.l.b16 %v6447
  %v6615 = vunpack.c.l.b16 %v6448
  %v6616 = vunpack.c.l.b16 %v6449
  %v6617 = vunpack.c.l.b16 %v6450
  %v6618 = vunpack.c.l.b16 %v6451
  %v6619 = vunpack.c.l.b16 %v6452
  %v6620 = vunpack.c.l.b16 %v6453
  %v6621 = vunpack.c.l.b16 %v6454
  %v6622 = vunpack.c.l.b16 %v6455
  %v6623 = vunpack.c.l.b16 %v6456
  %v6624 = vunpack.c.l.b16 %v6457
  %v6625 = vunpack.c.l.b16 %v6458
  %v6626 = vunpack.c.l.b16 %v6459
  %v6627 = vunpack.c.l.b16 %v6460
  %v6628 = vunpack.c.l.b16 %v6461
  %v6629 = vunpack.c.l.b16 %v6462
  %v6630 = vunpack.c.l.b16 %v6463
  %v6631 = vunpack.c.l.b16 %v6464
  %v6632 = vunpack.c.l.b16 %v6465
  %v6633 = vunpack.c.l.b16 %v6466
  %v6634 = vunpack.c.l.b16 %v6467
  %v6635 = vunpack.c.l.b16 %v6468
  %v6636 = vunpack.c.l.b16 %v6469
  %v6637 = vunpack.c.l.b16 %v6470
  %v6638 = vunpack.c.l.b16 %v6471
  %v6639 = vunpack.c.l.b16 %v6472
  %v6640 = vunpack.c.l.b16 %v6473
  %v6641 = vunpack.c.l.b16 %v6474
  %v6642 = vunpack.c.l.b16 %v6475
  %v6643 = vunpack.c.l.b16 %v6476
  %v6644 = vunpack.c.l.b16 %v6477
  %v6645 = vunpack.c.l.b16 %v6478
  %v6646 = vunpack.c.l.b16 %v6479
  %v6647 = vunpack.c.l.b16 %v6480
  %v6648 = vunpack.c.l.b16 %v6481
  %v6649 = vunpack.c.l.b16 %v6482
  %v6650 = vunpack.c.l.b16 %v6483
  %v6651 = vunpack.c.l.b16 %v6484
  %v6652 = vunpack.c.l.b16 %v6485
  %v6653 = vunpack.c.l.b16 %v6486
  %v6654 = vunpack.c.l.b16 %v6487
  %v6655 = vunpack.c.l.b16 %v6488
  %v6656 = vunpack.c.l.b16 %v6489
  %v6657 = vunpack.c.l.b16 %v6490
  %v6658 = vunpack.c.l.b16 %v6491
  %v6659 = vunpack.c.l.b16 %v6492
  %v6660 = vunpack.c.l.b16 %v6493
  %v6661 = vunpack.c.l.b16 %v6494
  %v6662 = vunpack.c.l.b16 %v6495
  %v6663 = vunpack.c.l.b16 %v6496
  %v6664 = vpack.c.b16 %v6584, %v6583
  %v6665 = vpack.c.b16 %v6586, %v6585
  %v6666 = vpack.c.b16 %v6588, %v6587
  %v6667 = vpack.c.b16 %v6590, %v6589
  %v6668 = vpack.c.b16 %v6592, %v6591
  %v6669 = vpack.c.b16 %v6594, %v6593
  %v6670 = vpack.c.b16 %v6596, %v6595
  %v6671 = vpack.c.b16 %v6598, %v6597
  %v6672 = vpack.c.b16 %v6600, %v6599
  %v6673 = vpack.c.b16 %v6602, %v6601
  %v6674 = vpack.c.b16 %v6604, %v6603
  %v6675 = vpack.c.b16 %v6606, %v6605
  %v6676 = vpack.c.b16 %v6608, %v6607
  %v6677 = vpack.c.b16 %v6610, %v6609
  %v6678 = vpack.c.b16 %v6612, %v6611
  %v6679 = vpack.c.b16 %v6614, %v6613
  %v6680 = vpack.c.b16 %v6616, %v6615
  %v6681 = vpack.c.b16 %v6618, %v6617
  %v6682 = vpack.c.b16 %v6620, %v6619
  %v6683 = vpack.c.b16 %v6622, %v6621
  %v6684 = vpack.c.b16 %v6624, %v6623
  %v6685 = vpack.c.b16 %v6626, %v6625
  %v6686 = vpack.c.b16 %v6628, %v6627
  %v6687 = vpack.c.b16 %v6630, %v6629
  %v6688 = vpack.c.b16 %v6632, %v6631
  %v6689 = vpack.c.b16 %v6634, %v6633
  %v6690 = vpack.c.b16 %v6636, %v6635
  %v6691 = vpack.c.b16 %v6638, %v6637
  %v6692 = vpack.c.b16 %v6640, %v6639
  %v6693 = vpack.c.b16 %v6642, %v6641
  %v6694 = vpack.c.b16 %v6644, %v6643
  %v6695 = vpack.c.b16 %v6646, %v6645
  %v6696 = vpack.c.b16 %v6648, %v6647
  %v6697 = vpack.c.b16 %v6650, %v6649
  %v6698 = vpack.c.b16 %v6652, %v6651
  %v6699 = vpack.c.b16 %v6654, %v6653
  %v6700 = vpack.c.b16 %v6656, %v6655
  %v6701 = vpack.c.b16 %v6658, %v6657
  %v6702 = vpack.c.b16 %v6660, %v6659
  %v6703 = vpack.c.b16 %v6662, %v6661
  %v6704 = vpack.c.b16 %v6663, %v6663
  %v6710 = vunpack.c.l.b16 %v6497
  %v6711 = vunpack.c.l.b16 %v6498
  %v6712 = vunpack.c.l.b16 %v6499
  %v6713 = vunpack.c.l.b16 %v6500
  %v6714 = vunpack.c.l.b16 %v6501
  %v6715 = vpack.c.b16 %v6711, %v6710
  %v6716 = vpack.c.b16 %v6713, %v6712
  %v6717 = vpack.c.b16 %v6714, %v6714
  %vm6720 = vcmask 293888
  %v6722 = vsel %vm6720, %v6664, 0
  %v6725 = vsel %vm6720, %v6665, 0
  %v6728 = vsel %vm6720, %v6666, 0
  %v6731 = vsel %vm6720, %v6667, 0
  %v6734 = vsel %vm6720, %v6668, 0
  %v6737 = vsel %vm6720, %v6669, 0
  %v6740 = vsel %vm6720, %v6670, 0
  %v6743 = vsel %vm6720, %v6671, 0
  %v6746 = vsel %vm6720, %v6672, 0
  %v6749 = vsel %vm6720, %v6673, 0
  %v6752 = vsel %vm6720, %v6674, 0
  %v6755 = vsel %vm6720, %v6675, 0
  %v6758 = vsel %vm6720, %v6676, 0
  %v6761 = vsel %vm6720, %v6677, 0
  %v6764 = vsel %vm6720, %v6678, 0
  %v6767 = vsel %vm6720, %v6679, 0
  %v6770 = vsel %vm6720, %v6680, 0
  %v6773 = vsel %vm6720, %v6681, 0
  %v6776 = vsel %vm6720, %v6682, 0
  %v6779 = vsel %vm6720, %v6683, 0
  %v6782 = vsel %vm6720, %v6684, 0
  %v6785 = vsel %vm6720, %v6685, 0
  %v6788 = vsel %vm6720, %v6686, 0
  %v6791 = vsel %vm6720, %v6687, 0
  %v6794 = vsel %vm6720, %v6688, 0
  %v6797 = vsel %vm6720, %v6689, 0
  %v6800 = vsel %vm6720, %v6690, 0
  %v6803 = vsel %vm6720, %v6691, 0
  %v6806 = vsel %vm6720, %v6692, 0
  %v6809 = vsel %vm6720, %v6693, 0
  %v6812 = vsel %vm6720, %v6694, 0
  %v6815 = vsel %vm6720, %v6695, 0
  %v6818 = vsel %vm6720, %v6696, 0
  %v6821 = vsel %vm6720, %v6697, 0
  %v6824 = vsel %vm6720, %v6698, 0
  %v6827 = vsel %vm6720, %v6699, 0
  %v6830 = vsel %vm6720, %v6700, 0
  %v6833 = vsel %vm6720, %v6701, 0
  %v6836 = vsel %vm6720, %v6702, 0
  %v6839 = vsel %vm6720, %v6703, 0
  %v6842 = vsel %vm6720, %v6704, 0
  %v6845 = vsel %vm1300, %v6717, 0
  %6847 = vmatprep.subr.bf16.mxu0 0
  %6848 = vmatpush1.bf16.msra.mxu0 %v6715
  %6849 = vmatprep.subr.bf16.mxu0 0
  %6850 = vmatpush1.bf16.msra.mxu0 %v6716
  %6851 = vmatprep.subr.bf16.mxu0 0
  %6852 = vmatpush1.bf16.msra.mxu0 %v6845
  %6853 = vmatprep.subr.bf16.mxu0 0
  %6854 = vmatpush1.bf16.msra.mxu0 0
  %6855 = vmatprep.subr.bf16.mxu0 0
  %6856 = vmatpush1.bf16.msra.mxu0 0
  %6857 = vmatprep.subr.bf16.mxu0 0
  %6858 = vmatpush1.bf16.msra.mxu0 0
  %6859 = vmatprep.subr.bf16.mxu0 0
  %6860 = vmatpush1.bf16.msra.mxu0 0
  %6861 = vmatprep.subr.bf16.mxu0 0
  %6862 = vmatpush1.bf16.msra.mxu0 0
  %6863 = vmatprep.subr.bf16.mxu0 0
  %6864 = vmatpush1.bf16.msra.mxu0 0
  %6865 = vmatprep.subr.bf16.mxu0 0
  %6866 = vmatpush1.bf16.msra.mxu0 0
  %6867 = vmatprep.subr.bf16.mxu0 0
  %6868 = vmatpush1.bf16.msra.mxu0 0
  %6869 = vmatprep.subr.bf16.mxu0 0
  %6870 = vmatpush1.bf16.msra.mxu0 0
  %6871 = vmatprep.subr.bf16.mxu0 0
  %6872 = vmatpush1.bf16.msra.mxu0 0
  %6873 = vmatprep.subr.bf16.mxu0 0
  %6874 = vmatpush1.bf16.msra.mxu0 0
  %6875 = vmatprep.subr.bf16.mxu0 0
  %6876 = vmatpush1.bf16.msra.mxu0 0
  %6877 = vmatprep.subr.bf16.mxu0 0
  %6878 = vmatpush1.bf16.msra.mxu0 0
  %6879 = vmatprep.mubr.bf16.mxu0 0
  %6880 = vmatmul.mubr.bf16.gmra.mrb[0].mxu0 %v6722
  %v6881 = vpop.f32.mrb[0].mxu0
  %v6882 = vadd.f32 0.0, %v6881
  %v6883 = vpop.f32.mrb[0].mxu0
  %v6884 = vpop.f32.mrb[0].mxu0
  %v6885 = vadd.f32 0.0, %v6884
  %v6886 = vpop.f32.mrb[0].mxu0
  %6887 = vmatprep.mubr.bf16.mxu0 0
  %6888 = vmatmul.mubr.bf16.gmra.mrb[0].mxu0 %v6725
  %v6889 = vpop.f32.mrb[0].mxu0
  %v6890 = vadd.f32 0.0, %v6889
  %v6891 = vpop.f32.mrb[0].mxu0
  %v6892 = vpop.f32.mrb[0].mxu0
  %v6893 = vadd.f32 0.0, %v6892
  %v6894 = vpop.f32.mrb[0].mxu0
  %6895 = vmatprep.mubr.bf16.mxu0 0
  %6896 = vmatmul.mubr.bf16.gmra.mrb[0].mxu0 %v6728
  %v6897 = vpop.f32.mrb[0].mxu0
  %v6898 = vadd.f32 0.0, %v6897
  %v6899 = vpop.f32.mrb[0].mxu0
  %v6900 = vpop.f32.mrb[0].mxu0
  %v6901 = vadd.f32 0.0, %v6900
  %v6902 = vpop.f32.mrb[0].mxu0
  %6903 = vmatprep.mubr.bf16.mxu0 0
  %6904 = vmatmul.mubr.bf16.gmra.mrb[0].mxu0 %v6731
  %v6905 = vpop.f32.mrb[0].mxu0
  %v6906 = vadd.f32 0.0, %v6905
  %v6907 = vpop.f32.mrb[0].mxu0
  %v6908 = vpop.f32.mrb[0].mxu0
  %v6909 = vadd.f32 0.0, %v6908
  %v6910 = vpop.f32.mrb[0].mxu0
  %6911 = vmatprep.mubr.bf16.mxu0 0
  %6912 = vmatmul.mubr.bf16.gmra.mrb[0].mxu0 %v6734
  %v6913 = vpop.f32.mrb[0].mxu0
  %v6914 = vadd.f32 0.0, %v6913
  %v6915 = vpop.f32.mrb[0].mxu0
  %v6916 = vpop.f32.mrb[0].mxu0
  %v6917 = vadd.f32 0.0, %v6916
  %v6918 = vpop.f32.mrb[0].mxu0
  %6919 = vmatprep.mubr.bf16.mxu0 0
  %6920 = vmatmul.mubr.bf16.gmra.mrb[0].mxu0 %v6737
  %v6921 = vpop.f32.mrb[0].mxu0
  %v6922 = vadd.f32 0.0, %v6921
  %v6923 = vpop.f32.mrb[0].mxu0
  %v6924 = vpop.f32.mrb[0].mxu0
  %v6925 = vadd.f32 0.0, %v6924
  %v6926 = vpop.f32.mrb[0].mxu0
  %6927 = vmatprep.mubr.bf16.mxu0 0
  %6928 = vmatmul.mubr.bf16.gmra.mrb[0].mxu0 %v6740
  %v6929 = vpop.f32.mrb[0].mxu0
  %v6930 = vadd.f32 0.0, %v6929
  %v6931 = vpop.f32.mrb[0].mxu0
  %v6932 = vpop.f32.mrb[0].mxu0
  %v6933 = vadd.f32 0.0, %v6932
  %v6934 = vpop.f32.mrb[0].mxu0
  %6935 = vmatprep.mubr.bf16.mxu0 0
  %6936 = vmatmul.mubr.bf16.gmra.mrb[0].mxu0 %v6743
  %v6937 = vpop.f32.mrb[0].mxu0
  %v6938 = vadd.f32 0.0, %v6937
  %v6939 = vpop.f32.mrb[0].mxu0
  %v6940 = vpop.f32.mrb[0].mxu0
  %v6941 = vadd.f32 0.0, %v6940
  %v6942 = vpop.f32.mrb[0].mxu0
  %6943 = vmatprep.mubr.bf16.mxu0 0
  %6944 = vmatmul.mubr.bf16.gmra.mrb[0].mxu0 %v6746
  %v6945 = vpop.f32.mrb[0].mxu0
  %v6946 = vadd.f32 0.0, %v6945
  %v6947 = vpop.f32.mrb[0].mxu0
  %v6948 = vpop.f32.mrb[0].mxu0
  %v6949 = vadd.f32 0.0, %v6948
  %v6950 = vpop.f32.mrb[0].mxu0
  %6951 = vmatprep.mubr.bf16.mxu0 0
  %6952 = vmatmul.mubr.bf16.gmra.mrb[0].mxu0 %v6749
  %v6953 = vpop.f32.mrb[0].mxu0
  %v6954 = vadd.f32 0.0, %v6953
  %v6955 = vpop.f32.mrb[0].mxu0
  %v6956 = vpop.f32.mrb[0].mxu0
  %v6957 = vadd.f32 0.0, %v6956
  %v6958 = vpop.f32.mrb[0].mxu0
  %6959 = vmatprep.mubr.bf16.mxu0 0
  %6960 = vmatmul.mubr.bf16.gmra.mrb[0].mxu0 %v6752
  %v6961 = vpop.f32.mrb[0].mxu0
  %v6962 = vadd.f32 0.0, %v6961
  %v6963 = vpop.f32.mrb[0].mxu0
  %v6964 = vpop.f32.mrb[0].mxu0
  %v6965 = vadd.f32 0.0, %v6964
  %v6966 = vpop.f32.mrb[0].mxu0
  %6967 = vmatprep.mubr.bf16.mxu0 0
  %6968 = vmatmul.mubr.bf16.gmra.mrb[0].mxu0 %v6755
  %v6969 = vpop.f32.mrb[0].mxu0
  %v6970 = vadd.f32 0.0, %v6969
  %v6971 = vpop.f32.mrb[0].mxu0
  %v6972 = vpop.f32.mrb[0].mxu0
  %v6973 = vadd.f32 0.0, %v6972
  %v6974 = vpop.f32.mrb[0].mxu0
  %6975 = vmatprep.mubr.bf16.mxu0 0
  %6976 = vmatmul.mubr.bf16.gmra.mrb[0].mxu0 %v6758
  %v6977 = vpop.f32.mrb[0].mxu0
  %v6978 = vadd.f32 0.0, %v6977
  %v6979 = vpop.f32.mrb[0].mxu0
  %v6980 = vpop.f32.mrb[0].mxu0
  %v6981 = vadd.f32 0.0, %v6980
  %v6982 = vpop.f32.mrb[0].mxu0
  %6983 = vmatprep.mubr.bf16.mxu0 0
  %6984 = vmatmul.mubr.bf16.gmra.mrb[0].mxu0 %v6761
  %v6985 = vpop.f32.mrb[0].mxu0
  %v6986 = vadd.f32 0.0, %v6985
  %v6987 = vpop.f32.mrb[0].mxu0
  %v6988 = vpop.f32.mrb[0].mxu0
  %v6989 = vadd.f32 0.0, %v6988
  %v6990 = vpop.f32.mrb[0].mxu0
  %6991 = vmatprep.mubr.bf16.mxu0 0
  %6992 = vmatmul.mubr.bf16.gmra.mrb[0].mxu0 %v6764
  %v6993 = vpop.f32.mrb[0].mxu0
  %v6994 = vadd.f32 0.0, %v6993
  %v6995 = vpop.f32.mrb[0].mxu0
  %v6996 = vpop.f32.mrb[0].mxu0
  %v6997 = vadd.f32 0.0, %v6996
  %v6998 = vpop.f32.mrb[0].mxu0
  %6999 = vmatprep.mubr.bf16.mxu0 0
  %7000 = vmatmul.mubr.bf16.gmra.mrb[0].mxu0 %v6767
  %v7001 = vpop.f32.mrb[0].mxu0
  %v7002 = vadd.f32 0.0, %v7001
  %v7003 = vpop.f32.mrb[0].mxu0
  %v7004 = vpop.f32.mrb[0].mxu0
  %v7005 = vadd.f32 0.0, %v7004
  %v7006 = vpop.f32.mrb[0].mxu0
  %7007 = vmatprep.mubr.bf16.mxu0 0
  %7008 = vmatmul.mubr.bf16.gmra.mrb[0].mxu0 %v6770
  %v7009 = vpop.f32.mrb[0].mxu0
  %v7010 = vadd.f32 0.0, %v7009
  %v7011 = vpop.f32.mrb[0].mxu0
  %v7012 = vpop.f32.mrb[0].mxu0
  %v7013 = vadd.f32 0.0, %v7012
  %v7014 = vpop.f32.mrb[0].mxu0
  %7015 = vmatprep.mubr.bf16.mxu0 0
  %7016 = vmatmul.mubr.bf16.gmra.mrb[0].mxu0 %v6773
  %v7017 = vpop.f32.mrb[0].mxu0
  %v7018 = vadd.f32 0.0, %v7017
  %v7019 = vpop.f32.mrb[0].mxu0
  %v7020 = vpop.f32.mrb[0].mxu0
  %v7021 = vadd.f32 0.0, %v7020
  %v7022 = vpop.f32.mrb[0].mxu0
  %7023 = vmatprep.mubr.bf16.mxu0 0
  %7024 = vmatmul.mubr.bf16.gmra.mrb[0].mxu0 %v6776
  %v7025 = vpop.f32.mrb[0].mxu0
  %v7026 = vadd.f32 0.0, %v7025
  %v7027 = vpop.f32.mrb[0].mxu0
  %v7028 = vpop.f32.mrb[0].mxu0
  %v7029 = vadd.f32 0.0, %v7028
  %v7030 = vpop.f32.mrb[0].mxu0
  %7031 = vmatprep.mubr.bf16.mxu0 0
  %7032 = vmatmul.mubr.bf16.gmra.mrb[0].mxu0 %v6779
  %v7033 = vpop.f32.mrb[0].mxu0
  %v7034 = vadd.f32 0.0, %v7033
  %v7035 = vpop.f32.mrb[0].mxu0
  %v7036 = vpop.f32.mrb[0].mxu0
  %v7037 = vadd.f32 0.0, %v7036
  %v7038 = vpop.f32.mrb[0].mxu0
  %7039 = vmatprep.mubr.bf16.mxu0 0
  %7040 = vmatmul.mubr.bf16.gmra.mrb[0].mxu0 %v6782
  %v7041 = vpop.f32.mrb[0].mxu0
  %v7042 = vadd.f32 0.0, %v7041
  %v7043 = vpop.f32.mrb[0].mxu0
  %v7044 = vpop.f32.mrb[0].mxu0
  %v7045 = vadd.f32 0.0, %v7044
  %v7046 = vpop.f32.mrb[0].mxu0
  %7047 = vmatprep.mubr.bf16.mxu0 0
  %7048 = vmatmul.mubr.bf16.gmra.mrb[0].mxu0 %v6785
  %v7049 = vpop.f32.mrb[0].mxu0
  %v7050 = vadd.f32 0.0, %v7049
  %v7051 = vpop.f32.mrb[0].mxu0
  %v7052 = vpop.f32.mrb[0].mxu0
  %v7053 = vadd.f32 0.0, %v7052
  %v7054 = vpop.f32.mrb[0].mxu0
  %7055 = vmatprep.mubr.bf16.mxu0 0
  %7056 = vmatmul.mubr.bf16.gmra.mrb[0].mxu0 %v6788
  %v7057 = vpop.f32.mrb[0].mxu0
  %v7058 = vadd.f32 0.0, %v7057
  %v7059 = vpop.f32.mrb[0].mxu0
  %v7060 = vpop.f32.mrb[0].mxu0
  %v7061 = vadd.f32 0.0, %v7060
  %v7062 = vpop.f32.mrb[0].mxu0
  %7063 = vmatprep.mubr.bf16.mxu0 0
  %7064 = vmatmul.mubr.bf16.gmra.mrb[0].mxu0 %v6791
  %v7065 = vpop.f32.mrb[0].mxu0
  %v7066 = vadd.f32 0.0, %v7065
  %v7067 = vpop.f32.mrb[0].mxu0
  %v7068 = vpop.f32.mrb[0].mxu0
  %v7069 = vadd.f32 0.0, %v7068
  %v7070 = vpop.f32.mrb[0].mxu0
  %7071 = vmatprep.mubr.bf16.mxu0 0
  %7072 = vmatmul.mubr.bf16.gmra.mrb[0].mxu0 %v6794
  %v7073 = vpop.f32.mrb[0].mxu0
  %v7074 = vadd.f32 0.0, %v7073
  %v7075 = vpop.f32.mrb[0].mxu0
  %v7076 = vpop.f32.mrb[0].mxu0
  %v7077 = vadd.f32 0.0, %v7076
  %v7078 = vpop.f32.mrb[0].mxu0
  %7079 = vmatprep.mubr.bf16.mxu0 0
  %7080 = vmatmul.mubr.bf16.gmra.mrb[0].mxu0 %v6797
  %v7081 = vpop.f32.mrb[0].mxu0
  %v7082 = vadd.f32 0.0, %v7081
  %v7083 = vpop.f32.mrb[0].mxu0
  %v7084 = vpop.f32.mrb[0].mxu0
  %v7085 = vadd.f32 0.0, %v7084
  %v7086 = vpop.f32.mrb[0].mxu0
  %7087 = vmatprep.mubr.bf16.mxu0 0
  %7088 = vmatmul.mubr.bf16.gmra.mrb[0].mxu0 %v6800
  %v7089 = vpop.f32.mrb[0].mxu0
  %v7090 = vadd.f32 0.0, %v7089
  %v7091 = vpop.f32.mrb[0].mxu0
  %v7092 = vpop.f32.mrb[0].mxu0
  %v7093 = vadd.f32 0.0, %v7092
  %v7094 = vpop.f32.mrb[0].mxu0
  %7095 = vmatprep.mubr.bf16.mxu0 0
  %7096 = vmatmul.mubr.bf16.gmra.mrb[0].mxu0 %v6803
  %v7097 = vpop.f32.mrb[0].mxu0
  %v7098 = vadd.f32 0.0, %v7097
  %v7099 = vpop.f32.mrb[0].mxu0
  %v7100 = vpop.f32.mrb[0].mxu0
  %v7101 = vadd.f32 0.0, %v7100
  %v7102 = vpop.f32.mrb[0].mxu0
  %7103 = vmatprep.mubr.bf16.mxu0 0
  %7104 = vmatmul.mubr.bf16.gmra.mrb[0].mxu0 %v6806
  %v7105 = vpop.f32.mrb[0].mxu0
  %v7106 = vadd.f32 0.0, %v7105
  %v7107 = vpop.f32.mrb[0].mxu0
  %v7108 = vpop.f32.mrb[0].mxu0
  %v7109 = vadd.f32 0.0, %v7108
  %v7110 = vpop.f32.mrb[0].mxu0
  %7111 = vmatprep.mubr.bf16.mxu0 0
  %7112 = vmatmul.mubr.bf16.gmra.mrb[0].mxu0 %v6809
  %v7113 = vpop.f32.mrb[0].mxu0
  %v7114 = vadd.f32 0.0, %v7113
  %v7115 = vpop.f32.mrb[0].mxu0
  %v7116 = vpop.f32.mrb[0].mxu0
  %v7117 = vadd.f32 0.0, %v7116
  %v7118 = vpop.f32.mrb[0].mxu0
  %7119 = vmatprep.mubr.bf16.mxu0 0
  %7120 = vmatmul.mubr.bf16.gmra.mrb[0].mxu0 %v6812
  %v7121 = vpop.f32.mrb[0].mxu0
  %v7122 = vadd.f32 0.0, %v7121
  %v7123 = vpop.f32.mrb[0].mxu0
  %v7124 = vpop.f32.mrb[0].mxu0
  %v7125 = vadd.f32 0.0, %v7124
  %v7126 = vpop.f32.mrb[0].mxu0
  %7127 = vmatprep.mubr.bf16.mxu0 0
  %7128 = vmatmul.mubr.bf16.gmra.mrb[0].mxu0 %v6815
  %v7129 = vpop.f32.mrb[0].mxu0
  %v7130 = vadd.f32 0.0, %v7129
  %v7131 = vpop.f32.mrb[0].mxu0
  %v7132 = vpop.f32.mrb[0].mxu0
  %v7133 = vadd.f32 0.0, %v7132
  %v7134 = vpop.f32.mrb[0].mxu0
  %7135 = vmatprep.mubr.bf16.mxu0 0
  %7136 = vmatmul.mubr.bf16.gmra.mrb[0].mxu0 %v6818
  %v7137 = vpop.f32.mrb[0].mxu0
  %v7138 = vadd.f32 0.0, %v7137
  %v7139 = vpop.f32.mrb[0].mxu0
  %v7140 = vpop.f32.mrb[0].mxu0
  %v7141 = vadd.f32 0.0, %v7140
  %v7142 = vpop.f32.mrb[0].mxu0
  %7143 = vmatprep.mubr.bf16.mxu0 0
  %7144 = vmatmul.mubr.bf16.gmra.mrb[0].mxu0 %v6821
  %v7145 = vpop.f32.mrb[0].mxu0
  %v7146 = vadd.f32 0.0, %v7145
  %v7147 = vpop.f32.mrb[0].mxu0
  %v7148 = vpop.f32.mrb[0].mxu0
  %v7149 = vadd.f32 0.0, %v7148
  %v7150 = vpop.f32.mrb[0].mxu0
  %7151 = vmatprep.mubr.bf16.mxu0 0
  %7152 = vmatmul.mubr.bf16.gmra.mrb[0].mxu0 %v6824
  %v7153 = vpop.f32.mrb[0].mxu0
  %v7154 = vadd.f32 0.0, %v7153
  %v7155 = vpop.f32.mrb[0].mxu0
  %v7156 = vpop.f32.mrb[0].mxu0
  %v7157 = vadd.f32 0.0, %v7156
  %v7158 = vpop.f32.mrb[0].mxu0
  %7159 = vmatprep.mubr.bf16.mxu0 0
  %7160 = vmatmul.mubr.bf16.gmra.mrb[0].mxu0 %v6827
  %v7161 = vpop.f32.mrb[0].mxu0
  %v7162 = vadd.f32 0.0, %v7161
  %v7163 = vpop.f32.mrb[0].mxu0
  %v7164 = vpop.f32.mrb[0].mxu0
  %v7165 = vadd.f32 0.0, %v7164
  %v7166 = vpop.f32.mrb[0].mxu0
  %7167 = vmatprep.mubr.bf16.mxu0 0
  %7168 = vmatmul.mubr.bf16.gmra.mrb[0].mxu0 %v6830
  %v7169 = vpop.f32.mrb[0].mxu0
  %v7170 = vadd.f32 0.0, %v7169
  %v7171 = vpop.f32.mrb[0].mxu0
  %v7172 = vpop.f32.mrb[0].mxu0
  %v7173 = vadd.f32 0.0, %v7172
  %v7174 = vpop.f32.mrb[0].mxu0
  %7175 = vmatprep.mubr.bf16.mxu0 0
  %7176 = vmatmul.mubr.bf16.gmra.mrb[0].mxu0 %v6833
  %v7177 = vpop.f32.mrb[0].mxu0
  %v7178 = vadd.f32 0.0, %v7177
  %v7179 = vpop.f32.mrb[0].mxu0
  %v7180 = vpop.f32.mrb[0].mxu0
  %v7181 = vadd.f32 0.0, %v7180
  %v7182 = vpop.f32.mrb[0].mxu0
  %7183 = vmatprep.mubr.bf16.mxu0 0
  %7184 = vmatmul.mubr.bf16.gmra.mrb[0].mxu0 %v6836
  %v7185 = vpop.f32.mrb[0].mxu0
  %v7186 = vadd.f32 0.0, %v7185
  %v7187 = vpop.f32.mrb[0].mxu0
  %v7188 = vpop.f32.mrb[0].mxu0
  %v7189 = vadd.f32 0.0, %v7188
  %v7190 = vpop.f32.mrb[0].mxu0
  %7191 = vmatprep.mubr.bf16.mxu0 0
  %7192 = vmatmul.mubr.bf16.gmra.mrb[0].mxu0 %v6839
  %v7193 = vpop.f32.mrb[0].mxu0
  %v7194 = vadd.f32 0.0, %v7193
  %v7195 = vpop.f32.mrb[0].mxu0
  %v7196 = vpop.f32.mrb[0].mxu0
  %v7197 = vadd.f32 0.0, %v7196
  %v7198 = vpop.f32.mrb[0].mxu0
  %7199 = vmatprep.mubr.bf16.mxu0 0
  %7200 = vmatmul.mubr.bf16.gmra.mrb[0].mxu0 %v6842
  %v7201 = vpop.f32.mrb[0].mxu0
  %v7202 = vadd.f32 0.0, %v7201
  %v7203 = vpop.f32.mrb[0].mxu0
  %v7204 = vpop.f32.mrb[0].mxu0
  %v7205 = vpop.f32.mrb[0].mxu0
  %7206 = vdwg.mxu0
  %v7243 = vunpack.c.l.b16 %v6380
  %v7244 = vunpack.c.l.b16 %v6381
  %v7245 = vunpack.c.l.b16 %v6382
  %v7246 = vunpack.c.l.b16 %v6383
  %v7247 = vunpack.c.l.b16 %v6384
  %v7248 = vunpack.c.l.b16 %v6385
  %v7249 = vunpack.c.l.b16 %v6386
  %v7250 = vunpack.c.l.b16 %v6387
  %v7251 = vunpack.c.l.b16 %v6388
  %v7252 = vunpack.c.l.b16 %v6389
  %v7253 = vunpack.c.l.b16 %v6390
  %v7254 = vunpack.c.l.b16 %v6391
  %v7255 = vunpack.c.l.b16 %v6392
  %v7256 = vunpack.c.l.b16 %v6393
  %v7257 = vunpack.c.l.b16 %v6394
  %v7258 = vunpack.c.l.b16 %v6395
  %v7259 = vunpack.c.l.b16 %v6396
  %v7260 = vunpack.c.l.b16 %v6397
  %v7261 = vunpack.c.l.b16 %v6398
  %v7262 = vunpack.c.l.b16 %v6399
  %v7263 = vunpack.c.l.b16 %v6400
  %v7264 = vunpack.c.l.b16 %v6401
  %v7265 = vunpack.c.l.b16 %v6402
  %v7266 = vunpack.c.l.b16 %v6403
  %v7267 = vunpack.c.l.b16 %v6404
  %v7268 = vunpack.c.l.b16 %v6405
  %v7269 = vunpack.c.l.b16 %v6406
  %v7270 = vunpack.c.l.b16 %v6407
  %v7271 = vunpack.c.l.b16 %v6408
  %v7272 = vunpack.c.l.b16 %v6409
  %v7273 = vunpack.c.l.b16 %v6410
  %v7274 = vunpack.c.l.b16 %v6411
  %v7275 = vunpack.c.l.b16 %v6412
  %v7276 = vunpack.c.l.b16 %v6413
  %v7277 = vunpack.c.l.b16 %v6414
  %v7278 = vunpack.c.l.b16 %v6415
  %v7279 = vpack.c.b16 %v7244, %v7243
  %v7280 = vpack.c.b16 %v7246, %v7245
  %v7281 = vpack.c.b16 %v7248, %v7247
  %v7282 = vpack.c.b16 %v7250, %v7249
  %v7283 = vpack.c.b16 %v7252, %v7251
  %v7284 = vpack.c.b16 %v7254, %v7253
  %v7285 = vpack.c.b16 %v7256, %v7255
  %v7286 = vpack.c.b16 %v7258, %v7257
  %v7287 = vpack.c.b16 %v7260, %v7259
  %v7288 = vpack.c.b16 %v7262, %v7261
  %v7289 = vpack.c.b16 %v7264, %v7263
  %v7290 = vpack.c.b16 %v7266, %v7265
  %v7291 = vpack.c.b16 %v7268, %v7267
  %v7292 = vpack.c.b16 %v7270, %v7269
  %v7293 = vpack.c.b16 %v7272, %v7271
  %v7294 = vpack.c.b16 %v7274, %v7273
  %v7295 = vpack.c.b16 %v7276, %v7275
  %v7296 = vpack.c.b16 %v7278, %v7277
  %v7316 = vsel %vm2999, %v6259, 0
  %v7319 = vsel %vm2999, %v6262, 0
  %v7322 = vsel %vm2999, %v6265, 0
  %v7325 = vsel %vm2999, %v6268, 0
  %v7328 = vsel %vm2999, %v6271, 0
  %v7331 = vsel %vm2999, %v6274, 0
  %v7334 = vsel %vm2999, %v6277, 0
  %v7337 = vsel %vm2999, %v6280, 0
  %v7340 = vsel %vm2999, %v6283, 0
  %v7343 = vsel %vm2999, %v6286, 0
  %v7346 = vsel %vm2999, %v6289, 0
  %v7349 = vsel %vm2999, %v6292, 0
  %v7352 = vsel %vm2999, %v6295, 0
  %v7355 = vsel %vm2999, %v6298, 0
  %v7358 = vsel %vm2999, %v6301, 0
  %v7361 = vsel %vm2999, %v6304, 0
  %v7364 = vsel %vm2999, %v6307, 0
  %v7367 = vsel %vm2999, %v6310, 0
  %v7370 = vsel %vm2999, %v6313, 0
  %v7373 = vsel %vm2999, %v6316, 0
  %v7376 = vsel %vm2999, %v6319, 0
  %v7379 = vsel %vm2999, %v6322, 0
  %v7382 = vsel %vm2999, %v6325, 0
  %v7385 = vsel %vm2999, %v6328, 0
  %v7388 = vsel %vm2999, %v6331, 0
  %v7391 = vsel %vm2999, %v6334, 0
  %v7394 = vsel %vm2999, %v6337, 0
  %v7397 = vsel %vm2999, %v6340, 0
  %v7400 = vsel %vm2999, %v6343, 0
  %v7403 = vsel %vm2999, %v6346, 0
  %v7406 = vsel %vm2999, %v6349, 0
  %v7409 = vsel %vm2999, %v6352, 0
  %v7412 = vsel %vm2999, %v6355, 0
  %v7415 = vsel %vm2999, %v6358, 0
  %v7418 = vsel %vm2999, %v6361, 0
  %v7421 = vsel %vm2999, %v6364, 0
  %v7424 = vsel %vm2999, %v6367, 0
  %v7427 = vsel %vm2999, %v6370, 0
  %v7430 = vsel %vm2999, %v6373, 0
  %v7433 = vsel %vm2999, %v6376, 0
  %v7436 = vsel %vm2999, %v6379, 0
  %7438 = vmatprep.subr.bf16.mxu0 0
  %7439 = vmatpush1.bf16.msra.mxu0 %v7279
  %7440 = vmatprep.subr.bf16.mxu0 0
  %7441 = vmatpush1.bf16.msra.mxu0 %v7280
  %7442 = vmatprep.subr.bf16.mxu0 0
  %7443 = vmatpush1.bf16.msra.mxu0 %v7281
  %7444 = vmatprep.subr.bf16.mxu0 0
  %7445 = vmatpush1.bf16.msra.mxu0 %v7282
  %7446 = vmatprep.subr.bf16.mxu0 0
  %7447 = vmatpush1.bf16.msra.mxu0 %v7283
  %7448 = vmatprep.subr.bf16.mxu0 0
  %7449 = vmatpush1.bf16.msra.mxu0 %v7284
  %7450 = vmatprep.subr.bf16.mxu0 0
  %7451 = vmatpush1.bf16.msra.mxu0 %v7285
  %7452 = vmatprep.subr.bf16.mxu0 0
  %7453 = vmatpush1.bf16.msra.mxu0 %v7286
  %7454 = vmatprep.subr.bf16.mxu0 0
  %7455 = vmatpush1.bf16.msra.mxu0 %v7287
  %7456 = vmatprep.subr.bf16.mxu0 0
  %7457 = vmatpush1.bf16.msra.mxu0 %v7288
  %7458 = vmatprep.subr.bf16.mxu0 0
  %7459 = vmatpush1.bf16.msra.mxu0 %v7289
  %7460 = vmatprep.subr.bf16.mxu0 0
  %7461 = vmatpush1.bf16.msra.mxu0 %v7290
  %7462 = vmatprep.subr.bf16.mxu0 0
  %7463 = vmatpush1.bf16.msra.mxu0 %v7291
  %7464 = vmatprep.subr.bf16.mxu0 0
  %7465 = vmatpush1.bf16.msra.mxu0 %v7292
  %7466 = vmatprep.subr.bf16.mxu0 0
  %7467 = vmatpush1.bf16.msra.mxu0 %v7293
  %7468 = vmatprep.subr.bf16.mxu0 0
  %7469 = vmatpush1.bf16.msra.mxu0 %v7294
  %7470 = vmatprep.mubr.bf16.mxu0 %v6258
  %7471 = vmatmul.mubr.bf16.gmra.mrb[0].mxu0 %v6257
  %v7472 = vpop.f32.mrb[0].mxu0
  %v7473 = vadd.f32 %v6882, %v7472
  %v7474 = vpop.f32.mrb[0].mxu0
  %v7475 = vpop.f32.mrb[0].mxu0
  %v7476 = vadd.f32 %v6885, %v7475
  %v7477 = vpop.f32.mrb[0].mxu0
  %7478 = vmatprep.mubr.bf16.mxu0 %v6261
  %7479 = vmatmul.mubr.bf16.gmra.mrb[0].mxu0 %v6260
  %v7480 = vpop.f32.mrb[0].mxu0
  %v7481 = vadd.f32 %v6890, %v7480
  %v7482 = vpop.f32.mrb[0].mxu0
  %v7483 = vpop.f32.mrb[0].mxu0
  %v7484 = vadd.f32 %v6893, %v7483
  %v7485 = vpop.f32.mrb[0].mxu0
  %7486 = vmatprep.mubr.bf16.mxu0 %v6264
  %7487 = vmatmul.mubr.bf16.gmra.mrb[0].mxu0 %v6263
  %v7488 = vpop.f32.mrb[0].mxu0
  %v7489 = vadd.f32 %v6898, %v7488
  %v7490 = vpop.f32.mrb[0].mxu0
  %v7491 = vpop.f32.mrb[0].mxu0
  %v7492 = vadd.f32 %v6901, %v7491
  %v7493 = vpop.f32.mrb[0].mxu0
  %7494 = vmatprep.mubr.bf16.mxu0 %v6267
  %7495 = vmatmul.mubr.bf16.gmra.mrb[0].mxu0 %v6266
  %v7496 = vpop.f32.mrb[0].mxu0
  %v7497 = vadd.f32 %v6906, %v7496
  %v7498 = vpop.f32.mrb[0].mxu0
  %v7499 = vpop.f32.mrb[0].mxu0
  %v7500 = vadd.f32 %v6909, %v7499
  %v7501 = vpop.f32.mrb[0].mxu0
  %7502 = vmatprep.mubr.bf16.mxu0 %v6270
  %7503 = vmatmul.mubr.bf16.gmra.mrb[0].mxu0 %v6269
  %v7504 = vpop.f32.mrb[0].mxu0
  %v7505 = vadd.f32 %v6914, %v7504
  %v7506 = vpop.f32.mrb[0].mxu0
  %v7507 = vpop.f32.mrb[0].mxu0
  %v7508 = vadd.f32 %v6917, %v7507
  %v7509 = vpop.f32.mrb[0].mxu0
  %7510 = vmatprep.mubr.bf16.mxu0 %v6273
  %7511 = vmatmul.mubr.bf16.gmra.mrb[0].mxu0 %v6272
  %v7512 = vpop.f32.mrb[0].mxu0
  %v7513 = vadd.f32 %v6922, %v7512
  %v7514 = vpop.f32.mrb[0].mxu0
  %v7515 = vpop.f32.mrb[0].mxu0
  %v7516 = vadd.f32 %v6925, %v7515
  %v7517 = vpop.f32.mrb[0].mxu0
  %7518 = vmatprep.mubr.bf16.mxu0 %v6276
  %7519 = vmatmul.mubr.bf16.gmra.mrb[0].mxu0 %v6275
  %v7520 = vpop.f32.mrb[0].mxu0
  %v7521 = vadd.f32 %v6930, %v7520
  %v7522 = vpop.f32.mrb[0].mxu0
  %v7523 = vpop.f32.mrb[0].mxu0
  %v7524 = vadd.f32 %v6933, %v7523
  %v7525 = vpop.f32.mrb[0].mxu0
  %7526 = vmatprep.mubr.bf16.mxu0 %v6279
  %7527 = vmatmul.mubr.bf16.gmra.mrb[0].mxu0 %v6278
  %v7528 = vpop.f32.mrb[0].mxu0
  %v7529 = vadd.f32 %v6938, %v7528
  %v7530 = vpop.f32.mrb[0].mxu0
  %v7531 = vpop.f32.mrb[0].mxu0
  %v7532 = vadd.f32 %v6941, %v7531
  %v7533 = vpop.f32.mrb[0].mxu0
  %7534 = vmatprep.mubr.bf16.mxu0 %v6282
  %7535 = vmatmul.mubr.bf16.gmra.mrb[0].mxu0 %v6281
  %v7536 = vpop.f32.mrb[0].mxu0
  %v7537 = vadd.f32 %v6946, %v7536
  %v7538 = vpop.f32.mrb[0].mxu0
  %v7539 = vpop.f32.mrb[0].mxu0
  %v7540 = vadd.f32 %v6949, %v7539
  %v7541 = vpop.f32.mrb[0].mxu0
  %7542 = vmatprep.mubr.bf16.mxu0 %v6285
  %7543 = vmatmul.mubr.bf16.gmra.mrb[0].mxu0 %v6284
  %v7544 = vpop.f32.mrb[0].mxu0
  %v7545 = vadd.f32 %v6954, %v7544
  %v7546 = vpop.f32.mrb[0].mxu0
  %v7547 = vpop.f32.mrb[0].mxu0
  %v7548 = vadd.f32 %v6957, %v7547
  %v7549 = vpop.f32.mrb[0].mxu0
  %7550 = vmatprep.mubr.bf16.mxu0 %v6288
  %7551 = vmatmul.mubr.bf16.gmra.mrb[0].mxu0 %v6287
  %v7552 = vpop.f32.mrb[0].mxu0
  %v7553 = vadd.f32 %v6962, %v7552
  %v7554 = vpop.f32.mrb[0].mxu0
  %v7555 = vpop.f32.mrb[0].mxu0
  %v7556 = vadd.f32 %v6965, %v7555
  %v7557 = vpop.f32.mrb[0].mxu0
  %7558 = vmatprep.mubr.bf16.mxu0 %v6291
  %7559 = vmatmul.mubr.bf16.gmra.mrb[0].mxu0 %v6290
  %v7560 = vpop.f32.mrb[0].mxu0
  %v7561 = vadd.f32 %v6970, %v7560
  %v7562 = vpop.f32.mrb[0].mxu0
  %v7563 = vpop.f32.mrb[0].mxu0
  %v7564 = vadd.f32 %v6973, %v7563
  %v7565 = vpop.f32.mrb[0].mxu0
  %7566 = vmatprep.mubr.bf16.mxu0 %v6294
  %7567 = vmatmul.mubr.bf16.gmra.mrb[0].mxu0 %v6293
  %v7568 = vpop.f32.mrb[0].mxu0
  %v7569 = vadd.f32 %v6978, %v7568
  %v7570 = vpop.f32.mrb[0].mxu0
  %v7571 = vpop.f32.mrb[0].mxu0
  %v7572 = vadd.f32 %v6981, %v7571
  %v7573 = vpop.f32.mrb[0].mxu0
  %7574 = vmatprep.mubr.bf16.mxu0 %v6297
  %7575 = vmatmul.mubr.bf16.gmra.mrb[0].mxu0 %v6296
  %v7576 = vpop.f32.mrb[0].mxu0
  %v7577 = vadd.f32 %v6986, %v7576
  %v7578 = vpop.f32.mrb[0].mxu0
  %v7579 = vpop.f32.mrb[0].mxu0
  %v7580 = vadd.f32 %v6989, %v7579
  %v7581 = vpop.f32.mrb[0].mxu0
  %7582 = vmatprep.mubr.bf16.mxu0 %v6300
  %7583 = vmatmul.mubr.bf16.gmra.mrb[0].mxu0 %v6299
  %v7584 = vpop.f32.mrb[0].mxu0
  %v7585 = vadd.f32 %v6994, %v7584
  %v7586 = vpop.f32.mrb[0].mxu0
  %v7587 = vpop.f32.mrb[0].mxu0
  %v7588 = vadd.f32 %v6997, %v7587
  %v7589 = vpop.f32.mrb[0].mxu0
  %7590 = vmatprep.mubr.bf16.mxu0 %v6303
  %7591 = vmatmul.mubr.bf16.gmra.mrb[0].mxu0 %v6302
  %v7592 = vpop.f32.mrb[0].mxu0
  %v7593 = vadd.f32 %v7002, %v7592
  %v7594 = vpop.f32.mrb[0].mxu0
  %v7595 = vpop.f32.mrb[0].mxu0
  %v7596 = vadd.f32 %v7005, %v7595
  %v7597 = vpop.f32.mrb[0].mxu0
  %7598 = vmatprep.mubr.bf16.mxu0 %v6306
  %7599 = vmatmul.mubr.bf16.gmra.mrb[0].mxu0 %v6305
  %v7600 = vpop.f32.mrb[0].mxu0
  %v7601 = vadd.f32 %v7010, %v7600
  %v7602 = vpop.f32.mrb[0].mxu0
  %v7603 = vpop.f32.mrb[0].mxu0
  %v7604 = vadd.f32 %v7013, %v7603
  %v7605 = vpop.f32.mrb[0].mxu0
  %7606 = vmatprep.mubr.bf16.mxu0 %v6309
  %7607 = vmatmul.mubr.bf16.gmra.mrb[0].mxu0 %v6308
  %v7608 = vpop.f32.mrb[0].mxu0
  %v7609 = vadd.f32 %v7018, %v7608
  %v7610 = vpop.f32.mrb[0].mxu0
  %v7611 = vpop.f32.mrb[0].mxu0
  %v7612 = vadd.f32 %v7021, %v7611
  %v7613 = vpop.f32.mrb[0].mxu0
  %7614 = vmatprep.mubr.bf16.mxu0 %v6312
  %7615 = vmatmul.mubr.bf16.gmra.mrb[0].mxu0 %v6311
  %v7616 = vpop.f32.mrb[0].mxu0
  %v7617 = vadd.f32 %v7026, %v7616
  %v7618 = vpop.f32.mrb[0].mxu0
  %v7619 = vpop.f32.mrb[0].mxu0
  %v7620 = vadd.f32 %v7029, %v7619
  %v7621 = vpop.f32.mrb[0].mxu0
  %7622 = vmatprep.mubr.bf16.mxu0 %v6315
  %7623 = vmatmul.mubr.bf16.gmra.mrb[0].mxu0 %v6314
  %v7624 = vpop.f32.mrb[0].mxu0
  %v7625 = vadd.f32 %v7034, %v7624
  %v7626 = vpop.f32.mrb[0].mxu0
  %v7627 = vpop.f32.mrb[0].mxu0
  %v7628 = vadd.f32 %v7037, %v7627
  %v7629 = vpop.f32.mrb[0].mxu0
  %7630 = vmatprep.mubr.bf16.mxu0 %v6318
  %7631 = vmatmul.mubr.bf16.gmra.mrb[0].mxu0 %v6317
  %v7632 = vpop.f32.mrb[0].mxu0
  %v7633 = vadd.f32 %v7042, %v7632
  %v7634 = vpop.f32.mrb[0].mxu0
  %v7635 = vpop.f32.mrb[0].mxu0
  %v7636 = vadd.f32 %v7045, %v7635
  %v7637 = vpop.f32.mrb[0].mxu0
  %7638 = vmatprep.mubr.bf16.mxu0 %v6321
  %7639 = vmatmul.mubr.bf16.gmra.mrb[0].mxu0 %v6320
  %v7640 = vpop.f32.mrb[0].mxu0
  %v7641 = vadd.f32 %v7050, %v7640
  %v7642 = vpop.f32.mrb[0].mxu0
  %v7643 = vpop.f32.mrb[0].mxu0
  %v7644 = vadd.f32 %v7053, %v7643
  %v7645 = vpop.f32.mrb[0].mxu0
  %7646 = vmatprep.mubr.bf16.mxu0 %v6324
  %7647 = vmatmul.mubr.bf16.gmra.mrb[0].mxu0 %v6323
  %v7648 = vpop.f32.mrb[0].mxu0
  %v7649 = vadd.f32 %v7058, %v7648
  %v7650 = vpop.f32.mrb[0].mxu0
  %v7651 = vpop.f32.mrb[0].mxu0
  %v7652 = vadd.f32 %v7061, %v7651
  %v7653 = vpop.f32.mrb[0].mxu0
  %7654 = vmatprep.mubr.bf16.mxu0 %v6327
  %7655 = vmatmul.mubr.bf16.gmra.mrb[0].mxu0 %v6326
  %v7656 = vpop.f32.mrb[0].mxu0
  %v7657 = vadd.f32 %v7066, %v7656
  %v7658 = vpop.f32.mrb[0].mxu0
  %v7659 = vpop.f32.mrb[0].mxu0
  %v7660 = vadd.f32 %v7069, %v7659
  %v7661 = vpop.f32.mrb[0].mxu0
  %7662 = vmatprep.mubr.bf16.mxu0 %v6330
  %7663 = vmatmul.mubr.bf16.gmra.mrb[0].mxu0 %v6329
  %v7664 = vpop.f32.mrb[0].mxu0
  %v7665 = vadd.f32 %v7074, %v7664
  %v7666 = vpop.f32.mrb[0].mxu0
  %v7667 = vpop.f32.mrb[0].mxu0
  %v7668 = vadd.f32 %v7077, %v7667
  %v7669 = vpop.f32.mrb[0].mxu0
  %7670 = vmatprep.mubr.bf16.mxu0 %v6333
  %7671 = vmatmul.mubr.bf16.gmra.mrb[0].mxu0 %v6332
  %v7672 = vpop.f32.mrb[0].mxu0
  %v7673 = vadd.f32 %v7082, %v7672
  %v7674 = vpop.f32.mrb[0].mxu0
  %v7675 = vpop.f32.mrb[0].mxu0
  %v7676 = vadd.f32 %v7085, %v7675
  %v7677 = vpop.f32.mrb[0].mxu0
  %7678 = vmatprep.mubr.bf16.mxu0 %v6336
  %7679 = vmatmul.mubr.bf16.gmra.mrb[0].mxu0 %v6335
  %v7680 = vpop.f32.mrb[0].mxu0
  %v7681 = vadd.f32 %v7090, %v7680
  %v7682 = vpop.f32.mrb[0].mxu0
  %v7683 = vpop.f32.mrb[0].mxu0
  %v7684 = vadd.f32 %v7093, %v7683
  %v7685 = vpop.f32.mrb[0].mxu0
  %7686 = vmatprep.mubr.bf16.mxu0 %v6339
  %7687 = vmatmul.mubr.bf16.gmra.mrb[0].mxu0 %v6338
  %v7688 = vpop.f32.mrb[0].mxu0
  %v7689 = vadd.f32 %v7098, %v7688
  %v7690 = vpop.f32.mrb[0].mxu0
  %v7691 = vpop.f32.mrb[0].mxu0
  %v7692 = vadd.f32 %v7101, %v7691
  %v7693 = vpop.f32.mrb[0].mxu0
  %7694 = vmatprep.mubr.bf16.mxu0 %v6342
  %7695 = vmatmul.mubr.bf16.gmra.mrb[0].mxu0 %v6341
  %v7696 = vpop.f32.mrb[0].mxu0
  %v7697 = vadd.f32 %v7106, %v7696
  %v7698 = vpop.f32.mrb[0].mxu0
  %v7699 = vpop.f32.mrb[0].mxu0
  %v7700 = vadd.f32 %v7109, %v7699
  %v7701 = vpop.f32.mrb[0].mxu0
  %7702 = vmatprep.mubr.bf16.mxu0 %v6345
  %7703 = vmatmul.mubr.bf16.gmra.mrb[0].mxu0 %v6344
  %v7704 = vpop.f32.mrb[0].mxu0
  %v7705 = vadd.f32 %v7114, %v7704
  %v7706 = vpop.f32.mrb[0].mxu0
  %v7707 = vpop.f32.mrb[0].mxu0
  %v7708 = vadd.f32 %v7117, %v7707
  %v7709 = vpop.f32.mrb[0].mxu0
  %7710 = vmatprep.mubr.bf16.mxu0 %v6348
  %7711 = vmatmul.mubr.bf16.gmra.mrb[0].mxu0 %v6347
  %v7712 = vpop.f32.mrb[0].mxu0
  %v7713 = vadd.f32 %v7122, %v7712
  %v7714 = vpop.f32.mrb[0].mxu0
  %v7715 = vpop.f32.mrb[0].mxu0
  %v7716 = vadd.f32 %v7125, %v7715
  %v7717 = vpop.f32.mrb[0].mxu0
  %7718 = vmatprep.mubr.bf16.mxu0 %v6351
  %7719 = vmatmul.mubr.bf16.gmra.mrb[0].mxu0 %v6350
  %v7720 = vpop.f32.mrb[0].mxu0
  %v7721 = vadd.f32 %v7130, %v7720
  %v7722 = vpop.f32.mrb[0].mxu0
  %v7723 = vpop.f32.mrb[0].mxu0
  %v7724 = vadd.f32 %v7133, %v7723
  %v7725 = vpop.f32.mrb[0].mxu0
  %7726 = vmatprep.mubr.bf16.mxu0 %v6354
  %7727 = vmatmul.mubr.bf16.gmra.mrb[0].mxu0 %v6353
  %v7728 = vpop.f32.mrb[0].mxu0
  %v7729 = vadd.f32 %v7138, %v7728
  %v7730 = vpop.f32.mrb[0].mxu0
  %v7731 = vpop.f32.mrb[0].mxu0
  %v7732 = vadd.f32 %v7141, %v7731
  %v7733 = vpop.f32.mrb[0].mxu0
  %7734 = vmatprep.mubr.bf16.mxu0 %v6357
  %7735 = vmatmul.mubr.bf16.gmra.mrb[0].mxu0 %v6356
  %v7736 = vpop.f32.mrb[0].mxu0
  %v7737 = vadd.f32 %v7146, %v7736
  %v7738 = vpop.f32.mrb[0].mxu0
  %v7739 = vpop.f32.mrb[0].mxu0
  %v7740 = vadd.f32 %v7149, %v7739
  %v7741 = vpop.f32.mrb[0].mxu0
  %7742 = vmatprep.mubr.bf16.mxu0 %v6360
  %7743 = vmatmul.mubr.bf16.gmra.mrb[0].mxu0 %v6359
  %v7744 = vpop.f32.mrb[0].mxu0
  %v7745 = vadd.f32 %v7154, %v7744
  %v7746 = vpop.f32.mrb[0].mxu0
  %v7747 = vpop.f32.mrb[0].mxu0
  %v7748 = vadd.f32 %v7157, %v7747
  %v7749 = vpop.f32.mrb[0].mxu0
  %7750 = vmatprep.mubr.bf16.mxu0 %v6363
  %7751 = vmatmul.mubr.bf16.gmra.mrb[0].mxu0 %v6362
  %v7752 = vpop.f32.mrb[0].mxu0
  %v7753 = vadd.f32 %v7162, %v7752
  %v7754 = vpop.f32.mrb[0].mxu0
  %v7755 = vpop.f32.mrb[0].mxu0
  %v7756 = vadd.f32 %v7165, %v7755
  %v7757 = vpop.f32.mrb[0].mxu0
  %7758 = vmatprep.mubr.bf16.mxu0 %v6366
  %7759 = vmatmul.mubr.bf16.gmra.mrb[0].mxu0 %v6365
  %v7760 = vpop.f32.mrb[0].mxu0
  %v7761 = vadd.f32 %v7170, %v7760
  %v7762 = vpop.f32.mrb[0].mxu0
  %v7763 = vpop.f32.mrb[0].mxu0
  %v7764 = vadd.f32 %v7173, %v7763
  %v7765 = vpop.f32.mrb[0].mxu0
  %7766 = vmatprep.mubr.bf16.mxu0 %v6369
  %7767 = vmatmul.mubr.bf16.gmra.mrb[0].mxu0 %v6368
  %v7768 = vpop.f32.mrb[0].mxu0
  %v7769 = vadd.f32 %v7178, %v7768
  %v7770 = vpop.f32.mrb[0].mxu0
  %v7771 = vpop.f32.mrb[0].mxu0
  %v7772 = vadd.f32 %v7181, %v7771
  %v7773 = vpop.f32.mrb[0].mxu0
  %7774 = vmatprep.mubr.bf16.mxu0 %v6372
  %7775 = vmatmul.mubr.bf16.gmra.mrb[0].mxu0 %v6371
  %v7776 = vpop.f32.mrb[0].mxu0
  %v7777 = vadd.f32 %v7186, %v7776
  %v7778 = vpop.f32.mrb[0].mxu0
  %v7779 = vpop.f32.mrb[0].mxu0
  %v7780 = vadd.f32 %v7189, %v7779
  %v7781 = vpop.f32.mrb[0].mxu0
  %7782 = vmatprep.mubr.bf16.mxu0 %v6375
  %7783 = vmatmul.mubr.bf16.gmra.mrb[0].mxu0 %v6374
  %v7784 = vpop.f32.mrb[0].mxu0
  %v7785 = vadd.f32 %v7194, %v7784
  %v7786 = vpop.f32.mrb[0].mxu0
  %v7787 = vpop.f32.mrb[0].mxu0
  %v7788 = vadd.f32 %v7197, %v7787
  %v7789 = vpop.f32.mrb[0].mxu0
  %7790 = vmatprep.mubr.bf16.mxu0 %v6378
  %7791 = vmatmul.mubr.bf16.gmra.mrb[0].mxu0 %v6377
  %v7792 = vpop.f32.mrb[0].mxu0
  %v7793 = vadd.f32 %v7202, %v7792
  %v7794 = vpop.f32.mrb[0].mxu0
  %v7795 = vpop.f32.mrb[0].mxu0
  %v7796 = vpop.f32.mrb[0].mxu0
  %7797 = vdwg.mxu0
  %7798 = vmatprep.subr.bf16.mxu0 0
  %7799 = vmatpush1.bf16.msra.mxu0 %v7295
  %7800 = vmatprep.subr.bf16.mxu0 0
  %7801 = vmatpush1.bf16.msra.mxu0 %v7296
  %7802 = vmatprep.subr.bf16.mxu0 0
  %7803 = vmatpush1.bf16.msra.mxu0 0
  %7804 = vmatprep.subr.bf16.mxu0 0
  %7805 = vmatpush1.bf16.msra.mxu0 0
  %7806 = vmatprep.subr.bf16.mxu0 0
  %7807 = vmatpush1.bf16.msra.mxu0 0
  %7808 = vmatprep.subr.bf16.mxu0 0
  %7809 = vmatpush1.bf16.msra.mxu0 0
  %7810 = vmatprep.subr.bf16.mxu0 0
  %7811 = vmatpush1.bf16.msra.mxu0 0
  %7812 = vmatprep.subr.bf16.mxu0 0
  %7813 = vmatpush1.bf16.msra.mxu0 0
  %7814 = vmatprep.subr.bf16.mxu0 0
  %7815 = vmatpush1.bf16.msra.mxu0 0
  %7816 = vmatprep.subr.bf16.mxu0 0
  %7817 = vmatpush1.bf16.msra.mxu0 0
  %7818 = vmatprep.subr.bf16.mxu0 0
  %7819 = vmatpush1.bf16.msra.mxu0 0
  %7820 = vmatprep.subr.bf16.mxu0 0
  %7821 = vmatpush1.bf16.msra.mxu0 0
  %7822 = vmatprep.subr.bf16.mxu0 0
  %7823 = vmatpush1.bf16.msra.mxu0 0
  %7824 = vmatprep.subr.bf16.mxu0 0
  %7825 = vmatpush1.bf16.msra.mxu0 0
  %7826 = vmatprep.subr.bf16.mxu0 0
  %7827 = vmatpush1.bf16.msra.mxu0 0
  %7828 = vmatprep.subr.bf16.mxu0 0
  %7829 = vmatpush1.bf16.msra.mxu0 0
  %7830 = vmatprep.mubr.bf16.mxu0 0
  %7831 = vmatmul.mubr.bf16.gmra.mrb[0].mxu0 %v7316
  %v7832 = vpop.f32.mrb[0].mxu0
  %v7833 = vadd.f32 %v7473, %v7832
  %v7834 = vpop.f32.mrb[0].mxu0
  %v7835 = vpop.f32.mrb[0].mxu0
  %v7836 = vadd.f32 %v7476, %v7835
  %v7837 = vpop.f32.mrb[0].mxu0
  %7838 = vmatprep.mubr.bf16.mxu0 0
  %7839 = vmatmul.mubr.bf16.gmra.mrb[0].mxu0 %v7319
  %v7840 = vpop.f32.mrb[0].mxu0
  %v7841 = vadd.f32 %v7481, %v7840
  %v7842 = vpop.f32.mrb[0].mxu0
  %v7843 = vpop.f32.mrb[0].mxu0
  %v7844 = vadd.f32 %v7484, %v7843
  %v7845 = vpop.f32.mrb[0].mxu0
  %7846 = vmatprep.mubr.bf16.mxu0 0
  %7847 = vmatmul.mubr.bf16.gmra.mrb[0].mxu0 %v7322
  %v7848 = vpop.f32.mrb[0].mxu0
  %v7849 = vadd.f32 %v7489, %v7848
  %v7850 = vpop.f32.mrb[0].mxu0
  %v7851 = vpop.f32.mrb[0].mxu0
  %v7852 = vadd.f32 %v7492, %v7851
  %v7853 = vpop.f32.mrb[0].mxu0
  %7854 = vmatprep.mubr.bf16.mxu0 0
  %7855 = vmatmul.mubr.bf16.gmra.mrb[0].mxu0 %v7325
  %v7856 = vpop.f32.mrb[0].mxu0
  %v7857 = vadd.f32 %v7497, %v7856
  %v7858 = vpop.f32.mrb[0].mxu0
  %v7859 = vpop.f32.mrb[0].mxu0
  %v7860 = vadd.f32 %v7500, %v7859
  %v7861 = vpop.f32.mrb[0].mxu0
  %7862 = vmatprep.mubr.bf16.mxu0 0
  %7863 = vmatmul.mubr.bf16.gmra.mrb[0].mxu0 %v7328
  %v7864 = vpop.f32.mrb[0].mxu0
  %v7865 = vadd.f32 %v7505, %v7864
  %v7866 = vpop.f32.mrb[0].mxu0
  %v7867 = vpop.f32.mrb[0].mxu0
  %v7868 = vadd.f32 %v7508, %v7867
  %v7869 = vpop.f32.mrb[0].mxu0
  %7870 = vmatprep.mubr.bf16.mxu0 0
  %7871 = vmatmul.mubr.bf16.gmra.mrb[0].mxu0 %v7331
  %v7872 = vpop.f32.mrb[0].mxu0
  %v7873 = vadd.f32 %v7513, %v7872
  %v7874 = vpop.f32.mrb[0].mxu0
  %v7875 = vpop.f32.mrb[0].mxu0
  %v7876 = vadd.f32 %v7516, %v7875
  %v7877 = vpop.f32.mrb[0].mxu0
  %7878 = vmatprep.mubr.bf16.mxu0 0
  %7879 = vmatmul.mubr.bf16.gmra.mrb[0].mxu0 %v7334
  %v7880 = vpop.f32.mrb[0].mxu0
  %v7881 = vadd.f32 %v7521, %v7880
  %v7882 = vpop.f32.mrb[0].mxu0
  %v7883 = vpop.f32.mrb[0].mxu0
  %v7884 = vadd.f32 %v7524, %v7883
  %v7885 = vpop.f32.mrb[0].mxu0
  %7886 = vmatprep.mubr.bf16.mxu0 0
  %7887 = vmatmul.mubr.bf16.gmra.mrb[0].mxu0 %v7337
  %v7888 = vpop.f32.mrb[0].mxu0
  %v7889 = vadd.f32 %v7529, %v7888
  %v7890 = vpop.f32.mrb[0].mxu0
  %v7891 = vpop.f32.mrb[0].mxu0
  %v7892 = vadd.f32 %v7532, %v7891
  %v7893 = vpop.f32.mrb[0].mxu0
  %7894 = vmatprep.mubr.bf16.mxu0 0
  %7895 = vmatmul.mubr.bf16.gmra.mrb[0].mxu0 %v7340
  %v7896 = vpop.f32.mrb[0].mxu0
  %v7897 = vadd.f32 %v7537, %v7896
  %v7898 = vpop.f32.mrb[0].mxu0
  %v7899 = vpop.f32.mrb[0].mxu0
  %v7900 = vadd.f32 %v7540, %v7899
  %v7901 = vpop.f32.mrb[0].mxu0
  %7902 = vmatprep.mubr.bf16.mxu0 0
  %7903 = vmatmul.mubr.bf16.gmra.mrb[0].mxu0 %v7343
  %v7904 = vpop.f32.mrb[0].mxu0
  %v7905 = vadd.f32 %v7545, %v7904
  %v7906 = vpop.f32.mrb[0].mxu0
  %v7907 = vpop.f32.mrb[0].mxu0
  %v7908 = vadd.f32 %v7548, %v7907
  %v7909 = vpop.f32.mrb[0].mxu0
  %7910 = vmatprep.mubr.bf16.mxu0 0
  %7911 = vmatmul.mubr.bf16.gmra.mrb[0].mxu0 %v7346
  %v7912 = vpop.f32.mrb[0].mxu0
  %v7913 = vadd.f32 %v7553, %v7912
  %v7914 = vpop.f32.mrb[0].mxu0
  %v7915 = vpop.f32.mrb[0].mxu0
  %v7916 = vadd.f32 %v7556, %v7915
  %v7917 = vpop.f32.mrb[0].mxu0
  %7918 = vmatprep.mubr.bf16.mxu0 0
  %7919 = vmatmul.mubr.bf16.gmra.mrb[0].mxu0 %v7349
  %v7920 = vpop.f32.mrb[0].mxu0
  %v7921 = vadd.f32 %v7561, %v7920
  %v7922 = vpop.f32.mrb[0].mxu0
  %v7923 = vpop.f32.mrb[0].mxu0
  %v7924 = vadd.f32 %v7564, %v7923
  %v7925 = vpop.f32.mrb[0].mxu0
  %7926 = vmatprep.mubr.bf16.mxu0 0
  %7927 = vmatmul.mubr.bf16.gmra.mrb[0].mxu0 %v7352
  %v7928 = vpop.f32.mrb[0].mxu0
  %v7929 = vadd.f32 %v7569, %v7928
  %v7930 = vpop.f32.mrb[0].mxu0
  %v7931 = vpop.f32.mrb[0].mxu0
  %v7932 = vadd.f32 %v7572, %v7931
  %v7933 = vpop.f32.mrb[0].mxu0
  %7934 = vmatprep.mubr.bf16.mxu0 0
  %7935 = vmatmul.mubr.bf16.gmra.mrb[0].mxu0 %v7355
  %v7936 = vpop.f32.mrb[0].mxu0
  %v7937 = vadd.f32 %v7577, %v7936
  %v7938 = vpop.f32.mrb[0].mxu0
  %v7939 = vpop.f32.mrb[0].mxu0
  %v7940 = vadd.f32 %v7580, %v7939
  %v7941 = vpop.f32.mrb[0].mxu0
  %7942 = vmatprep.mubr.bf16.mxu0 0
  %7943 = vmatmul.mubr.bf16.gmra.mrb[0].mxu0 %v7358
  %v7944 = vpop.f32.mrb[0].mxu0
  %v7945 = vadd.f32 %v7585, %v7944
  %v7946 = vpop.f32.mrb[0].mxu0
  %v7947 = vpop.f32.mrb[0].mxu0
  %v7948 = vadd.f32 %v7588, %v7947
  %v7949 = vpop.f32.mrb[0].mxu0
  %7950 = vmatprep.mubr.bf16.mxu0 0
  %7951 = vmatmul.mubr.bf16.gmra.mrb[0].mxu0 %v7361
  %v7952 = vpop.f32.mrb[0].mxu0
  %v7953 = vadd.f32 %v7593, %v7952
  %v7954 = vpop.f32.mrb[0].mxu0
  %v7955 = vpop.f32.mrb[0].mxu0
  %v7956 = vadd.f32 %v7596, %v7955
  %v7957 = vpop.f32.mrb[0].mxu0
  %7958 = vmatprep.mubr.bf16.mxu0 0
  %7959 = vmatmul.mubr.bf16.gmra.mrb[0].mxu0 %v7364
  %v7960 = vpop.f32.mrb[0].mxu0
  %v7961 = vadd.f32 %v7601, %v7960
  %v7962 = vpop.f32.mrb[0].mxu0
  %v7963 = vpop.f32.mrb[0].mxu0
  %v7964 = vadd.f32 %v7604, %v7963
  %v7965 = vpop.f32.mrb[0].mxu0
  %7966 = vmatprep.mubr.bf16.mxu0 0
  %7967 = vmatmul.mubr.bf16.gmra.mrb[0].mxu0 %v7367
  %v7968 = vpop.f32.mrb[0].mxu0
  %v7969 = vadd.f32 %v7609, %v7968
  %v7970 = vpop.f32.mrb[0].mxu0
  %v7971 = vpop.f32.mrb[0].mxu0
  %v7972 = vadd.f32 %v7612, %v7971
  %v7973 = vpop.f32.mrb[0].mxu0
  %7974 = vmatprep.mubr.bf16.mxu0 0
  %7975 = vmatmul.mubr.bf16.gmra.mrb[0].mxu0 %v7370
  %v7976 = vpop.f32.mrb[0].mxu0
  %v7977 = vadd.f32 %v7617, %v7976
  %v7978 = vpop.f32.mrb[0].mxu0
  %v7979 = vpop.f32.mrb[0].mxu0
  %v7980 = vadd.f32 %v7620, %v7979
  %v7981 = vpop.f32.mrb[0].mxu0
  %7982 = vmatprep.mubr.bf16.mxu0 0
  %7983 = vmatmul.mubr.bf16.gmra.mrb[0].mxu0 %v7373
  %v7984 = vpop.f32.mrb[0].mxu0
  %v7985 = vadd.f32 %v7625, %v7984
  %v7986 = vpop.f32.mrb[0].mxu0
  %v7987 = vpop.f32.mrb[0].mxu0
  %v7988 = vadd.f32 %v7628, %v7987
  %v7989 = vpop.f32.mrb[0].mxu0
  %7990 = vmatprep.mubr.bf16.mxu0 0
  %7991 = vmatmul.mubr.bf16.gmra.mrb[0].mxu0 %v7376
  %v7992 = vpop.f32.mrb[0].mxu0
  %v7993 = vadd.f32 %v7633, %v7992
  %v7994 = vpop.f32.mrb[0].mxu0
  %v7995 = vpop.f32.mrb[0].mxu0
  %v7996 = vadd.f32 %v7636, %v7995
  %v7997 = vpop.f32.mrb[0].mxu0
  %7998 = vmatprep.mubr.bf16.mxu0 0
  %7999 = vmatmul.mubr.bf16.gmra.mrb[0].mxu0 %v7379
  %v8000 = vpop.f32.mrb[0].mxu0
  %v8001 = vadd.f32 %v7641, %v8000
  %v8002 = vpop.f32.mrb[0].mxu0
  %v8003 = vpop.f32.mrb[0].mxu0
  %v8004 = vadd.f32 %v7644, %v8003
  %v8005 = vpop.f32.mrb[0].mxu0
  %8006 = vmatprep.mubr.bf16.mxu0 0
  %8007 = vmatmul.mubr.bf16.gmra.mrb[0].mxu0 %v7382
  %v8008 = vpop.f32.mrb[0].mxu0
  %v8009 = vadd.f32 %v7649, %v8008
  %v8010 = vpop.f32.mrb[0].mxu0
  %v8011 = vpop.f32.mrb[0].mxu0
  %v8012 = vadd.f32 %v7652, %v8011
  %v8013 = vpop.f32.mrb[0].mxu0
  %8014 = vmatprep.mubr.bf16.mxu0 0
  %8015 = vmatmul.mubr.bf16.gmra.mrb[0].mxu0 %v7385
  %v8016 = vpop.f32.mrb[0].mxu0
  %v8017 = vadd.f32 %v7657, %v8016
  %v8018 = vpop.f32.mrb[0].mxu0
  %v8019 = vpop.f32.mrb[0].mxu0
  %v8020 = vadd.f32 %v7660, %v8019
  %v8021 = vpop.f32.mrb[0].mxu0
  %8022 = vmatprep.mubr.bf16.mxu0 0
  %8023 = vmatmul.mubr.bf16.gmra.mrb[0].mxu0 %v7388
  %v8024 = vpop.f32.mrb[0].mxu0
  %v8025 = vadd.f32 %v7665, %v8024
  %v8026 = vpop.f32.mrb[0].mxu0
  %v8027 = vpop.f32.mrb[0].mxu0
  %v8028 = vadd.f32 %v7668, %v8027
  %v8029 = vpop.f32.mrb[0].mxu0
  %8030 = vmatprep.mubr.bf16.mxu0 0
  %8031 = vmatmul.mubr.bf16.gmra.mrb[0].mxu0 %v7391
  %v8032 = vpop.f32.mrb[0].mxu0
  %v8033 = vadd.f32 %v7673, %v8032
  %v8034 = vpop.f32.mrb[0].mxu0
  %v8035 = vpop.f32.mrb[0].mxu0
  %v8036 = vadd.f32 %v7676, %v8035
  %v8037 = vpop.f32.mrb[0].mxu0
  %8038 = vmatprep.mubr.bf16.mxu0 0
  %8039 = vmatmul.mubr.bf16.gmra.mrb[0].mxu0 %v7394
  %v8040 = vpop.f32.mrb[0].mxu0
  %v8041 = vadd.f32 %v7681, %v8040
  %v8042 = vpop.f32.mrb[0].mxu0
  %v8043 = vpop.f32.mrb[0].mxu0
  %v8044 = vadd.f32 %v7684, %v8043
  %v8045 = vpop.f32.mrb[0].mxu0
  %8046 = vmatprep.mubr.bf16.mxu0 0
  %8047 = vmatmul.mubr.bf16.gmra.mrb[0].mxu0 %v7397
  %v8048 = vpop.f32.mrb[0].mxu0
  %v8049 = vadd.f32 %v7689, %v8048
  %v8050 = vpop.f32.mrb[0].mxu0
  %v8051 = vpop.f32.mrb[0].mxu0
  %v8052 = vadd.f32 %v7692, %v8051
  %v8053 = vpop.f32.mrb[0].mxu0
  %8054 = vmatprep.mubr.bf16.mxu0 0
  %8055 = vmatmul.mubr.bf16.gmra.mrb[0].mxu0 %v7400
  %v8056 = vpop.f32.mrb[0].mxu0
  %v8057 = vadd.f32 %v7697, %v8056
  %v8058 = vpop.f32.mrb[0].mxu0
  %v8059 = vpop.f32.mrb[0].mxu0
  %v8060 = vadd.f32 %v7700, %v8059
  %v8061 = vpop.f32.mrb[0].mxu0
  %8062 = vmatprep.mubr.bf16.mxu0 0
  %8063 = vmatmul.mubr.bf16.gmra.mrb[0].mxu0 %v7403
  %v8064 = vpop.f32.mrb[0].mxu0
  %v8065 = vadd.f32 %v7705, %v8064
  %v8066 = vpop.f32.mrb[0].mxu0
  %v8067 = vpop.f32.mrb[0].mxu0
  %v8068 = vadd.f32 %v7708, %v8067
  %v8069 = vpop.f32.mrb[0].mxu0
  %8070 = vmatprep.mubr.bf16.mxu0 0
  %8071 = vmatmul.mubr.bf16.gmra.mrb[0].mxu0 %v7406
  %v8072 = vpop.f32.mrb[0].mxu0
  %v8073 = vadd.f32 %v7713, %v8072
  %v8074 = vpop.f32.mrb[0].mxu0
  %v8075 = vpop.f32.mrb[0].mxu0
  %v8076 = vadd.f32 %v7716, %v8075
  %v8077 = vpop.f32.mrb[0].mxu0
  %8078 = vmatprep.mubr.bf16.mxu0 0
  %8079 = vmatmul.mubr.bf16.gmra.mrb[0].mxu0 %v7409
  %v8080 = vpop.f32.mrb[0].mxu0
  %v8081 = vadd.f32 %v7721, %v8080
  %v8082 = vpop.f32.mrb[0].mxu0
  %v8083 = vpop.f32.mrb[0].mxu0
  %v8084 = vadd.f32 %v7724, %v8083
  %v8085 = vpop.f32.mrb[0].mxu0
  %8086 = vmatprep.mubr.bf16.mxu0 0
  %8087 = vmatmul.mubr.bf16.gmra.mrb[0].mxu0 %v7412
  %v8088 = vpop.f32.mrb[0].mxu0
  %v8089 = vadd.f32 %v7729, %v8088
  %v8090 = vpop.f32.mrb[0].mxu0
  %v8091 = vpop.f32.mrb[0].mxu0
  %v8092 = vadd.f32 %v7732, %v8091
  %v8093 = vpop.f32.mrb[0].mxu0
  %8094 = vmatprep.mubr.bf16.mxu0 0
  %8095 = vmatmul.mubr.bf16.gmra.mrb[0].mxu0 %v7415
  %v8096 = vpop.f32.mrb[0].mxu0
  %v8097 = vadd.f32 %v7737, %v8096
  %v8098 = vpop.f32.mrb[0].mxu0
  %v8099 = vpop.f32.mrb[0].mxu0
  %v8100 = vadd.f32 %v7740, %v8099
  %v8101 = vpop.f32.mrb[0].mxu0
  %8102 = vmatprep.mubr.bf16.mxu0 0
  %8103 = vmatmul.mubr.bf16.gmra.mrb[0].mxu0 %v7418
  %v8104 = vpop.f32.mrb[0].mxu0
  %v8105 = vadd.f32 %v7745, %v8104
  %v8106 = vpop.f32.mrb[0].mxu0
  %v8107 = vpop.f32.mrb[0].mxu0
  %v8108 = vadd.f32 %v7748, %v8107
  %v8109 = vpop.f32.mrb[0].mxu0
  %8110 = vmatprep.mubr.bf16.mxu0 0
  %8111 = vmatmul.mubr.bf16.gmra.mrb[0].mxu0 %v7421
  %v8112 = vpop.f32.mrb[0].mxu0
  %v8113 = vadd.f32 %v7753, %v8112
  %v8114 = vpop.f32.mrb[0].mxu0
  %v8115 = vpop.f32.mrb[0].mxu0
  %v8116 = vadd.f32 %v7756, %v8115
  %v8117 = vpop.f32.mrb[0].mxu0
  %8118 = vmatprep.mubr.bf16.mxu0 0
  %8119 = vmatmul.mubr.bf16.gmra.mrb[0].mxu0 %v7424
  %v8120 = vpop.f32.mrb[0].mxu0
  %v8121 = vadd.f32 %v7761, %v8120
  %v8122 = vpop.f32.mrb[0].mxu0
  %v8123 = vpop.f32.mrb[0].mxu0
  %v8124 = vadd.f32 %v7764, %v8123
  %v8125 = vpop.f32.mrb[0].mxu0
  %8126 = vmatprep.mubr.bf16.mxu0 0
  %8127 = vmatmul.mubr.bf16.gmra.mrb[0].mxu0 %v7427
  %v8128 = vpop.f32.mrb[0].mxu0
  %v8129 = vadd.f32 %v7769, %v8128
  %v8130 = vpop.f32.mrb[0].mxu0
  %v8131 = vpop.f32.mrb[0].mxu0
  %v8132 = vadd.f32 %v7772, %v8131
  %v8133 = vpop.f32.mrb[0].mxu0
  %8134 = vmatprep.mubr.bf16.mxu0 0
  %8135 = vmatmul.mubr.bf16.gmra.mrb[0].mxu0 %v7430
  %v8136 = vpop.f32.mrb[0].mxu0
  %v8137 = vadd.f32 %v7777, %v8136
  %v8138 = vpop.f32.mrb[0].mxu0
  %v8139 = vpop.f32.mrb[0].mxu0
  %v8140 = vadd.f32 %v7780, %v8139
  %v8141 = vpop.f32.mrb[0].mxu0
  %8142 = vmatprep.mubr.bf16.mxu0 0
  %8143 = vmatmul.mubr.bf16.gmra.mrb[0].mxu0 %v7433
  %v8144 = vpop.f32.mrb[0].mxu0
  %v8145 = vadd.f32 %v7785, %v8144
  %v8146 = vpop.f32.mrb[0].mxu0
  %v8147 = vpop.f32.mrb[0].mxu0
  %v8148 = vadd.f32 %v7788, %v8147
  %v8149 = vpop.f32.mrb[0].mxu0
  %8150 = vmatprep.mubr.bf16.mxu0 0
  %8151 = vmatmul.mubr.bf16.gmra.mrb[0].mxu0 %v7436
  %v8152 = vpop.f32.mrb[0].mxu0
  %v8153 = vadd.f32 %v7793, %v8152
  %v8154 = vpop.f32.mrb[0].mxu0
  %v8155 = vpop.f32.mrb[0].mxu0
  %v8156 = vpop.f32.mrb[0].mxu0
  %8157 = vdwg.mxu0
  %v8158 = vld [vmem:[%s7] sm:$0x1]
  %v8160 = vlaneseq
  %v8161 = vshrl.u32 %v8160, 7
  %v8162 = vsub.s32 0, %v8161
  %v8163 = vrot.slane %v8158, %v8162
  %v8165 = vadd.f32 %v7833, %v8163
  %v8166 = vadd.f32 %v7836, %v8163
  %v8167 = vadd.f32 %v7841, %v8163
  %v8168 = vadd.f32 %v7844, %v8163
  %v8169 = vadd.f32 %v7849, %v8163
  %v8170 = vadd.f32 %v7852, %v8163
  %v8171 = vadd.f32 %v7857, %v8163
  %v8172 = vadd.f32 %v7860, %v8163
  %v8173 = vadd.f32 %v7865, %v8163
  %v8174 = vadd.f32 %v7868, %v8163
  %v8175 = vadd.f32 %v7873, %v8163
  %v8176 = vadd.f32 %v7876, %v8163
  %v8177 = vadd.f32 %v7881, %v8163
  %v8178 = vadd.f32 %v7884, %v8163
  %v8179 = vadd.f32 %v7889, %v8163
  %v8180 = vadd.f32 %v7892, %v8163
  %v8181 = vadd.f32 %v7897, %v8163
  %v8182 = vadd.f32 %v7900, %v8163
  %v8183 = vadd.f32 %v7905, %v8163
  %v8184 = vadd.f32 %v7908, %v8163
  %v8185 = vadd.f32 %v7913, %v8163
  %v8186 = vadd.f32 %v7916, %v8163
  %v8187 = vadd.f32 %v7921, %v8163
  %v8188 = vadd.f32 %v7924, %v8163
  %v8189 = vadd.f32 %v7929, %v8163
  %v8190 = vadd.f32 %v7932, %v8163
  %v8191 = vadd.f32 %v7937, %v8163
  %v8192 = vadd.f32 %v7940, %v8163
  %v8193 = vadd.f32 %v7945, %v8163
  %v8194 = vadd.f32 %v7948, %v8163
  %v8195 = vadd.f32 %v7953, %v8163
  %v8196 = vadd.f32 %v7956, %v8163
  %v8197 = vadd.f32 %v7961, %v8163
  %v8198 = vadd.f32 %v7964, %v8163
  %v8199 = vadd.f32 %v7969, %v8163
  %v8200 = vadd.f32 %v7972, %v8163
  %v8201 = vadd.f32 %v7977, %v8163
  %v8202 = vadd.f32 %v7980, %v8163
  %v8203 = vadd.f32 %v7985, %v8163
  %v8204 = vadd.f32 %v7988, %v8163
  %v8205 = vadd.f32 %v7993, %v8163
  %v8206 = vadd.f32 %v7996, %v8163
  %v8207 = vadd.f32 %v8001, %v8163
  %v8208 = vadd.f32 %v8004, %v8163
  %v8209 = vadd.f32 %v8009, %v8163
  %v8210 = vadd.f32 %v8012, %v8163
  %v8211 = vadd.f32 %v8017, %v8163
  %v8212 = vadd.f32 %v8020, %v8163
  %v8213 = vadd.f32 %v8025, %v8163
  %v8214 = vadd.f32 %v8028, %v8163
  %v8215 = vadd.f32 %v8033, %v8163
  %v8216 = vadd.f32 %v8036, %v8163
  %v8217 = vadd.f32 %v8041, %v8163
  %v8218 = vadd.f32 %v8044, %v8163
  %v8219 = vadd.f32 %v8049, %v8163
  %v8220 = vadd.f32 %v8052, %v8163
  %v8221 = vadd.f32 %v8057, %v8163
  %v8222 = vadd.f32 %v8060, %v8163
  %v8223 = vadd.f32 %v8065, %v8163
  %v8224 = vadd.f32 %v8068, %v8163
  %v8225 = vadd.f32 %v8073, %v8163
  %v8226 = vadd.f32 %v8076, %v8163
  %v8227 = vadd.f32 %v8081, %v8163
  %v8228 = vadd.f32 %v8084, %v8163
  %v8229 = vadd.f32 %v8089, %v8163
  %v8230 = vadd.f32 %v8092, %v8163
  %v8231 = vadd.f32 %v8097, %v8163
  %v8232 = vadd.f32 %v8100, %v8163
  %v8233 = vadd.f32 %v8105, %v8163
  %v8234 = vadd.f32 %v8108, %v8163
  %v8235 = vadd.f32 %v8113, %v8163
  %v8236 = vadd.f32 %v8116, %v8163
  %v8237 = vadd.f32 %v8121, %v8163
  %v8238 = vadd.f32 %v8124, %v8163
  %v8239 = vadd.f32 %v8129, %v8163
  %v8240 = vadd.f32 %v8132, %v8163
  %v8241 = vadd.f32 %v8137, %v8163
  %v8242 = vadd.f32 %v8140, %v8163
  %v8243 = vadd.f32 %v8145, %v8163
  %v8244 = vadd.f32 %v8148, %v8163
  %v8245 = vadd.f32 %v8153, %v8163
  %v8246 = vtanh.pop %v8165
  %v8247 = vtanh.pop %v8166
  %v8248 = vtanh.pop %v8167
  %v8249 = vtanh.pop %v8168
  %v8250 = vtanh.pop %v8169
  %v8251 = vtanh.pop %v8170
  %v8252 = vtanh.pop %v8171
  %v8253 = vtanh.pop %v8172
  %v8254 = vtanh.pop %v8173
  %v8255 = vtanh.pop %v8174
  %v8256 = vtanh.pop %v8175
  %v8257 = vtanh.pop %v8176
  %v8258 = vtanh.pop %v8177
  %v8259 = vtanh.pop %v8178
  %v8260 = vtanh.pop %v8179
  %v8261 = vtanh.pop %v8180
  %v8262 = vtanh.pop %v8181
  %v8263 = vtanh.pop %v8182
  %v8264 = vtanh.pop %v8183
  %v8265 = vtanh.pop %v8184
  %v8266 = vtanh.pop %v8185
  %v8267 = vtanh.pop %v8186
  %v8268 = vtanh.pop %v8187
  %v8269 = vtanh.pop %v8188
  %v8270 = vtanh.pop %v8189
  %v8271 = vtanh.pop %v8190
  %v8272 = vtanh.pop %v8191
  %v8273 = vtanh.pop %v8192
  %v8274 = vtanh.pop %v8193
  %v8275 = vtanh.pop %v8194
  %v8276 = vtanh.pop %v8195
  %v8277 = vtanh.pop %v8196
  %v8278 = vtanh.pop %v8197
  %v8279 = vtanh.pop %v8198
  %v8280 = vtanh.pop %v8199
  %v8281 = vtanh.pop %v8200
  %v8282 = vtanh.pop %v8201
  %v8283 = vtanh.pop %v8202
  %v8284 = vtanh.pop %v8203
  %v8285 = vtanh.pop %v8204
  %v8286 = vtanh.pop %v8205
  %v8287 = vtanh.pop %v8206
  %v8288 = vtanh.pop %v8207
  %v8289 = vtanh.pop %v8208
  %v8290 = vtanh.pop %v8209
  %v8291 = vtanh.pop %v8210
  %v8292 = vtanh.pop %v8211
  %v8293 = vtanh.pop %v8212
  %v8294 = vtanh.pop %v8213
  %v8295 = vtanh.pop %v8214
  %v8296 = vtanh.pop %v8215
  %v8297 = vtanh.pop %v8216
  %v8298 = vtanh.pop %v8217
  %v8299 = vtanh.pop %v8218
  %v8300 = vtanh.pop %v8219
  %v8301 = vtanh.pop %v8220
  %v8302 = vtanh.pop %v8221
  %v8303 = vtanh.pop %v8222
  %v8304 = vtanh.pop %v8223
  %v8305 = vtanh.pop %v8224
  %v8306 = vtanh.pop %v8225
  %v8307 = vtanh.pop %v8226
  %v8308 = vtanh.pop %v8227
  %v8309 = vtanh.pop %v8228
  %v8310 = vtanh.pop %v8229
  %v8311 = vtanh.pop %v8230
  %v8312 = vtanh.pop %v8231
  %v8313 = vtanh.pop %v8232
  %v8314 = vtanh.pop %v8233
  %v8315 = vtanh.pop %v8234
  %v8316 = vtanh.pop %v8235
  %v8317 = vtanh.pop %v8236
  %v8318 = vtanh.pop %v8237
  %v8319 = vtanh.pop %v8238
  %v8320 = vtanh.pop %v8239
  %v8321 = vtanh.pop %v8240
  %v8322 = vtanh.pop %v8241
  %v8323 = vtanh.pop %v8242
  %v8324 = vtanh.pop %v8243
  %v8325 = vtanh.pop %v8244
  %v8326 = vtanh.pop %v8245
  %v8327 = vsub.f32 1.0, %v2352
  %v8328 = vsub.f32 1.0, %v2354
  %v8329 = vsub.f32 1.0, %v2356
  %v8330 = vsub.f32 1.0, %v2358
  %v8331 = vsub.f32 1.0, %v2360
  %v8332 = vsub.f32 1.0, %v2362
  %v8333 = vsub.f32 1.0, %v2364
  %v8334 = vsub.f32 1.0, %v2366
  %v8335 = vsub.f32 1.0, %v2368
  %v8336 = vsub.f32 1.0, %v2370
  %v8337 = vsub.f32 1.0, %v2372
  %v8338 = vsub.f32 1.0, %v2374
  %v8339 = vsub.f32 1.0, %v2376
  %v8340 = vsub.f32 1.0, %v2378
  %v8341 = vsub.f32 1.0, %v2380
  %v8342 = vsub.f32 1.0, %v2382
  %v8343 = vsub.f32 1.0, %v2384
  %v8344 = vsub.f32 1.0, %v2386
  %v8345 = vsub.f32 1.0, %v2388
  %v8346 = vsub.f32 1.0, %v2390
  %v8347 = vsub.f32 1.0, %v2392
  %v8348 = vsub.f32 1.0, %v2394
  %v8349 = vsub.f32 1.0, %v2396
  %v8350 = vsub.f32 1.0, %v2398
  %v8351 = vsub.f32 1.0, %v2400
  %v8352 = vsub.f32 1.0, %v2402
  %v8353 = vsub.f32 1.0, %v2404
  %v8354 = vsub.f32 1.0, %v2406
  %v8355 = vsub.f32 1.0, %v2408
  %v8356 = vsub.f32 1.0, %v2410
  %v8357 = vsub.f32 1.0, %v2412
  %v8358 = vsub.f32 1.0, %v2414
  %v8359 = vsub.f32 1.0, %v2416
  %v8360 = vsub.f32 1.0, %v2418
  %v8361 = vsub.f32 1.0, %v2420
  %v8362 = vsub.f32 1.0, %v2422
  %v8363 = vsub.f32 1.0, %v2424
  %v8364 = vsub.f32 1.0, %v2426
  %v8365 = vsub.f32 1.0, %v2428
  %v8366 = vsub.f32 1.0, %v2430
  %v8367 = vsub.f32 1.0, %v2432
  %v8368 = vsub.f32 1.0, %v2434
  %v8369 = vsub.f32 1.0, %v2436
  %v8370 = vsub.f32 1.0, %v2438
  %v8371 = vsub.f32 1.0, %v2440
  %v8372 = vsub.f32 1.0, %v2442
  %v8373 = vsub.f32 1.0, %v2444
  %v8374 = vsub.f32 1.0, %v2446
  %v8375 = vsub.f32 1.0, %v2448
  %v8376 = vsub.f32 1.0, %v2450
  %v8377 = vsub.f32 1.0, %v2452
  %v8378 = vsub.f32 1.0, %v2454
  %v8379 = vsub.f32 1.0, %v2456
  %v8380 = vsub.f32 1.0, %v2458
  %v8381 = vsub.f32 1.0, %v2460
  %v8382 = vsub.f32 1.0, %v2462
  %v8383 = vsub.f32 1.0, %v2464
  %v8384 = vsub.f32 1.0, %v2466
  %v8385 = vsub.f32 1.0, %v2468
  %v8386 = vsub.f32 1.0, %v2470
  %v8387 = vsub.f32 1.0, %v2472
  %v8388 = vsub.f32 1.0, %v2474
  %v8389 = vsub.f32 1.0, %v2476
  %v8390 = vsub.f32 1.0, %v2478
  %v8391 = vsub.f32 1.0, %v2480
  %v8392 = vsub.f32 1.0, %v2482
  %v8393 = vsub.f32 1.0, %v2484
  %v8394 = vsub.f32 1.0, %v2486
  %v8395 = vsub.f32 1.0, %v2488
  %v8396 = vsub.f32 1.0, %v2490
  %v8397 = vsub.f32 1.0, %v2492
  %v8398 = vsub.f32 1.0, %v2494
  %v8399 = vsub.f32 1.0, %v2496
  %v8400 = vsub.f32 1.0, %v2498
  %v8401 = vsub.f32 1.0, %v2500
  %v8402 = vsub.f32 1.0, %v2502
  %v8403 = vsub.f32 1.0, %v2504
  %v8404 = vsub.f32 1.0, %v2506
  %v8405 = vsub.f32 1.0, %v2508
  %v8406 = vsub.f32 1.0, %v2510
  %v8407 = vsub.f32 1.0, %v2512
  %v8408 = vmul.f32 %v8327, %v2513
  %v8409 = vmul.f32 %v8328, %v2514
  %v8410 = vmul.f32 %v8329, %v2515
  %v8411 = vmul.f32 %v8330, %v2516
  %v8412 = vmul.f32 %v8331, %v2517
  %v8413 = vmul.f32 %v8332, %v2518
  %v8414 = vmul.f32 %v8333, %v2519
  %v8415 = vmul.f32 %v8334, %v2520
  %v8416 = vmul.f32 %v8335, %v2521
  %v8417 = vmul.f32 %v8336, %v2522
  %v8418 = vmul.f32 %v8337, %v2523
  %v8419 = vmul.f32 %v8338, %v2524
  %v8420 = vmul.f32 %v8339, %v2525
  %v8421 = vmul.f32 %v8340, %v2526
  %v8422 = vmul.f32 %v8341, %v2527
  %v8423 = vmul.f32 %v8342, %v2528
  %v8424 = vmul.f32 %v8343, %v2529
  %v8425 = vmul.f32 %v8344, %v2530
  %v8426 = vmul.f32 %v8345, %v2531
  %v8427 = vmul.f32 %v8346, %v2532
  %v8428 = vmul.f32 %v8347, %v2533
  %v8429 = vmul.f32 %v8348, %v2534
  %v8430 = vmul.f32 %v8349, %v2535
  %v8431 = vmul.f32 %v8350, %v2536
  %v8432 = vmul.f32 %v8351, %v2537
  %v8433 = vmul.f32 %v8352, %v2538
  %v8434 = vmul.f32 %v8353, %v2539
  %v8435 = vmul.f32 %v8354, %v2540
  %v8436 = vmul.f32 %v8355, %v2541
  %v8437 = vmul.f32 %v8356, %v2542
  %v8438 = vmul.f32 %v8357, %v2543
  %v8439 = vmul.f32 %v8358, %v2544
  %v8440 = vmul.f32 %v8359, %v2545
  %v8441 = vmul.f32 %v8360, %v2546
  %v8442 = vmul.f32 %v8361, %v2547
  %v8443 = vmul.f32 %v8362, %v2548
  %v8444 = vmul.f32 %v8363, %v2549
  %v8445 = vmul.f32 %v8364, %v2550
  %v8446 = vmul.f32 %v8365, %v2551
  %v8447 = vmul.f32 %v8366, %v2552
  %v8448 = vmul.f32 %v8367, %v2553
  %v8449 = vmul.f32 %v8368, %v2554
  %v8450 = vmul.f32 %v8369, %v2555
  %v8451 = vmul.f32 %v8370, %v2556
  %v8452 = vmul.f32 %v8371, %v2557
  %v8453 = vmul.f32 %v8372, %v2558
  %v8454 = vmul.f32 %v8373, %v2559
  %v8455 = vmul.f32 %v8374, %v2560
  %v8456 = vmul.f32 %v8375, %v2561
  %v8457 = vmul.f32 %v8376, %v2562
  %v8458 = vmul.f32 %v8377, %v2563
  %v8459 = vmul.f32 %v8378, %v2564
  %v8460 = vmul.f32 %v8379, %v2565
  %v8461 = vmul.f32 %v8380, %v2566
  %v8462 = vmul.f32 %v8381, %v2567
  %v8463 = vmul.f32 %v8382, %v2568
  %v8464 = vmul.f32 %v8383, %v2569
  %v8465 = vmul.f32 %v8384, %v2570
  %v8466 = vmul.f32 %v8385, %v2571
  %v8467 = vmul.f32 %v8386, %v2572
  %v8468 = vmul.f32 %v8387, %v2573
  %v8469 = vmul.f32 %v8388, %v2574
  %v8470 = vmul.f32 %v8389, %v2575
  %v8471 = vmul.f32 %v8390, %v2576
  %v8472 = vmul.f32 %v8391, %v2577
  %v8473 = vmul.f32 %v8392, %v2578
  %v8474 = vmul.f32 %v8393, %v2579
  %v8475 = vmul.f32 %v8394, %v2580
  %v8476 = vmul.f32 %v8395, %v2581
  %v8477 = vmul.f32 %v8396, %v2582
  %v8478 = vmul.f32 %v8397, %v2583
  %v8479 = vmul.f32 %v8398, %v2584
  %v8480 = vmul.f32 %v8399, %v2585
  %v8481 = vmul.f32 %v8400, %v2586
  %v8482 = vmul.f32 %v8401, %v2587
  %v8483 = vmul.f32 %v8402, %v2588
  %v8484 = vmul.f32 %v8403, %v2589
  %v8485 = vmul.f32 %v8404, %v2590
  %v8486 = vmul.f32 %v8405, %v2591
  %v8487 = vmul.f32 %v8406, %v2592
  %v8488 = vmul.f32 %v8407, %v2593
  %v8489 = vmul.f32 %v2352, %v8246
  %v8490 = vmul.f32 %v2354, %v8247
  %v8491 = vmul.f32 %v2356, %v8248
  %v8492 = vmul.f32 %v2358, %v8249
  %v8493 = vmul.f32 %v2360, %v8250
  %v8494 = vmul.f32 %v2362, %v8251
  %v8495 = vmul.f32 %v2364, %v8252
  %v8496 = vmul.f32 %v2366, %v8253
  %v8497 = vmul.f32 %v2368, %v8254
  %v8498 = vmul.f32 %v2370, %v8255
  %v8499 = vmul.f32 %v2372, %v8256
  %v8500 = vmul.f32 %v2374, %v8257
  %v8501 = vmul.f32 %v2376, %v8258
  %v8502 = vmul.f32 %v2378, %v8259
  %v8503 = vmul.f32 %v2380, %v8260
  %v8504 = vmul.f32 %v2382, %v8261
  %v8505 = vmul.f32 %v2384, %v8262
  %v8506 = vmul.f32 %v2386, %v8263
  %v8507 = vmul.f32 %v2388, %v8264
  %v8508 = vmul.f32 %v2390, %v8265
  %v8509 = vmul.f32 %v2392, %v8266
  %v8510 = vmul.f32 %v2394, %v8267
  %v8511 = vmul.f32 %v2396, %v8268
  %v8512 = vmul.f32 %v2398, %v8269
  %v8513 = vmul.f32 %v2400, %v8270
  %v8514 = vmul.f32 %v2402, %v8271
  %v8515 = vmul.f32 %v2404, %v8272
  %v8516 = vmul.f32 %v2406, %v8273
  %v8517 = vmul.f32 %v2408, %v8274
  %v8518 = vmul.f32 %v2410, %v8275
  %v8519 = vmul.f32 %v2412, %v8276
  %v8520 = vmul.f32 %v2414, %v8277
  %v8521 = vmul.f32 %v2416, %v8278
  %v8522 = vmul.f32 %v2418, %v8279
  %v8523 = vmul.f32 %v2420, %v8280
  %v8524 = vmul.f32 %v2422, %v8281
  %v8525 = vmul.f32 %v2424, %v8282
  %v8526 = vmul.f32 %v2426, %v8283
  %v8527 = vmul.f32 %v2428, %v8284
  %v8528 = vmul.f32 %v2430, %v8285
  %v8529 = vmul.f32 %v2432, %v8286
  %v8530 = vmul.f32 %v2434, %v8287
  %v8531 = vmul.f32 %v2436, %v8288
  %v8532 = vmul.f32 %v2438, %v8289
  %v8533 = vmul.f32 %v2440, %v8290
  %v8534 = vmul.f32 %v2442, %v8291
  %v8535 = vmul.f32 %v2444, %v8292
  %v8536 = vmul.f32 %v2446, %v8293
  %v8537 = vmul.f32 %v2448, %v8294
  %v8538 = vmul.f32 %v2450, %v8295
  %v8539 = vmul.f32 %v2452, %v8296
  %v8540 = vmul.f32 %v2454, %v8297
  %v8541 = vmul.f32 %v2456, %v8298
  %v8542 = vmul.f32 %v2458, %v8299
  %v8543 = vmul.f32 %v2460, %v8300
  %v8544 = vmul.f32 %v2462, %v8301
  %v8545 = vmul.f32 %v2464, %v8302
  %v8546 = vmul.f32 %v2466, %v8303
  %v8547 = vmul.f32 %v2468, %v8304
  %v8548 = vmul.f32 %v2470, %v8305
  %v8549 = vmul.f32 %v2472, %v8306
  %v8550 = vmul.f32 %v2474, %v8307
  %v8551 = vmul.f32 %v2476, %v8308
  %v8552 = vmul.f32 %v2478, %v8309
  %v8553 = vmul.f32 %v2480, %v8310
  %v8554 = vmul.f32 %v2482, %v8311
  %v8555 = vmul.f32 %v2484, %v8312
  %v8556 = vmul.f32 %v2486, %v8313
  %v8557 = vmul.f32 %v2488, %v8314
  %v8558 = vmul.f32 %v2490, %v8315
  %v8559 = vmul.f32 %v2492, %v8316
  %v8560 = vmul.f32 %v2494, %v8317
  %v8561 = vmul.f32 %v2496, %v8318
  %v8562 = vmul.f32 %v2498, %v8319
  %v8563 = vmul.f32 %v2500, %v8320
  %v8564 = vmul.f32 %v2502, %v8321
  %v8565 = vmul.f32 %v2504, %v8322
  %v8566 = vmul.f32 %v2506, %v8323
  %v8567 = vmul.f32 %v2508, %v8324
  %v8568 = vmul.f32 %v2510, %v8325
  %v8569 = vmul.f32 %v2512, %v8326
  %v8570 = vadd.f32 %v8408, %v8489
  %v8571 = vadd.f32 %v8409, %v8490
  %v8572 = vadd.f32 %v8410, %v8491
  %v8573 = vadd.f32 %v8411, %v8492
  %v8574 = vadd.f32 %v8412, %v8493
  %v8575 = vadd.f32 %v8413, %v8494
  %v8576 = vadd.f32 %v8414, %v8495
  %v8577 = vadd.f32 %v8415, %v8496
  %v8578 = vadd.f32 %v8416, %v8497
  %v8579 = vadd.f32 %v8417, %v8498
  %v8580 = vadd.f32 %v8418, %v8499
  %v8581 = vadd.f32 %v8419, %v8500
  %v8582 = vadd.f32 %v8420, %v8501
  %v8583 = vadd.f32 %v8421, %v8502
  %v8584 = vadd.f32 %v8422, %v8503
  %v8585 = vadd.f32 %v8423, %v8504
  %v8586 = vadd.f32 %v8424, %v8505
  %v8587 = vadd.f32 %v8425, %v8506
  %v8588 = vadd.f32 %v8426, %v8507
  %v8589 = vadd.f32 %v8427, %v8508
  %v8590 = vadd.f32 %v8428, %v8509
  %v8591 = vadd.f32 %v8429, %v8510
  %v8592 = vadd.f32 %v8430, %v8511
  %v8593 = vadd.f32 %v8431, %v8512
  %v8594 = vadd.f32 %v8432, %v8513
  %v8595 = vadd.f32 %v8433, %v8514
  %v8596 = vadd.f32 %v8434, %v8515
  %v8597 = vadd.f32 %v8435, %v8516
  %v8598 = vadd.f32 %v8436, %v8517
  %v8599 = vadd.f32 %v8437, %v8518
  %v8600 = vadd.f32 %v8438, %v8519
  %v8601 = vadd.f32 %v8439, %v8520
  %v8602 = vadd.f32 %v8440, %v8521
  %v8603 = vadd.f32 %v8441, %v8522
  %v8604 = vadd.f32 %v8442, %v8523
  %v8605 = vadd.f32 %v8443, %v8524
  %v8606 = vadd.f32 %v8444, %v8525
  %v8607 = vadd.f32 %v8445, %v8526
  %v8608 = vadd.f32 %v8446, %v8527
  %v8609 = vadd.f32 %v8447, %v8528
  %v8610 = vadd.f32 %v8448, %v8529
  %v8611 = vadd.f32 %v8449, %v8530
  %v8612 = vadd.f32 %v8450, %v8531
  %v8613 = vadd.f32 %v8451, %v8532
  %v8614 = vadd.f32 %v8452, %v8533
  %v8615 = vadd.f32 %v8453, %v8534
  %v8616 = vadd.f32 %v8454, %v8535
  %v8617 = vadd.f32 %v8455, %v8536
  %v8618 = vadd.f32 %v8456, %v8537
  %v8619 = vadd.f32 %v8457, %v8538
  %v8620 = vadd.f32 %v8458, %v8539
  %v8621 = vadd.f32 %v8459, %v8540
  %v8622 = vadd.f32 %v8460, %v8541
  %v8623 = vadd.f32 %v8461, %v8542
  %v8624 = vadd.f32 %v8462, %v8543
  %v8625 = vadd.f32 %v8463, %v8544
  %v8626 = vadd.f32 %v8464, %v8545
  %v8627 = vadd.f32 %v8465, %v8546
  %v8628 = vadd.f32 %v8466, %v8547
  %v8629 = vadd.f32 %v8467, %v8548
  %v8630 = vadd.f32 %v8468, %v8549
  %v8631 = vadd.f32 %v8469, %v8550
  %v8632 = vadd.f32 %v8470, %v8551
  %v8633 = vadd.f32 %v8471, %v8552
  %v8634 = vadd.f32 %v8472, %v8553
  %v8635 = vadd.f32 %v8473, %v8554
  %v8636 = vadd.f32 %v8474, %v8555
  %v8637 = vadd.f32 %v8475, %v8556
  %v8638 = vadd.f32 %v8476, %v8557
  %v8639 = vadd.f32 %v8477, %v8558
  %v8640 = vadd.f32 %v8478, %v8559
  %v8641 = vadd.f32 %v8479, %v8560
  %v8642 = vadd.f32 %v8480, %v8561
  %v8643 = vadd.f32 %v8481, %v8562
  %v8644 = vadd.f32 %v8482, %v8563
  %v8645 = vadd.f32 %v8483, %v8564
  %v8646 = vadd.f32 %v8484, %v8565
  %v8647 = vadd.f32 %v8485, %v8566
  %v8648 = vadd.f32 %v8486, %v8567
  %v8649 = vadd.f32 %v8487, %v8568
  %v8650 = vadd.f32 %v8488, %v8569
  %8651 = vst.msk [vmem:[%s8] sm:$0xff] %vm2999, %v8570
  %8652 = vst.msk [vmem:[%s8 + $0x8] sm:$0xff] %vm2999, %v8571
  %8653 = vst.msk [vmem:[%s8 + $0x10] sm:$0xff] %vm2999, %v8572
  %8654 = vst.msk [vmem:[%s8 + $0x18] sm:$0xff] %vm2999, %v8573
  %8655 = vst.msk [vmem:[%s8 + $0x20] sm:$0xff] %vm2999, %v8574
  %8656 = vst.msk [vmem:[%s8 + $0x28] sm:$0xff] %vm2999, %v8575
  %8657 = vst.msk [vmem:[%s8 + $0x30] sm:$0xff] %vm2999, %v8576
  %8658 = vst.msk [vmem:[%s8 + $0x38] sm:$0xff] %vm2999, %v8577
  %8659 = vst.msk [vmem:[%s8 + $0x40] sm:$0xff] %vm2999, %v8578
  %8660 = vst.msk [vmem:[%s8 + $0x48] sm:$0xff] %vm2999, %v8579
  %8661 = vst.msk [vmem:[%s8 + $0x50] sm:$0xff] %vm2999, %v8580
  %8662 = vst.msk [vmem:[%s8 + $0x58] sm:$0xff] %vm2999, %v8581
  %8663 = vst.msk [vmem:[%s8 + $0x60] sm:$0xff] %vm2999, %v8582
  %8664 = vst.msk [vmem:[%s8 + $0x68] sm:$0xff] %vm2999, %v8583
  %8665 = vst.msk [vmem:[%s8 + $0x70] sm:$0xff] %vm2999, %v8584
  %8666 = vst.msk [vmem:[%s8 + $0x78] sm:$0xff] %vm2999, %v8585
  %8667 = vst.msk [vmem:[%s8 + $0x80] sm:$0xff] %vm2999, %v8586
  %8668 = vst.msk [vmem:[%s8 + $0x88] sm:$0xff] %vm2999, %v8587
  %8669 = vst.msk [vmem:[%s8 + $0x90] sm:$0xff] %vm2999, %v8588
  %8670 = vst.msk [vmem:[%s8 + $0x98] sm:$0xff] %vm2999, %v8589
  %8671 = vst.msk [vmem:[%s8 + $0xa0] sm:$0xff] %vm2999, %v8590
  %8672 = vst.msk [vmem:[%s8 + $0xa8] sm:$0xff] %vm2999, %v8591
  %8673 = vst.msk [vmem:[%s8 + $0xb0] sm:$0xff] %vm2999, %v8592
  %8674 = vst.msk [vmem:[%s8 + $0xb8] sm:$0xff] %vm2999, %v8593
  %8675 = vst.msk [vmem:[%s8 + $0xc0] sm:$0xff] %vm2999, %v8594
  %8676 = vst.msk [vmem:[%s8 + $0xc8] sm:$0xff] %vm2999, %v8595
  %8677 = vst.msk [vmem:[%s8 + $0xd0] sm:$0xff] %vm2999, %v8596
  %8678 = vst.msk [vmem:[%s8 + $0xd8] sm:$0xff] %vm2999, %v8597
  %8679 = vst.msk [vmem:[%s8 + $0xe0] sm:$0xff] %vm2999, %v8598
  %8680 = vst.msk [vmem:[%s8 + $0xe8] sm:$0xff] %vm2999, %v8599
  %8681 = vst.msk [vmem:[%s8 + $0xf0] sm:$0xff] %vm2999, %v8600
  %8682 = vst.msk [vmem:[%s8 + $0xf8] sm:$0xff] %vm2999, %v8601
  %8683 = vst.msk [vmem:[%s8 + $0x100] sm:$0xff] %vm2999, %v8602
  %8684 = vst.msk [vmem:[%s8 + $0x108] sm:$0xff] %vm2999, %v8603
  %8685 = vst.msk [vmem:[%s8 + $0x110] sm:$0xff] %vm2999, %v8604
  %8686 = vst.msk [vmem:[%s8 + $0x118] sm:$0xff] %vm2999, %v8605
  %8687 = vst.msk [vmem:[%s8 + $0x120] sm:$0xff] %vm2999, %v8606
  %8688 = vst.msk [vmem:[%s8 + $0x128] sm:$0xff] %vm2999, %v8607
  %8689 = vst.msk [vmem:[%s8 + $0x130] sm:$0xff] %vm2999, %v8608
  %8690 = vst.msk [vmem:[%s8 + $0x138] sm:$0xff] %vm2999, %v8609
  %8691 = vst.msk [vmem:[%s8 + $0x140] sm:$0xff] %vm2999, %v8610
  %8692 = vst.msk [vmem:[%s8 + $0x148] sm:$0xff] %vm2999, %v8611
  %8693 = vst.msk [vmem:[%s8 + $0x150] sm:$0xff] %vm2999, %v8612
  %8694 = vst.msk [vmem:[%s8 + $0x158] sm:$0xff] %vm2999, %v8613
  %8695 = vst.msk [vmem:[%s8 + $0x160] sm:$0xff] %vm2999, %v8614
  %8696 = vst.msk [vmem:[%s8 + $0x168] sm:$0xff] %vm2999, %v8615
  %8697 = vst.msk [vmem:[%s8 + $0x170] sm:$0xff] %vm2999, %v8616
  %8698 = vst.msk [vmem:[%s8 + $0x178] sm:$0xff] %vm2999, %v8617
  %8699 = vst.msk [vmem:[%s8 + $0x180] sm:$0xff] %vm2999, %v8618
  %8700 = vst.msk [vmem:[%s8 + $0x188] sm:$0xff] %vm2999, %v8619
  %8701 = vst.msk [vmem:[%s8 + $0x190] sm:$0xff] %vm2999, %v8620
  %8702 = vst.msk [vmem:[%s8 + $0x198] sm:$0xff] %vm2999, %v8621
  %8703 = vst.msk [vmem:[%s8 + $0x1a0] sm:$0xff] %vm2999, %v8622
  %8704 = vst.msk [vmem:[%s8 + $0x1a8] sm:$0xff] %vm2999, %v8623
  %8705 = vst.msk [vmem:[%s8 + $0x1b0] sm:$0xff] %vm2999, %v8624
  %8706 = vst.msk [vmem:[%s8 + $0x1b8] sm:$0xff] %vm2999, %v8625
  %8707 = vst.msk [vmem:[%s8 + $0x1c0] sm:$0xff] %vm2999, %v8626
  %8708 = vst.msk [vmem:[%s8 + $0x1c8] sm:$0xff] %vm2999, %v8627
  %8709 = vst.msk [vmem:[%s8 + $0x1d0] sm:$0xff] %vm2999, %v8628
  %8710 = vst.msk [vmem:[%s8 + $0x1d8] sm:$0xff] %vm2999, %v8629
  %8711 = vst.msk [vmem:[%s8 + $0x1e0] sm:$0xff] %vm2999, %v8630
  %8712 = vst.msk [vmem:[%s8 + $0x1e8] sm:$0xff] %vm2999, %v8631
  %8713 = vst.msk [vmem:[%s8 + $0x1f0] sm:$0xff] %vm2999, %v8632
  %8714 = vst.msk [vmem:[%s8 + $0x1f8] sm:$0xff] %vm2999, %v8633
  %8715 = vst.msk [vmem:[%s8 + $0x200] sm:$0xff] %vm2999, %v8634
  %8716 = vst.msk [vmem:[%s8 + $0x208] sm:$0xff] %vm2999, %v8635
  %8717 = vst.msk [vmem:[%s8 + $0x210] sm:$0xff] %vm2999, %v8636
  %8718 = vst.msk [vmem:[%s8 + $0x218] sm:$0xff] %vm2999, %v8637
  %8719 = vst.msk [vmem:[%s8 + $0x220] sm:$0xff] %vm2999, %v8638
  %8720 = vst.msk [vmem:[%s8 + $0x228] sm:$0xff] %vm2999, %v8639
  %8721 = vst.msk [vmem:[%s8 + $0x230] sm:$0xff] %vm2999, %v8640
  %8722 = vst.msk [vmem:[%s8 + $0x238] sm:$0xff] %vm2999, %v8641
  %8723 = vst.msk [vmem:[%s8 + $0x240] sm:$0xff] %vm2999, %v8642
  %8724 = vst.msk [vmem:[%s8 + $0x248] sm:$0xff] %vm2999, %v8643
  %8725 = vst.msk [vmem:[%s8 + $0x250] sm:$0xff] %vm2999, %v8644
  %8726 = vst.msk [vmem:[%s8 + $0x258] sm:$0xff] %vm2999, %v8645
  %8727 = vst.msk [vmem:[%s8 + $0x260] sm:$0xff] %vm2999, %v8646
  %8728 = vst.msk [vmem:[%s8 + $0x268] sm:$0xff] %vm2999, %v8647
  %8729 = vst.msk [vmem:[%s8 + $0x270] sm:$0xff] %vm2999, %v8648
  %8730 = vst.msk [vmem:[%s8 + $0x278] sm:$0xff] %vm2999, %v8649
  %8731 = vst.msk [vmem:[%s8 + $0x280] sm:$0xff] %vm2999, %v8650
  // Predicated region
  $region34: #{tpu_custom_call.1} parent=0 // pred_check
    _
  $region35: #{tpu_custom_call.1} parent=0 // pred_check_branch
    %8733 = sbr.rel (0) target = $region37
  $region36: #{tpu_custom_call.1} parent=0 // pred_region
    _
  $region37: #{tpu_custom_call.1} parent=0 // pred_fallthru
    _
  // Predicated region
  $region38: #{tpu_custom_call.1} parent=0 // pred_check
    _
  $region39: #{tpu_custom_call.1} parent=0 // pred_check_branch
    %8735 = sbr.rel (0) target = $region41
  $region40: #{tpu_custom_call.1} parent=0 // pred_region
    _
  $region41: #{tpu_custom_call.1} parent=0 // pred_fallthru
    _

</llo_original>
